<compile_context>
chip_gen: v7x
topology: tpu7x:2x2x1
jax: 0.10.0
libtpu: 0.0.40
codegen_flags: <defaults>
</compile_context>

<pallas_src>
import functools

import jax
import jax.numpy as jnp
from jax.experimental import pallas as pl
from jax.experimental.pallas import tpu as pltpu


def _round_up(x, m):
    return ((x + m - 1) // m) * m


# ----------------------------------------------------------------------------
# Pallas kernels
# ----------------------------------------------------------------------------
def _matmul_bn_relu_kernel(x_ref, w_ref, scale_ref, shift_ref, o_ref, acc_ref):
    """Fused (x @ w) * scale + shift -> ReLU, with a K-reduction grid axis."""
    k = pl.program_id(1)

    @pl.when(k == 0)
    def _():
        acc_ref[...] = jnp.zeros_like(acc_ref)

    acc_ref[...] += jnp.dot(x_ref[...], w_ref[...],
                            preferred_element_type=jnp.float32)

    @pl.when(k == pl.num_programs(1) - 1)
    def _():
        y = acc_ref[...] * scale_ref[...] + shift_ref[...]
        o_ref[...] = jnp.maximum(y, 0.0).astype(o_ref.dtype)


def matmul_bn_relu(x, w, scale, shift, *, tm=256, tk=512,
                   out_dtype=jnp.float32, keep_padded_rows=False):
    """x: (M, K), w: (K, N), scale/shift: (1, N) f32 -> (M, N) out_dtype.

    * x / w are cast to bf16 for the MXU; accumulation and the BN/ReLU
      epilogue stay in f32 (portable across v5e/v6e/v7x).
    * M is zero-padded up to a multiple of tm (never collapses to one tile).
    * K is tiled by tk (padded with zeros when needed - numerically exact).
    """
    M, K = x.shape
    K2, N = w.shape
    assert K == K2

    # ---- pad M to a tile multiple --------------------------------------
    Mp = _round_up(M, tm)
    if Mp != M:
        x = jnp.pad(x, ((0, Mp - M), (0, 0)))

    # ---- pick / pad the K tiling ---------------------------------------
    if K > tk:
        tk_eff = tk
    else:
        tk_eff = _round_up(K, 16)           # packing-friendly small-K tile
    Kp = _round_up(K, tk_eff)
    if Kp != K:
        x = jnp.pad(x, ((0, 0), (0, Kp - K)))
        w = jnp.pad(w, ((0, Kp - K), (0, 0)))

    x = x.astype(jnp.bfloat16)
    w = w.astype(jnp.bfloat16)
    scale = scale.astype(jnp.float32)
    shift = shift.astype(jnp.float32)

    grid = (Mp // tm, Kp // tk_eff)
    cost = pl.CostEstimate(
        flops=2 * Mp * Kp * N,
        transcendentals=0,
        bytes_accessed=Mp * Kp * 2 + Kp * N * 2
        + Mp * N * jnp.dtype(out_dtype).itemsize,
    )

    out = pl.pallas_call(
        _matmul_bn_relu_kernel,
        out_shape=jax.ShapeDtypeStruct((Mp, N), out_dtype),
        grid_spec=pltpu.PrefetchScalarGridSpec(
            num_scalar_prefetch=0,
            grid=grid,
            in_specs=[
                pl.BlockSpec((tm, tk_eff), lambda i, k: (i, k)),
                pl.BlockSpec((tk_eff, N), lambda i, k: (k, 0)),
                pl.BlockSpec((1, N), lambda i, k: (0, 0)),
                pl.BlockSpec((1, N), lambda i, k: (0, 0)),
            ],
            out_specs=pl.BlockSpec((tm, N), lambda i, k: (i, 0)),
            scratch_shapes=[pltpu.VMEM((tm, N), jnp.float32)],
        ),
        compiler_params=pltpu.CompilerParams(
            dimension_semantics=("parallel", "arbitrary"),
        ),
        cost_estimate=cost,
    )(x, w, scale, shift)

    if keep_padded_rows or Mp == M:
        return out
    return out[:M]


def _concat_conv_bn_relu_kernel(x1, x2, x3, x4, x5,
                                w1, w2, w3, w4, w5,
                                scale_ref, shift_ref, o_ref):
    """Final 1x1 conv over a virtual 5-way channel concat:
       out = relu((sum_i x_i @ w_i) * scale + shift)."""
    acc = jnp.dot(x1[...], w1[...], preferred_element_type=jnp.float32)
    acc = acc + jnp.dot(x2[...], w2[...], preferred_element_type=jnp.float32)
    acc = acc + jnp.dot(x3[...], w3[...], preferred_element_type=jnp.float32)
    acc = acc + jnp.dot(x4[...], w4[...], preferred_element_type=jnp.float32)
    acc = acc + jnp.dot(x5[...], w5[...], preferred_element_type=jnp.float32)
    y = acc * scale_ref[...] + shift_ref[...]
    o_ref[...] = jnp.maximum(y, 0.0).astype(o_ref.dtype)


def concat_conv_bn_relu(branches, w_chunks, scale, shift, *, tm=256):
    """branches: 5 x (Mp, C) bf16, w_chunks: 5 x (C, N). Avoids the (Mp, 5*C)
    concat entirely."""
    Mp, C = branches[0].shape
    N = w_chunks[0].shape[1]
    assert Mp % tm == 0

    xin = [b.astype(jnp.bfloat16) for b in branches]
    win = [w.astype(jnp.bfloat16) for w in w_chunks]
    grid = (Mp // tm,)

    in_specs = (
        [pl.BlockSpec((tm, C), lambda i: (i, 0))] * 5
        + [pl.BlockSpec((C, N), lambda i: (0, 0))] * 5
        + [pl.BlockSpec((1, N), lambda i: (0, 0))] * 2
    )
    return pl.pallas_call(
        _concat_conv_bn_relu_kernel,
        out_shape=jax.ShapeDtypeStruct((Mp, N), jnp.float32),
        grid_spec=pltpu.PrefetchScalarGridSpec(
            num_scalar_prefetch=0,
            grid=grid,
            in_specs=in_specs,
            out_specs=pl.BlockSpec((tm, N), lambda i: (i, 0)),
        ),
        compiler_params=pltpu.CompilerParams(
            dimension_semantics=("parallel",),
        ),
    )(*xin, *win, scale.astype(jnp.float32), shift.astype(jnp.float32))


def _global_avg_pool_kernel(inv_hw, x_ref, o_ref):
    """Tiled mean over the H*W axis. x block: (N, thw, C) -> o: (N, C)."""
    j = pl.program_id(0)

    @pl.when(j == 0)
    def _():
        o_ref[...] = jnp.zeros_like(o_ref)

    o_ref[...] += jnp.sum(x_ref[...], axis=1)

    @pl.when(j == pl.num_programs(0) - 1)
    def _():
        o_ref[...] = o_ref[...] * inv_hw


def global_avg_pool(x_nhwc, *, thw=128):
    n, h, w, c = x_nhwc.shape
    hw = h * w
    x = x_nhwc.reshape(n, hw, c).astype(jnp.float32)

    thw_eff = min(thw, _round_up(hw, 8))
    hwp = _round_up(hw, thw_eff)
    if hwp != hw:
        x = jnp.pad(x, ((0, 0), (0, hwp - hw), (0, 0)))   # zeros don't change the sum

    kernel = functools.partial(_global_avg_pool_kernel, float(1.0 / hw))
    return pl.pallas_call(
        kernel,
        out_shape=jax.ShapeDtypeStruct((n, c), jnp.float32),
        grid_spec=pltpu.PrefetchScalarGridSpec(
            num_scalar_prefetch=0,
            grid=(hwp // thw_eff,),
            in_specs=[pl.BlockSpec((n, thw_eff, c), lambda j: (0, j, 0))],
            out_specs=pl.BlockSpec((n, c), lambda j: (0, 0)),
        ),
        compiler_params=pltpu.CompilerParams(
            dimension_semantics=("arbitrary",),
        ),
    )(x)


# ----------------------------------------------------------------------------
# Glue helpers (pure JAX)
# ----------------------------------------------------------------------------
def fold_bn(gamma, beta, mean, var, eps=1e-5):
    """Fold eval-mode BatchNorm into a per-channel scale/shift (1, C)."""
    s = gamma / jnp.sqrt(var + eps)
    b = beta - mean * s
    return s.reshape(1, -1), b.reshape(1, -1)


def dilated_im2col(x_nhwc, dilation):
    """3x3 dilated conv, padding=dilation -> (N, H, W, 9*C) tap matrix."""
    # TODO(synk): stream the 9 shifted windows straight from the padded
    # feature map inside the matmul kernel (manual DMA) to avoid
    # materializing this tensor in HBM at production Cin.
    n, h, w, c = x_nhwc.shape
    d = int(dilation)
    xp = jnp.pad(x_nhwc, ((0, 0), (d, d), (d, d), (0, 0)))
    taps = []
    for ky in range(3):
        for kx in range(3):
            taps.append(xp[:, ky * d:ky * d + h, kx * d:kx * d + w, :])
    return jnp.concatenate(taps, axis=-1)


def conv3x3_weight_to_matrix(w_oihw):
    """Torch (O, Cin, 3, 3) -> (9*Cin, O), matching dilated_im2col tap order."""
    o, cin, kh, kw = w_oihw.shape
    return jnp.transpose(w_oihw, (2, 3, 1, 0)).reshape(kh * kw * cin, o)


def conv1x1_weight_to_matrix(w_oi11):
    o, cin = w_oi11.shape[0], w_oi11.shape[1]
    return w_oi11.reshape(o, cin).T


# ----------------------------------------------------------------------------
# Parameter construction (deterministic, synthetic)
# ----------------------------------------------------------------------------
def make_bn_params(key, c):
    k1, k2, k3, k4 = jax.random.split(key, 4)
    return dict(
        gamma=jax.random.uniform(k1, (c,), jnp.float32, 0.5, 1.5),
        beta=jax.random.normal(k2, (c,), jnp.float32) * 0.1,
        mean=jax.random.normal(k3, (c,), jnp.float32) * 0.1,
        var=jax.random.uniform(k4, (c,), jnp.float32, 0.5, 1.5),
    )


def aspp_dilations(output_stride):
    assert output_stride in (8, 16)
    return (1, 6, 12, 18) if output_stride == 16 else (1, 12, 24, 36)


def init_aspp_params(key, in_channels):
    keys = jax.random.split(key, 16)
    scale = 0.05
    return {
        "aspp1": {
            "w": jax.random.normal(keys[0], (256, in_channels, 1, 1), jnp.float32) * scale,
            "bn": make_bn_params(keys[1], 256),
        },
        "aspp2": {
            "w": jax.random.normal(keys[2], (256, in_channels, 3, 3), jnp.float32) * scale,
            "bn": make_bn_params(keys[3], 256),
        },
        "aspp3": {
            "w": jax.random.normal(keys[4], (256, in_channels, 3, 3), jnp.float32) * scale,
            "bn": make_bn_params(keys[5], 256),
        },
        "aspp4": {
            "w": jax.random.normal(keys[6], (256, in_channels, 3, 3), jnp.float32) * scale,
            "bn": make_bn_params(keys[7], 256),
        },
        "pool": {
            "w": jax.random.normal(keys[8], (256, in_channels, 1, 1), jnp.float32) * scale,
            "bn": make_bn_params(keys[9], 256),
        },
        "conv1": {
            "w": jax.random.normal(keys[10], (256, 256 * 5, 1, 1), jnp.float32) * scale,
        },
        "bn1": make_bn_params(keys[11], 256),
    }


# ----------------------------------------------------------------------------
# ASPP forward
# ----------------------------------------------------------------------------
@functools.partial(jax.jit, static_argnums=(2,))
def aspp_forward(x_nchw, params, dilations):
    n, cin, h, w = x_nchw.shape
    m = n * h * w
    tm = 256

    x = jnp.transpose(x_nchw, (0, 2, 3, 1)).astype(jnp.float32)   # NHWC, f32
    x_bf16 = x.astype(jnp.bfloat16)

    branch_outs = []

    # aspp1: 1x1 conv + BN + ReLU
    wm = conv1x1_weight_to_matrix(params["aspp1"]["w"])
    s, b = fold_bn(**params["aspp1"]["bn"])
    branch_outs.append(
        matmul_bn_relu(x_bf16.reshape(m, cin), wm, s, b, tm=tm,
                       out_dtype=jnp.bfloat16, keep_padded_rows=True))

    # aspp2/3/4: dilated 3x3 conv + BN + ReLU (im2col in bf16 -> K-tiled matmul)
    for name, d in zip(("aspp2", "aspp3", "aspp4"), dilations[1:]):
        cols = dilated_im2col(x_bf16, d).reshape(m, 9 * cin)
        wm = conv3x3_weight_to_matrix(params[name]["w"])
        s, b = fold_bn(**params[name]["bn"])
        branch_outs.append(
            matmul_bn_relu(cols, wm, s, b, tm=tm,
                           out_dtype=jnp.bfloat16, keep_padded_rows=True))

    # avg_pool branch: global avg pool -> 1x1 conv + BN + ReLU -> bilinear
    # upsample back to (H, W). With a 1x1 source and align_corners=True the
    # interpolation is an exact constant broadcast.
    pooled = global_avg_pool(x)                                   # (N, Cin) f32
    wm = conv1x1_weight_to_matrix(params["pool"]["w"])
    s, b = fold_bn(**params["pool"]["bn"])
    yp = matmul_bn_relu(pooled, wm, s, b, tm=tm,
                        out_dtype=jnp.bfloat16)                   # (N, 256)
    mp = branch_outs[0].shape[0]                                  # padded M
    yp_full = jnp.broadcast_to(yp[:, None, :], (n, h * w, 256)).reshape(m, 256)
    if mp != m:
        yp_full = jnp.pad(yp_full, ((0, mp - m), (0, 0)))
    branch_outs.append(yp_full)

    # Final 1x1 conv + BN1 + ReLU over the virtual channel concat:
    # split conv1's weight into 5 (256, 256) chunks, accumulate in one kernel.
    w1 = params["conv1"]["w"].reshape(256, 256 * 5).T             # (1280, 256)
    w_chunks = [w1[i * 256:(i + 1) * 256] for i in range(5)]
    s, b = fold_bn(**params["bn1"])
    out = concat_conv_bn_relu(branch_outs, w_chunks, s, b, tm=tm)  # (Mp, 256) f32

    # Dropout(0.5) is identity in eval mode.
    out = out[:m].reshape(n, h, w, 256)
    return jnp.transpose(out, (0, 3, 1, 2))                       # back to NCHW


# ----------------------------------------------------------------------------
if __name__ == "__main__":
    key = jax.random.PRNGKey(0)
    k_x, k_p = jax.random.split(key)

    N, C, H, W = 2, 4, 16, 16
    output_stride = 16

    x = jax.random.normal(k_x, (N, C, H, W), jnp.float32)
    params = init_aspp_params(k_p, in_channels=C)
    dilations = aspp_dilations(output_stride)

    y = aspp_forward(x, params, dilations)
    y = jax.block_until_ready(y)
    assert y.shape == (N, 256, H, W)
    assert bool(jnp.all(jnp.isfinite(y)))
    print("KERNEL_OK")
</pallas_src>

<mosaic_0001>
module attributes {stable_mosaic.version = 11 : i64} {
  func.func @_matmul_bn_relu_kernel(%arg0: i32, %arg1: i32, %arg2: memref<256x48xbf16, #tpu.memory_space<vmem>>, %arg3: memref<48x256xbf16, #tpu.memory_space<vmem>>, %arg4: memref<1x256xf32, #tpu.memory_space<vmem>>, %arg5: memref<1x256xf32, #tpu.memory_space<vmem>>, %arg6: memref<256x256xbf16, #tpu.memory_space<vmem>>, %arg7: memref<256x256xf32, #tpu.memory_space<vmem>>) attributes {dimension_semantics = [#tpu.dimension_semantics<parallel>, #tpu.dimension_semantics<arbitrary>], iteration_bounds = array<i64: 2, 1>, scalar_prefetch = 0 : i64, scratch_operands = 1 : i64, tpu.core_type = #tpu.core_type<tc>, window_params = [{transform_indices = @transform_0, window_bounds = array<i64: 256, 48>}, {transform_indices = @transform_1, window_bounds = array<i64: 48, 256>}, {pipeline_mode = #tpu.pipeline_mode<synchronous>, transform_indices = @transform_2, window_bounds = array<i64: 1, 256>}, {pipeline_mode = #tpu.pipeline_mode<synchronous>, transform_indices = @transform_3, window_bounds = array<i64: 1, 256>}, {transform_indices = @transform_4, window_bounds = array<i64: 256, 256>}]} {
    %c0_i32 = arith.constant 0 : i32
    %0 = arith.cmpi eq, %arg1, %c0_i32 : i32
    %1 = arith.extui %0 : i1 to i32
    %c0_i32_0 = arith.constant 0 : i32
    %2 = arith.cmpi ne, %1, %c0_i32_0 : i32
    scf.if %2 {
      %cst_10 = arith.constant 0.000000e+00 : f32
      %12 = vector.broadcast %cst_10 : f32 to vector<256x256xf32>
      %c0_11 = arith.constant 0 : index
      %c0_12 = arith.constant 0 : index
      %13 = vector.load %arg7[%c0_11, %c0_12] : memref<256x256xf32, #tpu.memory_space<vmem>>, vector<256x256xf32>
      tpu.vector_store %arg7[%c0_11, %c0_12], %12 {strides = array<i32>} : memref<256x256xf32, #tpu.memory_space<vmem>>, vector<256x256xf32>,
    } else {
    }
    %c0 = arith.constant 0 : index
    %c0_1 = arith.constant 0 : index
    %3 = vector.load %arg7[%c0, %c0_1] : memref<256x256xf32, #tpu.memory_space<vmem>>, vector<256x256xf32>
    %c0_2 = arith.constant 0 : index
    %c0_3 = arith.constant 0 : index
    %4 = vector.load %arg2[%c0_2, %c0_3] : memref<256x48xbf16, #tpu.memory_space<vmem>>, vector<256x48xbf16>
    %c0_4 = arith.constant 0 : index
    %c0_5 = arith.constant 0 : index
    %5 = vector.load %arg3[%c0_4, %c0_5] : memref<48x256xbf16, #tpu.memory_space<vmem>>, vector<48x256xbf16>
    %cst = arith.constant dense<0.000000e+00> : vector<256x256xf32>
    %6 = tpu.matmul %4, %5, %cst {dimension_numbers = #tpu.dot_dimension_numbers<[1], [0], [0], [1], [0, 0, 1, 1], [], []>} : vector<256x48xbf16>, vector<48x256xbf16>, vector<256x256xf32> -> vector<256x256xf32>
    %7 = arith.addf %3, %6 : vector<256x256xf32>
    %c0_6 = arith.constant 0 : index
    %c0_7 = arith.constant 0 : index
    %8 = vector.load %arg7[%c0_6, %c0_7] : memref<256x256xf32, #tpu.memory_space<vmem>>, vector<256x256xf32>
    tpu.vector_store %arg7[%c0_6, %c0_7], %7 {strides = array<i32>} : memref<256x256xf32, #tpu.memory_space<vmem>>, vector<256x256xf32>,
    %c0_i32_8 = arith.constant 0 : i32
    %9 = arith.cmpi eq, %arg1, %c0_i32_8 : i32
    %10 = arith.extui %9 : i1 to i32
    %c0_i32_9 = arith.constant 0 : i32
    %11 = arith.cmpi ne, %10, %c0_i32_9 : i32
    scf.if %11 {
      %c0_10 = arith.constant 0 : index
      %c0_11 = arith.constant 0 : index
      %12 = vector.load %arg7[%c0_10, %c0_11] : memref<256x256xf32, #tpu.memory_space<vmem>>, vector<256x256xf32>
      %c0_12 = arith.constant 0 : index
      %c0_13 = arith.constant 0 : index
      %13 = vector.load %arg4[%c0_12, %c0_13] : memref<1x256xf32, #tpu.memory_space<vmem>>, vector<1x256xf32>
      %14 = vector.broadcast %13 : vector<1x256xf32> to vector<256x256xf32>
      %15 = arith.mulf %12, %14 : vector<256x256xf32>
      %c0_14 = arith.constant 0 : index
      %c0_15 = arith.constant 0 : index
      %16 = vector.load %arg5[%c0_14, %c0_15] : memref<1x256xf32, #tpu.memory_space<vmem>>, vector<1x256xf32>
      %17 = vector.broadcast %16 : vector<1x256xf32> to vector<256x256xf32>
      %18 = arith.addf %15, %17 : vector<256x256xf32>
      %cst_16 = arith.constant 0.000000e+00 : f32
      %19 = vector.broadcast %cst_16 : f32 to vector<256x256xf32>
      %20 = arith.maximumf %18, %19 : vector<256x256xf32>
      %21 = arith.truncf %20 : vector<256x256xf32> to vector<256x256xbf16>
      %c0_17 = arith.constant 0 : index
      %c0_18 = arith.constant 0 : index
      %22 = vector.load %arg6[%c0_17, %c0_18] : memref<256x256xbf16, #tpu.memory_space<vmem>>, vector<256x256xbf16>
      tpu.vector_store %arg6[%c0_17, %c0_18], %21 {strides = array<i32>} : memref<256x256xbf16, #tpu.memory_space<vmem>>, vector<256x256xbf16>,
    } else {
    }
    return
  }
  func.func @transform_0(%arg0: i32, %arg1: i32) -> (i32, i32) {
    %c0_i32 = arith.constant 0 : i32
    return %arg0, %arg1 : i32, i32
  }
  func.func @transform_1(%arg0: i32, %arg1: i32) -> (i32, i32) {
    %c0_i32 = arith.constant 0 : i32
    %c0_i32_0 = arith.constant 0 : i32
    return %arg1, %c0_i32 : i32, i32
  }
  func.func @transform_2(%arg0: i32, %arg1: i32) -> (i32, i32) {
    %c0_i32 = arith.constant 0 : i32
    %c0_i32_0 = arith.constant 0 : i32
    %c0_i32_1 = arith.constant 0 : i32
    return %c0_i32, %c0_i32_0 : i32, i32
  }
  func.func @transform_3(%arg0: i32, %arg1: i32) -> (i32, i32) {
    %c0_i32 = arith.constant 0 : i32
    %c0_i32_0 = arith.constant 0 : i32
    %c0_i32_1 = arith.constant 0 : i32
    return %c0_i32, %c0_i32_0 : i32, i32
  }
  func.func @transform_4(%arg0: i32, %arg1: i32) -> (i32, i32) {
    %c0_i32 = arith.constant 0 : i32
    %c0_i32_0 = arith.constant 0 : i32
    return %arg0, %c0_i32 : i32, i32
  }
}

module attributes {stable_mosaic.version = 11 : i64} {
  func.func @_matmul_bn_relu_kernel(%arg0: i32, %arg1: i32, %arg2: memref<256x16xbf16, #tpu.memory_space<vmem>>, %arg3: memref<16x256xbf16, #tpu.memory_space<vmem>>, %arg4: memref<1x256xf32, #tpu.memory_space<vmem>>, %arg5: memref<1x256xf32, #tpu.memory_space<vmem>>, %arg6: memref<256x256xbf16, #tpu.memory_space<vmem>>, %arg7: memref<256x256xf32, #tpu.memory_space<vmem>>) attributes {dimension_semantics = [#tpu.dimension_semantics<parallel>, #tpu.dimension_semantics<arbitrary>], iteration_bounds = array<i64: 2, 1>, scalar_prefetch = 0 : i64, scratch_operands = 1 : i64, tpu.core_type = #tpu.core_type<tc>, window_params = [{transform_indices = @transform_0, window_bounds = array<i64: 256, 16>}, {transform_indices = @transform_1, window_bounds = array<i64: 16, 256>}, {pipeline_mode = #tpu.pipeline_mode<synchronous>, transform_indices = @transform_2, window_bounds = array<i64: 1, 256>}, {pipeline_mode = #tpu.pipeline_mode<synchronous>, transform_indices = @transform_3, window_bounds = array<i64: 1, 256>}, {transform_indices = @transform_4, window_bounds = array<i64: 256, 256>}]} {
    %c0_i32 = arith.constant 0 : i32
    %0 = arith.cmpi eq, %arg1, %c0_i32 : i32
    %1 = arith.extui %0 : i1 to i32
    %c0_i32_0 = arith.constant 0 : i32
    %2 = arith.cmpi ne, %1, %c0_i32_0 : i32
    scf.if %2 {
      %cst_10 = arith.constant 0.000000e+00 : f32
      %12 = vector.broadcast %cst_10 : f32 to vector<256x256xf32>
      %c0_11 = arith.constant 0 : index
      %c0_12 = arith.constant 0 : index
      %13 = vector.load %arg7[%c0_11, %c0_12] : memref<256x256xf32, #tpu.memory_space<vmem>>, vector<256x256xf32>
      tpu.vector_store %arg7[%c0_11, %c0_12], %12 {strides = array<i32>} : memref<256x256xf32, #tpu.memory_space<vmem>>, vector<256x256xf32>,
    } else {
    }
    %c0 = arith.constant 0 : index
    %c0_1 = arith.constant 0 : index
    %3 = vector.load %arg7[%c0, %c0_1] : memref<256x256xf32, #tpu.memory_space<vmem>>, vector<256x256xf32>
    %c0_2 = arith.constant 0 : index
    %c0_3 = arith.constant 0 : index
    %4 = vector.load %arg2[%c0_2, %c0_3] : memref<256x16xbf16, #tpu.memory_space<vmem>>, vector<256x16xbf16>
    %c0_4 = arith.constant 0 : index
    %c0_5 = arith.constant 0 : index
    %5 = vector.load %arg3[%c0_4, %c0_5] : memref<16x256xbf16, #tpu.memory_space<vmem>>, vector<16x256xbf16>
    %cst = arith.constant dense<0.000000e+00> : vector<256x256xf32>
    %6 = tpu.matmul %4, %5, %cst {dimension_numbers = #tpu.dot_dimension_numbers<[1], [0], [0], [1], [0, 0, 1, 1], [], []>} : vector<256x16xbf16>, vector<16x256xbf16>, vector<256x256xf32> -> vector<256x256xf32>
    %7 = arith.addf %3, %6 : vector<256x256xf32>
    %c0_6 = arith.constant 0 : index
    %c0_7 = arith.constant 0 : index
    %8 = vector.load %arg7[%c0_6, %c0_7] : memref<256x256xf32, #tpu.memory_space<vmem>>, vector<256x256xf32>
    tpu.vector_store %arg7[%c0_6, %c0_7], %7 {strides = array<i32>} : memref<256x256xf32, #tpu.memory_space<vmem>>, vector<256x256xf32>,
    %c0_i32_8 = arith.constant 0 : i32
    %9 = arith.cmpi eq, %arg1, %c0_i32_8 : i32
    %10 = arith.extui %9 : i1 to i32
    %c0_i32_9 = arith.constant 0 : i32
    %11 = arith.cmpi ne, %10, %c0_i32_9 : i32
    scf.if %11 {
      %c0_10 = arith.constant 0 : index
      %c0_11 = arith.constant 0 : index
      %12 = vector.load %arg7[%c0_10, %c0_11] : memref<256x256xf32, #tpu.memory_space<vmem>>, vector<256x256xf32>
      %c0_12 = arith.constant 0 : index
      %c0_13 = arith.constant 0 : index
      %13 = vector.load %arg4[%c0_12, %c0_13] : memref<1x256xf32, #tpu.memory_space<vmem>>, vector<1x256xf32>
      %14 = vector.broadcast %13 : vector<1x256xf32> to vector<256x256xf32>
      %15 = arith.mulf %12, %14 : vector<256x256xf32>
      %c0_14 = arith.constant 0 : index
      %c0_15 = arith.constant 0 : index
      %16 = vector.load %arg5[%c0_14, %c0_15] : memref<1x256xf32, #tpu.memory_space<vmem>>, vector<1x256xf32>
      %17 = vector.broadcast %16 : vector<1x256xf32> to vector<256x256xf32>
      %18 = arith.addf %15, %17 : vector<256x256xf32>
      %cst_16 = arith.constant 0.000000e+00 : f32
      %19 = vector.broadcast %cst_16 : f32 to vector<256x256xf32>
      %20 = arith.maximumf %18, %19 : vector<256x256xf32>
      %21 = arith.truncf %20 : vector<256x256xf32> to vector<256x256xbf16>
      %c0_17 = arith.constant 0 : index
      %c0_18 = arith.constant 0 : index
      %22 = vector.load %arg6[%c0_17, %c0_18] : memref<256x256xbf16, #tpu.memory_space<vmem>>, vector<256x256xbf16>
      tpu.vector_store %arg6[%c0_17, %c0_18], %21 {strides = array<i32>} : memref<256x256xbf16, #tpu.memory_space<vmem>>, vector<256x256xbf16>,
    } else {
    }
    return
  }
  func.func @transform_0(%arg0: i32, %arg1: i32) -> (i32, i32) {
    %c0_i32 = arith.constant 0 : i32
    return %arg0, %arg1 : i32, i32
  }
  func.func @transform_1(%arg0: i32, %arg1: i32) -> (i32, i32) {
    %c0_i32 = arith.constant 0 : i32
    %c0_i32_0 = arith.constant 0 : i32
    return %arg1, %c0_i32 : i32, i32
  }
  func.func @transform_2(%arg0: i32, %arg1: i32) -> (i32, i32) {
    %c0_i32 = arith.constant 0 : i32
    %c0_i32_0 = arith.constant 0 : i32
    %c0_i32_1 = arith.constant 0 : i32
    return %c0_i32, %c0_i32_0 : i32, i32
  }
  func.func @transform_3(%arg0: i32, %arg1: i32) -> (i32, i32) {
    %c0_i32 = arith.constant 0 : i32
    %c0_i32_0 = arith.constant 0 : i32
    %c0_i32_1 = arith.constant 0 : i32
    return %c0_i32, %c0_i32_0 : i32, i32
  }
  func.func @transform_4(%arg0: i32, %arg1: i32) -> (i32, i32) {
    %c0_i32 = arith.constant 0 : i32
    %c0_i32_0 = arith.constant 0 : i32
    return %arg0, %c0_i32 : i32, i32
  }
}

module attributes {stable_mosaic.version = 11 : i64} {
  func.func @_global_avg_pool_kernel(%arg0: i32, %arg1: memref<2x128x4xf32, #tpu.memory_space<vmem>>, %arg2: memref<2x4xf32, #tpu.memory_space<vmem>>) attributes {dimension_semantics = [#tpu.dimension_semantics<arbitrary>], iteration_bounds = array<i64: 2>, scalar_prefetch = 0 : i64, scratch_operands = 0 : i64, tpu.core_type = #tpu.core_type<tc>, window_params = [{transform_indices = @transform_0, window_bounds = array<i64: 2, 128, 4>}, {pipeline_mode = #tpu.pipeline_mode<synchronous>, transform_indices = @transform_1, window_bounds = array<i64: 2, 4>}]} {
    %c0_i32 = arith.constant 0 : i32
    %0 = arith.cmpi eq, %arg0, %c0_i32 : i32
    %1 = arith.extui %0 : i1 to i32
    %c0_i32_0 = arith.constant 0 : i32
    %2 = arith.cmpi ne, %1, %c0_i32_0 : i32
    scf.if %2 {
      %cst_8 = arith.constant 0.000000e+00 : f32
      %11 = vector.broadcast %cst_8 : f32 to vector<2x4xf32>
      %c0_9 = arith.constant 0 : index
      %c0_10 = arith.constant 0 : index
      %12 = vector.load %arg2[%c0_9, %c0_10] : memref<2x4xf32, #tpu.memory_space<vmem>>, vector<2x4xf32>
      tpu.vector_store %arg2[%c0_9, %c0_10], %11 {strides = array<i32>} : memref<2x4xf32, #tpu.memory_space<vmem>>, vector<2x4xf32>,
    } else {
    }
    %c0 = arith.constant 0 : index
    %c0_1 = arith.constant 0 : index
    %3 = vector.load %arg2[%c0, %c0_1] : memref<2x4xf32, #tpu.memory_space<vmem>>, vector<2x4xf32>
    %c0_2 = arith.constant 0 : index
    %c0_3 = arith.constant 0 : index
    %c0_4 = arith.constant 0 : index
    %4 = vector.load %arg1[%c0_2, %c0_3, %c0_4] : memref<2x128x4xf32, #tpu.memory_space<vmem>>, vector<2x128x4xf32>
    %cst = arith.constant dense<0.000000e+00> : vector<2x4xf32>
    %5 = vector.multi_reduction <add>, %4, %cst [1] : vector<2x128x4xf32> to vector<2x4xf32>
    %6 = arith.addf %3, %5 : vector<2x4xf32>
    %c0_5 = arith.constant 0 : index
    %c0_6 = arith.constant 0 : index
    %7 = vector.load %arg2[%c0_5, %c0_6] : memref<2x4xf32, #tpu.memory_space<vmem>>, vector<2x4xf32>
    tpu.vector_store %arg2[%c0_5, %c0_6], %6 {strides = array<i32>} : memref<2x4xf32, #tpu.memory_space<vmem>>, vector<2x4xf32>,
    %c1_i32 = arith.constant 1 : i32
    %8 = arith.cmpi eq, %arg0, %c1_i32 : i32
    %9 = arith.extui %8 : i1 to i32
    %c0_i32_7 = arith.constant 0 : i32
    %10 = arith.cmpi ne, %9, %c0_i32_7 : i32
    scf.if %10 {
      %c0_8 = arith.constant 0 : index
      %c0_9 = arith.constant 0 : index
      %11 = vector.load %arg2[%c0_8, %c0_9] : memref<2x4xf32, #tpu.memory_space<vmem>>, vector<2x4xf32>
      %cst_10 = arith.constant 3.906250e-03 : f32
      %12 = vector.broadcast %cst_10 : f32 to vector<2x4xf32>
      %13 = arith.mulf %11, %12 : vector<2x4xf32>
      %c0_11 = arith.constant 0 : index
      %c0_12 = arith.constant 0 : index
      %14 = vector.load %arg2[%c0_11, %c0_12] : memref<2x4xf32, #tpu.memory_space<vmem>>, vector<2x4xf32>
      tpu.vector_store %arg2[%c0_11, %c0_12], %13 {strides = array<i32>} : memref<2x4xf32, #tpu.memory_space<vmem>>, vector<2x4xf32>,
    } else {
    }
    return
  }
  func.func @transform_0(%arg0: i32) -> (i32, i32, i32) {
    %c0_i32 = arith.constant 0 : i32
    %c0_i32_0 = arith.constant 0 : i32
    %c0_i32_1 = arith.constant 0 : i32
    return %c0_i32, %arg0, %c0_i32_0 : i32, i32, i32
  }
  func.func @transform_1(%arg0: i32) -> (i32, i32) {
    %c0_i32 = arith.constant 0 : i32
    %c0_i32_0 = arith.constant 0 : i32
    %c0_i32_1 = arith.constant 0 : i32
    return %c0_i32, %c0_i32_0 : i32, i32
  }
}

module attributes {stable_mosaic.version = 11 : i64} {
  func.func @_matmul_bn_relu_kernel(%arg0: i32, %arg1: i32, %arg2: memref<256x16xbf16, #tpu.memory_space<vmem>>, %arg3: memref<16x256xbf16, #tpu.memory_space<vmem>>, %arg4: memref<1x256xf32, #tpu.memory_space<vmem>>, %arg5: memref<1x256xf32, #tpu.memory_space<vmem>>, %arg6: memref<256x256xbf16, #tpu.memory_space<vmem>>, %arg7: memref<256x256xf32, #tpu.memory_space<vmem>>) attributes {dimension_semantics = [#tpu.dimension_semantics<parallel>, #tpu.dimension_semantics<arbitrary>], iteration_bounds = array<i64: 1, 1>, scalar_prefetch = 0 : i64, scratch_operands = 1 : i64, tpu.core_type = #tpu.core_type<tc>, window_params = [{transform_indices = @transform_0, window_bounds = array<i64: 256, 16>}, {transform_indices = @transform_1, window_bounds = array<i64: 16, 256>}, {pipeline_mode = #tpu.pipeline_mode<synchronous>, transform_indices = @transform_2, window_bounds = array<i64: 1, 256>}, {pipeline_mode = #tpu.pipeline_mode<synchronous>, transform_indices = @transform_3, window_bounds = array<i64: 1, 256>}, {transform_indices = @transform_4, window_bounds = array<i64: 256, 256>}]} {
    %c0_i32 = arith.constant 0 : i32
    %0 = arith.cmpi eq, %arg1, %c0_i32 : i32
    %1 = arith.extui %0 : i1 to i32
    %c0_i32_0 = arith.constant 0 : i32
    %2 = arith.cmpi ne, %1, %c0_i32_0 : i32
    scf.if %2 {
      %cst_10 = arith.constant 0.000000e+00 : f32
      %12 = vector.broadcast %cst_10 : f32 to vector<256x256xf32>
      %c0_11 = arith.constant 0 : index
      %c0_12 = arith.constant 0 : index
      %13 = vector.load %arg7[%c0_11, %c0_12] : memref<256x256xf32, #tpu.memory_space<vmem>>, vector<256x256xf32>
      tpu.vector_store %arg7[%c0_11, %c0_12], %12 {strides = array<i32>} : memref<256x256xf32, #tpu.memory_space<vmem>>, vector<256x256xf32>,
    } else {
    }
    %c0 = arith.constant 0 : index
    %c0_1 = arith.constant 0 : index
    %3 = vector.load %arg7[%c0, %c0_1] : memref<256x256xf32, #tpu.memory_space<vmem>>, vector<256x256xf32>
    %c0_2 = arith.constant 0 : index
    %c0_3 = arith.constant 0 : index
    %4 = vector.load %arg2[%c0_2, %c0_3] : memref<256x16xbf16, #tpu.memory_space<vmem>>, vector<256x16xbf16>
    %c0_4 = arith.constant 0 : index
    %c0_5 = arith.constant 0 : index
    %5 = vector.load %arg3[%c0_4, %c0_5] : memref<16x256xbf16, #tpu.memory_space<vmem>>, vector<16x256xbf16>
    %cst = arith.constant dense<0.000000e+00> : vector<256x256xf32>
    %6 = tpu.matmul %4, %5, %cst {dimension_numbers = #tpu.dot_dimension_numbers<[1], [0], [0], [1], [0, 0, 1, 1], [], []>} : vector<256x16xbf16>, vector<16x256xbf16>, vector<256x256xf32> -> vector<256x256xf32>
    %7 = arith.addf %3, %6 : vector<256x256xf32>
    %c0_6 = arith.constant 0 : index
    %c0_7 = arith.constant 0 : index
    %8 = vector.load %arg7[%c0_6, %c0_7] : memref<256x256xf32, #tpu.memory_space<vmem>>, vector<256x256xf32>
    tpu.vector_store %arg7[%c0_6, %c0_7], %7 {strides = array<i32>} : memref<256x256xf32, #tpu.memory_space<vmem>>, vector<256x256xf32>,
    %c0_i32_8 = arith.constant 0 : i32
    %9 = arith.cmpi eq, %arg1, %c0_i32_8 : i32
    %10 = arith.extui %9 : i1 to i32
    %c0_i32_9 = arith.constant 0 : i32
    %11 = arith.cmpi ne, %10, %c0_i32_9 : i32
    scf.if %11 {
      %c0_10 = arith.constant 0 : index
      %c0_11 = arith.constant 0 : index
      %12 = vector.load %arg7[%c0_10, %c0_11] : memref<256x256xf32, #tpu.memory_space<vmem>>, vector<256x256xf32>
      %c0_12 = arith.constant 0 : index
      %c0_13 = arith.constant 0 : index
      %13 = vector.load %arg4[%c0_12, %c0_13] : memref<1x256xf32, #tpu.memory_space<vmem>>, vector<1x256xf32>
      %14 = vector.broadcast %13 : vector<1x256xf32> to vector<256x256xf32>
      %15 = arith.mulf %12, %14 : vector<256x256xf32>
      %c0_14 = arith.constant 0 : index
      %c0_15 = arith.constant 0 : index
      %16 = vector.load %arg5[%c0_14, %c0_15] : memref<1x256xf32, #tpu.memory_space<vmem>>, vector<1x256xf32>
      %17 = vector.broadcast %16 : vector<1x256xf32> to vector<256x256xf32>
      %18 = arith.addf %15, %17 : vector<256x256xf32>
      %cst_16 = arith.constant 0.000000e+00 : f32
      %19 = vector.broadcast %cst_16 : f32 to vector<256x256xf32>
      %20 = arith.maximumf %18, %19 : vector<256x256xf32>
      %21 = arith.truncf %20 : vector<256x256xf32> to vector<256x256xbf16>
      %c0_17 = arith.constant 0 : index
      %c0_18 = arith.constant 0 : index
      %22 = vector.load %arg6[%c0_17, %c0_18] : memref<256x256xbf16, #tpu.memory_space<vmem>>, vector<256x256xbf16>
      tpu.vector_store %arg6[%c0_17, %c0_18], %21 {strides = array<i32>} : memref<256x256xbf16, #tpu.memory_space<vmem>>, vector<256x256xbf16>,
    } else {
    }
    return
  }
  func.func @transform_0(%arg0: i32, %arg1: i32) -> (i32, i32) {
    %c0_i32 = arith.constant 0 : i32
    return %arg0, %arg1 : i32, i32
  }
  func.func @transform_1(%arg0: i32, %arg1: i32) -> (i32, i32) {
    %c0_i32 = arith.constant 0 : i32
    %c0_i32_0 = arith.constant 0 : i32
    return %arg1, %c0_i32 : i32, i32
  }
  func.func @transform_2(%arg0: i32, %arg1: i32) -> (i32, i32) {
    %c0_i32 = arith.constant 0 : i32
    %c0_i32_0 = arith.constant 0 : i32
    %c0_i32_1 = arith.constant 0 : i32
    return %c0_i32, %c0_i32_0 : i32, i32
  }
  func.func @transform_3(%arg0: i32, %arg1: i32) -> (i32, i32) {
    %c0_i32 = arith.constant 0 : i32
    %c0_i32_0 = arith.constant 0 : i32
    %c0_i32_1 = arith.constant 0 : i32
    return %c0_i32, %c0_i32_0 : i32, i32
  }
  func.func @transform_4(%arg0: i32, %arg1: i32) -> (i32, i32) {
    %c0_i32 = arith.constant 0 : i32
    %c0_i32_0 = arith.constant 0 : i32
    return %arg0, %c0_i32 : i32, i32
  }
}

module attributes {stable_mosaic.version = 11 : i64} {
  func.func @_concat_conv_bn_relu_kernel(%arg0: i32, %arg1: memref<256x256xbf16, #tpu.memory_space<vmem>>, %arg2: memref<256x256xbf16, #tpu.memory_space<vmem>>, %arg3: memref<256x256xbf16, #tpu.memory_space<vmem>>, %arg4: memref<256x256xbf16, #tpu.memory_space<vmem>>, %arg5: memref<256x256xbf16, #tpu.memory_space<vmem>>, %arg6: memref<256x256xbf16, #tpu.memory_space<vmem>>, %arg7: memref<256x256xbf16, #tpu.memory_space<vmem>>, %arg8: memref<256x256xbf16, #tpu.memory_space<vmem>>, %arg9: memref<256x256xbf16, #tpu.memory_space<vmem>>, %arg10: memref<256x256xbf16, #tpu.memory_space<vmem>>, %arg11: memref<1x256xf32, #tpu.memory_space<vmem>>, %arg12: memref<1x256xf32, #tpu.memory_space<vmem>>, %arg13: memref<256x256xf32, #tpu.memory_space<vmem>>) attributes {dimension_semantics = [#tpu.dimension_semantics<parallel>], iteration_bounds = array<i64: 2>, scalar_prefetch = 0 : i64, scratch_operands = 0 : i64, tpu.core_type = #tpu.core_type<tc>, window_params = [{transform_indices = @transform_0, window_bounds = array<i64: 256, 256>}, {transform_indices = @transform_1, window_bounds = array<i64: 256, 256>}, {transform_indices = @transform_2, window_bounds = array<i64: 256, 256>}, {transform_indices = @transform_3, window_bounds = array<i64: 256, 256>}, {transform_indices = @transform_4, window_bounds = array<i64: 256, 256>}, {pipeline_mode = #tpu.pipeline_mode<synchronous>, transform_indices = @transform_5, window_bounds = array<i64: 256, 256>}, {pipeline_mode = #tpu.pipeline_mode<synchronous>, transform_indices = @transform_6, window_bounds = array<i64: 256, 256>}, {pipeline_mode = #tpu.pipeline_mode<synchronous>, transform_indices = @transform_7, window_bounds = array<i64: 256, 256>}, {pipeline_mode = #tpu.pipeline_mode<synchronous>, transform_indices = @transform_8, window_bounds = array<i64: 256, 256>}, {pipeline_mode = #tpu.pipeline_mode<synchronous>, transform_indices = @transform_9, window_bounds = array<i64: 256, 256>}, {pipeline_mode = #tpu.pipeline_mode<synchronous>, transform_indices = @transform_10, window_bounds = array<i64: 1, 256>}, {pipeline_mode = #tpu.pipeline_mode<synchronous>, transform_indices = @transform_11, window_bounds = array<i64: 1, 256>}, {transform_indices = @transform_12, window_bounds = array<i64: 256, 256>}]} {
    %c0 = arith.constant 0 : index
    %c0_0 = arith.constant 0 : index
    %0 = vector.load %arg1[%c0, %c0_0] : memref<256x256xbf16, #tpu.memory_space<vmem>>, vector<256x256xbf16>
    %c0_1 = arith.constant 0 : index
    %c0_2 = arith.constant 0 : index
    %1 = vector.load %arg6[%c0_1, %c0_2] : memref<256x256xbf16, #tpu.memory_space<vmem>>, vector<256x256xbf16>
    %cst = arith.constant dense<0.000000e+00> : vector<256x256xf32>
    %2 = tpu.matmul %0, %1, %cst {dimension_numbers = #tpu.dot_dimension_numbers<[1], [0], [0], [1], [0, 0, 1, 1], [], []>} : vector<256x256xbf16>, vector<256x256xbf16>, vector<256x256xf32> -> vector<256x256xf32>
    %c0_3 = arith.constant 0 : index
    %c0_4 = arith.constant 0 : index
    %3 = vector.load %arg2[%c0_3, %c0_4] : memref<256x256xbf16, #tpu.memory_space<vmem>>, vector<256x256xbf16>
    %c0_5 = arith.constant 0 : index
    %c0_6 = arith.constant 0 : index
    %4 = vector.load %arg7[%c0_5, %c0_6] : memref<256x256xbf16, #tpu.memory_space<vmem>>, vector<256x256xbf16>
    %cst_7 = arith.constant dense<0.000000e+00> : vector<256x256xf32>
    %5 = tpu.matmul %3, %4, %cst_7 {dimension_numbers = #tpu.dot_dimension_numbers<[1], [0], [0], [1], [0, 0, 1, 1], [], []>} : vector<256x256xbf16>, vector<256x256xbf16>, vector<256x256xf32> -> vector<256x256xf32>
    %6 = arith.addf %2, %5 : vector<256x256xf32>
    %c0_8 = arith.constant 0 : index
    %c0_9 = arith.constant 0 : index
    %7 = vector.load %arg3[%c0_8, %c0_9] : memref<256x256xbf16, #tpu.memory_space<vmem>>, vector<256x256xbf16>
    %c0_10 = arith.constant 0 : index
    %c0_11 = arith.constant 0 : index
    %8 = vector.load %arg8[%c0_10, %c0_11] : memref<256x256xbf16, #tpu.memory_space<vmem>>, vector<256x256xbf16>
    %cst_12 = arith.constant dense<0.000000e+00> : vector<256x256xf32>
    %9 = tpu.matmul %7, %8, %cst_12 {dimension_numbers = #tpu.dot_dimension_numbers<[1], [0], [0], [1], [0, 0, 1, 1], [], []>} : vector<256x256xbf16>, vector<256x256xbf16>, vector<256x256xf32> -> vector<256x256xf32>
    %10 = arith.addf %6, %9 : vector<256x256xf32>
    %c0_13 = arith.constant 0 : index
    %c0_14 = arith.constant 0 : index
    %11 = vector.load %arg4[%c0_13, %c0_14] : memref<256x256xbf16, #tpu.memory_space<vmem>>, vector<256x256xbf16>
    %c0_15 = arith.constant 0 : index
    %c0_16 = arith.constant 0 : index
    %12 = vector.load %arg9[%c0_15, %c0_16] : memref<256x256xbf16, #tpu.memory_space<vmem>>, vector<256x256xbf16>
    %cst_17 = arith.constant dense<0.000000e+00> : vector<256x256xf32>
    %13 = tpu.matmul %11, %12, %cst_17 {dimension_numbers = #tpu.dot_dimension_numbers<[1], [0], [0], [1], [0, 0, 1, 1], [], []>} : vector<256x256xbf16>, vector<256x256xbf16>, vector<256x256xf32> -> vector<256x256xf32>
    %14 = arith.addf %10, %13 : vector<256x256xf32>
    %c0_18 = arith.constant 0 : index
    %c0_19 = arith.constant 0 : index
    %15 = vector.load %arg5[%c0_18, %c0_19] : memref<256x256xbf16, #tpu.memory_space<vmem>>, vector<256x256xbf16>
    %c0_20 = arith.constant 0 : index
    %c0_21 = arith.constant 0 : index
    %16 = vector.load %arg10[%c0_20, %c0_21] : memref<256x256xbf16, #tpu.memory_space<vmem>>, vector<256x256xbf16>
    %cst_22 = arith.constant dense<0.000000e+00> : vector<256x256xf32>
    %17 = tpu.matmul %15, %16, %cst_22 {dimension_numbers = #tpu.dot_dimension_numbers<[1], [0], [0], [1], [0, 0, 1, 1], [], []>} : vector<256x256xbf16>, vector<256x256xbf16>, vector<256x256xf32> -> vector<256x256xf32>
    %18 = arith.addf %14, %17 : vector<256x256xf32>
    %c0_23 = arith.constant 0 : index
    %c0_24 = arith.constant 0 : index
    %19 = vector.load %arg11[%c0_23, %c0_24] : memref<1x256xf32, #tpu.memory_space<vmem>>, vector<1x256xf32>
    %20 = vector.broadcast %19 : vector<1x256xf32> to vector<256x256xf32>
    %21 = arith.mulf %18, %20 : vector<256x256xf32>
    %c0_25 = arith.constant 0 : index
    %c0_26 = arith.constant 0 : index
    %22 = vector.load %arg12[%c0_25, %c0_26] : memref<1x256xf32, #tpu.memory_space<vmem>>, vector<1x256xf32>
    %23 = vector.broadcast %22 : vector<1x256xf32> to vector<256x256xf32>
    %24 = arith.addf %21, %23 : vector<256x256xf32>
    %cst_27 = arith.constant 0.000000e+00 : f32
    %25 = vector.broadcast %cst_27 : f32 to vector<256x256xf32>
    %26 = arith.maximumf %24, %25 : vector<256x256xf32>
    %c0_28 = arith.constant 0 : index
    %c0_29 = arith.constant 0 : index
    %27 = vector.load %arg13[%c0_28, %c0_29] : memref<256x256xf32, #tpu.memory_space<vmem>>, vector<256x256xf32>
    tpu.vector_store %arg13[%c0_28, %c0_29], %26 {strides = array<i32>} : memref<256x256xf32, #tpu.memory_space<vmem>>, vector<256x256xf32>,
    return
  }
  func.func @transform_0(%arg0: i32) -> (i32, i32) {
    %c0_i32 = arith.constant 0 : i32
    %c0_i32_0 = arith.constant 0 : i32
    return %arg0, %c0_i32 : i32, i32
  }
  func.func @transform_1(%arg0: i32) -> (i32, i32) {
    %c0_i32 = arith.constant 0 : i32
    %c0_i32_0 = arith.constant 0 : i32
    return %arg0, %c0_i32 : i32, i32
  }
  func.func @transform_2(%arg0: i32) -> (i32, i32) {
    %c0_i32 = arith.constant 0 : i32
    %c0_i32_0 = arith.constant 0 : i32
    return %arg0, %c0_i32 : i32, i32
  }
  func.func @transform_3(%arg0: i32) -> (i32, i32) {
    %c0_i32 = arith.constant 0 : i32
    %c0_i32_0 = arith.constant 0 : i32
    return %arg0, %c0_i32 : i32, i32
  }
  func.func @transform_4(%arg0: i32) -> (i32, i32) {
    %c0_i32 = arith.constant 0 : i32
    %c0_i32_0 = arith.constant 0 : i32
    return %arg0, %c0_i32 : i32, i32
  }
  func.func @transform_5(%arg0: i32) -> (i32, i32) {
    %c0_i32 = arith.constant 0 : i32
    %c0_i32_0 = arith.constant 0 : i32
    %c0_i32_1 = arith.constant 0 : i32
    return %c0_i32, %c0_i32_0 : i32, i32
  }
  func.func @transform_6(%arg0: i32) -> (i32, i32) {
    %c0_i32 = arith.constant 0 : i32
    %c0_i32_0 = arith.constant 0 : i32
    %c0_i32_1 = arith.constant 0 : i32
    return %c0_i32, %c0_i32_0 : i32, i32
  }
  func.func @transform_7(%arg0: i32) -> (i32, i32) {
    %c0_i32 = arith.constant 0 : i32
    %c0_i32_0 = arith.constant 0 : i32
    %c0_i32_1 = arith.constant 0 : i32
    return %c0_i32, %c0_i32_0 : i32, i32
  }
  func.func @transform_8(%arg0: i32) -> (i32, i32) {
    %c0_i32 = arith.constant 0 : i32
    %c0_i32_0 = arith.constant 0 : i32
    %c0_i32_1 = arith.constant 0 : i32
    return %c0_i32, %c0_i32_0 : i32, i32
  }
  func.func @transform_9(%arg0: i32) -> (i32, i32) {
    %c0_i32 = arith.constant 0 : i32
    %c0_i32_0 = arith.constant 0 : i32
    %c0_i32_1 = arith.constant 0 : i32
    return %c0_i32, %c0_i32_0 : i32, i32
  }
  func.func @transform_10(%arg0: i32) -> (i32, i32) {
    %c0_i32 = arith.constant 0 : i32
    %c0_i32_0 = arith.constant 0 : i32
    %c0_i32_1 = arith.constant 0 : i32
    return %c0_i32, %c0_i32_0 : i32, i32
  }
  func.func @transform_11(%arg0: i32) -> (i32, i32) {
    %c0_i32 = arith.constant 0 : i32
    %c0_i32_0 = arith.constant 0 : i32
    %c0_i32_1 = arith.constant 0 : i32
    return %c0_i32, %c0_i32_0 : i32, i32
  }
  func.func @transform_12(%arg0: i32) -> (i32, i32) {
    %c0_i32 = arith.constant 0 : i32
    %c0_i32_0 = arith.constant 0 : i32
    return %arg0, %c0_i32 : i32, i32
  }
}

</mosaic_0001>

<llo_original>
// kernel: aspp_forward.9
$region0: #{aspp_forward.9}
  #allocation0 [shape = 'u32[]', space=smem, size = 0x4, offset = 0x4, fixed_abs, tag = 'smem constant byte address 0x4 - core index']
  #allocation1 [shape = 'u32[144,128]{1,0:T(1,128)}', space=vmem, size = 0x12000, scoped, tag = 'internal scratch']
  #allocation2 [shape = 'f32[256,256]{1,0:T(8,128)}', space=vmem, size = 0x40000, scoped, tag = 'scratch operand']
  %s0 = inlined_call_operand.vmem [shape: bf16[512,48], index: 0, kind: input, shape index: {}]
  %s1 = inlined_call_operand.vmem [shape: bf16[48,256], index: 1, kind: input, shape index: {}]
  %s2 = inlined_call_operand.vmem [shape: f32[1,256], index: 2, kind: input, shape index: {}]
  %s3 = inlined_call_operand.vmem [shape: f32[1,256], index: 3, kind: input, shape index: {}]
  %s4 = inlined_call_operand.vmem [shape: bf16[512,256], index: 4, kind: output, shape index: {}]
  %s5 = sld [smem:[#allocation0]]
  $region57: #{aspp_forward.9} parent=0
    _
  %s7 = ssub.s32 1, %s5
  %s8 = scalar_select 0, %s7, %s5
  loop: start=0, step=1, limit=4
  $region2: #{aspp_forward.9} parent=0 // loop_pre_header
    _
  $region3: #{aspp_forward.9} parent=0 // loop_header
    %s10 = sphi 0, %s14
    %p11 = scmp.ge.s32.totalorder %s10, 4
    %s17 = sphi 0, %s29
    %s18 = sphi 0, %s25
    %s19 = sphi 0, %s17
    %s20 = sphi 0, %s18
    %s21 = sphi 0, %s19
    %s22 = sphi 0, %s20
    %s34 = sphi 0, %s36
    %s37 = sphi 0, %s34
    %s38 = sphi 0, %s37
    %s54 = sphi 0, %s38
    %s60 = sphi 0, %s62
    %s63 = sphi 0, %s60
    %s64 = sphi 0, %s63
    %s80 = sphi 0, %s64
    %s84 = sphi 0, %s84
    %s86 = sphi 0, %s84
    %s87 = sphi 0, %s86
    %s101 = sphi 0, %s87
    %s105 = sphi 0, %s105
    %s107 = sphi 0, %s105
    %s108 = sphi 0, %s107
    %s122 = sphi 0, %s108
    %s128 = sphi 0, %s130
    %s131 = sphi 0, %s128
    %s132 = sphi 0, %s131
    %s148 = sphi 0, %s132
  $region4: #{aspp_forward.9} parent=0 // loop_header_branch
    %13 = sbr.rel (%p11) target = $region8
  $region5: #{aspp_forward.9} parent=0 // loop_body
    %s15 = ssub.s32 %s10, 1
    %s16 = ssub.s32 %s10, 2
    %s23 = sadd.s32 1, %s18
    %p24 = scmp.ge.s32.totalorder %s23, 1
    %s25 = scalar_select %p24, 0, %s23
    %s26 = sadd.s32 1, %s17
    %s27 = scalar_select %p24, %s26, %s17
    %p28 = scmp.ge.s32.totalorder %s27, 2
    %s29 = scalar_select %p28, 0, %s27
    %s30 = ssub.s32 %s17, %s29
    %s31 = ssub.s32 %s18, %s25
    %s32 = sor.u32 %s30, %s31
    %p33 = scmp.eq.s32.totalorder %s32, 0
    %s35 = sadd.s32 %s34, 1
    %s36 = scalar_select %p33, %s34, %s35
    %p39 = pneg %p33
    %p40 = scmp.eq.s32.totalorder %s10, 1
    %p41 = por %p39, %p40
    %p42 = scmp.ne.s32.totalorder %s34, %s37
    %p43 = scmp.eq.s32.totalorder %s10, 0
    %p44 = por %p42, %p43
    %p45 = scmp.ne.s32.totalorder %s34, %s37
    %p46 = scmp.eq.s32.totalorder %s15, 1
    %p47 = por %p45, %p46
    %p48 = scmp.ne.s32.totalorder %s37, %s38
    %p49 = scmp.eq.s32.totalorder %s15, 0
    %p50 = por %p48, %p49
    %p51 = scmp.ne.s32.totalorder %s37, %s38
    %p52 = scmp.eq.s32.totalorder %s16, 1
    %p53 = por %p51, %p52
    %p55 = scmp.ne.s32.totalorder %s38, %s54
    %p56 = scmp.eq.s32.totalorder %s16, 0
    %p57 = por %p55, %p56
    %s58 = ssub.s32 %s18, %s25
    %p59 = scmp.eq.s32.totalorder %s58, 0
    %s61 = sadd.s32 %s60, 1
    %s62 = scalar_select %p59, %s60, %s61
    %p65 = pneg %p59
    %p66 = scmp.eq.s32.totalorder %s10, 1
    %p67 = por %p65, %p66
    %p68 = scmp.ne.s32.totalorder %s60, %s63
    %p69 = scmp.eq.s32.totalorder %s10, 0
    %p70 = por %p68, %p69
    %p71 = scmp.ne.s32.totalorder %s60, %s63
    %p72 = scmp.eq.s32.totalorder %s15, 1
    %p73 = por %p71, %p72
    %p74 = scmp.ne.s32.totalorder %s63, %s64
    %p75 = scmp.eq.s32.totalorder %s15, 0
    %p76 = por %p74, %p75
    %p77 = scmp.ne.s32.totalorder %s63, %s64
    %p78 = scmp.eq.s32.totalorder %s16, 1
    %p79 = por %p77, %p78
    %p81 = scmp.ne.s32.totalorder %s64, %s80
    %p82 = scmp.eq.s32.totalorder %s16, 0
    %p83 = por %p81, %p82
    %s85 = sadd.s32 %s84, 1
    %p88 = scmp.eq.s32.totalorder %s10, 1
    %p89 = scmp.ne.s32.totalorder %s84, %s86
    %p90 = scmp.eq.s32.totalorder %s10, 0
    %p91 = por %p89, %p90
    %p92 = scmp.ne.s32.totalorder %s84, %s86
    %p93 = scmp.eq.s32.totalorder %s15, 1
    %p94 = por %p92, %p93
    %p95 = scmp.ne.s32.totalorder %s86, %s87
    %p96 = scmp.eq.s32.totalorder %s15, 0
    %p97 = por %p95, %p96
    %p98 = scmp.ne.s32.totalorder %s86, %s87
    %p99 = scmp.eq.s32.totalorder %s16, 1
    %p100 = por %p98, %p99
    %p102 = scmp.ne.s32.totalorder %s87, %s101
    %p103 = scmp.eq.s32.totalorder %s16, 0
    %p104 = por %p102, %p103
    %s106 = sadd.s32 %s105, 1
    %p109 = scmp.eq.s32.totalorder %s10, 1
    %p110 = scmp.ne.s32.totalorder %s105, %s107
    %p111 = scmp.eq.s32.totalorder %s10, 0
    %p112 = por %p110, %p111
    %p113 = scmp.ne.s32.totalorder %s105, %s107
    %p114 = scmp.eq.s32.totalorder %s15, 1
    %p115 = por %p113, %p114
    %p116 = scmp.ne.s32.totalorder %s107, %s108
    %p117 = scmp.eq.s32.totalorder %s15, 0
    %p118 = por %p116, %p117
    %p119 = scmp.ne.s32.totalorder %s107, %s108
    %p120 = scmp.eq.s32.totalorder %s16, 1
    %p121 = por %p119, %p120
    %p123 = scmp.ne.s32.totalorder %s108, %s122
    %p124 = scmp.eq.s32.totalorder %s16, 0
    %p125 = por %p123, %p124
    %s126 = ssub.s32 %s17, %s29
    %p127 = scmp.eq.s32.totalorder %s126, 0
    %s129 = sadd.s32 %s128, 1
    %s130 = scalar_select %p127, %s128, %s129
    %p133 = pneg %p127
    %p134 = scmp.eq.s32.totalorder %s10, 1
    %p135 = por %p133, %p134
    %p136 = scmp.ne.s32.totalorder %s128, %s131
    %p137 = scmp.eq.s32.totalorder %s10, 0
    %p138 = por %p136, %p137
    %p139 = scmp.ne.s32.totalorder %s128, %s131
    %p140 = scmp.eq.s32.totalorder %s15, 1
    %p141 = por %p139, %p140
    %p142 = scmp.ne.s32.totalorder %s131, %s132
    %p143 = scmp.eq.s32.totalorder %s15, 0
    %p144 = por %p142, %p143
    %p145 = scmp.ne.s32.totalorder %s131, %s132
    %p146 = scmp.eq.s32.totalorder %s16, 1
    %p147 = por %p145, %p146
    %p149 = scmp.ne.s32.totalorder %s132, %s148
    %p150 = scmp.eq.s32.totalorder %s16, 0
    %p151 = por %p149, %p150
    %p152 = scmp.le.s32.totalorder 1, %s10
    %p153 = scmp.lt.s32.totalorder %s10, 3
    %p154 = pnand %p152, %p153
    %p155 = pneg %p154
    // Predicated region
    $region9: #{aspp_forward.9} parent=5 // pred_check
      _
    $region10: #{aspp_forward.9} parent=5 // pred_check_branch
      %157 = sbr.rel (%p154) target = $region12
    $region11: #{aspp_forward.9} parent=5 // pred_region
      %s158 = ssub.s32 %s10, 1
      // Predicated region
      $region13: #{aspp_forward.9} parent=11 // pred_check
        %p159 = pneg %p76
      $region14: #{aspp_forward.9} parent=11 // pred_check_branch
        %161 = sbr.rel (%p159) target = $region16
      $region15: #{aspp_forward.9} parent=11 // pred_region
        %s162 = smul.u32 6, %s20
        %p163 = scmp.lt.s32.totalorder %s162, 5
        %s164 = scalar_select %p163, %s162, 5
        %s165 = smul.addr %s164, 2
        %s166 = smul.addr %s165, 4
        %s167 = scalar_lea.vmem %s1, %s166
        %s168 = smul.u32 6, %s20
      $region16: #{aspp_forward.9} parent=11 // pred_fallthru
        _
      // Predicated region
      $region17: #{aspp_forward.9} parent=11 // pred_check
        %p169 = pneg %p97
      $region18: #{aspp_forward.9} parent=11 // pred_check_branch
        %171 = sbr.rel (%p169) target = $region20
      $region19: #{aspp_forward.9} parent=11 // pred_region
        _
      $region20: #{aspp_forward.9} parent=11 // pred_fallthru
        _
      // Predicated region
      $region21: #{aspp_forward.9} parent=11 // pred_check
        %p172 = pneg %p118
      $region22: #{aspp_forward.9} parent=11 // pred_check_branch
        %174 = sbr.rel (%p172) target = $region24
      $region23: #{aspp_forward.9} parent=11 // pred_region
        _
      $region24: #{aspp_forward.9} parent=11 // pred_fallthru
        _
    $region12: #{aspp_forward.9} parent=5 // pred_fallthru
      _
    %p175 = scmp.lt.s32.totalorder %s10, 2
    // Predicated region
    $region25: #{aspp_forward.9} parent=5 // pred_check
      %p176 = pneg %p175
    $region26: #{aspp_forward.9} parent=5 // pred_check_branch
      %178 = sbr.rel (%p176) target = $region28
    $region27: #{aspp_forward.9} parent=5 // pred_region
      // Predicated region
      $region29: #{aspp_forward.9} parent=27 // pred_check
        %p179 = pneg %p44
      $region30: #{aspp_forward.9} parent=27 // pred_check_branch
        %181 = sbr.rel (%p179) target = $region32
      $region31: #{aspp_forward.9} parent=27 // pred_region
        %s182 = smul.u32 32, %s17
        %p183 = scmp.lt.s32.totalorder %s182, 63
        %s184 = scalar_select %p183, %s182, 63
        %p185 = scmp.lt.s32.totalorder %s18, 0
        %s186 = scalar_select %p185, %s18, 0
        %s187 = sadd.s32 %s186, %s184
        %s188 = smul.addr %s187, 4
        %s189 = scalar_lea.vmem %s0, %s188
        %s190 = smul.u32 32, %s17
      $region32: #{aspp_forward.9} parent=27 // pred_fallthru
        _
    $region28: #{aspp_forward.9} parent=5 // pred_fallthru
      _
    %p191 = scmp.le.s32.totalorder 1, %s10
    %p192 = scmp.lt.s32.totalorder %s10, 3
    %p193 = pnand %p191, %p192
    %p194 = pneg %p193
    // Predicated region
    $region33: #{aspp_forward.9} parent=5 // pred_check
      _
    $region34: #{aspp_forward.9} parent=5 // pred_check_branch
      %196 = sbr.rel (%p193) target = $region36
    $region35: #{aspp_forward.9} parent=5 // pred_region
      %s197 = ssub.s32 %s10, 1
      %s198 = smul.u32 32, %s19
      %p199 = scmp.lt.s32.totalorder %s198, 63
      %s200 = scalar_select %p199, %s198, 63
      %p201 = scmp.lt.s32.totalorder %s20, 0
      %s202 = scalar_select %p201, %s20, 0
      %s203 = sadd.s32 %s202, %s200
      %s204 = smul.addr %s203, 4
      %s205 = scalar_lea.vmem %s0, %s204
      %p206 = pneg %p50
      %p207 = pneg %p47
      %s208 = smul.u32 6, %s20
      %p209 = scmp.lt.s32.totalorder %s208, 5
      %s210 = scalar_select %p209, %s208, 5
      %s211 = smul.addr %s210, 2
      %s212 = smul.addr %s211, 4
      %s213 = scalar_lea.vmem %s1, %s212
      %p214 = pneg %p76
      %p215 = pneg %p73
      %p216 = pneg %p97
      %p217 = pneg %p94
      %p218 = pneg %p118
      %p219 = pneg %p115
      %p220 = pneg %p144
      %p221 = pneg %p141
      %s222 = smul.u32 32, %s19
      %p223 = scmp.lt.s32.totalorder %s222, 63
      %s224 = scalar_select %p223, %s222, 63
      %s225 = smul.addr %s224, 2
      %s226 = smul.addr %s225, 4
      %s227 = scalar_lea.vmem %s4, %s226
      %s228 = smul.u32 32, %s19
      %p229 = scmp.lt.s32.totalorder %s228, 63
      %s230 = scalar_select %p229, %s228, 63
      %p231 = scmp.lt.s32.totalorder %s20, 0
      %s232 = scalar_select %p231, %s20, 0
      %s233 = sadd.s32 %s232, %s230
      %s234 = smul.addr %s233, 4
      %s235 = scalar_lea.vmem %s0, %s234
      %s236 = smul.u32 32, %s19
      %s237 = smul.u32 6, %s20
      %p238 = scmp.lt.s32.totalorder %s237, 5
      %s239 = scalar_select %p238, %s237, 5
      %s240 = smul.addr %s239, 2
      %s241 = smul.addr %s240, 4
      %s242 = scalar_lea.vmem %s1, %s241
      %s243 = smul.u32 6, %s20
      %s244 = smul.u32 32, %s19
      %p245 = scmp.lt.s32.totalorder %s244, 63
      %s246 = scalar_select %p245, %s244, 63
      %s247 = smul.addr %s246, 2
      %s248 = smul.addr %s247, 4
      %s249 = scalar_lea.vmem %s4, %s248
      %s250 = smul.u32 32, %s19
      %p252 = scmp.eq.s32.totalorder %s20, 0
      // Predicated region
      $region37: #{aspp_forward.9} parent=35 // pred_check
        %p253 = pneg %p252
      $region38: #{aspp_forward.9} parent=35 // pred_check_branch
        %255 = sbr.rel (%p253) target = $region40
      $region39: #{aspp_forward.9} parent=35 // pred_region
        %256 = vst [vmem:[#allocation2] sm:$0xff] 0.0
        %257 = vst [vmem:[#allocation2 + $0x8] sm:$0xff] 0.0
        %258 = vst [vmem:[#allocation2 + $0x10] sm:$0xff] 0.0
        %259 = vst [vmem:[#allocation2 + $0x18] sm:$0xff] 0.0
        %260 = vst [vmem:[#allocation2 + $0x20] sm:$0xff] 0.0
        %261 = vst [vmem:[#allocation2 + $0x28] sm:$0xff] 0.0
        %262 = vst [vmem:[#allocation2 + $0x30] sm:$0xff] 0.0
        %263 = vst [vmem:[#allocation2 + $0x38] sm:$0xff] 0.0
        %264 = vst [vmem:[#allocation2 + $0x40] sm:$0xff] 0.0
        %265 = vst [vmem:[#allocation2 + $0x48] sm:$0xff] 0.0
        %266 = vst [vmem:[#allocation2 + $0x50] sm:$0xff] 0.0
        %267 = vst [vmem:[#allocation2 + $0x58] sm:$0xff] 0.0
        %268 = vst [vmem:[#allocation2 + $0x60] sm:$0xff] 0.0
        %269 = vst [vmem:[#allocation2 + $0x68] sm:$0xff] 0.0
        %270 = vst [vmem:[#allocation2 + $0x70] sm:$0xff] 0.0
        %271 = vst [vmem:[#allocation2 + $0x78] sm:$0xff] 0.0
        %272 = vst [vmem:[#allocation2 + $0x80] sm:$0xff] 0.0
        %273 = vst [vmem:[#allocation2 + $0x88] sm:$0xff] 0.0
        %274 = vst [vmem:[#allocation2 + $0x90] sm:$0xff] 0.0
        %275 = vst [vmem:[#allocation2 + $0x98] sm:$0xff] 0.0
        %276 = vst [vmem:[#allocation2 + $0xa0] sm:$0xff] 0.0
        %277 = vst [vmem:[#allocation2 + $0xa8] sm:$0xff] 0.0
        %278 = vst [vmem:[#allocation2 + $0xb0] sm:$0xff] 0.0
        %279 = vst [vmem:[#allocation2 + $0xb8] sm:$0xff] 0.0
        %280 = vst [vmem:[#allocation2 + $0xc0] sm:$0xff] 0.0
        %281 = vst [vmem:[#allocation2 + $0xc8] sm:$0xff] 0.0
        %282 = vst [vmem:[#allocation2 + $0xd0] sm:$0xff] 0.0
        %283 = vst [vmem:[#allocation2 + $0xd8] sm:$0xff] 0.0
        %284 = vst [vmem:[#allocation2 + $0xe0] sm:$0xff] 0.0
        %285 = vst [vmem:[#allocation2 + $0xe8] sm:$0xff] 0.0
        %286 = vst [vmem:[#allocation2 + $0xf0] sm:$0xff] 0.0
        %287 = vst [vmem:[#allocation2 + $0xf8] sm:$0xff] 0.0
        %288 = vst [vmem:[#allocation2 + $0x100] sm:$0xff] 0.0
        %289 = vst [vmem:[#allocation2 + $0x108] sm:$0xff] 0.0
        %290 = vst [vmem:[#allocation2 + $0x110] sm:$0xff] 0.0
        %291 = vst [vmem:[#allocation2 + $0x118] sm:$0xff] 0.0
        %292 = vst [vmem:[#allocation2 + $0x120] sm:$0xff] 0.0
        %293 = vst [vmem:[#allocation2 + $0x128] sm:$0xff] 0.0
        %294 = vst [vmem:[#allocation2 + $0x130] sm:$0xff] 0.0
        %295 = vst [vmem:[#allocation2 + $0x138] sm:$0xff] 0.0
        %296 = vst [vmem:[#allocation2 + $0x140] sm:$0xff] 0.0
        %297 = vst [vmem:[#allocation2 + $0x148] sm:$0xff] 0.0
        %298 = vst [vmem:[#allocation2 + $0x150] sm:$0xff] 0.0
        %299 = vst [vmem:[#allocation2 + $0x158] sm:$0xff] 0.0
        %300 = vst [vmem:[#allocation2 + $0x160] sm:$0xff] 0.0
        %301 = vst [vmem:[#allocation2 + $0x168] sm:$0xff] 0.0
        %302 = vst [vmem:[#allocation2 + $0x170] sm:$0xff] 0.0
        %303 = vst [vmem:[#allocation2 + $0x178] sm:$0xff] 0.0
        %304 = vst [vmem:[#allocation2 + $0x180] sm:$0xff] 0.0
        %305 = vst [vmem:[#allocation2 + $0x188] sm:$0xff] 0.0
        %306 = vst [vmem:[#allocation2 + $0x190] sm:$0xff] 0.0
        %307 = vst [vmem:[#allocation2 + $0x198] sm:$0xff] 0.0
        %308 = vst [vmem:[#allocation2 + $0x1a0] sm:$0xff] 0.0
        %309 = vst [vmem:[#allocation2 + $0x1a8] sm:$0xff] 0.0
        %310 = vst [vmem:[#allocation2 + $0x1b0] sm:$0xff] 0.0
        %311 = vst [vmem:[#allocation2 + $0x1b8] sm:$0xff] 0.0
        %312 = vst [vmem:[#allocation2 + $0x1c0] sm:$0xff] 0.0
        %313 = vst [vmem:[#allocation2 + $0x1c8] sm:$0xff] 0.0
        %314 = vst [vmem:[#allocation2 + $0x1d0] sm:$0xff] 0.0
        %315 = vst [vmem:[#allocation2 + $0x1d8] sm:$0xff] 0.0
        %316 = vst [vmem:[#allocation2 + $0x1e0] sm:$0xff] 0.0
        %317 = vst [vmem:[#allocation2 + $0x1e8] sm:$0xff] 0.0
        %318 = vst [vmem:[#allocation2 + $0x1f0] sm:$0xff] 0.0
        %319 = vst [vmem:[#allocation2 + $0x1f8] sm:$0xff] 0.0
      $region40: #{aspp_forward.9} parent=35 // pred_fallthru
        _
      %v320 = vld [vmem:[#allocation2] sm:$0xff]
      %v321 = vld [vmem:[#allocation2 + $0x8] sm:$0xff]
      %v322 = vld [vmem:[#allocation2 + $0x10] sm:$0xff]
      %v323 = vld [vmem:[#allocation2 + $0x18] sm:$0xff]
      %v324 = vld [vmem:[#allocation2 + $0x20] sm:$0xff]
      %v325 = vld [vmem:[#allocation2 + $0x28] sm:$0xff]
      %v326 = vld [vmem:[#allocation2 + $0x30] sm:$0xff]
      %v327 = vld [vmem:[#allocation2 + $0x38] sm:$0xff]
      %v328 = vld [vmem:[#allocation2 + $0x40] sm:$0xff]
      %v329 = vld [vmem:[#allocation2 + $0x48] sm:$0xff]
      %v330 = vld [vmem:[#allocation2 + $0x50] sm:$0xff]
      %v331 = vld [vmem:[#allocation2 + $0x58] sm:$0xff]
      %v332 = vld [vmem:[#allocation2 + $0x60] sm:$0xff]
      %v333 = vld [vmem:[#allocation2 + $0x68] sm:$0xff]
      %v334 = vld [vmem:[#allocation2 + $0x70] sm:$0xff]
      %v335 = vld [vmem:[#allocation2 + $0x78] sm:$0xff]
      %v336 = vld [vmem:[#allocation2 + $0x80] sm:$0xff]
      %v337 = vld [vmem:[#allocation2 + $0x88] sm:$0xff]
      %v338 = vld [vmem:[#allocation2 + $0x90] sm:$0xff]
      %v339 = vld [vmem:[#allocation2 + $0x98] sm:$0xff]
      %v340 = vld [vmem:[#allocation2 + $0xa0] sm:$0xff]
      %v341 = vld [vmem:[#allocation2 + $0xa8] sm:$0xff]
      %v342 = vld [vmem:[#allocation2 + $0xb0] sm:$0xff]
      %v343 = vld [vmem:[#allocation2 + $0xb8] sm:$0xff]
      %v344 = vld [vmem:[#allocation2 + $0xc0] sm:$0xff]
      %v345 = vld [vmem:[#allocation2 + $0xc8] sm:$0xff]
      %v346 = vld [vmem:[#allocation2 + $0xd0] sm:$0xff]
      %v347 = vld [vmem:[#allocation2 + $0xd8] sm:$0xff]
      %v348 = vld [vmem:[#allocation2 + $0xe0] sm:$0xff]
      %v349 = vld [vmem:[#allocation2 + $0xe8] sm:$0xff]
      %v350 = vld [vmem:[#allocation2 + $0xf0] sm:$0xff]
      %v351 = vld [vmem:[#allocation2 + $0xf8] sm:$0xff]
      %v352 = vld [vmem:[#allocation2 + $0x100] sm:$0xff]
      %v353 = vld [vmem:[#allocation2 + $0x108] sm:$0xff]
      %v354 = vld [vmem:[#allocation2 + $0x110] sm:$0xff]
      %v355 = vld [vmem:[#allocation2 + $0x118] sm:$0xff]
      %v356 = vld [vmem:[#allocation2 + $0x120] sm:$0xff]
      %v357 = vld [vmem:[#allocation2 + $0x128] sm:$0xff]
      %v358 = vld [vmem:[#allocation2 + $0x130] sm:$0xff]
      %v359 = vld [vmem:[#allocation2 + $0x138] sm:$0xff]
      %v360 = vld [vmem:[#allocation2 + $0x140] sm:$0xff]
      %v361 = vld [vmem:[#allocation2 + $0x148] sm:$0xff]
      %v362 = vld [vmem:[#allocation2 + $0x150] sm:$0xff]
      %v363 = vld [vmem:[#allocation2 + $0x158] sm:$0xff]
      %v364 = vld [vmem:[#allocation2 + $0x160] sm:$0xff]
      %v365 = vld [vmem:[#allocation2 + $0x168] sm:$0xff]
      %v366 = vld [vmem:[#allocation2 + $0x170] sm:$0xff]
      %v367 = vld [vmem:[#allocation2 + $0x178] sm:$0xff]
      %v368 = vld [vmem:[#allocation2 + $0x180] sm:$0xff]
      %v369 = vld [vmem:[#allocation2 + $0x188] sm:$0xff]
      %v370 = vld [vmem:[#allocation2 + $0x190] sm:$0xff]
      %v371 = vld [vmem:[#allocation2 + $0x198] sm:$0xff]
      %v372 = vld [vmem:[#allocation2 + $0x1a0] sm:$0xff]
      %v373 = vld [vmem:[#allocation2 + $0x1a8] sm:$0xff]
      %v374 = vld [vmem:[#allocation2 + $0x1b0] sm:$0xff]
      %v375 = vld [vmem:[#allocation2 + $0x1b8] sm:$0xff]
      %v376 = vld [vmem:[#allocation2 + $0x1c0] sm:$0xff]
      %v377 = vld [vmem:[#allocation2 + $0x1c8] sm:$0xff]
      %v378 = vld [vmem:[#allocation2 + $0x1d0] sm:$0xff]
      %v379 = vld [vmem:[#allocation2 + $0x1d8] sm:$0xff]
      %v380 = vld [vmem:[#allocation2 + $0x1e0] sm:$0xff]
      %v381 = vld [vmem:[#allocation2 + $0x1e8] sm:$0xff]
      %v382 = vld [vmem:[#allocation2 + $0x1f0] sm:$0xff]
      %v383 = vld [vmem:[#allocation2 + $0x1f8] sm:$0xff]
      %v384 = vld [vmem:[%s235] sm:$0xf]
      %v385 = vld [vmem:[%s235 + $0x4] sm:$0xf]
      %v386 = vld [vmem:[%s235 + $0x8] sm:$0xf]
      %v387 = vld [vmem:[%s235 + $0xc] sm:$0xf]
      %v388 = vld [vmem:[%s235 + $0x10] sm:$0xf]
      %v389 = vld [vmem:[%s235 + $0x14] sm:$0xf]
      %v390 = vld [vmem:[%s235 + $0x18] sm:$0xf]
      %v391 = vld [vmem:[%s235 + $0x1c] sm:$0xf]
      %v392 = vld [vmem:[%s235 + $0x20] sm:$0xf]
      %v393 = vld [vmem:[%s235 + $0x24] sm:$0xf]
      %v394 = vld [vmem:[%s235 + $0x28] sm:$0xf]
      %v395 = vld [vmem:[%s235 + $0x2c] sm:$0xf]
      %v396 = vld [vmem:[%s235 + $0x30] sm:$0xf]
      %v397 = vld [vmem:[%s235 + $0x34] sm:$0xf]
      %v398 = vld [vmem:[%s235 + $0x38] sm:$0xf]
      %v399 = vld [vmem:[%s235 + $0x3c] sm:$0xf]
      %v400 = vld [vmem:[%s235 + $0x40] sm:$0xf]
      %v401 = vld [vmem:[%s235 + $0x44] sm:$0xf]
      %v402 = vld [vmem:[%s235 + $0x48] sm:$0xf]
      %v403 = vld [vmem:[%s235 + $0x4c] sm:$0xf]
      %v404 = vld [vmem:[%s235 + $0x50] sm:$0xf]
      %v405 = vld [vmem:[%s235 + $0x54] sm:$0xf]
      %v406 = vld [vmem:[%s235 + $0x58] sm:$0xf]
      %v407 = vld [vmem:[%s235 + $0x5c] sm:$0xf]
      %v408 = vld [vmem:[%s235 + $0x60] sm:$0xf]
      %v409 = vld [vmem:[%s235 + $0x64] sm:$0xf]
      %v410 = vld [vmem:[%s235 + $0x68] sm:$0xf]
      %v411 = vld [vmem:[%s235 + $0x6c] sm:$0xf]
      %v412 = vld [vmem:[%s235 + $0x70] sm:$0xf]
      %v413 = vld [vmem:[%s235 + $0x74] sm:$0xf]
      %v414 = vld [vmem:[%s235 + $0x78] sm:$0xf]
      %v415 = vld [vmem:[%s235 + $0x7c] sm:$0xf]
      %v416 = vld [vmem:[%s242] sm:$0xff]
      %v417 = vld [vmem:[%s242 + $0x8] sm:$0xff]
      %v418 = vld [vmem:[%s242 + $0x10] sm:$0xff]
      %v419 = vld [vmem:[%s242 + $0x18] sm:$0xff]
      %v420 = vld [vmem:[%s242 + $0x20] sm:$0xff]
      %v421 = vld [vmem:[%s242 + $0x28] sm:$0xff]
      %v454 = vunpack.c.l.b16 %v384
      %v455 = vunpack.c.l.b16 %v385
      %v456 = vunpack.c.l.b16 %v386
      %v457 = vunpack.c.l.b16 %v387
      %v458 = vunpack.c.l.b16 %v388
      %v459 = vunpack.c.l.b16 %v389
      %v460 = vunpack.c.l.b16 %v390
      %v461 = vunpack.c.l.b16 %v391
      %v462 = vunpack.c.l.b16 %v392
      %v463 = vunpack.c.l.b16 %v393
      %v464 = vunpack.c.l.b16 %v394
      %v465 = vunpack.c.l.b16 %v395
      %v466 = vunpack.c.l.b16 %v396
      %v467 = vunpack.c.l.b16 %v397
      %v468 = vunpack.c.l.b16 %v398
      %v469 = vunpack.c.l.b16 %v399
      %v470 = vunpack.c.l.b16 %v400
      %v471 = vunpack.c.l.b16 %v401
      %v472 = vunpack.c.l.b16 %v402
      %v473 = vunpack.c.l.b16 %v403
      %v474 = vunpack.c.l.b16 %v404
      %v475 = vunpack.c.l.b16 %v405
      %v476 = vunpack.c.l.b16 %v406
      %v477 = vunpack.c.l.b16 %v407
      %v478 = vunpack.c.l.b16 %v408
      %v479 = vunpack.c.l.b16 %v409
      %v480 = vunpack.c.l.b16 %v410
      %v481 = vunpack.c.l.b16 %v411
      %v482 = vunpack.c.l.b16 %v412
      %v483 = vunpack.c.l.b16 %v413
      %v484 = vunpack.c.l.b16 %v414
      %v485 = vunpack.c.l.b16 %v415
      %v486 = vpack.c.b16 %v455, %v454
      %v487 = vpack.c.b16 %v457, %v456
      %v488 = vpack.c.b16 %v459, %v458
      %v489 = vpack.c.b16 %v461, %v460
      %v490 = vpack.c.b16 %v463, %v462
      %v491 = vpack.c.b16 %v465, %v464
      %v492 = vpack.c.b16 %v467, %v466
      %v493 = vpack.c.b16 %v469, %v468
      %v494 = vpack.c.b16 %v471, %v470
      %v495 = vpack.c.b16 %v473, %v472
      %v496 = vpack.c.b16 %v475, %v474
      %v497 = vpack.c.b16 %v477, %v476
      %v498 = vpack.c.b16 %v479, %v478
      %v499 = vpack.c.b16 %v481, %v480
      %v500 = vpack.c.b16 %v483, %v482
      %v501 = vpack.c.b16 %v485, %v484
      %v508 = vunpack.c.l.b16 %v416
      %v509 = vunpack.c.h.b16 %v416
      %v510 = vunpack.c.l.b16 %v417
      %v511 = vunpack.c.h.b16 %v417
      %v512 = vunpack.c.l.b16 %v418
      %v513 = vunpack.c.h.b16 %v418
      %v514 = vunpack.c.l.b16 %v419
      %v515 = vunpack.c.h.b16 %v419
      %v516 = vunpack.c.l.b16 %v420
      %v517 = vunpack.c.h.b16 %v420
      %v518 = vunpack.c.l.b16 %v421
      %v519 = vunpack.c.h.b16 %v421
      %v520 = vpack.c.b16 %v510, %v508
      %v521 = vpack.c.b16 %v511, %v509
      %v522 = vpack.c.b16 %v514, %v512
      %v523 = vpack.c.b16 %v515, %v513
      %v524 = vpack.c.b16 %v518, %v516
      %v525 = vpack.c.b16 %v519, %v517
      %vm532 = vcmask 392192
      %v534 = vsel %vm532, %v486, 0
      %v537 = vsel %vm532, %v487, 0
      %v540 = vsel %vm532, %v488, 0
      %v543 = vsel %vm532, %v489, 0
      %v546 = vsel %vm532, %v490, 0
      %v549 = vsel %vm532, %v491, 0
      %v552 = vsel %vm532, %v492, 0
      %v555 = vsel %vm532, %v493, 0
      %v558 = vsel %vm532, %v494, 0
      %v561 = vsel %vm532, %v495, 0
      %v564 = vsel %vm532, %v496, 0
      %v567 = vsel %vm532, %v497, 0
      %v570 = vsel %vm532, %v498, 0
      %v573 = vsel %vm532, %v499, 0
      %v576 = vsel %vm532, %v500, 0
      %v579 = vsel %vm532, %v501, 0
      %581 = vmatprep.subr.bf16.mxu0 %v521
      %582 = vmatpush1.bf16.msra.mxu0 %v520
      %583 = vmatprep.subr.bf16.mxu0 %v523
      %584 = vmatpush1.bf16.msra.mxu0 %v522
      %585 = vmatprep.subr.bf16.mxu0 %v525
      %586 = vmatpush1.bf16.msra.mxu0 %v524
      %587 = vmatprep.subr.bf16.mxu0 0
      %588 = vmatpush1.bf16.msra.mxu0 0
      %589 = vmatprep.subr.bf16.mxu0 0
      %590 = vmatpush1.bf16.msra.mxu0 0
      %591 = vmatprep.subr.bf16.mxu0 0
      %592 = vmatpush1.bf16.msra.mxu0 0
      %593 = vmatprep.subr.bf16.mxu0 0
      %594 = vmatpush1.bf16.msra.mxu0 0
      %595 = vmatprep.subr.bf16.mxu0 0
      %596 = vmatpush1.bf16.msra.mxu0 0
      %597 = vmatprep.subr.bf16.mxu0 0
      %598 = vmatpush1.bf16.msra.mxu0 0
      %599 = vmatprep.subr.bf16.mxu0 0
      %600 = vmatpush1.bf16.msra.mxu0 0
      %601 = vmatprep.subr.bf16.mxu0 0
      %602 = vmatpush1.bf16.msra.mxu0 0
      %603 = vmatprep.subr.bf16.mxu0 0
      %604 = vmatpush1.bf16.msra.mxu0 0
      %605 = vmatprep.subr.bf16.mxu0 0
      %606 = vmatpush1.bf16.msra.mxu0 0
      %607 = vmatprep.subr.bf16.mxu0 0
      %608 = vmatpush1.bf16.msra.mxu0 0
      %609 = vmatprep.subr.bf16.mxu0 0
      %610 = vmatpush1.bf16.msra.mxu0 0
      %611 = vmatprep.subr.bf16.mxu0 0
      %612 = vmatpush1.bf16.msra.mxu0 0
      %613 = vmatprep.mubr.bf16.mxu0 0
      %614 = vmatmul.mubr.bf16.gmra.mrb[0].mxu0 %v534
      %v615 = vpop.f32.mrb[0].mxu0
      %v616 = vadd.f32 0.0, %v615
      %v617 = vpop.f32.mrb[0].mxu0
      %v618 = vadd.f32 0.0, %v617
      %v619 = vpop.f32.mrb[0].mxu0
      %v620 = vadd.f32 0.0, %v619
      %v621 = vpop.f32.mrb[0].mxu0
      %v622 = vadd.f32 0.0, %v621
      %623 = vmatprep.mubr.bf16.mxu0 0
      %624 = vmatmul.mubr.bf16.gmra.mrb[0].mxu0 %v537
      %v625 = vpop.f32.mrb[0].mxu0
      %v626 = vadd.f32 0.0, %v625
      %v627 = vpop.f32.mrb[0].mxu0
      %v628 = vadd.f32 0.0, %v627
      %v629 = vpop.f32.mrb[0].mxu0
      %v630 = vadd.f32 0.0, %v629
      %v631 = vpop.f32.mrb[0].mxu0
      %v632 = vadd.f32 0.0, %v631
      %633 = vmatprep.mubr.bf16.mxu0 0
      %634 = vmatmul.mubr.bf16.gmra.mrb[0].mxu0 %v540
      %v635 = vpop.f32.mrb[0].mxu0
      %v636 = vadd.f32 0.0, %v635
      %v637 = vpop.f32.mrb[0].mxu0
      %v638 = vadd.f32 0.0, %v637
      %v639 = vpop.f32.mrb[0].mxu0
      %v640 = vadd.f32 0.0, %v639
      %v641 = vpop.f32.mrb[0].mxu0
      %v642 = vadd.f32 0.0, %v641
      %643 = vmatprep.mubr.bf16.mxu0 0
      %644 = vmatmul.mubr.bf16.gmra.mrb[0].mxu0 %v543
      %v645 = vpop.f32.mrb[0].mxu0
      %v646 = vadd.f32 0.0, %v645
      %v647 = vpop.f32.mrb[0].mxu0
      %v648 = vadd.f32 0.0, %v647
      %v649 = vpop.f32.mrb[0].mxu0
      %v650 = vadd.f32 0.0, %v649
      %v651 = vpop.f32.mrb[0].mxu0
      %v652 = vadd.f32 0.0, %v651
      %653 = vmatprep.mubr.bf16.mxu0 0
      %654 = vmatmul.mubr.bf16.gmra.mrb[0].mxu0 %v546
      %v655 = vpop.f32.mrb[0].mxu0
      %v656 = vadd.f32 0.0, %v655
      %v657 = vpop.f32.mrb[0].mxu0
      %v658 = vadd.f32 0.0, %v657
      %v659 = vpop.f32.mrb[0].mxu0
      %v660 = vadd.f32 0.0, %v659
      %v661 = vpop.f32.mrb[0].mxu0
      %v662 = vadd.f32 0.0, %v661
      %663 = vmatprep.mubr.bf16.mxu0 0
      %664 = vmatmul.mubr.bf16.gmra.mrb[0].mxu0 %v549
      %v665 = vpop.f32.mrb[0].mxu0
      %v666 = vadd.f32 0.0, %v665
      %v667 = vpop.f32.mrb[0].mxu0
      %v668 = vadd.f32 0.0, %v667
      %v669 = vpop.f32.mrb[0].mxu0
      %v670 = vadd.f32 0.0, %v669
      %v671 = vpop.f32.mrb[0].mxu0
      %v672 = vadd.f32 0.0, %v671
      %673 = vmatprep.mubr.bf16.mxu0 0
      %674 = vmatmul.mubr.bf16.gmra.mrb[0].mxu0 %v552
      %v675 = vpop.f32.mrb[0].mxu0
      %v676 = vadd.f32 0.0, %v675
      %v677 = vpop.f32.mrb[0].mxu0
      %v678 = vadd.f32 0.0, %v677
      %v679 = vpop.f32.mrb[0].mxu0
      %v680 = vadd.f32 0.0, %v679
      %v681 = vpop.f32.mrb[0].mxu0
      %v682 = vadd.f32 0.0, %v681
      %683 = vmatprep.mubr.bf16.mxu0 0
      %684 = vmatmul.mubr.bf16.gmra.mrb[0].mxu0 %v555
      %v685 = vpop.f32.mrb[0].mxu0
      %v686 = vadd.f32 0.0, %v685
      %v687 = vpop.f32.mrb[0].mxu0
      %v688 = vadd.f32 0.0, %v687
      %v689 = vpop.f32.mrb[0].mxu0
      %v690 = vadd.f32 0.0, %v689
      %v691 = vpop.f32.mrb[0].mxu0
      %v692 = vadd.f32 0.0, %v691
      %693 = vmatprep.mubr.bf16.mxu0 0
      %694 = vmatmul.mubr.bf16.gmra.mrb[0].mxu0 %v558
      %v695 = vpop.f32.mrb[0].mxu0
      %v696 = vadd.f32 0.0, %v695
      %v697 = vpop.f32.mrb[0].mxu0
      %v698 = vadd.f32 0.0, %v697
      %v699 = vpop.f32.mrb[0].mxu0
      %v700 = vadd.f32 0.0, %v699
      %v701 = vpop.f32.mrb[0].mxu0
      %v702 = vadd.f32 0.0, %v701
      %703 = vmatprep.mubr.bf16.mxu0 0
      %704 = vmatmul.mubr.bf16.gmra.mrb[0].mxu0 %v561
      %v705 = vpop.f32.mrb[0].mxu0
      %v706 = vadd.f32 0.0, %v705
      %v707 = vpop.f32.mrb[0].mxu0
      %v708 = vadd.f32 0.0, %v707
      %v709 = vpop.f32.mrb[0].mxu0
      %v710 = vadd.f32 0.0, %v709
      %v711 = vpop.f32.mrb[0].mxu0
      %v712 = vadd.f32 0.0, %v711
      %713 = vmatprep.mubr.bf16.mxu0 0
      %714 = vmatmul.mubr.bf16.gmra.mrb[0].mxu0 %v564
      %v715 = vpop.f32.mrb[0].mxu0
      %v716 = vadd.f32 0.0, %v715
      %v717 = vpop.f32.mrb[0].mxu0
      %v718 = vadd.f32 0.0, %v717
      %v719 = vpop.f32.mrb[0].mxu0
      %v720 = vadd.f32 0.0, %v719
      %v721 = vpop.f32.mrb[0].mxu0
      %v722 = vadd.f32 0.0, %v721
      %723 = vmatprep.mubr.bf16.mxu0 0
      %724 = vmatmul.mubr.bf16.gmra.mrb[0].mxu0 %v567
      %v725 = vpop.f32.mrb[0].mxu0
      %v726 = vadd.f32 0.0, %v725
      %v727 = vpop.f32.mrb[0].mxu0
      %v728 = vadd.f32 0.0, %v727
      %v729 = vpop.f32.mrb[0].mxu0
      %v730 = vadd.f32 0.0, %v729
      %v731 = vpop.f32.mrb[0].mxu0
      %v732 = vadd.f32 0.0, %v731
      %733 = vmatprep.mubr.bf16.mxu0 0
      %734 = vmatmul.mubr.bf16.gmra.mrb[0].mxu0 %v570
      %v735 = vpop.f32.mrb[0].mxu0
      %v736 = vadd.f32 0.0, %v735
      %v737 = vpop.f32.mrb[0].mxu0
      %v738 = vadd.f32 0.0, %v737
      %v739 = vpop.f32.mrb[0].mxu0
      %v740 = vadd.f32 0.0, %v739
      %v741 = vpop.f32.mrb[0].mxu0
      %v742 = vadd.f32 0.0, %v741
      %743 = vmatprep.mubr.bf16.mxu0 0
      %744 = vmatmul.mubr.bf16.gmra.mrb[0].mxu0 %v573
      %v745 = vpop.f32.mrb[0].mxu0
      %v746 = vadd.f32 0.0, %v745
      %v747 = vpop.f32.mrb[0].mxu0
      %v748 = vadd.f32 0.0, %v747
      %v749 = vpop.f32.mrb[0].mxu0
      %v750 = vadd.f32 0.0, %v749
      %v751 = vpop.f32.mrb[0].mxu0
      %v752 = vadd.f32 0.0, %v751
      %753 = vmatprep.mubr.bf16.mxu0 0
      %754 = vmatmul.mubr.bf16.gmra.mrb[0].mxu0 %v576
      %v755 = vpop.f32.mrb[0].mxu0
      %v756 = vadd.f32 0.0, %v755
      %v757 = vpop.f32.mrb[0].mxu0
      %v758 = vadd.f32 0.0, %v757
      %v759 = vpop.f32.mrb[0].mxu0
      %v760 = vadd.f32 0.0, %v759
      %v761 = vpop.f32.mrb[0].mxu0
      %v762 = vadd.f32 0.0, %v761
      %763 = vmatprep.mubr.bf16.mxu0 0
      %764 = vmatmul.mubr.bf16.gmra.mrb[0].mxu0 %v579
      %v765 = vpop.f32.mrb[0].mxu0
      %v766 = vadd.f32 0.0, %v765
      %v767 = vpop.f32.mrb[0].mxu0
      %v768 = vadd.f32 0.0, %v767
      %v769 = vpop.f32.mrb[0].mxu0
      %v770 = vadd.f32 0.0, %v769
      %v771 = vpop.f32.mrb[0].mxu0
      %v772 = vadd.f32 0.0, %v771
      %773 = vdwg.mxu0
      %v774 = vadd.f32 %v320, %v616
      %v775 = vadd.f32 %v321, %v618
      %v776 = vadd.f32 %v322, %v620
      %v777 = vadd.f32 %v323, %v622
      %v778 = vadd.f32 %v324, %v626
      %v779 = vadd.f32 %v325, %v628
      %v780 = vadd.f32 %v326, %v630
      %v781 = vadd.f32 %v327, %v632
      %v782 = vadd.f32 %v328, %v636
      %v783 = vadd.f32 %v329, %v638
      %v784 = vadd.f32 %v330, %v640
      %v785 = vadd.f32 %v331, %v642
      %v786 = vadd.f32 %v332, %v646
      %v787 = vadd.f32 %v333, %v648
      %v788 = vadd.f32 %v334, %v650
      %v789 = vadd.f32 %v335, %v652
      %v790 = vadd.f32 %v336, %v656
      %v791 = vadd.f32 %v337, %v658
      %v792 = vadd.f32 %v338, %v660
      %v793 = vadd.f32 %v339, %v662
      %v794 = vadd.f32 %v340, %v666
      %v795 = vadd.f32 %v341, %v668
      %v796 = vadd.f32 %v342, %v670
      %v797 = vadd.f32 %v343, %v672
      %v798 = vadd.f32 %v344, %v676
      %v799 = vadd.f32 %v345, %v678
      %v800 = vadd.f32 %v346, %v680
      %v801 = vadd.f32 %v347, %v682
      %v802 = vadd.f32 %v348, %v686
      %v803 = vadd.f32 %v349, %v688
      %v804 = vadd.f32 %v350, %v690
      %v805 = vadd.f32 %v351, %v692
      %v806 = vadd.f32 %v352, %v696
      %v807 = vadd.f32 %v353, %v698
      %v808 = vadd.f32 %v354, %v700
      %v809 = vadd.f32 %v355, %v702
      %v810 = vadd.f32 %v356, %v706
      %v811 = vadd.f32 %v357, %v708
      %v812 = vadd.f32 %v358, %v710
      %v813 = vadd.f32 %v359, %v712
      %v814 = vadd.f32 %v360, %v716
      %v815 = vadd.f32 %v361, %v718
      %v816 = vadd.f32 %v362, %v720
      %v817 = vadd.f32 %v363, %v722
      %v818 = vadd.f32 %v364, %v726
      %v819 = vadd.f32 %v365, %v728
      %v820 = vadd.f32 %v366, %v730
      %v821 = vadd.f32 %v367, %v732
      %v822 = vadd.f32 %v368, %v736
      %v823 = vadd.f32 %v369, %v738
      %v824 = vadd.f32 %v370, %v740
      %v825 = vadd.f32 %v371, %v742
      %v826 = vadd.f32 %v372, %v746
      %v827 = vadd.f32 %v373, %v748
      %v828 = vadd.f32 %v374, %v750
      %v829 = vadd.f32 %v375, %v752
      %v830 = vadd.f32 %v376, %v756
      %v831 = vadd.f32 %v377, %v758
      %v832 = vadd.f32 %v378, %v760
      %v833 = vadd.f32 %v379, %v762
      %v834 = vadd.f32 %v380, %v766
      %v835 = vadd.f32 %v381, %v768
      %v836 = vadd.f32 %v382, %v770
      %v837 = vadd.f32 %v383, %v772
      %838 = vst [vmem:[#allocation2] sm:$0xff] %v774
      %839 = vst [vmem:[#allocation2 + $0x8] sm:$0xff] %v775
      %840 = vst [vmem:[#allocation2 + $0x10] sm:$0xff] %v776
      %841 = vst [vmem:[#allocation2 + $0x18] sm:$0xff] %v777
      %842 = vst [vmem:[#allocation2 + $0x20] sm:$0xff] %v778
      %843 = vst [vmem:[#allocation2 + $0x28] sm:$0xff] %v779
      %844 = vst [vmem:[#allocation2 + $0x30] sm:$0xff] %v780
      %845 = vst [vmem:[#allocation2 + $0x38] sm:$0xff] %v781
      %846 = vst [vmem:[#allocation2 + $0x40] sm:$0xff] %v782
      %847 = vst [vmem:[#allocation2 + $0x48] sm:$0xff] %v783
      %848 = vst [vmem:[#allocation2 + $0x50] sm:$0xff] %v784
      %849 = vst [vmem:[#allocation2 + $0x58] sm:$0xff] %v785
      %850 = vst [vmem:[#allocation2 + $0x60] sm:$0xff] %v786
      %851 = vst [vmem:[#allocation2 + $0x68] sm:$0xff] %v787
      %852 = vst [vmem:[#allocation2 + $0x70] sm:$0xff] %v788
      %853 = vst [vmem:[#allocation2 + $0x78] sm:$0xff] %v789
      %854 = vst [vmem:[#allocation2 + $0x80] sm:$0xff] %v790
      %855 = vst [vmem:[#allocation2 + $0x88] sm:$0xff] %v791
      %856 = vst [vmem:[#allocation2 + $0x90] sm:$0xff] %v792
      %857 = vst [vmem:[#allocation2 + $0x98] sm:$0xff] %v793
      %858 = vst [vmem:[#allocation2 + $0xa0] sm:$0xff] %v794
      %859 = vst [vmem:[#allocation2 + $0xa8] sm:$0xff] %v795
      %860 = vst [vmem:[#allocation2 + $0xb0] sm:$0xff] %v796
      %861 = vst [vmem:[#allocation2 + $0xb8] sm:$0xff] %v797
      %862 = vst [vmem:[#allocation2 + $0xc0] sm:$0xff] %v798
      %863 = vst [vmem:[#allocation2 + $0xc8] sm:$0xff] %v799
      %864 = vst [vmem:[#allocation2 + $0xd0] sm:$0xff] %v800
      %865 = vst [vmem:[#allocation2 + $0xd8] sm:$0xff] %v801
      %866 = vst [vmem:[#allocation2 + $0xe0] sm:$0xff] %v802
      %867 = vst [vmem:[#allocation2 + $0xe8] sm:$0xff] %v803
      %868 = vst [vmem:[#allocation2 + $0xf0] sm:$0xff] %v804
      %869 = vst [vmem:[#allocation2 + $0xf8] sm:$0xff] %v805
      %870 = vst [vmem:[#allocation2 + $0x100] sm:$0xff] %v806
      %871 = vst [vmem:[#allocation2 + $0x108] sm:$0xff] %v807
      %872 = vst [vmem:[#allocation2 + $0x110] sm:$0xff] %v808
      %873 = vst [vmem:[#allocation2 + $0x118] sm:$0xff] %v809
      %874 = vst [vmem:[#allocation2 + $0x120] sm:$0xff] %v810
      %875 = vst [vmem:[#allocation2 + $0x128] sm:$0xff] %v811
      %876 = vst [vmem:[#allocation2 + $0x130] sm:$0xff] %v812
      %877 = vst [vmem:[#allocation2 + $0x138] sm:$0xff] %v813
      %878 = vst [vmem:[#allocation2 + $0x140] sm:$0xff] %v814
      %879 = vst [vmem:[#allocation2 + $0x148] sm:$0xff] %v815
      %880 = vst [vmem:[#allocation2 + $0x150] sm:$0xff] %v816
      %881 = vst [vmem:[#allocation2 + $0x158] sm:$0xff] %v817
      %882 = vst [vmem:[#allocation2 + $0x160] sm:$0xff] %v818
      %883 = vst [vmem:[#allocation2 + $0x168] sm:$0xff] %v819
      %884 = vst [vmem:[#allocation2 + $0x170] sm:$0xff] %v820
      %885 = vst [vmem:[#allocation2 + $0x178] sm:$0xff] %v821
      %886 = vst [vmem:[#allocation2 + $0x180] sm:$0xff] %v822
      %887 = vst [vmem:[#allocation2 + $0x188] sm:$0xff] %v823
      %888 = vst [vmem:[#allocation2 + $0x190] sm:$0xff] %v824
      %889 = vst [vmem:[#allocation2 + $0x198] sm:$0xff] %v825
      %890 = vst [vmem:[#allocation2 + $0x1a0] sm:$0xff] %v826
      %891 = vst [vmem:[#allocation2 + $0x1a8] sm:$0xff] %v827
      %892 = vst [vmem:[#allocation2 + $0x1b0] sm:$0xff] %v828
      %893 = vst [vmem:[#allocation2 + $0x1b8] sm:$0xff] %v829
      %894 = vst [vmem:[#allocation2 + $0x1c0] sm:$0xff] %v830
      %895 = vst [vmem:[#allocation2 + $0x1c8] sm:$0xff] %v831
      %896 = vst [vmem:[#allocation2 + $0x1d0] sm:$0xff] %v832
      %897 = vst [vmem:[#allocation2 + $0x1d8] sm:$0xff] %v833
      %898 = vst [vmem:[#allocation2 + $0x1e0] sm:$0xff] %v834
      %899 = vst [vmem:[#allocation2 + $0x1e8] sm:$0xff] %v835
      %900 = vst [vmem:[#allocation2 + $0x1f0] sm:$0xff] %v836
      %901 = vst [vmem:[#allocation2 + $0x1f8] sm:$0xff] %v837
      // Predicated region
      $region41: #{aspp_forward.9} parent=35 // pred_check
        %p902 = pneg %p252
      $region42: #{aspp_forward.9} parent=35 // pred_check_branch
        %904 = sbr.rel (%p902) target = $region44
      $region43: #{aspp_forward.9} parent=35 // pred_region
        %v905 = vld [vmem:[#allocation2] sm:$0xff]
        %v906 = vld [vmem:[#allocation2 + $0x8] sm:$0xff]
        %v907 = vld [vmem:[#allocation2 + $0x10] sm:$0xff]
        %v908 = vld [vmem:[#allocation2 + $0x18] sm:$0xff]
        %v909 = vld [vmem:[#allocation2 + $0x20] sm:$0xff]
        %v910 = vld [vmem:[#allocation2 + $0x28] sm:$0xff]
        %v911 = vld [vmem:[#allocation2 + $0x30] sm:$0xff]
        %v912 = vld [vmem:[#allocation2 + $0x38] sm:$0xff]
        %v913 = vld [vmem:[#allocation2 + $0x40] sm:$0xff]
        %v914 = vld [vmem:[#allocation2 + $0x48] sm:$0xff]
        %v915 = vld [vmem:[#allocation2 + $0x50] sm:$0xff]
        %v916 = vld [vmem:[#allocation2 + $0x58] sm:$0xff]
        %v917 = vld [vmem:[#allocation2 + $0x60] sm:$0xff]
        %v918 = vld [vmem:[#allocation2 + $0x68] sm:$0xff]
        %v919 = vld [vmem:[#allocation2 + $0x70] sm:$0xff]
        %v920 = vld [vmem:[#allocation2 + $0x78] sm:$0xff]
        %v921 = vld [vmem:[#allocation2 + $0x80] sm:$0xff]
        %v922 = vld [vmem:[#allocation2 + $0x88] sm:$0xff]
        %v923 = vld [vmem:[#allocation2 + $0x90] sm:$0xff]
        %v924 = vld [vmem:[#allocation2 + $0x98] sm:$0xff]
        %v925 = vld [vmem:[#allocation2 + $0xa0] sm:$0xff]
        %v926 = vld [vmem:[#allocation2 + $0xa8] sm:$0xff]
        %v927 = vld [vmem:[#allocation2 + $0xb0] sm:$0xff]
        %v928 = vld [vmem:[#allocation2 + $0xb8] sm:$0xff]
        %v929 = vld [vmem:[#allocation2 + $0xc0] sm:$0xff]
        %v930 = vld [vmem:[#allocation2 + $0xc8] sm:$0xff]
        %v931 = vld [vmem:[#allocation2 + $0xd0] sm:$0xff]
        %v932 = vld [vmem:[#allocation2 + $0xd8] sm:$0xff]
        %v933 = vld [vmem:[#allocation2 + $0xe0] sm:$0xff]
        %v934 = vld [vmem:[#allocation2 + $0xe8] sm:$0xff]
        %v935 = vld [vmem:[#allocation2 + $0xf0] sm:$0xff]
        %v936 = vld [vmem:[#allocation2 + $0xf8] sm:$0xff]
        %v937 = vld [vmem:[#allocation2 + $0x100] sm:$0xff]
        %v938 = vld [vmem:[#allocation2 + $0x108] sm:$0xff]
        %v939 = vld [vmem:[#allocation2 + $0x110] sm:$0xff]
        %v940 = vld [vmem:[#allocation2 + $0x118] sm:$0xff]
        %v941 = vld [vmem:[#allocation2 + $0x120] sm:$0xff]
        %v942 = vld [vmem:[#allocation2 + $0x128] sm:$0xff]
        %v943 = vld [vmem:[#allocation2 + $0x130] sm:$0xff]
        %v944 = vld [vmem:[#allocation2 + $0x138] sm:$0xff]
        %v945 = vld [vmem:[#allocation2 + $0x140] sm:$0xff]
        %v946 = vld [vmem:[#allocation2 + $0x148] sm:$0xff]
        %v947 = vld [vmem:[#allocation2 + $0x150] sm:$0xff]
        %v948 = vld [vmem:[#allocation2 + $0x158] sm:$0xff]
        %v949 = vld [vmem:[#allocation2 + $0x160] sm:$0xff]
        %v950 = vld [vmem:[#allocation2 + $0x168] sm:$0xff]
        %v951 = vld [vmem:[#allocation2 + $0x170] sm:$0xff]
        %v952 = vld [vmem:[#allocation2 + $0x178] sm:$0xff]
        %v953 = vld [vmem:[#allocation2 + $0x180] sm:$0xff]
        %v954 = vld [vmem:[#allocation2 + $0x188] sm:$0xff]
        %v955 = vld [vmem:[#allocation2 + $0x190] sm:$0xff]
        %v956 = vld [vmem:[#allocation2 + $0x198] sm:$0xff]
        %v957 = vld [vmem:[#allocation2 + $0x1a0] sm:$0xff]
        %v958 = vld [vmem:[#allocation2 + $0x1a8] sm:$0xff]
        %v959 = vld [vmem:[#allocation2 + $0x1b0] sm:$0xff]
        %v960 = vld [vmem:[#allocation2 + $0x1b8] sm:$0xff]
        %v961 = vld [vmem:[#allocation2 + $0x1c0] sm:$0xff]
        %v962 = vld [vmem:[#allocation2 + $0x1c8] sm:$0xff]
        %v963 = vld [vmem:[#allocation2 + $0x1d0] sm:$0xff]
        %v964 = vld [vmem:[#allocation2 + $0x1d8] sm:$0xff]
        %v965 = vld [vmem:[#allocation2 + $0x1e0] sm:$0xff]
        %v966 = vld [vmem:[#allocation2 + $0x1e8] sm:$0xff]
        %v967 = vld [vmem:[#allocation2 + $0x1f0] sm:$0xff]
        %v968 = vld [vmem:[#allocation2 + $0x1f8] sm:$0xff]
        %v969 = vld [vmem:[%s2] sm:$0x3]
        %v971 = vlaneseq
        %v972 = vshrl.u32 %v971, 7
        %v973 = vsub.s32 0, %v972
        %v974 = vrot.slane %v969, %v973
        %v975 = vlaneseq
        %v976 = vshrl.u32 %v975, 7
        %v977 = vsub.s32 1, %v976
        %v978 = vrot.slane %v969, %v977
        %v981 = vmul.f32 %v905, %v974
        %v982 = vmul.f32 %v906, %v978
        %v983 = vmul.f32 %v907, %v974
        %v984 = vmul.f32 %v908, %v978
        %v985 = vmul.f32 %v909, %v974
        %v986 = vmul.f32 %v910, %v978
        %v987 = vmul.f32 %v911, %v974
        %v988 = vmul.f32 %v912, %v978
        %v989 = vmul.f32 %v913, %v974
        %v990 = vmul.f32 %v914, %v978
        %v991 = vmul.f32 %v915, %v974
        %v992 = vmul.f32 %v916, %v978
        %v993 = vmul.f32 %v917, %v974
        %v994 = vmul.f32 %v918, %v978
        %v995 = vmul.f32 %v919, %v974
        %v996 = vmul.f32 %v920, %v978
        %v997 = vmul.f32 %v921, %v974
        %v998 = vmul.f32 %v922, %v978
        %v999 = vmul.f32 %v923, %v974
        %v1000 = vmul.f32 %v924, %v978
        %v1001 = vmul.f32 %v925, %v974
        %v1002 = vmul.f32 %v926, %v978
        %v1003 = vmul.f32 %v927, %v974
        %v1004 = vmul.f32 %v928, %v978
        %v1005 = vmul.f32 %v929, %v974
        %v1006 = vmul.f32 %v930, %v978
        %v1007 = vmul.f32 %v931, %v974
        %v1008 = vmul.f32 %v932, %v978
        %v1009 = vmul.f32 %v933, %v974
        %v1010 = vmul.f32 %v934, %v978
        %v1011 = vmul.f32 %v935, %v974
        %v1012 = vmul.f32 %v936, %v978
        %v1013 = vmul.f32 %v937, %v974
        %v1014 = vmul.f32 %v938, %v978
        %v1015 = vmul.f32 %v939, %v974
        %v1016 = vmul.f32 %v940, %v978
        %v1017 = vmul.f32 %v941, %v974
        %v1018 = vmul.f32 %v942, %v978
        %v1019 = vmul.f32 %v943, %v974
        %v1020 = vmul.f32 %v944, %v978
        %v1021 = vmul.f32 %v945, %v974
        %v1022 = vmul.f32 %v946, %v978
        %v1023 = vmul.f32 %v947, %v974
        %v1024 = vmul.f32 %v948, %v978
        %v1025 = vmul.f32 %v949, %v974
        %v1026 = vmul.f32 %v950, %v978
        %v1027 = vmul.f32 %v951, %v974
        %v1028 = vmul.f32 %v952, %v978
        %v1029 = vmul.f32 %v953, %v974
        %v1030 = vmul.f32 %v954, %v978
        %v1031 = vmul.f32 %v955, %v974
        %v1032 = vmul.f32 %v956, %v978
        %v1033 = vmul.f32 %v957, %v974
        %v1034 = vmul.f32 %v958, %v978
        %v1035 = vmul.f32 %v959, %v974
        %v1036 = vmul.f32 %v960, %v978
        %v1037 = vmul.f32 %v961, %v974
        %v1038 = vmul.f32 %v962, %v978
        %v1039 = vmul.f32 %v963, %v974
        %v1040 = vmul.f32 %v964, %v978
        %v1041 = vmul.f32 %v965, %v974
        %v1042 = vmul.f32 %v966, %v978
        %v1043 = vmul.f32 %v967, %v974
        %v1044 = vmul.f32 %v968, %v978
        %v1045 = vld [vmem:[%s3] sm:$0x3]
        %v1047 = vlaneseq
        %v1048 = vshrl.u32 %v1047, 7
        %v1049 = vsub.s32 0, %v1048
        %v1050 = vrot.slane %v1045, %v1049
        %v1051 = vlaneseq
        %v1052 = vshrl.u32 %v1051, 7
        %v1053 = vsub.s32 1, %v1052
        %v1054 = vrot.slane %v1045, %v1053
        %v1057 = vadd.f32 %v981, %v1050
        %v1058 = vadd.f32 %v982, %v1054
        %v1059 = vadd.f32 %v983, %v1050
        %v1060 = vadd.f32 %v984, %v1054
        %v1061 = vadd.f32 %v985, %v1050
        %v1062 = vadd.f32 %v986, %v1054
        %v1063 = vadd.f32 %v987, %v1050
        %v1064 = vadd.f32 %v988, %v1054
        %v1065 = vadd.f32 %v989, %v1050
        %v1066 = vadd.f32 %v990, %v1054
        %v1067 = vadd.f32 %v991, %v1050
        %v1068 = vadd.f32 %v992, %v1054
        %v1069 = vadd.f32 %v993, %v1050
        %v1070 = vadd.f32 %v994, %v1054
        %v1071 = vadd.f32 %v995, %v1050
        %v1072 = vadd.f32 %v996, %v1054
        %v1073 = vadd.f32 %v997, %v1050
        %v1074 = vadd.f32 %v998, %v1054
        %v1075 = vadd.f32 %v999, %v1050
        %v1076 = vadd.f32 %v1000, %v1054
        %v1077 = vadd.f32 %v1001, %v1050
        %v1078 = vadd.f32 %v1002, %v1054
        %v1079 = vadd.f32 %v1003, %v1050
        %v1080 = vadd.f32 %v1004, %v1054
        %v1081 = vadd.f32 %v1005, %v1050
        %v1082 = vadd.f32 %v1006, %v1054
        %v1083 = vadd.f32 %v1007, %v1050
        %v1084 = vadd.f32 %v1008, %v1054
        %v1085 = vadd.f32 %v1009, %v1050
        %v1086 = vadd.f32 %v1010, %v1054
        %v1087 = vadd.f32 %v1011, %v1050
        %v1088 = vadd.f32 %v1012, %v1054
        %v1089 = vadd.f32 %v1013, %v1050
        %v1090 = vadd.f32 %v1014, %v1054
        %v1091 = vadd.f32 %v1015, %v1050
        %v1092 = vadd.f32 %v1016, %v1054
        %v1093 = vadd.f32 %v1017, %v1050
        %v1094 = vadd.f32 %v1018, %v1054
        %v1095 = vadd.f32 %v1019, %v1050
        %v1096 = vadd.f32 %v1020, %v1054
        %v1097 = vadd.f32 %v1021, %v1050
        %v1098 = vadd.f32 %v1022, %v1054
        %v1099 = vadd.f32 %v1023, %v1050
        %v1100 = vadd.f32 %v1024, %v1054
        %v1101 = vadd.f32 %v1025, %v1050
        %v1102 = vadd.f32 %v1026, %v1054
        %v1103 = vadd.f32 %v1027, %v1050
        %v1104 = vadd.f32 %v1028, %v1054
        %v1105 = vadd.f32 %v1029, %v1050
        %v1106 = vadd.f32 %v1030, %v1054
        %v1107 = vadd.f32 %v1031, %v1050
        %v1108 = vadd.f32 %v1032, %v1054
        %v1109 = vadd.f32 %v1033, %v1050
        %v1110 = vadd.f32 %v1034, %v1054
        %v1111 = vadd.f32 %v1035, %v1050
        %v1112 = vadd.f32 %v1036, %v1054
        %v1113 = vadd.f32 %v1037, %v1050
        %v1114 = vadd.f32 %v1038, %v1054
        %v1115 = vadd.f32 %v1039, %v1050
        %v1116 = vadd.f32 %v1040, %v1054
        %v1117 = vadd.f32 %v1041, %v1050
        %v1118 = vadd.f32 %v1042, %v1054
        %v1119 = vadd.f32 %v1043, %v1050
        %v1120 = vadd.f32 %v1044, %v1054
        %v1121 = vmax.f32 %v1057, 0.0
        %v1122 = vmax.f32 %v1058, 0.0
        %v1123 = vmax.f32 %v1059, 0.0
        %v1124 = vmax.f32 %v1060, 0.0
        %v1125 = vmax.f32 %v1061, 0.0
        %v1126 = vmax.f32 %v1062, 0.0
        %v1127 = vmax.f32 %v1063, 0.0
        %v1128 = vmax.f32 %v1064, 0.0
        %v1129 = vmax.f32 %v1065, 0.0
        %v1130 = vmax.f32 %v1066, 0.0
        %v1131 = vmax.f32 %v1067, 0.0
        %v1132 = vmax.f32 %v1068, 0.0
        %v1133 = vmax.f32 %v1069, 0.0
        %v1134 = vmax.f32 %v1070, 0.0
        %v1135 = vmax.f32 %v1071, 0.0
        %v1136 = vmax.f32 %v1072, 0.0
        %v1137 = vmax.f32 %v1073, 0.0
        %v1138 = vmax.f32 %v1074, 0.0
        %v1139 = vmax.f32 %v1075, 0.0
        %v1140 = vmax.f32 %v1076, 0.0
        %v1141 = vmax.f32 %v1077, 0.0
        %v1142 = vmax.f32 %v1078, 0.0
        %v1143 = vmax.f32 %v1079, 0.0
        %v1144 = vmax.f32 %v1080, 0.0
        %v1145 = vmax.f32 %v1081, 0.0
        %v1146 = vmax.f32 %v1082, 0.0
        %v1147 = vmax.f32 %v1083, 0.0
        %v1148 = vmax.f32 %v1084, 0.0
        %v1149 = vmax.f32 %v1085, 0.0
        %v1150 = vmax.f32 %v1086, 0.0
        %v1151 = vmax.f32 %v1087, 0.0
        %v1152 = vmax.f32 %v1088, 0.0
        %v1153 = vmax.f32 %v1089, 0.0
        %v1154 = vmax.f32 %v1090, 0.0
        %v1155 = vmax.f32 %v1091, 0.0
        %v1156 = vmax.f32 %v1092, 0.0
        %v1157 = vmax.f32 %v1093, 0.0
        %v1158 = vmax.f32 %v1094, 0.0
        %v1159 = vmax.f32 %v1095, 0.0
        %v1160 = vmax.f32 %v1096, 0.0
        %v1161 = vmax.f32 %v1097, 0.0
        %v1162 = vmax.f32 %v1098, 0.0
        %v1163 = vmax.f32 %v1099, 0.0
        %v1164 = vmax.f32 %v1100, 0.0
        %v1165 = vmax.f32 %v1101, 0.0
        %v1166 = vmax.f32 %v1102, 0.0
        %v1167 = vmax.f32 %v1103, 0.0
        %v1168 = vmax.f32 %v1104, 0.0
        %v1169 = vmax.f32 %v1105, 0.0
        %v1170 = vmax.f32 %v1106, 0.0
        %v1171 = vmax.f32 %v1107, 0.0
        %v1172 = vmax.f32 %v1108, 0.0
        %v1173 = vmax.f32 %v1109, 0.0
        %v1174 = vmax.f32 %v1110, 0.0
        %v1175 = vmax.f32 %v1111, 0.0
        %v1176 = vmax.f32 %v1112, 0.0
        %v1177 = vmax.f32 %v1113, 0.0
        %v1178 = vmax.f32 %v1114, 0.0
        %v1179 = vmax.f32 %v1115, 0.0
        %v1180 = vmax.f32 %v1116, 0.0
        %v1181 = vmax.f32 %v1117, 0.0
        %v1182 = vmax.f32 %v1118, 0.0
        %v1183 = vmax.f32 %v1119, 0.0
        %v1184 = vmax.f32 %v1120, 0.0
        %v1185 = vpack.c.bf16 %v1123, %v1121
        %v1186 = vpack.c.bf16 %v1124, %v1122
        %v1187 = vpack.c.bf16 %v1127, %v1125
        %v1188 = vpack.c.bf16 %v1128, %v1126
        %v1189 = vpack.c.bf16 %v1131, %v1129
        %v1190 = vpack.c.bf16 %v1132, %v1130
        %v1191 = vpack.c.bf16 %v1135, %v1133
        %v1192 = vpack.c.bf16 %v1136, %v1134
        %v1193 = vpack.c.bf16 %v1139, %v1137
        %v1194 = vpack.c.bf16 %v1140, %v1138
        %v1195 = vpack.c.bf16 %v1143, %v1141
        %v1196 = vpack.c.bf16 %v1144, %v1142
        %v1197 = vpack.c.bf16 %v1147, %v1145
        %v1198 = vpack.c.bf16 %v1148, %v1146
        %v1199 = vpack.c.bf16 %v1151, %v1149
        %v1200 = vpack.c.bf16 %v1152, %v1150
        %v1201 = vpack.c.bf16 %v1155, %v1153
        %v1202 = vpack.c.bf16 %v1156, %v1154
        %v1203 = vpack.c.bf16 %v1159, %v1157
        %v1204 = vpack.c.bf16 %v1160, %v1158
        %v1205 = vpack.c.bf16 %v1163, %v1161
        %v1206 = vpack.c.bf16 %v1164, %v1162
        %v1207 = vpack.c.bf16 %v1167, %v1165
        %v1208 = vpack.c.bf16 %v1168, %v1166
        %v1209 = vpack.c.bf16 %v1171, %v1169
        %v1210 = vpack.c.bf16 %v1172, %v1170
        %v1211 = vpack.c.bf16 %v1175, %v1173
        %v1212 = vpack.c.bf16 %v1176, %v1174
        %v1213 = vpack.c.bf16 %v1179, %v1177
        %v1214 = vpack.c.bf16 %v1180, %v1178
        %v1215 = vpack.c.bf16 %v1183, %v1181
        %v1216 = vpack.c.bf16 %v1184, %v1182
        %v1249 = vunpack.c.l.b16 %v1185
        %v1250 = vunpack.c.l.b16 %v1186
        %v1251 = vunpack.c.h.b16 %v1185
        %v1252 = vunpack.c.h.b16 %v1186
        %v1253 = vunpack.c.l.b16 %v1187
        %v1254 = vunpack.c.l.b16 %v1188
        %v1255 = vunpack.c.h.b16 %v1187
        %v1256 = vunpack.c.h.b16 %v1188
        %v1257 = vunpack.c.l.b16 %v1189
        %v1258 = vunpack.c.l.b16 %v1190
        %v1259 = vunpack.c.h.b16 %v1189
        %v1260 = vunpack.c.h.b16 %v1190
        %v1261 = vunpack.c.l.b16 %v1191
        %v1262 = vunpack.c.l.b16 %v1192
        %v1263 = vunpack.c.h.b16 %v1191
        %v1264 = vunpack.c.h.b16 %v1192
        %v1265 = vunpack.c.l.b16 %v1193
        %v1266 = vunpack.c.l.b16 %v1194
        %v1267 = vunpack.c.h.b16 %v1193
        %v1268 = vunpack.c.h.b16 %v1194
        %v1269 = vunpack.c.l.b16 %v1195
        %v1270 = vunpack.c.l.b16 %v1196
        %v1271 = vunpack.c.h.b16 %v1195
        %v1272 = vunpack.c.h.b16 %v1196
        %v1273 = vunpack.c.l.b16 %v1197
        %v1274 = vunpack.c.l.b16 %v1198
        %v1275 = vunpack.c.h.b16 %v1197
        %v1276 = vunpack.c.h.b16 %v1198
        %v1277 = vunpack.c.l.b16 %v1199
        %v1278 = vunpack.c.l.b16 %v1200
        %v1279 = vunpack.c.h.b16 %v1199
        %v1280 = vunpack.c.h.b16 %v1200
        %v1281 = vunpack.c.l.b16 %v1201
        %v1282 = vunpack.c.l.b16 %v1202
        %v1283 = vunpack.c.h.b16 %v1201
        %v1284 = vunpack.c.h.b16 %v1202
        %v1285 = vunpack.c.l.b16 %v1203
        %v1286 = vunpack.c.l.b16 %v1204
        %v1287 = vunpack.c.h.b16 %v1203
        %v1288 = vunpack.c.h.b16 %v1204
        %v1289 = vunpack.c.l.b16 %v1205
        %v1290 = vunpack.c.l.b16 %v1206
        %v1291 = vunpack.c.h.b16 %v1205
        %v1292 = vunpack.c.h.b16 %v1206
        %v1293 = vunpack.c.l.b16 %v1207
        %v1294 = vunpack.c.l.b16 %v1208
        %v1295 = vunpack.c.h.b16 %v1207
        %v1296 = vunpack.c.h.b16 %v1208
        %v1297 = vunpack.c.l.b16 %v1209
        %v1298 = vunpack.c.l.b16 %v1210
        %v1299 = vunpack.c.h.b16 %v1209
        %v1300 = vunpack.c.h.b16 %v1210
        %v1301 = vunpack.c.l.b16 %v1211
        %v1302 = vunpack.c.l.b16 %v1212
        %v1303 = vunpack.c.h.b16 %v1211
        %v1304 = vunpack.c.h.b16 %v1212
        %v1305 = vunpack.c.l.b16 %v1213
        %v1306 = vunpack.c.l.b16 %v1214
        %v1307 = vunpack.c.h.b16 %v1213
        %v1308 = vunpack.c.h.b16 %v1214
        %v1309 = vunpack.c.l.b16 %v1215
        %v1310 = vunpack.c.l.b16 %v1216
        %v1311 = vunpack.c.h.b16 %v1215
        %v1312 = vunpack.c.h.b16 %v1216
        %v1313 = vpack.c.b16 %v1250, %v1249
        %v1314 = vpack.c.b16 %v1252, %v1251
        %v1315 = vpack.c.b16 %v1254, %v1253
        %v1316 = vpack.c.b16 %v1256, %v1255
        %v1317 = vpack.c.b16 %v1258, %v1257
        %v1318 = vpack.c.b16 %v1260, %v1259
        %v1319 = vpack.c.b16 %v1262, %v1261
        %v1320 = vpack.c.b16 %v1264, %v1263
        %v1321 = vpack.c.b16 %v1266, %v1265
        %v1322 = vpack.c.b16 %v1268, %v1267
        %v1323 = vpack.c.b16 %v1270, %v1269
        %v1324 = vpack.c.b16 %v1272, %v1271
        %v1325 = vpack.c.b16 %v1274, %v1273
        %v1326 = vpack.c.b16 %v1276, %v1275
        %v1327 = vpack.c.b16 %v1278, %v1277
        %v1328 = vpack.c.b16 %v1280, %v1279
        %v1329 = vpack.c.b16 %v1282, %v1281
        %v1330 = vpack.c.b16 %v1284, %v1283
        %v1331 = vpack.c.b16 %v1286, %v1285
        %v1332 = vpack.c.b16 %v1288, %v1287
        %v1333 = vpack.c.b16 %v1290, %v1289
        %v1334 = vpack.c.b16 %v1292, %v1291
        %v1335 = vpack.c.b16 %v1294, %v1293
        %v1336 = vpack.c.b16 %v1296, %v1295
        %v1337 = vpack.c.b16 %v1298, %v1297
        %v1338 = vpack.c.b16 %v1300, %v1299
        %v1339 = vpack.c.b16 %v1302, %v1301
        %v1340 = vpack.c.b16 %v1304, %v1303
        %v1341 = vpack.c.b16 %v1306, %v1305
        %v1342 = vpack.c.b16 %v1308, %v1307
        %v1343 = vpack.c.b16 %v1310, %v1309
        %v1344 = vpack.c.b16 %v1312, %v1311
        %1377 = vst [vmem:[%s249] sm:$0xff] %v1313
        %1378 = vst [vmem:[%s249 + $0x8] sm:$0xff] %v1314
        %1379 = vst [vmem:[%s249 + $0x10] sm:$0xff] %v1315
        %1380 = vst [vmem:[%s249 + $0x18] sm:$0xff] %v1316
        %1381 = vst [vmem:[%s249 + $0x20] sm:$0xff] %v1317
        %1382 = vst [vmem:[%s249 + $0x28] sm:$0xff] %v1318
        %1383 = vst [vmem:[%s249 + $0x30] sm:$0xff] %v1319
        %1384 = vst [vmem:[%s249 + $0x38] sm:$0xff] %v1320
        %1385 = vst [vmem:[%s249 + $0x40] sm:$0xff] %v1321
        %1386 = vst [vmem:[%s249 + $0x48] sm:$0xff] %v1322
        %1387 = vst [vmem:[%s249 + $0x50] sm:$0xff] %v1323
        %1388 = vst [vmem:[%s249 + $0x58] sm:$0xff] %v1324
        %1389 = vst [vmem:[%s249 + $0x60] sm:$0xff] %v1325
        %1390 = vst [vmem:[%s249 + $0x68] sm:$0xff] %v1326
        %1391 = vst [vmem:[%s249 + $0x70] sm:$0xff] %v1327
        %1392 = vst [vmem:[%s249 + $0x78] sm:$0xff] %v1328
        %1393 = vst [vmem:[%s249 + $0x80] sm:$0xff] %v1329
        %1394 = vst [vmem:[%s249 + $0x88] sm:$0xff] %v1330
        %1395 = vst [vmem:[%s249 + $0x90] sm:$0xff] %v1331
        %1396 = vst [vmem:[%s249 + $0x98] sm:$0xff] %v1332
        %1397 = vst [vmem:[%s249 + $0xa0] sm:$0xff] %v1333
        %1398 = vst [vmem:[%s249 + $0xa8] sm:$0xff] %v1334
        %1399 = vst [vmem:[%s249 + $0xb0] sm:$0xff] %v1335
        %1400 = vst [vmem:[%s249 + $0xb8] sm:$0xff] %v1336
        %1401 = vst [vmem:[%s249 + $0xc0] sm:$0xff] %v1337
        %1402 = vst [vmem:[%s249 + $0xc8] sm:$0xff] %v1338
        %1403 = vst [vmem:[%s249 + $0xd0] sm:$0xff] %v1339
        %1404 = vst [vmem:[%s249 + $0xd8] sm:$0xff] %v1340
        %1405 = vst [vmem:[%s249 + $0xe0] sm:$0xff] %v1341
        %1406 = vst [vmem:[%s249 + $0xe8] sm:$0xff] %v1342
        %1407 = vst [vmem:[%s249 + $0xf0] sm:$0xff] %v1343
        %1408 = vst [vmem:[%s249 + $0xf8] sm:$0xff] %v1344
      $region44: #{aspp_forward.9} parent=35 // pred_fallthru
        _
      %s1409 = smul.u32 32, %s19
      %p1410 = scmp.lt.s32.totalorder %s1409, 63
      %s1411 = scalar_select %p1410, %s1409, 63
      %s1412 = smul.addr %s1411, 2
      %s1413 = smul.addr %s1412, 4
      %s1414 = scalar_lea.vmem %s4, %s1413
      // Predicated region
      $region45: #{aspp_forward.9} parent=35 // pred_check
        %p1415 = pneg %p141
      $region46: #{aspp_forward.9} parent=35 // pred_check_branch
        %1417 = sbr.rel (%p1415) target = $region48
      $region47: #{aspp_forward.9} parent=35 // pred_region
        %s1418 = smul.u32 32, %s19
      $region48: #{aspp_forward.9} parent=35 // pred_fallthru
        _
    $region36: #{aspp_forward.9} parent=5 // pred_fallthru
      _
    %p1419 = scmp.le.s32.totalorder 2, %s10
    // Predicated region
    $region49: #{aspp_forward.9} parent=5 // pred_check
      %p1420 = pneg %p1419
    $region50: #{aspp_forward.9} parent=5 // pred_check_branch
      %1422 = sbr.rel (%p1420) target = $region52
    $region51: #{aspp_forward.9} parent=5 // pred_region
      %s1423 = ssub.s32 %s10, 2
      // Predicated region
      $region53: #{aspp_forward.9} parent=51 // pred_check
        %p1424 = pneg %p147
      $region54: #{aspp_forward.9} parent=51 // pred_check_branch
        %1426 = sbr.rel (%p1424) target = $region56
      $region55: #{aspp_forward.9} parent=51 // pred_region
        %s1427 = smul.u32 32, %s21
        %p1428 = scmp.lt.s32.totalorder %s1427, 63
        %s1429 = scalar_select %p1428, %s1427, 63
        %s1430 = smul.addr %s1429, 2
        %s1431 = smul.addr %s1430, 4
        %s1432 = scalar_lea.vmem %s4, %s1431
      $region56: #{aspp_forward.9} parent=51 // pred_fallthru
        _
    $region52: #{aspp_forward.9} parent=5 // pred_fallthru
      _
  $region6: #{aspp_forward.9} parent=0 // loop_footer
    %s14 = sadd.s32 1, %s10
  $region7: #{aspp_forward.9} parent=0 // loop_footer_branch
    %9 = sbr.rel target = $region3
  $region8: #{aspp_forward.9} parent=0 // loop_exit
    _

// kernel: aspp_forward.7
$region0: #{aspp_forward.7}
  #allocation0 [shape = 'u32[]', space=smem, size = 0x4, offset = 0x4, fixed_abs, tag = 'smem constant byte address 0x4 - core index']
  #allocation1 [shape = 'u32[144,128]{1,0:T(1,128)}', space=vmem, size = 0x12000, scoped, tag = 'internal scratch']
  #allocation2 [shape = 'f32[256,256]{1,0:T(8,128)}', space=vmem, size = 0x40000, scoped, tag = 'scratch operand']
  %s0 = inlined_call_operand.vmem [shape: bf16[512,16], index: 0, kind: input, shape index: {}]
  %s1 = inlined_call_operand.vmem [shape: bf16[16,256], index: 1, kind: input, shape index: {}]
  %s2 = inlined_call_operand.vmem [shape: f32[1,256], index: 2, kind: input, shape index: {}]
  %s3 = inlined_call_operand.vmem [shape: f32[1,256], index: 3, kind: input, shape index: {}]
  %s4 = inlined_call_operand.vmem [shape: bf16[512,256], index: 4, kind: output, shape index: {}]
  %s5 = sld [smem:[#allocation0]]
  $region57: #{aspp_forward.7} parent=0
    _
  %s7 = ssub.s32 1, %s5
  %s8 = scalar_select 0, %s7, %s5
  loop: start=0, step=1, limit=4
  $region2: #{aspp_forward.7} parent=0 // loop_pre_header
    _
  $region3: #{aspp_forward.7} parent=0 // loop_header
    %s10 = sphi 0, %s14
    %p11 = scmp.ge.s32.totalorder %s10, 4
    %s17 = sphi 0, %s29
    %s18 = sphi 0, %s25
    %s19 = sphi 0, %s17
    %s20 = sphi 0, %s18
    %s21 = sphi 0, %s19
    %s22 = sphi 0, %s20
    %s34 = sphi 0, %s36
    %s37 = sphi 0, %s34
    %s38 = sphi 0, %s37
    %s54 = sphi 0, %s38
    %s60 = sphi 0, %s62
    %s63 = sphi 0, %s60
    %s64 = sphi 0, %s63
    %s80 = sphi 0, %s64
    %s84 = sphi 0, %s84
    %s86 = sphi 0, %s84
    %s87 = sphi 0, %s86
    %s101 = sphi 0, %s87
    %s105 = sphi 0, %s105
    %s107 = sphi 0, %s105
    %s108 = sphi 0, %s107
    %s122 = sphi 0, %s108
    %s128 = sphi 0, %s130
    %s131 = sphi 0, %s128
    %s132 = sphi 0, %s131
    %s148 = sphi 0, %s132
  $region4: #{aspp_forward.7} parent=0 // loop_header_branch
    %13 = sbr.rel (%p11) target = $region8
  $region5: #{aspp_forward.7} parent=0 // loop_body
    %s15 = ssub.s32 %s10, 1
    %s16 = ssub.s32 %s10, 2
    %s23 = sadd.s32 1, %s18
    %p24 = scmp.ge.s32.totalorder %s23, 1
    %s25 = scalar_select %p24, 0, %s23
    %s26 = sadd.s32 1, %s17
    %s27 = scalar_select %p24, %s26, %s17
    %p28 = scmp.ge.s32.totalorder %s27, 2
    %s29 = scalar_select %p28, 0, %s27
    %s30 = ssub.s32 %s17, %s29
    %s31 = ssub.s32 %s18, %s25
    %s32 = sor.u32 %s30, %s31
    %p33 = scmp.eq.s32.totalorder %s32, 0
    %s35 = sadd.s32 %s34, 1
    %s36 = scalar_select %p33, %s34, %s35
    %p39 = pneg %p33
    %p40 = scmp.eq.s32.totalorder %s10, 1
    %p41 = por %p39, %p40
    %p42 = scmp.ne.s32.totalorder %s34, %s37
    %p43 = scmp.eq.s32.totalorder %s10, 0
    %p44 = por %p42, %p43
    %p45 = scmp.ne.s32.totalorder %s34, %s37
    %p46 = scmp.eq.s32.totalorder %s15, 1
    %p47 = por %p45, %p46
    %p48 = scmp.ne.s32.totalorder %s37, %s38
    %p49 = scmp.eq.s32.totalorder %s15, 0
    %p50 = por %p48, %p49
    %p51 = scmp.ne.s32.totalorder %s37, %s38
    %p52 = scmp.eq.s32.totalorder %s16, 1
    %p53 = por %p51, %p52
    %p55 = scmp.ne.s32.totalorder %s38, %s54
    %p56 = scmp.eq.s32.totalorder %s16, 0
    %p57 = por %p55, %p56
    %s58 = ssub.s32 %s18, %s25
    %p59 = scmp.eq.s32.totalorder %s58, 0
    %s61 = sadd.s32 %s60, 1
    %s62 = scalar_select %p59, %s60, %s61
    %p65 = pneg %p59
    %p66 = scmp.eq.s32.totalorder %s10, 1
    %p67 = por %p65, %p66
    %p68 = scmp.ne.s32.totalorder %s60, %s63
    %p69 = scmp.eq.s32.totalorder %s10, 0
    %p70 = por %p68, %p69
    %p71 = scmp.ne.s32.totalorder %s60, %s63
    %p72 = scmp.eq.s32.totalorder %s15, 1
    %p73 = por %p71, %p72
    %p74 = scmp.ne.s32.totalorder %s63, %s64
    %p75 = scmp.eq.s32.totalorder %s15, 0
    %p76 = por %p74, %p75
    %p77 = scmp.ne.s32.totalorder %s63, %s64
    %p78 = scmp.eq.s32.totalorder %s16, 1
    %p79 = por %p77, %p78
    %p81 = scmp.ne.s32.totalorder %s64, %s80
    %p82 = scmp.eq.s32.totalorder %s16, 0
    %p83 = por %p81, %p82
    %s85 = sadd.s32 %s84, 1
    %p88 = scmp.eq.s32.totalorder %s10, 1
    %p89 = scmp.ne.s32.totalorder %s84, %s86
    %p90 = scmp.eq.s32.totalorder %s10, 0
    %p91 = por %p89, %p90
    %p92 = scmp.ne.s32.totalorder %s84, %s86
    %p93 = scmp.eq.s32.totalorder %s15, 1
    %p94 = por %p92, %p93
    %p95 = scmp.ne.s32.totalorder %s86, %s87
    %p96 = scmp.eq.s32.totalorder %s15, 0
    %p97 = por %p95, %p96
    %p98 = scmp.ne.s32.totalorder %s86, %s87
    %p99 = scmp.eq.s32.totalorder %s16, 1
    %p100 = por %p98, %p99
    %p102 = scmp.ne.s32.totalorder %s87, %s101
    %p103 = scmp.eq.s32.totalorder %s16, 0
    %p104 = por %p102, %p103
    %s106 = sadd.s32 %s105, 1
    %p109 = scmp.eq.s32.totalorder %s10, 1
    %p110 = scmp.ne.s32.totalorder %s105, %s107
    %p111 = scmp.eq.s32.totalorder %s10, 0
    %p112 = por %p110, %p111
    %p113 = scmp.ne.s32.totalorder %s105, %s107
    %p114 = scmp.eq.s32.totalorder %s15, 1
    %p115 = por %p113, %p114
    %p116 = scmp.ne.s32.totalorder %s107, %s108
    %p117 = scmp.eq.s32.totalorder %s15, 0
    %p118 = por %p116, %p117
    %p119 = scmp.ne.s32.totalorder %s107, %s108
    %p120 = scmp.eq.s32.totalorder %s16, 1
    %p121 = por %p119, %p120
    %p123 = scmp.ne.s32.totalorder %s108, %s122
    %p124 = scmp.eq.s32.totalorder %s16, 0
    %p125 = por %p123, %p124
    %s126 = ssub.s32 %s17, %s29
    %p127 = scmp.eq.s32.totalorder %s126, 0
    %s129 = sadd.s32 %s128, 1
    %s130 = scalar_select %p127, %s128, %s129
    %p133 = pneg %p127
    %p134 = scmp.eq.s32.totalorder %s10, 1
    %p135 = por %p133, %p134
    %p136 = scmp.ne.s32.totalorder %s128, %s131
    %p137 = scmp.eq.s32.totalorder %s10, 0
    %p138 = por %p136, %p137
    %p139 = scmp.ne.s32.totalorder %s128, %s131
    %p140 = scmp.eq.s32.totalorder %s15, 1
    %p141 = por %p139, %p140
    %p142 = scmp.ne.s32.totalorder %s131, %s132
    %p143 = scmp.eq.s32.totalorder %s15, 0
    %p144 = por %p142, %p143
    %p145 = scmp.ne.s32.totalorder %s131, %s132
    %p146 = scmp.eq.s32.totalorder %s16, 1
    %p147 = por %p145, %p146
    %p149 = scmp.ne.s32.totalorder %s132, %s148
    %p150 = scmp.eq.s32.totalorder %s16, 0
    %p151 = por %p149, %p150
    %p152 = scmp.le.s32.totalorder 1, %s10
    %p153 = scmp.lt.s32.totalorder %s10, 3
    %p154 = pnand %p152, %p153
    %p155 = pneg %p154
    // Predicated region
    $region9: #{aspp_forward.7} parent=5 // pred_check
      _
    $region10: #{aspp_forward.7} parent=5 // pred_check_branch
      %157 = sbr.rel (%p154) target = $region12
    $region11: #{aspp_forward.7} parent=5 // pred_region
      %s158 = ssub.s32 %s10, 1
      // Predicated region
      $region13: #{aspp_forward.7} parent=11 // pred_check
        %p159 = pneg %p76
      $region14: #{aspp_forward.7} parent=11 // pred_check_branch
        %161 = sbr.rel (%p159) target = $region16
      $region15: #{aspp_forward.7} parent=11 // pred_region
        %s162 = smul.u32 2, %s20
        %p163 = scmp.lt.s32.totalorder %s162, 1
        %s164 = scalar_select %p163, %s162, 1
        %s165 = smul.addr %s164, 2
        %s166 = smul.addr %s165, 4
        %s167 = scalar_lea.vmem %s1, %s166
        %s168 = smul.u32 2, %s20
      $region16: #{aspp_forward.7} parent=11 // pred_fallthru
        _
      // Predicated region
      $region17: #{aspp_forward.7} parent=11 // pred_check
        %p169 = pneg %p97
      $region18: #{aspp_forward.7} parent=11 // pred_check_branch
        %171 = sbr.rel (%p169) target = $region20
      $region19: #{aspp_forward.7} parent=11 // pred_region
        _
      $region20: #{aspp_forward.7} parent=11 // pred_fallthru
        _
      // Predicated region
      $region21: #{aspp_forward.7} parent=11 // pred_check
        %p172 = pneg %p118
      $region22: #{aspp_forward.7} parent=11 // pred_check_branch
        %174 = sbr.rel (%p172) target = $region24
      $region23: #{aspp_forward.7} parent=11 // pred_region
        _
      $region24: #{aspp_forward.7} parent=11 // pred_fallthru
        _
    $region12: #{aspp_forward.7} parent=5 // pred_fallthru
      _
    %p175 = scmp.lt.s32.totalorder %s10, 2
    // Predicated region
    $region25: #{aspp_forward.7} parent=5 // pred_check
      %p176 = pneg %p175
    $region26: #{aspp_forward.7} parent=5 // pred_check_branch
      %178 = sbr.rel (%p176) target = $region28
    $region27: #{aspp_forward.7} parent=5 // pred_region
      // Predicated region
      $region29: #{aspp_forward.7} parent=27 // pred_check
        %p179 = pneg %p44
      $region30: #{aspp_forward.7} parent=27 // pred_check_branch
        %181 = sbr.rel (%p179) target = $region32
      $region31: #{aspp_forward.7} parent=27 // pred_region
        %s182 = smul.u32 32, %s17
        %p183 = scmp.lt.s32.totalorder %s182, 63
        %s184 = scalar_select %p183, %s182, 63
        %p185 = scmp.lt.s32.totalorder %s18, 0
        %s186 = scalar_select %p185, %s18, 0
        %s187 = sadd.s32 %s186, %s184
        %s188 = smul.addr %s187, 4
        %s189 = scalar_lea.vmem %s0, %s188
        %s190 = smul.u32 32, %s17
      $region32: #{aspp_forward.7} parent=27 // pred_fallthru
        _
    $region28: #{aspp_forward.7} parent=5 // pred_fallthru
      _
    %p191 = scmp.le.s32.totalorder 1, %s10
    %p192 = scmp.lt.s32.totalorder %s10, 3
    %p193 = pnand %p191, %p192
    %p194 = pneg %p193
    // Predicated region
    $region33: #{aspp_forward.7} parent=5 // pred_check
      _
    $region34: #{aspp_forward.7} parent=5 // pred_check_branch
      %196 = sbr.rel (%p193) target = $region36
    $region35: #{aspp_forward.7} parent=5 // pred_region
      %s197 = ssub.s32 %s10, 1
      %s198 = smul.u32 32, %s19
      %p199 = scmp.lt.s32.totalorder %s198, 63
      %s200 = scalar_select %p199, %s198, 63
      %p201 = scmp.lt.s32.totalorder %s20, 0
      %s202 = scalar_select %p201, %s20, 0
      %s203 = sadd.s32 %s202, %s200
      %s204 = smul.addr %s203, 4
      %s205 = scalar_lea.vmem %s0, %s204
      %p206 = pneg %p50
      %p207 = pneg %p47
      %s208 = smul.u32 2, %s20
      %p209 = scmp.lt.s32.totalorder %s208, 1
      %s210 = scalar_select %p209, %s208, 1
      %s211 = smul.addr %s210, 2
      %s212 = smul.addr %s211, 4
      %s213 = scalar_lea.vmem %s1, %s212
      %p214 = pneg %p76
      %p215 = pneg %p73
      %p216 = pneg %p97
      %p217 = pneg %p94
      %p218 = pneg %p118
      %p219 = pneg %p115
      %p220 = pneg %p144
      %p221 = pneg %p141
      %s222 = smul.u32 32, %s19
      %p223 = scmp.lt.s32.totalorder %s222, 63
      %s224 = scalar_select %p223, %s222, 63
      %s225 = smul.addr %s224, 2
      %s226 = smul.addr %s225, 4
      %s227 = scalar_lea.vmem %s4, %s226
      %s228 = smul.u32 32, %s19
      %p229 = scmp.lt.s32.totalorder %s228, 63
      %s230 = scalar_select %p229, %s228, 63
      %p231 = scmp.lt.s32.totalorder %s20, 0
      %s232 = scalar_select %p231, %s20, 0
      %s233 = sadd.s32 %s232, %s230
      %s234 = smul.addr %s233, 4
      %s235 = scalar_lea.vmem %s0, %s234
      %s236 = smul.u32 32, %s19
      %s237 = smul.u32 2, %s20
      %p238 = scmp.lt.s32.totalorder %s237, 1
      %s239 = scalar_select %p238, %s237, 1
      %s240 = smul.addr %s239, 2
      %s241 = smul.addr %s240, 4
      %s242 = scalar_lea.vmem %s1, %s241
      %s243 = smul.u32 2, %s20
      %s244 = smul.u32 32, %s19
      %p245 = scmp.lt.s32.totalorder %s244, 63
      %s246 = scalar_select %p245, %s244, 63
      %s247 = smul.addr %s246, 2
      %s248 = smul.addr %s247, 4
      %s249 = scalar_lea.vmem %s4, %s248
      %s250 = smul.u32 32, %s19
      %p252 = scmp.eq.s32.totalorder %s20, 0
      // Predicated region
      $region37: #{aspp_forward.7} parent=35 // pred_check
        %p253 = pneg %p252
      $region38: #{aspp_forward.7} parent=35 // pred_check_branch
        %255 = sbr.rel (%p253) target = $region40
      $region39: #{aspp_forward.7} parent=35 // pred_region
        %256 = vst [vmem:[#allocation2] sm:$0xff] 0.0
        %257 = vst [vmem:[#allocation2 + $0x8] sm:$0xff] 0.0
        %258 = vst [vmem:[#allocation2 + $0x10] sm:$0xff] 0.0
        %259 = vst [vmem:[#allocation2 + $0x18] sm:$0xff] 0.0
        %260 = vst [vmem:[#allocation2 + $0x20] sm:$0xff] 0.0
        %261 = vst [vmem:[#allocation2 + $0x28] sm:$0xff] 0.0
        %262 = vst [vmem:[#allocation2 + $0x30] sm:$0xff] 0.0
        %263 = vst [vmem:[#allocation2 + $0x38] sm:$0xff] 0.0
        %264 = vst [vmem:[#allocation2 + $0x40] sm:$0xff] 0.0
        %265 = vst [vmem:[#allocation2 + $0x48] sm:$0xff] 0.0
        %266 = vst [vmem:[#allocation2 + $0x50] sm:$0xff] 0.0
        %267 = vst [vmem:[#allocation2 + $0x58] sm:$0xff] 0.0
        %268 = vst [vmem:[#allocation2 + $0x60] sm:$0xff] 0.0
        %269 = vst [vmem:[#allocation2 + $0x68] sm:$0xff] 0.0
        %270 = vst [vmem:[#allocation2 + $0x70] sm:$0xff] 0.0
        %271 = vst [vmem:[#allocation2 + $0x78] sm:$0xff] 0.0
        %272 = vst [vmem:[#allocation2 + $0x80] sm:$0xff] 0.0
        %273 = vst [vmem:[#allocation2 + $0x88] sm:$0xff] 0.0
        %274 = vst [vmem:[#allocation2 + $0x90] sm:$0xff] 0.0
        %275 = vst [vmem:[#allocation2 + $0x98] sm:$0xff] 0.0
        %276 = vst [vmem:[#allocation2 + $0xa0] sm:$0xff] 0.0
        %277 = vst [vmem:[#allocation2 + $0xa8] sm:$0xff] 0.0
        %278 = vst [vmem:[#allocation2 + $0xb0] sm:$0xff] 0.0
        %279 = vst [vmem:[#allocation2 + $0xb8] sm:$0xff] 0.0
        %280 = vst [vmem:[#allocation2 + $0xc0] sm:$0xff] 0.0
        %281 = vst [vmem:[#allocation2 + $0xc8] sm:$0xff] 0.0
        %282 = vst [vmem:[#allocation2 + $0xd0] sm:$0xff] 0.0
        %283 = vst [vmem:[#allocation2 + $0xd8] sm:$0xff] 0.0
        %284 = vst [vmem:[#allocation2 + $0xe0] sm:$0xff] 0.0
        %285 = vst [vmem:[#allocation2 + $0xe8] sm:$0xff] 0.0
        %286 = vst [vmem:[#allocation2 + $0xf0] sm:$0xff] 0.0
        %287 = vst [vmem:[#allocation2 + $0xf8] sm:$0xff] 0.0
        %288 = vst [vmem:[#allocation2 + $0x100] sm:$0xff] 0.0
        %289 = vst [vmem:[#allocation2 + $0x108] sm:$0xff] 0.0
        %290 = vst [vmem:[#allocation2 + $0x110] sm:$0xff] 0.0
        %291 = vst [vmem:[#allocation2 + $0x118] sm:$0xff] 0.0
        %292 = vst [vmem:[#allocation2 + $0x120] sm:$0xff] 0.0
        %293 = vst [vmem:[#allocation2 + $0x128] sm:$0xff] 0.0
        %294 = vst [vmem:[#allocation2 + $0x130] sm:$0xff] 0.0
        %295 = vst [vmem:[#allocation2 + $0x138] sm:$0xff] 0.0
        %296 = vst [vmem:[#allocation2 + $0x140] sm:$0xff] 0.0
        %297 = vst [vmem:[#allocation2 + $0x148] sm:$0xff] 0.0
        %298 = vst [vmem:[#allocation2 + $0x150] sm:$0xff] 0.0
        %299 = vst [vmem:[#allocation2 + $0x158] sm:$0xff] 0.0
        %300 = vst [vmem:[#allocation2 + $0x160] sm:$0xff] 0.0
        %301 = vst [vmem:[#allocation2 + $0x168] sm:$0xff] 0.0
        %302 = vst [vmem:[#allocation2 + $0x170] sm:$0xff] 0.0
        %303 = vst [vmem:[#allocation2 + $0x178] sm:$0xff] 0.0
        %304 = vst [vmem:[#allocation2 + $0x180] sm:$0xff] 0.0
        %305 = vst [vmem:[#allocation2 + $0x188] sm:$0xff] 0.0
        %306 = vst [vmem:[#allocation2 + $0x190] sm:$0xff] 0.0
        %307 = vst [vmem:[#allocation2 + $0x198] sm:$0xff] 0.0
        %308 = vst [vmem:[#allocation2 + $0x1a0] sm:$0xff] 0.0
        %309 = vst [vmem:[#allocation2 + $0x1a8] sm:$0xff] 0.0
        %310 = vst [vmem:[#allocation2 + $0x1b0] sm:$0xff] 0.0
        %311 = vst [vmem:[#allocation2 + $0x1b8] sm:$0xff] 0.0
        %312 = vst [vmem:[#allocation2 + $0x1c0] sm:$0xff] 0.0
        %313 = vst [vmem:[#allocation2 + $0x1c8] sm:$0xff] 0.0
        %314 = vst [vmem:[#allocation2 + $0x1d0] sm:$0xff] 0.0
        %315 = vst [vmem:[#allocation2 + $0x1d8] sm:$0xff] 0.0
        %316 = vst [vmem:[#allocation2 + $0x1e0] sm:$0xff] 0.0
        %317 = vst [vmem:[#allocation2 + $0x1e8] sm:$0xff] 0.0
        %318 = vst [vmem:[#allocation2 + $0x1f0] sm:$0xff] 0.0
        %319 = vst [vmem:[#allocation2 + $0x1f8] sm:$0xff] 0.0
      $region40: #{aspp_forward.7} parent=35 // pred_fallthru
        _
      %v320 = vld [vmem:[#allocation2] sm:$0xff]
      %v321 = vld [vmem:[#allocation2 + $0x8] sm:$0xff]
      %v322 = vld [vmem:[#allocation2 + $0x10] sm:$0xff]
      %v323 = vld [vmem:[#allocation2 + $0x18] sm:$0xff]
      %v324 = vld [vmem:[#allocation2 + $0x20] sm:$0xff]
      %v325 = vld [vmem:[#allocation2 + $0x28] sm:$0xff]
      %v326 = vld [vmem:[#allocation2 + $0x30] sm:$0xff]
      %v327 = vld [vmem:[#allocation2 + $0x38] sm:$0xff]
      %v328 = vld [vmem:[#allocation2 + $0x40] sm:$0xff]
      %v329 = vld [vmem:[#allocation2 + $0x48] sm:$0xff]
      %v330 = vld [vmem:[#allocation2 + $0x50] sm:$0xff]
      %v331 = vld [vmem:[#allocation2 + $0x58] sm:$0xff]
      %v332 = vld [vmem:[#allocation2 + $0x60] sm:$0xff]
      %v333 = vld [vmem:[#allocation2 + $0x68] sm:$0xff]
      %v334 = vld [vmem:[#allocation2 + $0x70] sm:$0xff]
      %v335 = vld [vmem:[#allocation2 + $0x78] sm:$0xff]
      %v336 = vld [vmem:[#allocation2 + $0x80] sm:$0xff]
      %v337 = vld [vmem:[#allocation2 + $0x88] sm:$0xff]
      %v338 = vld [vmem:[#allocation2 + $0x90] sm:$0xff]
      %v339 = vld [vmem:[#allocation2 + $0x98] sm:$0xff]
      %v340 = vld [vmem:[#allocation2 + $0xa0] sm:$0xff]
      %v341 = vld [vmem:[#allocation2 + $0xa8] sm:$0xff]
      %v342 = vld [vmem:[#allocation2 + $0xb0] sm:$0xff]
      %v343 = vld [vmem:[#allocation2 + $0xb8] sm:$0xff]
      %v344 = vld [vmem:[#allocation2 + $0xc0] sm:$0xff]
      %v345 = vld [vmem:[#allocation2 + $0xc8] sm:$0xff]
      %v346 = vld [vmem:[#allocation2 + $0xd0] sm:$0xff]
      %v347 = vld [vmem:[#allocation2 + $0xd8] sm:$0xff]
      %v348 = vld [vmem:[#allocation2 + $0xe0] sm:$0xff]
      %v349 = vld [vmem:[#allocation2 + $0xe8] sm:$0xff]
      %v350 = vld [vmem:[#allocation2 + $0xf0] sm:$0xff]
      %v351 = vld [vmem:[#allocation2 + $0xf8] sm:$0xff]
      %v352 = vld [vmem:[#allocation2 + $0x100] sm:$0xff]
      %v353 = vld [vmem:[#allocation2 + $0x108] sm:$0xff]
      %v354 = vld [vmem:[#allocation2 + $0x110] sm:$0xff]
      %v355 = vld [vmem:[#allocation2 + $0x118] sm:$0xff]
      %v356 = vld [vmem:[#allocation2 + $0x120] sm:$0xff]
      %v357 = vld [vmem:[#allocation2 + $0x128] sm:$0xff]
      %v358 = vld [vmem:[#allocation2 + $0x130] sm:$0xff]
      %v359 = vld [vmem:[#allocation2 + $0x138] sm:$0xff]
      %v360 = vld [vmem:[#allocation2 + $0x140] sm:$0xff]
      %v361 = vld [vmem:[#allocation2 + $0x148] sm:$0xff]
      %v362 = vld [vmem:[#allocation2 + $0x150] sm:$0xff]
      %v363 = vld [vmem:[#allocation2 + $0x158] sm:$0xff]
      %v364 = vld [vmem:[#allocation2 + $0x160] sm:$0xff]
      %v365 = vld [vmem:[#allocation2 + $0x168] sm:$0xff]
      %v366 = vld [vmem:[#allocation2 + $0x170] sm:$0xff]
      %v367 = vld [vmem:[#allocation2 + $0x178] sm:$0xff]
      %v368 = vld [vmem:[#allocation2 + $0x180] sm:$0xff]
      %v369 = vld [vmem:[#allocation2 + $0x188] sm:$0xff]
      %v370 = vld [vmem:[#allocation2 + $0x190] sm:$0xff]
      %v371 = vld [vmem:[#allocation2 + $0x198] sm:$0xff]
      %v372 = vld [vmem:[#allocation2 + $0x1a0] sm:$0xff]
      %v373 = vld [vmem:[#allocation2 + $0x1a8] sm:$0xff]
      %v374 = vld [vmem:[#allocation2 + $0x1b0] sm:$0xff]
      %v375 = vld [vmem:[#allocation2 + $0x1b8] sm:$0xff]
      %v376 = vld [vmem:[#allocation2 + $0x1c0] sm:$0xff]
      %v377 = vld [vmem:[#allocation2 + $0x1c8] sm:$0xff]
      %v378 = vld [vmem:[#allocation2 + $0x1d0] sm:$0xff]
      %v379 = vld [vmem:[#allocation2 + $0x1d8] sm:$0xff]
      %v380 = vld [vmem:[#allocation2 + $0x1e0] sm:$0xff]
      %v381 = vld [vmem:[#allocation2 + $0x1e8] sm:$0xff]
      %v382 = vld [vmem:[#allocation2 + $0x1f0] sm:$0xff]
      %v383 = vld [vmem:[#allocation2 + $0x1f8] sm:$0xff]
      %v384 = vld [vmem:[%s235] sm:$0xf]
      %v385 = vld [vmem:[%s235 + $0x4] sm:$0xf]
      %v386 = vld [vmem:[%s235 + $0x8] sm:$0xf]
      %v387 = vld [vmem:[%s235 + $0xc] sm:$0xf]
      %v388 = vld [vmem:[%s235 + $0x10] sm:$0xf]
      %v389 = vld [vmem:[%s235 + $0x14] sm:$0xf]
      %v390 = vld [vmem:[%s235 + $0x18] sm:$0xf]
      %v391 = vld [vmem:[%s235 + $0x1c] sm:$0xf]
      %v392 = vld [vmem:[%s235 + $0x20] sm:$0xf]
      %v393 = vld [vmem:[%s235 + $0x24] sm:$0xf]
      %v394 = vld [vmem:[%s235 + $0x28] sm:$0xf]
      %v395 = vld [vmem:[%s235 + $0x2c] sm:$0xf]
      %v396 = vld [vmem:[%s235 + $0x30] sm:$0xf]
      %v397 = vld [vmem:[%s235 + $0x34] sm:$0xf]
      %v398 = vld [vmem:[%s235 + $0x38] sm:$0xf]
      %v399 = vld [vmem:[%s235 + $0x3c] sm:$0xf]
      %v400 = vld [vmem:[%s235 + $0x40] sm:$0xf]
      %v401 = vld [vmem:[%s235 + $0x44] sm:$0xf]
      %v402 = vld [vmem:[%s235 + $0x48] sm:$0xf]
      %v403 = vld [vmem:[%s235 + $0x4c] sm:$0xf]
      %v404 = vld [vmem:[%s235 + $0x50] sm:$0xf]
      %v405 = vld [vmem:[%s235 + $0x54] sm:$0xf]
      %v406 = vld [vmem:[%s235 + $0x58] sm:$0xf]
      %v407 = vld [vmem:[%s235 + $0x5c] sm:$0xf]
      %v408 = vld [vmem:[%s235 + $0x60] sm:$0xf]
      %v409 = vld [vmem:[%s235 + $0x64] sm:$0xf]
      %v410 = vld [vmem:[%s235 + $0x68] sm:$0xf]
      %v411 = vld [vmem:[%s235 + $0x6c] sm:$0xf]
      %v412 = vld [vmem:[%s235 + $0x70] sm:$0xf]
      %v413 = vld [vmem:[%s235 + $0x74] sm:$0xf]
      %v414 = vld [vmem:[%s235 + $0x78] sm:$0xf]
      %v415 = vld [vmem:[%s235 + $0x7c] sm:$0xf]
      %v416 = vld [vmem:[%s242] sm:$0xff]
      %v417 = vld [vmem:[%s242 + $0x8] sm:$0xff]
      %v450 = vunpack.c.l.b16 %v384
      %v451 = vunpack.c.l.b16 %v385
      %v452 = vunpack.c.l.b16 %v386
      %v453 = vunpack.c.l.b16 %v387
      %v454 = vunpack.c.l.b16 %v388
      %v455 = vunpack.c.l.b16 %v389
      %v456 = vunpack.c.l.b16 %v390
      %v457 = vunpack.c.l.b16 %v391
      %v458 = vunpack.c.l.b16 %v392
      %v459 = vunpack.c.l.b16 %v393
      %v460 = vunpack.c.l.b16 %v394
      %v461 = vunpack.c.l.b16 %v395
      %v462 = vunpack.c.l.b16 %v396
      %v463 = vunpack.c.l.b16 %v397
      %v464 = vunpack.c.l.b16 %v398
      %v465 = vunpack.c.l.b16 %v399
      %v466 = vunpack.c.l.b16 %v400
      %v467 = vunpack.c.l.b16 %v401
      %v468 = vunpack.c.l.b16 %v402
      %v469 = vunpack.c.l.b16 %v403
      %v470 = vunpack.c.l.b16 %v404
      %v471 = vunpack.c.l.b16 %v405
      %v472 = vunpack.c.l.b16 %v406
      %v473 = vunpack.c.l.b16 %v407
      %v474 = vunpack.c.l.b16 %v408
      %v475 = vunpack.c.l.b16 %v409
      %v476 = vunpack.c.l.b16 %v410
      %v477 = vunpack.c.l.b16 %v411
      %v478 = vunpack.c.l.b16 %v412
      %v479 = vunpack.c.l.b16 %v413
      %v480 = vunpack.c.l.b16 %v414
      %v481 = vunpack.c.l.b16 %v415
      %v482 = vpack.c.b16 %v451, %v450
      %v483 = vpack.c.b16 %v453, %v452
      %v484 = vpack.c.b16 %v455, %v454
      %v485 = vpack.c.b16 %v457, %v456
      %v486 = vpack.c.b16 %v459, %v458
      %v487 = vpack.c.b16 %v461, %v460
      %v488 = vpack.c.b16 %v463, %v462
      %v489 = vpack.c.b16 %v465, %v464
      %v490 = vpack.c.b16 %v467, %v466
      %v491 = vpack.c.b16 %v469, %v468
      %v492 = vpack.c.b16 %v471, %v470
      %v493 = vpack.c.b16 %v473, %v472
      %v494 = vpack.c.b16 %v475, %v474
      %v495 = vpack.c.b16 %v477, %v476
      %v496 = vpack.c.b16 %v479, %v478
      %v497 = vpack.c.b16 %v481, %v480
      %v500 = vunpack.c.l.b16 %v416
      %v501 = vunpack.c.h.b16 %v416
      %v502 = vunpack.c.l.b16 %v417
      %v503 = vunpack.c.h.b16 %v417
      %v504 = vpack.c.b16 %v502, %v500
      %v505 = vpack.c.b16 %v503, %v501
      %vm508 = vcmask 130048
      %v510 = vsel %vm508, %v482, 0
      %v513 = vsel %vm508, %v483, 0
      %v516 = vsel %vm508, %v484, 0
      %v519 = vsel %vm508, %v485, 0
      %v522 = vsel %vm508, %v486, 0
      %v525 = vsel %vm508, %v487, 0
      %v528 = vsel %vm508, %v488, 0
      %v531 = vsel %vm508, %v489, 0
      %v534 = vsel %vm508, %v490, 0
      %v537 = vsel %vm508, %v491, 0
      %v540 = vsel %vm508, %v492, 0
      %v543 = vsel %vm508, %v493, 0
      %v546 = vsel %vm508, %v494, 0
      %v549 = vsel %vm508, %v495, 0
      %v552 = vsel %vm508, %v496, 0
      %v555 = vsel %vm508, %v497, 0
      %557 = vmatprep.subr.bf16.mxu0 %v505
      %558 = vmatpush1.bf16.msra.mxu0 %v504
      %559 = vmatprep.subr.bf16.mxu0 0
      %560 = vmatpush1.bf16.msra.mxu0 0
      %561 = vmatprep.subr.bf16.mxu0 0
      %562 = vmatpush1.bf16.msra.mxu0 0
      %563 = vmatprep.subr.bf16.mxu0 0
      %564 = vmatpush1.bf16.msra.mxu0 0
      %565 = vmatprep.subr.bf16.mxu0 0
      %566 = vmatpush1.bf16.msra.mxu0 0
      %567 = vmatprep.subr.bf16.mxu0 0
      %568 = vmatpush1.bf16.msra.mxu0 0
      %569 = vmatprep.subr.bf16.mxu0 0
      %570 = vmatpush1.bf16.msra.mxu0 0
      %571 = vmatprep.subr.bf16.mxu0 0
      %572 = vmatpush1.bf16.msra.mxu0 0
      %573 = vmatprep.subr.bf16.mxu0 0
      %574 = vmatpush1.bf16.msra.mxu0 0
      %575 = vmatprep.subr.bf16.mxu0 0
      %576 = vmatpush1.bf16.msra.mxu0 0
      %577 = vmatprep.subr.bf16.mxu0 0
      %578 = vmatpush1.bf16.msra.mxu0 0
      %579 = vmatprep.subr.bf16.mxu0 0
      %580 = vmatpush1.bf16.msra.mxu0 0
      %581 = vmatprep.subr.bf16.mxu0 0
      %582 = vmatpush1.bf16.msra.mxu0 0
      %583 = vmatprep.subr.bf16.mxu0 0
      %584 = vmatpush1.bf16.msra.mxu0 0
      %585 = vmatprep.subr.bf16.mxu0 0
      %586 = vmatpush1.bf16.msra.mxu0 0
      %587 = vmatprep.subr.bf16.mxu0 0
      %588 = vmatpush1.bf16.msra.mxu0 0
      %589 = vmatprep.mubr.bf16.mxu0 0
      %590 = vmatmul.mubr.bf16.gmra.mrb[0].mxu0 %v510
      %v591 = vpop.f32.mrb[0].mxu0
      %v592 = vadd.f32 0.0, %v591
      %v593 = vpop.f32.mrb[0].mxu0
      %v594 = vadd.f32 0.0, %v593
      %v595 = vpop.f32.mrb[0].mxu0
      %v596 = vadd.f32 0.0, %v595
      %v597 = vpop.f32.mrb[0].mxu0
      %v598 = vadd.f32 0.0, %v597
      %599 = vmatprep.mubr.bf16.mxu0 0
      %600 = vmatmul.mubr.bf16.gmra.mrb[0].mxu0 %v513
      %v601 = vpop.f32.mrb[0].mxu0
      %v602 = vadd.f32 0.0, %v601
      %v603 = vpop.f32.mrb[0].mxu0
      %v604 = vadd.f32 0.0, %v603
      %v605 = vpop.f32.mrb[0].mxu0
      %v606 = vadd.f32 0.0, %v605
      %v607 = vpop.f32.mrb[0].mxu0
      %v608 = vadd.f32 0.0, %v607
      %609 = vmatprep.mubr.bf16.mxu0 0
      %610 = vmatmul.mubr.bf16.gmra.mrb[0].mxu0 %v516
      %v611 = vpop.f32.mrb[0].mxu0
      %v612 = vadd.f32 0.0, %v611
      %v613 = vpop.f32.mrb[0].mxu0
      %v614 = vadd.f32 0.0, %v613
      %v615 = vpop.f32.mrb[0].mxu0
      %v616 = vadd.f32 0.0, %v615
      %v617 = vpop.f32.mrb[0].mxu0
      %v618 = vadd.f32 0.0, %v617
      %619 = vmatprep.mubr.bf16.mxu0 0
      %620 = vmatmul.mubr.bf16.gmra.mrb[0].mxu0 %v519
      %v621 = vpop.f32.mrb[0].mxu0
      %v622 = vadd.f32 0.0, %v621
      %v623 = vpop.f32.mrb[0].mxu0
      %v624 = vadd.f32 0.0, %v623
      %v625 = vpop.f32.mrb[0].mxu0
      %v626 = vadd.f32 0.0, %v625
      %v627 = vpop.f32.mrb[0].mxu0
      %v628 = vadd.f32 0.0, %v627
      %629 = vmatprep.mubr.bf16.mxu0 0
      %630 = vmatmul.mubr.bf16.gmra.mrb[0].mxu0 %v522
      %v631 = vpop.f32.mrb[0].mxu0
      %v632 = vadd.f32 0.0, %v631
      %v633 = vpop.f32.mrb[0].mxu0
      %v634 = vadd.f32 0.0, %v633
      %v635 = vpop.f32.mrb[0].mxu0
      %v636 = vadd.f32 0.0, %v635
      %v637 = vpop.f32.mrb[0].mxu0
      %v638 = vadd.f32 0.0, %v637
      %639 = vmatprep.mubr.bf16.mxu0 0
      %640 = vmatmul.mubr.bf16.gmra.mrb[0].mxu0 %v525
      %v641 = vpop.f32.mrb[0].mxu0
      %v642 = vadd.f32 0.0, %v641
      %v643 = vpop.f32.mrb[0].mxu0
      %v644 = vadd.f32 0.0, %v643
      %v645 = vpop.f32.mrb[0].mxu0
      %v646 = vadd.f32 0.0, %v645
      %v647 = vpop.f32.mrb[0].mxu0
      %v648 = vadd.f32 0.0, %v647
      %649 = vmatprep.mubr.bf16.mxu0 0
      %650 = vmatmul.mubr.bf16.gmra.mrb[0].mxu0 %v528
      %v651 = vpop.f32.mrb[0].mxu0
      %v652 = vadd.f32 0.0, %v651
      %v653 = vpop.f32.mrb[0].mxu0
      %v654 = vadd.f32 0.0, %v653
      %v655 = vpop.f32.mrb[0].mxu0
      %v656 = vadd.f32 0.0, %v655
      %v657 = vpop.f32.mrb[0].mxu0
      %v658 = vadd.f32 0.0, %v657
      %659 = vmatprep.mubr.bf16.mxu0 0
      %660 = vmatmul.mubr.bf16.gmra.mrb[0].mxu0 %v531
      %v661 = vpop.f32.mrb[0].mxu0
      %v662 = vadd.f32 0.0, %v661
      %v663 = vpop.f32.mrb[0].mxu0
      %v664 = vadd.f32 0.0, %v663
      %v665 = vpop.f32.mrb[0].mxu0
      %v666 = vadd.f32 0.0, %v665
      %v667 = vpop.f32.mrb[0].mxu0
      %v668 = vadd.f32 0.0, %v667
      %669 = vmatprep.mubr.bf16.mxu0 0
      %670 = vmatmul.mubr.bf16.gmra.mrb[0].mxu0 %v534
      %v671 = vpop.f32.mrb[0].mxu0
      %v672 = vadd.f32 0.0, %v671
      %v673 = vpop.f32.mrb[0].mxu0
      %v674 = vadd.f32 0.0, %v673
      %v675 = vpop.f32.mrb[0].mxu0
      %v676 = vadd.f32 0.0, %v675
      %v677 = vpop.f32.mrb[0].mxu0
      %v678 = vadd.f32 0.0, %v677
      %679 = vmatprep.mubr.bf16.mxu0 0
      %680 = vmatmul.mubr.bf16.gmra.mrb[0].mxu0 %v537
      %v681 = vpop.f32.mrb[0].mxu0
      %v682 = vadd.f32 0.0, %v681
      %v683 = vpop.f32.mrb[0].mxu0
      %v684 = vadd.f32 0.0, %v683
      %v685 = vpop.f32.mrb[0].mxu0
      %v686 = vadd.f32 0.0, %v685
      %v687 = vpop.f32.mrb[0].mxu0
      %v688 = vadd.f32 0.0, %v687
      %689 = vmatprep.mubr.bf16.mxu0 0
      %690 = vmatmul.mubr.bf16.gmra.mrb[0].mxu0 %v540
      %v691 = vpop.f32.mrb[0].mxu0
      %v692 = vadd.f32 0.0, %v691
      %v693 = vpop.f32.mrb[0].mxu0
      %v694 = vadd.f32 0.0, %v693
      %v695 = vpop.f32.mrb[0].mxu0
      %v696 = vadd.f32 0.0, %v695
      %v697 = vpop.f32.mrb[0].mxu0
      %v698 = vadd.f32 0.0, %v697
      %699 = vmatprep.mubr.bf16.mxu0 0
      %700 = vmatmul.mubr.bf16.gmra.mrb[0].mxu0 %v543
      %v701 = vpop.f32.mrb[0].mxu0
      %v702 = vadd.f32 0.0, %v701
      %v703 = vpop.f32.mrb[0].mxu0
      %v704 = vadd.f32 0.0, %v703
      %v705 = vpop.f32.mrb[0].mxu0
      %v706 = vadd.f32 0.0, %v705
      %v707 = vpop.f32.mrb[0].mxu0
      %v708 = vadd.f32 0.0, %v707
      %709 = vmatprep.mubr.bf16.mxu0 0
      %710 = vmatmul.mubr.bf16.gmra.mrb[0].mxu0 %v546
      %v711 = vpop.f32.mrb[0].mxu0
      %v712 = vadd.f32 0.0, %v711
      %v713 = vpop.f32.mrb[0].mxu0
      %v714 = vadd.f32 0.0, %v713
      %v715 = vpop.f32.mrb[0].mxu0
      %v716 = vadd.f32 0.0, %v715
      %v717 = vpop.f32.mrb[0].mxu0
      %v718 = vadd.f32 0.0, %v717
      %719 = vmatprep.mubr.bf16.mxu0 0
      %720 = vmatmul.mubr.bf16.gmra.mrb[0].mxu0 %v549
      %v721 = vpop.f32.mrb[0].mxu0
      %v722 = vadd.f32 0.0, %v721
      %v723 = vpop.f32.mrb[0].mxu0
      %v724 = vadd.f32 0.0, %v723
      %v725 = vpop.f32.mrb[0].mxu0
      %v726 = vadd.f32 0.0, %v725
      %v727 = vpop.f32.mrb[0].mxu0
      %v728 = vadd.f32 0.0, %v727
      %729 = vmatprep.mubr.bf16.mxu0 0
      %730 = vmatmul.mubr.bf16.gmra.mrb[0].mxu0 %v552
      %v731 = vpop.f32.mrb[0].mxu0
      %v732 = vadd.f32 0.0, %v731
      %v733 = vpop.f32.mrb[0].mxu0
      %v734 = vadd.f32 0.0, %v733
      %v735 = vpop.f32.mrb[0].mxu0
      %v736 = vadd.f32 0.0, %v735
      %v737 = vpop.f32.mrb[0].mxu0
      %v738 = vadd.f32 0.0, %v737
      %739 = vmatprep.mubr.bf16.mxu0 0
      %740 = vmatmul.mubr.bf16.gmra.mrb[0].mxu0 %v555
      %v741 = vpop.f32.mrb[0].mxu0
      %v742 = vadd.f32 0.0, %v741
      %v743 = vpop.f32.mrb[0].mxu0
      %v744 = vadd.f32 0.0, %v743
      %v745 = vpop.f32.mrb[0].mxu0
      %v746 = vadd.f32 0.0, %v745
      %v747 = vpop.f32.mrb[0].mxu0
      %v748 = vadd.f32 0.0, %v747
      %749 = vdwg.mxu0
      %v750 = vadd.f32 %v320, %v592
      %v751 = vadd.f32 %v321, %v594
      %v752 = vadd.f32 %v322, %v596
      %v753 = vadd.f32 %v323, %v598
      %v754 = vadd.f32 %v324, %v602
      %v755 = vadd.f32 %v325, %v604
      %v756 = vadd.f32 %v326, %v606
      %v757 = vadd.f32 %v327, %v608
      %v758 = vadd.f32 %v328, %v612
      %v759 = vadd.f32 %v329, %v614
      %v760 = vadd.f32 %v330, %v616
      %v761 = vadd.f32 %v331, %v618
      %v762 = vadd.f32 %v332, %v622
      %v763 = vadd.f32 %v333, %v624
      %v764 = vadd.f32 %v334, %v626
      %v765 = vadd.f32 %v335, %v628
      %v766 = vadd.f32 %v336, %v632
      %v767 = vadd.f32 %v337, %v634
      %v768 = vadd.f32 %v338, %v636
      %v769 = vadd.f32 %v339, %v638
      %v770 = vadd.f32 %v340, %v642
      %v771 = vadd.f32 %v341, %v644
      %v772 = vadd.f32 %v342, %v646
      %v773 = vadd.f32 %v343, %v648
      %v774 = vadd.f32 %v344, %v652
      %v775 = vadd.f32 %v345, %v654
      %v776 = vadd.f32 %v346, %v656
      %v777 = vadd.f32 %v347, %v658
      %v778 = vadd.f32 %v348, %v662
      %v779 = vadd.f32 %v349, %v664
      %v780 = vadd.f32 %v350, %v666
      %v781 = vadd.f32 %v351, %v668
      %v782 = vadd.f32 %v352, %v672
      %v783 = vadd.f32 %v353, %v674
      %v784 = vadd.f32 %v354, %v676
      %v785 = vadd.f32 %v355, %v678
      %v786 = vadd.f32 %v356, %v682
      %v787 = vadd.f32 %v357, %v684
      %v788 = vadd.f32 %v358, %v686
      %v789 = vadd.f32 %v359, %v688
      %v790 = vadd.f32 %v360, %v692
      %v791 = vadd.f32 %v361, %v694
      %v792 = vadd.f32 %v362, %v696
      %v793 = vadd.f32 %v363, %v698
      %v794 = vadd.f32 %v364, %v702
      %v795 = vadd.f32 %v365, %v704
      %v796 = vadd.f32 %v366, %v706
      %v797 = vadd.f32 %v367, %v708
      %v798 = vadd.f32 %v368, %v712
      %v799 = vadd.f32 %v369, %v714
      %v800 = vadd.f32 %v370, %v716
      %v801 = vadd.f32 %v371, %v718
      %v802 = vadd.f32 %v372, %v722
      %v803 = vadd.f32 %v373, %v724
      %v804 = vadd.f32 %v374, %v726
      %v805 = vadd.f32 %v375, %v728
      %v806 = vadd.f32 %v376, %v732
      %v807 = vadd.f32 %v377, %v734
      %v808 = vadd.f32 %v378, %v736
      %v809 = vadd.f32 %v379, %v738
      %v810 = vadd.f32 %v380, %v742
      %v811 = vadd.f32 %v381, %v744
      %v812 = vadd.f32 %v382, %v746
      %v813 = vadd.f32 %v383, %v748
      %814 = vst [vmem:[#allocation2] sm:$0xff] %v750
      %815 = vst [vmem:[#allocation2 + $0x8] sm:$0xff] %v751
      %816 = vst [vmem:[#allocation2 + $0x10] sm:$0xff] %v752
      %817 = vst [vmem:[#allocation2 + $0x18] sm:$0xff] %v753
      %818 = vst [vmem:[#allocation2 + $0x20] sm:$0xff] %v754
      %819 = vst [vmem:[#allocation2 + $0x28] sm:$0xff] %v755
      %820 = vst [vmem:[#allocation2 + $0x30] sm:$0xff] %v756
      %821 = vst [vmem:[#allocation2 + $0x38] sm:$0xff] %v757
      %822 = vst [vmem:[#allocation2 + $0x40] sm:$0xff] %v758
      %823 = vst [vmem:[#allocation2 + $0x48] sm:$0xff] %v759
      %824 = vst [vmem:[#allocation2 + $0x50] sm:$0xff] %v760
      %825 = vst [vmem:[#allocation2 + $0x58] sm:$0xff] %v761
      %826 = vst [vmem:[#allocation2 + $0x60] sm:$0xff] %v762
      %827 = vst [vmem:[#allocation2 + $0x68] sm:$0xff] %v763
      %828 = vst [vmem:[#allocation2 + $0x70] sm:$0xff] %v764
      %829 = vst [vmem:[#allocation2 + $0x78] sm:$0xff] %v765
      %830 = vst [vmem:[#allocation2 + $0x80] sm:$0xff] %v766
      %831 = vst [vmem:[#allocation2 + $0x88] sm:$0xff] %v767
      %832 = vst [vmem:[#allocation2 + $0x90] sm:$0xff] %v768
      %833 = vst [vmem:[#allocation2 + $0x98] sm:$0xff] %v769
      %834 = vst [vmem:[#allocation2 + $0xa0] sm:$0xff] %v770
      %835 = vst [vmem:[#allocation2 + $0xa8] sm:$0xff] %v771
      %836 = vst [vmem:[#allocation2 + $0xb0] sm:$0xff] %v772
      %837 = vst [vmem:[#allocation2 + $0xb8] sm:$0xff] %v773
      %838 = vst [vmem:[#allocation2 + $0xc0] sm:$0xff] %v774
      %839 = vst [vmem:[#allocation2 + $0xc8] sm:$0xff] %v775
      %840 = vst [vmem:[#allocation2 + $0xd0] sm:$0xff] %v776
      %841 = vst [vmem:[#allocation2 + $0xd8] sm:$0xff] %v777
      %842 = vst [vmem:[#allocation2 + $0xe0] sm:$0xff] %v778
      %843 = vst [vmem:[#allocation2 + $0xe8] sm:$0xff] %v779
      %844 = vst [vmem:[#allocation2 + $0xf0] sm:$0xff] %v780
      %845 = vst [vmem:[#allocation2 + $0xf8] sm:$0xff] %v781
      %846 = vst [vmem:[#allocation2 + $0x100] sm:$0xff] %v782
      %847 = vst [vmem:[#allocation2 + $0x108] sm:$0xff] %v783
      %848 = vst [vmem:[#allocation2 + $0x110] sm:$0xff] %v784
      %849 = vst [vmem:[#allocation2 + $0x118] sm:$0xff] %v785
      %850 = vst [vmem:[#allocation2 + $0x120] sm:$0xff] %v786
      %851 = vst [vmem:[#allocation2 + $0x128] sm:$0xff] %v787
      %852 = vst [vmem:[#allocation2 + $0x130] sm:$0xff] %v788
      %853 = vst [vmem:[#allocation2 + $0x138] sm:$0xff] %v789
      %854 = vst [vmem:[#allocation2 + $0x140] sm:$0xff] %v790
      %855 = vst [vmem:[#allocation2 + $0x148] sm:$0xff] %v791
      %856 = vst [vmem:[#allocation2 + $0x150] sm:$0xff] %v792
      %857 = vst [vmem:[#allocation2 + $0x158] sm:$0xff] %v793
      %858 = vst [vmem:[#allocation2 + $0x160] sm:$0xff] %v794
      %859 = vst [vmem:[#allocation2 + $0x168] sm:$0xff] %v795
      %860 = vst [vmem:[#allocation2 + $0x170] sm:$0xff] %v796
      %861 = vst [vmem:[#allocation2 + $0x178] sm:$0xff] %v797
      %862 = vst [vmem:[#allocation2 + $0x180] sm:$0xff] %v798
      %863 = vst [vmem:[#allocation2 + $0x188] sm:$0xff] %v799
      %864 = vst [vmem:[#allocation2 + $0x190] sm:$0xff] %v800
      %865 = vst [vmem:[#allocation2 + $0x198] sm:$0xff] %v801
      %866 = vst [vmem:[#allocation2 + $0x1a0] sm:$0xff] %v802
      %867 = vst [vmem:[#allocation2 + $0x1a8] sm:$0xff] %v803
      %868 = vst [vmem:[#allocation2 + $0x1b0] sm:$0xff] %v804
      %869 = vst [vmem:[#allocation2 + $0x1b8] sm:$0xff] %v805
      %870 = vst [vmem:[#allocation2 + $0x1c0] sm:$0xff] %v806
      %871 = vst [vmem:[#allocation2 + $0x1c8] sm:$0xff] %v807
      %872 = vst [vmem:[#allocation2 + $0x1d0] sm:$0xff] %v808
      %873 = vst [vmem:[#allocation2 + $0x1d8] sm:$0xff] %v809
      %874 = vst [vmem:[#allocation2 + $0x1e0] sm:$0xff] %v810
      %875 = vst [vmem:[#allocation2 + $0x1e8] sm:$0xff] %v811
      %876 = vst [vmem:[#allocation2 + $0x1f0] sm:$0xff] %v812
      %877 = vst [vmem:[#allocation2 + $0x1f8] sm:$0xff] %v813
      // Predicated region
      $region41: #{aspp_forward.7} parent=35 // pred_check
        %p878 = pneg %p252
      $region42: #{aspp_forward.7} parent=35 // pred_check_branch
        %880 = sbr.rel (%p878) target = $region44
      $region43: #{aspp_forward.7} parent=35 // pred_region
        %v881 = vld [vmem:[#allocation2] sm:$0xff]
        %v882 = vld [vmem:[#allocation2 + $0x8] sm:$0xff]
        %v883 = vld [vmem:[#allocation2 + $0x10] sm:$0xff]
        %v884 = vld [vmem:[#allocation2 + $0x18] sm:$0xff]
        %v885 = vld [vmem:[#allocation2 + $0x20] sm:$0xff]
        %v886 = vld [vmem:[#allocation2 + $0x28] sm:$0xff]
        %v887 = vld [vmem:[#allocation2 + $0x30] sm:$0xff]
        %v888 = vld [vmem:[#allocation2 + $0x38] sm:$0xff]
        %v889 = vld [vmem:[#allocation2 + $0x40] sm:$0xff]
        %v890 = vld [vmem:[#allocation2 + $0x48] sm:$0xff]
        %v891 = vld [vmem:[#allocation2 + $0x50] sm:$0xff]
        %v892 = vld [vmem:[#allocation2 + $0x58] sm:$0xff]
        %v893 = vld [vmem:[#allocation2 + $0x60] sm:$0xff]
        %v894 = vld [vmem:[#allocation2 + $0x68] sm:$0xff]
        %v895 = vld [vmem:[#allocation2 + $0x70] sm:$0xff]
        %v896 = vld [vmem:[#allocation2 + $0x78] sm:$0xff]
        %v897 = vld [vmem:[#allocation2 + $0x80] sm:$0xff]
        %v898 = vld [vmem:[#allocation2 + $0x88] sm:$0xff]
        %v899 = vld [vmem:[#allocation2 + $0x90] sm:$0xff]
        %v900 = vld [vmem:[#allocation2 + $0x98] sm:$0xff]
        %v901 = vld [vmem:[#allocation2 + $0xa0] sm:$0xff]
        %v902 = vld [vmem:[#allocation2 + $0xa8] sm:$0xff]
        %v903 = vld [vmem:[#allocation2 + $0xb0] sm:$0xff]
        %v904 = vld [vmem:[#allocation2 + $0xb8] sm:$0xff]
        %v905 = vld [vmem:[#allocation2 + $0xc0] sm:$0xff]
        %v906 = vld [vmem:[#allocation2 + $0xc8] sm:$0xff]
        %v907 = vld [vmem:[#allocation2 + $0xd0] sm:$0xff]
        %v908 = vld [vmem:[#allocation2 + $0xd8] sm:$0xff]
        %v909 = vld [vmem:[#allocation2 + $0xe0] sm:$0xff]
        %v910 = vld [vmem:[#allocation2 + $0xe8] sm:$0xff]
        %v911 = vld [vmem:[#allocation2 + $0xf0] sm:$0xff]
        %v912 = vld [vmem:[#allocation2 + $0xf8] sm:$0xff]
        %v913 = vld [vmem:[#allocation2 + $0x100] sm:$0xff]
        %v914 = vld [vmem:[#allocation2 + $0x108] sm:$0xff]
        %v915 = vld [vmem:[#allocation2 + $0x110] sm:$0xff]
        %v916 = vld [vmem:[#allocation2 + $0x118] sm:$0xff]
        %v917 = vld [vmem:[#allocation2 + $0x120] sm:$0xff]
        %v918 = vld [vmem:[#allocation2 + $0x128] sm:$0xff]
        %v919 = vld [vmem:[#allocation2 + $0x130] sm:$0xff]
        %v920 = vld [vmem:[#allocation2 + $0x138] sm:$0xff]
        %v921 = vld [vmem:[#allocation2 + $0x140] sm:$0xff]
        %v922 = vld [vmem:[#allocation2 + $0x148] sm:$0xff]
        %v923 = vld [vmem:[#allocation2 + $0x150] sm:$0xff]
        %v924 = vld [vmem:[#allocation2 + $0x158] sm:$0xff]
        %v925 = vld [vmem:[#allocation2 + $0x160] sm:$0xff]
        %v926 = vld [vmem:[#allocation2 + $0x168] sm:$0xff]
        %v927 = vld [vmem:[#allocation2 + $0x170] sm:$0xff]
        %v928 = vld [vmem:[#allocation2 + $0x178] sm:$0xff]
        %v929 = vld [vmem:[#allocation2 + $0x180] sm:$0xff]
        %v930 = vld [vmem:[#allocation2 + $0x188] sm:$0xff]
        %v931 = vld [vmem:[#allocation2 + $0x190] sm:$0xff]
        %v932 = vld [vmem:[#allocation2 + $0x198] sm:$0xff]
        %v933 = vld [vmem:[#allocation2 + $0x1a0] sm:$0xff]
        %v934 = vld [vmem:[#allocation2 + $0x1a8] sm:$0xff]
        %v935 = vld [vmem:[#allocation2 + $0x1b0] sm:$0xff]
        %v936 = vld [vmem:[#allocation2 + $0x1b8] sm:$0xff]
        %v937 = vld [vmem:[#allocation2 + $0x1c0] sm:$0xff]
        %v938 = vld [vmem:[#allocation2 + $0x1c8] sm:$0xff]
        %v939 = vld [vmem:[#allocation2 + $0x1d0] sm:$0xff]
        %v940 = vld [vmem:[#allocation2 + $0x1d8] sm:$0xff]
        %v941 = vld [vmem:[#allocation2 + $0x1e0] sm:$0xff]
        %v942 = vld [vmem:[#allocation2 + $0x1e8] sm:$0xff]
        %v943 = vld [vmem:[#allocation2 + $0x1f0] sm:$0xff]
        %v944 = vld [vmem:[#allocation2 + $0x1f8] sm:$0xff]
        %v945 = vld [vmem:[%s2] sm:$0x3]
        %v947 = vlaneseq
        %v948 = vshrl.u32 %v947, 7
        %v949 = vsub.s32 0, %v948
        %v950 = vrot.slane %v945, %v949
        %v951 = vlaneseq
        %v952 = vshrl.u32 %v951, 7
        %v953 = vsub.s32 1, %v952
        %v954 = vrot.slane %v945, %v953
        %v957 = vmul.f32 %v881, %v950
        %v958 = vmul.f32 %v882, %v954
        %v959 = vmul.f32 %v883, %v950
        %v960 = vmul.f32 %v884, %v954
        %v961 = vmul.f32 %v885, %v950
        %v962 = vmul.f32 %v886, %v954
        %v963 = vmul.f32 %v887, %v950
        %v964 = vmul.f32 %v888, %v954
        %v965 = vmul.f32 %v889, %v950
        %v966 = vmul.f32 %v890, %v954
        %v967 = vmul.f32 %v891, %v950
        %v968 = vmul.f32 %v892, %v954
        %v969 = vmul.f32 %v893, %v950
        %v970 = vmul.f32 %v894, %v954
        %v971 = vmul.f32 %v895, %v950
        %v972 = vmul.f32 %v896, %v954
        %v973 = vmul.f32 %v897, %v950
        %v974 = vmul.f32 %v898, %v954
        %v975 = vmul.f32 %v899, %v950
        %v976 = vmul.f32 %v900, %v954
        %v977 = vmul.f32 %v901, %v950
        %v978 = vmul.f32 %v902, %v954
        %v979 = vmul.f32 %v903, %v950
        %v980 = vmul.f32 %v904, %v954
        %v981 = vmul.f32 %v905, %v950
        %v982 = vmul.f32 %v906, %v954
        %v983 = vmul.f32 %v907, %v950
        %v984 = vmul.f32 %v908, %v954
        %v985 = vmul.f32 %v909, %v950
        %v986 = vmul.f32 %v910, %v954
        %v987 = vmul.f32 %v911, %v950
        %v988 = vmul.f32 %v912, %v954
        %v989 = vmul.f32 %v913, %v950
        %v990 = vmul.f32 %v914, %v954
        %v991 = vmul.f32 %v915, %v950
        %v992 = vmul.f32 %v916, %v954
        %v993 = vmul.f32 %v917, %v950
        %v994 = vmul.f32 %v918, %v954
        %v995 = vmul.f32 %v919, %v950
        %v996 = vmul.f32 %v920, %v954
        %v997 = vmul.f32 %v921, %v950
        %v998 = vmul.f32 %v922, %v954
        %v999 = vmul.f32 %v923, %v950
        %v1000 = vmul.f32 %v924, %v954
        %v1001 = vmul.f32 %v925, %v950
        %v1002 = vmul.f32 %v926, %v954
        %v1003 = vmul.f32 %v927, %v950
        %v1004 = vmul.f32 %v928, %v954
        %v1005 = vmul.f32 %v929, %v950
        %v1006 = vmul.f32 %v930, %v954
        %v1007 = vmul.f32 %v931, %v950
        %v1008 = vmul.f32 %v932, %v954
        %v1009 = vmul.f32 %v933, %v950
        %v1010 = vmul.f32 %v934, %v954
        %v1011 = vmul.f32 %v935, %v950
        %v1012 = vmul.f32 %v936, %v954
        %v1013 = vmul.f32 %v937, %v950
        %v1014 = vmul.f32 %v938, %v954
        %v1015 = vmul.f32 %v939, %v950
        %v1016 = vmul.f32 %v940, %v954
        %v1017 = vmul.f32 %v941, %v950
        %v1018 = vmul.f32 %v942, %v954
        %v1019 = vmul.f32 %v943, %v950
        %v1020 = vmul.f32 %v944, %v954
        %v1021 = vld [vmem:[%s3] sm:$0x3]
        %v1023 = vlaneseq
        %v1024 = vshrl.u32 %v1023, 7
        %v1025 = vsub.s32 0, %v1024
        %v1026 = vrot.slane %v1021, %v1025
        %v1027 = vlaneseq
        %v1028 = vshrl.u32 %v1027, 7
        %v1029 = vsub.s32 1, %v1028
        %v1030 = vrot.slane %v1021, %v1029
        %v1033 = vadd.f32 %v957, %v1026
        %v1034 = vadd.f32 %v958, %v1030
        %v1035 = vadd.f32 %v959, %v1026
        %v1036 = vadd.f32 %v960, %v1030
        %v1037 = vadd.f32 %v961, %v1026
        %v1038 = vadd.f32 %v962, %v1030
        %v1039 = vadd.f32 %v963, %v1026
        %v1040 = vadd.f32 %v964, %v1030
        %v1041 = vadd.f32 %v965, %v1026
        %v1042 = vadd.f32 %v966, %v1030
        %v1043 = vadd.f32 %v967, %v1026
        %v1044 = vadd.f32 %v968, %v1030
        %v1045 = vadd.f32 %v969, %v1026
        %v1046 = vadd.f32 %v970, %v1030
        %v1047 = vadd.f32 %v971, %v1026
        %v1048 = vadd.f32 %v972, %v1030
        %v1049 = vadd.f32 %v973, %v1026
        %v1050 = vadd.f32 %v974, %v1030
        %v1051 = vadd.f32 %v975, %v1026
        %v1052 = vadd.f32 %v976, %v1030
        %v1053 = vadd.f32 %v977, %v1026
        %v1054 = vadd.f32 %v978, %v1030
        %v1055 = vadd.f32 %v979, %v1026
        %v1056 = vadd.f32 %v980, %v1030
        %v1057 = vadd.f32 %v981, %v1026
        %v1058 = vadd.f32 %v982, %v1030
        %v1059 = vadd.f32 %v983, %v1026
        %v1060 = vadd.f32 %v984, %v1030
        %v1061 = vadd.f32 %v985, %v1026
        %v1062 = vadd.f32 %v986, %v1030
        %v1063 = vadd.f32 %v987, %v1026
        %v1064 = vadd.f32 %v988, %v1030
        %v1065 = vadd.f32 %v989, %v1026
        %v1066 = vadd.f32 %v990, %v1030
        %v1067 = vadd.f32 %v991, %v1026
        %v1068 = vadd.f32 %v992, %v1030
        %v1069 = vadd.f32 %v993, %v1026
        %v1070 = vadd.f32 %v994, %v1030
        %v1071 = vadd.f32 %v995, %v1026
        %v1072 = vadd.f32 %v996, %v1030
        %v1073 = vadd.f32 %v997, %v1026
        %v1074 = vadd.f32 %v998, %v1030
        %v1075 = vadd.f32 %v999, %v1026
        %v1076 = vadd.f32 %v1000, %v1030
        %v1077 = vadd.f32 %v1001, %v1026
        %v1078 = vadd.f32 %v1002, %v1030
        %v1079 = vadd.f32 %v1003, %v1026
        %v1080 = vadd.f32 %v1004, %v1030
        %v1081 = vadd.f32 %v1005, %v1026
        %v1082 = vadd.f32 %v1006, %v1030
        %v1083 = vadd.f32 %v1007, %v1026
        %v1084 = vadd.f32 %v1008, %v1030
        %v1085 = vadd.f32 %v1009, %v1026
        %v1086 = vadd.f32 %v1010, %v1030
        %v1087 = vadd.f32 %v1011, %v1026
        %v1088 = vadd.f32 %v1012, %v1030
        %v1089 = vadd.f32 %v1013, %v1026
        %v1090 = vadd.f32 %v1014, %v1030
        %v1091 = vadd.f32 %v1015, %v1026
        %v1092 = vadd.f32 %v1016, %v1030
        %v1093 = vadd.f32 %v1017, %v1026
        %v1094 = vadd.f32 %v1018, %v1030
        %v1095 = vadd.f32 %v1019, %v1026
        %v1096 = vadd.f32 %v1020, %v1030
        %v1097 = vmax.f32 %v1033, 0.0
        %v1098 = vmax.f32 %v1034, 0.0
        %v1099 = vmax.f32 %v1035, 0.0
        %v1100 = vmax.f32 %v1036, 0.0
        %v1101 = vmax.f32 %v1037, 0.0
        %v1102 = vmax.f32 %v1038, 0.0
        %v1103 = vmax.f32 %v1039, 0.0
        %v1104 = vmax.f32 %v1040, 0.0
        %v1105 = vmax.f32 %v1041, 0.0
        %v1106 = vmax.f32 %v1042, 0.0
        %v1107 = vmax.f32 %v1043, 0.0
        %v1108 = vmax.f32 %v1044, 0.0
        %v1109 = vmax.f32 %v1045, 0.0
        %v1110 = vmax.f32 %v1046, 0.0
        %v1111 = vmax.f32 %v1047, 0.0
        %v1112 = vmax.f32 %v1048, 0.0
        %v1113 = vmax.f32 %v1049, 0.0
        %v1114 = vmax.f32 %v1050, 0.0
        %v1115 = vmax.f32 %v1051, 0.0
        %v1116 = vmax.f32 %v1052, 0.0
        %v1117 = vmax.f32 %v1053, 0.0
        %v1118 = vmax.f32 %v1054, 0.0
        %v1119 = vmax.f32 %v1055, 0.0
        %v1120 = vmax.f32 %v1056, 0.0
        %v1121 = vmax.f32 %v1057, 0.0
        %v1122 = vmax.f32 %v1058, 0.0
        %v1123 = vmax.f32 %v1059, 0.0
        %v1124 = vmax.f32 %v1060, 0.0
        %v1125 = vmax.f32 %v1061, 0.0
        %v1126 = vmax.f32 %v1062, 0.0
        %v1127 = vmax.f32 %v1063, 0.0
        %v1128 = vmax.f32 %v1064, 0.0
        %v1129 = vmax.f32 %v1065, 0.0
        %v1130 = vmax.f32 %v1066, 0.0
        %v1131 = vmax.f32 %v1067, 0.0
        %v1132 = vmax.f32 %v1068, 0.0
        %v1133 = vmax.f32 %v1069, 0.0
        %v1134 = vmax.f32 %v1070, 0.0
        %v1135 = vmax.f32 %v1071, 0.0
        %v1136 = vmax.f32 %v1072, 0.0
        %v1137 = vmax.f32 %v1073, 0.0
        %v1138 = vmax.f32 %v1074, 0.0
        %v1139 = vmax.f32 %v1075, 0.0
        %v1140 = vmax.f32 %v1076, 0.0
        %v1141 = vmax.f32 %v1077, 0.0
        %v1142 = vmax.f32 %v1078, 0.0
        %v1143 = vmax.f32 %v1079, 0.0
        %v1144 = vmax.f32 %v1080, 0.0
        %v1145 = vmax.f32 %v1081, 0.0
        %v1146 = vmax.f32 %v1082, 0.0
        %v1147 = vmax.f32 %v1083, 0.0
        %v1148 = vmax.f32 %v1084, 0.0
        %v1149 = vmax.f32 %v1085, 0.0
        %v1150 = vmax.f32 %v1086, 0.0
        %v1151 = vmax.f32 %v1087, 0.0
        %v1152 = vmax.f32 %v1088, 0.0
        %v1153 = vmax.f32 %v1089, 0.0
        %v1154 = vmax.f32 %v1090, 0.0
        %v1155 = vmax.f32 %v1091, 0.0
        %v1156 = vmax.f32 %v1092, 0.0
        %v1157 = vmax.f32 %v1093, 0.0
        %v1158 = vmax.f32 %v1094, 0.0
        %v1159 = vmax.f32 %v1095, 0.0
        %v1160 = vmax.f32 %v1096, 0.0
        %v1161 = vpack.c.bf16 %v1099, %v1097
        %v1162 = vpack.c.bf16 %v1100, %v1098
        %v1163 = vpack.c.bf16 %v1103, %v1101
        %v1164 = vpack.c.bf16 %v1104, %v1102
        %v1165 = vpack.c.bf16 %v1107, %v1105
        %v1166 = vpack.c.bf16 %v1108, %v1106
        %v1167 = vpack.c.bf16 %v1111, %v1109
        %v1168 = vpack.c.bf16 %v1112, %v1110
        %v1169 = vpack.c.bf16 %v1115, %v1113
        %v1170 = vpack.c.bf16 %v1116, %v1114
        %v1171 = vpack.c.bf16 %v1119, %v1117
        %v1172 = vpack.c.bf16 %v1120, %v1118
        %v1173 = vpack.c.bf16 %v1123, %v1121
        %v1174 = vpack.c.bf16 %v1124, %v1122
        %v1175 = vpack.c.bf16 %v1127, %v1125
        %v1176 = vpack.c.bf16 %v1128, %v1126
        %v1177 = vpack.c.bf16 %v1131, %v1129
        %v1178 = vpack.c.bf16 %v1132, %v1130
        %v1179 = vpack.c.bf16 %v1135, %v1133
        %v1180 = vpack.c.bf16 %v1136, %v1134
        %v1181 = vpack.c.bf16 %v1139, %v1137
        %v1182 = vpack.c.bf16 %v1140, %v1138
        %v1183 = vpack.c.bf16 %v1143, %v1141
        %v1184 = vpack.c.bf16 %v1144, %v1142
        %v1185 = vpack.c.bf16 %v1147, %v1145
        %v1186 = vpack.c.bf16 %v1148, %v1146
        %v1187 = vpack.c.bf16 %v1151, %v1149
        %v1188 = vpack.c.bf16 %v1152, %v1150
        %v1189 = vpack.c.bf16 %v1155, %v1153
        %v1190 = vpack.c.bf16 %v1156, %v1154
        %v1191 = vpack.c.bf16 %v1159, %v1157
        %v1192 = vpack.c.bf16 %v1160, %v1158
        %v1225 = vunpack.c.l.b16 %v1161
        %v1226 = vunpack.c.l.b16 %v1162
        %v1227 = vunpack.c.h.b16 %v1161
        %v1228 = vunpack.c.h.b16 %v1162
        %v1229 = vunpack.c.l.b16 %v1163
        %v1230 = vunpack.c.l.b16 %v1164
        %v1231 = vunpack.c.h.b16 %v1163
        %v1232 = vunpack.c.h.b16 %v1164
        %v1233 = vunpack.c.l.b16 %v1165
        %v1234 = vunpack.c.l.b16 %v1166
        %v1235 = vunpack.c.h.b16 %v1165
        %v1236 = vunpack.c.h.b16 %v1166
        %v1237 = vunpack.c.l.b16 %v1167
        %v1238 = vunpack.c.l.b16 %v1168
        %v1239 = vunpack.c.h.b16 %v1167
        %v1240 = vunpack.c.h.b16 %v1168
        %v1241 = vunpack.c.l.b16 %v1169
        %v1242 = vunpack.c.l.b16 %v1170
        %v1243 = vunpack.c.h.b16 %v1169
        %v1244 = vunpack.c.h.b16 %v1170
        %v1245 = vunpack.c.l.b16 %v1171
        %v1246 = vunpack.c.l.b16 %v1172
        %v1247 = vunpack.c.h.b16 %v1171
        %v1248 = vunpack.c.h.b16 %v1172
        %v1249 = vunpack.c.l.b16 %v1173
        %v1250 = vunpack.c.l.b16 %v1174
        %v1251 = vunpack.c.h.b16 %v1173
        %v1252 = vunpack.c.h.b16 %v1174
        %v1253 = vunpack.c.l.b16 %v1175
        %v1254 = vunpack.c.l.b16 %v1176
        %v1255 = vunpack.c.h.b16 %v1175
        %v1256 = vunpack.c.h.b16 %v1176
        %v1257 = vunpack.c.l.b16 %v1177
        %v1258 = vunpack.c.l.b16 %v1178
        %v1259 = vunpack.c.h.b16 %v1177
        %v1260 = vunpack.c.h.b16 %v1178
        %v1261 = vunpack.c.l.b16 %v1179
        %v1262 = vunpack.c.l.b16 %v1180
        %v1263 = vunpack.c.h.b16 %v1179
        %v1264 = vunpack.c.h.b16 %v1180
        %v1265 = vunpack.c.l.b16 %v1181
        %v1266 = vunpack.c.l.b16 %v1182
        %v1267 = vunpack.c.h.b16 %v1181
        %v1268 = vunpack.c.h.b16 %v1182
        %v1269 = vunpack.c.l.b16 %v1183
        %v1270 = vunpack.c.l.b16 %v1184
        %v1271 = vunpack.c.h.b16 %v1183
        %v1272 = vunpack.c.h.b16 %v1184
        %v1273 = vunpack.c.l.b16 %v1185
        %v1274 = vunpack.c.l.b16 %v1186
        %v1275 = vunpack.c.h.b16 %v1185
        %v1276 = vunpack.c.h.b16 %v1186
        %v1277 = vunpack.c.l.b16 %v1187
        %v1278 = vunpack.c.l.b16 %v1188
        %v1279 = vunpack.c.h.b16 %v1187
        %v1280 = vunpack.c.h.b16 %v1188
        %v1281 = vunpack.c.l.b16 %v1189
        %v1282 = vunpack.c.l.b16 %v1190
        %v1283 = vunpack.c.h.b16 %v1189
        %v1284 = vunpack.c.h.b16 %v1190
        %v1285 = vunpack.c.l.b16 %v1191
        %v1286 = vunpack.c.l.b16 %v1192
        %v1287 = vunpack.c.h.b16 %v1191
        %v1288 = vunpack.c.h.b16 %v1192
        %v1289 = vpack.c.b16 %v1226, %v1225
        %v1290 = vpack.c.b16 %v1228, %v1227
        %v1291 = vpack.c.b16 %v1230, %v1229
        %v1292 = vpack.c.b16 %v1232, %v1231
        %v1293 = vpack.c.b16 %v1234, %v1233
        %v1294 = vpack.c.b16 %v1236, %v1235
        %v1295 = vpack.c.b16 %v1238, %v1237
        %v1296 = vpack.c.b16 %v1240, %v1239
        %v1297 = vpack.c.b16 %v1242, %v1241
        %v1298 = vpack.c.b16 %v1244, %v1243
        %v1299 = vpack.c.b16 %v1246, %v1245
        %v1300 = vpack.c.b16 %v1248, %v1247
        %v1301 = vpack.c.b16 %v1250, %v1249
        %v1302 = vpack.c.b16 %v1252, %v1251
        %v1303 = vpack.c.b16 %v1254, %v1253
        %v1304 = vpack.c.b16 %v1256, %v1255
        %v1305 = vpack.c.b16 %v1258, %v1257
        %v1306 = vpack.c.b16 %v1260, %v1259
        %v1307 = vpack.c.b16 %v1262, %v1261
        %v1308 = vpack.c.b16 %v1264, %v1263
        %v1309 = vpack.c.b16 %v1266, %v1265
        %v1310 = vpack.c.b16 %v1268, %v1267
        %v1311 = vpack.c.b16 %v1270, %v1269
        %v1312 = vpack.c.b16 %v1272, %v1271
        %v1313 = vpack.c.b16 %v1274, %v1273
        %v1314 = vpack.c.b16 %v1276, %v1275
        %v1315 = vpack.c.b16 %v1278, %v1277
        %v1316 = vpack.c.b16 %v1280, %v1279
        %v1317 = vpack.c.b16 %v1282, %v1281
        %v1318 = vpack.c.b16 %v1284, %v1283
        %v1319 = vpack.c.b16 %v1286, %v1285
        %v1320 = vpack.c.b16 %v1288, %v1287
        %1353 = vst [vmem:[%s249] sm:$0xff] %v1289
        %1354 = vst [vmem:[%s249 + $0x8] sm:$0xff] %v1290
        %1355 = vst [vmem:[%s249 + $0x10] sm:$0xff] %v1291
        %1356 = vst [vmem:[%s249 + $0x18] sm:$0xff] %v1292
        %1357 = vst [vmem:[%s249 + $0x20] sm:$0xff] %v1293
        %1358 = vst [vmem:[%s249 + $0x28] sm:$0xff] %v1294
        %1359 = vst [vmem:[%s249 + $0x30] sm:$0xff] %v1295
        %1360 = vst [vmem:[%s249 + $0x38] sm:$0xff] %v1296
        %1361 = vst [vmem:[%s249 + $0x40] sm:$0xff] %v1297
        %1362 = vst [vmem:[%s249 + $0x48] sm:$0xff] %v1298
        %1363 = vst [vmem:[%s249 + $0x50] sm:$0xff] %v1299
        %1364 = vst [vmem:[%s249 + $0x58] sm:$0xff] %v1300
        %1365 = vst [vmem:[%s249 + $0x60] sm:$0xff] %v1301
        %1366 = vst [vmem:[%s249 + $0x68] sm:$0xff] %v1302
        %1367 = vst [vmem:[%s249 + $0x70] sm:$0xff] %v1303
        %1368 = vst [vmem:[%s249 + $0x78] sm:$0xff] %v1304
        %1369 = vst [vmem:[%s249 + $0x80] sm:$0xff] %v1305
        %1370 = vst [vmem:[%s249 + $0x88] sm:$0xff] %v1306
        %1371 = vst [vmem:[%s249 + $0x90] sm:$0xff] %v1307
        %1372 = vst [vmem:[%s249 + $0x98] sm:$0xff] %v1308
        %1373 = vst [vmem:[%s249 + $0xa0] sm:$0xff] %v1309
        %1374 = vst [vmem:[%s249 + $0xa8] sm:$0xff] %v1310
        %1375 = vst [vmem:[%s249 + $0xb0] sm:$0xff] %v1311
        %1376 = vst [vmem:[%s249 + $0xb8] sm:$0xff] %v1312
        %1377 = vst [vmem:[%s249 + $0xc0] sm:$0xff] %v1313
        %1378 = vst [vmem:[%s249 + $0xc8] sm:$0xff] %v1314
        %1379 = vst [vmem:[%s249 + $0xd0] sm:$0xff] %v1315
        %1380 = vst [vmem:[%s249 + $0xd8] sm:$0xff] %v1316
        %1381 = vst [vmem:[%s249 + $0xe0] sm:$0xff] %v1317
        %1382 = vst [vmem:[%s249 + $0xe8] sm:$0xff] %v1318
        %1383 = vst [vmem:[%s249 + $0xf0] sm:$0xff] %v1319
        %1384 = vst [vmem:[%s249 + $0xf8] sm:$0xff] %v1320
      $region44: #{aspp_forward.7} parent=35 // pred_fallthru
        _
      %s1385 = smul.u32 32, %s19
      %p1386 = scmp.lt.s32.totalorder %s1385, 63
      %s1387 = scalar_select %p1386, %s1385, 63
      %s1388 = smul.addr %s1387, 2
      %s1389 = smul.addr %s1388, 4
      %s1390 = scalar_lea.vmem %s4, %s1389
      // Predicated region
      $region45: #{aspp_forward.7} parent=35 // pred_check
        %p1391 = pneg %p141
      $region46: #{aspp_forward.7} parent=35 // pred_check_branch
        %1393 = sbr.rel (%p1391) target = $region48
      $region47: #{aspp_forward.7} parent=35 // pred_region
        %s1394 = smul.u32 32, %s19
      $region48: #{aspp_forward.7} parent=35 // pred_fallthru
        _
    $region36: #{aspp_forward.7} parent=5 // pred_fallthru
      _
    %p1395 = scmp.le.s32.totalorder 2, %s10
    // Predicated region
    $region49: #{aspp_forward.7} parent=5 // pred_check
      %p1396 = pneg %p1395
    $region50: #{aspp_forward.7} parent=5 // pred_check_branch
      %1398 = sbr.rel (%p1396) target = $region52
    $region51: #{aspp_forward.7} parent=5 // pred_region
      %s1399 = ssub.s32 %s10, 2
      // Predicated region
      $region53: #{aspp_forward.7} parent=51 // pred_check
        %p1400 = pneg %p147
      $region54: #{aspp_forward.7} parent=51 // pred_check_branch
        %1402 = sbr.rel (%p1400) target = $region56
      $region55: #{aspp_forward.7} parent=51 // pred_region
        %s1403 = smul.u32 32, %s21
        %p1404 = scmp.lt.s32.totalorder %s1403, 63
        %s1405 = scalar_select %p1404, %s1403, 63
        %s1406 = smul.addr %s1405, 2
        %s1407 = smul.addr %s1406, 4
        %s1408 = scalar_lea.vmem %s4, %s1407
      $region56: #{aspp_forward.7} parent=51 // pred_fallthru
        _
    $region52: #{aspp_forward.7} parent=5 // pred_fallthru
      _
  $region6: #{aspp_forward.7} parent=0 // loop_footer
    %s14 = sadd.s32 1, %s10
  $region7: #{aspp_forward.7} parent=0 // loop_footer_branch
    %9 = sbr.rel target = $region3
  $region8: #{aspp_forward.7} parent=0 // loop_exit
    _

// kernel: aspp_forward.11
$region0: #{aspp_forward.11}
  #allocation0 [shape = 'u32[]', space=smem, size = 0x4, offset = 0x4, fixed_abs, tag = 'smem constant byte address 0x4 - core index']
  #allocation1 [shape = 'u32[144,128]{1,0:T(1,128)}', space=vmem, size = 0x12000, scoped, tag = 'internal scratch']
  %s0 = inlined_call_operand.vmem [shape: f32[2,256,4], index: 0, kind: input, shape index: {}]
  %s1 = inlined_call_operand.vmem [shape: f32[2,4], index: 1, kind: output, shape index: {}]
  %s2 = sld [smem:[#allocation0]]
  $region83: #{aspp_forward.11} parent=0
    _
  %s4 = ssub.s32 1, %s2
  %s5 = scalar_select 0, %s4, %s2
  $region1: #{aspp_forward.11} parent=0
    #allocation2 [shape = 'u8[262144]{0}', space=vmem, size = 0x40000, scoped, tag = 'input window, operand 0']
    loop: start=0, step=1, limit=4
    $region2: #{aspp_forward.11} parent=1 // loop_pre_header
      _
    $region3: #{aspp_forward.11} parent=1 // loop_header
      %s7 = sphi 0, %s11
      %p8 = scmp.ge.s32.totalorder %s7, 4
      %s17 = sphi 0, %s19
      %s20 = sphi 0, %s17
      %s21 = sphi 0, %s20
      %s37 = sphi 0, %s21
      %s41 = sphi 0, %s41
      %s43 = sphi 0, %s41
      %s44 = sphi 0, %s43
      %s58 = sphi 0, %s44
    $region4: #{aspp_forward.11} parent=1 // loop_header_branch
      %10 = sbr.rel (%p8) target = $region8
    $region5: #{aspp_forward.11} parent=1 // loop_body
      %s12 = ssub.s32 %s7, 1
      %s13 = ssub.s32 %s7, 2
      %s14 = sadd.s32 %s7, 1
      %s15 = ssub.s32 %s7, %s14
      %p16 = scmp.eq.s32.totalorder %s15, 0
      %s18 = sadd.s32 %s17, 1
      %s19 = scalar_select %p16, %s17, %s18
      %p22 = pneg %p16
      %p23 = scmp.eq.s32.totalorder %s7, 1
      %p24 = por %p22, %p23
      %p25 = scmp.ne.s32.totalorder %s17, %s20
      %p26 = scmp.eq.s32.totalorder %s7, 0
      %p27 = por %p25, %p26
      %p28 = scmp.ne.s32.totalorder %s17, %s20
      %p29 = scmp.eq.s32.totalorder %s12, 1
      %p30 = por %p28, %p29
      %p31 = scmp.ne.s32.totalorder %s20, %s21
      %p32 = scmp.eq.s32.totalorder %s12, 0
      %p33 = por %p31, %p32
      %p34 = scmp.ne.s32.totalorder %s20, %s21
      %p35 = scmp.eq.s32.totalorder %s13, 1
      %p36 = por %p34, %p35
      %p38 = scmp.ne.s32.totalorder %s21, %s37
      %p39 = scmp.eq.s32.totalorder %s13, 0
      %p40 = por %p38, %p39
      %s42 = sadd.s32 %s41, 1
      %p45 = scmp.eq.s32.totalorder %s7, 1
      %p46 = scmp.ne.s32.totalorder %s41, %s43
      %p47 = scmp.eq.s32.totalorder %s7, 0
      %p48 = por %p46, %p47
      %p49 = scmp.ne.s32.totalorder %s41, %s43
      %p50 = scmp.eq.s32.totalorder %s12, 1
      %p51 = por %p49, %p50
      %p52 = scmp.ne.s32.totalorder %s43, %s44
      %p53 = scmp.eq.s32.totalorder %s12, 0
      %p54 = por %p52, %p53
      %p55 = scmp.ne.s32.totalorder %s43, %s44
      %p56 = scmp.eq.s32.totalorder %s13, 1
      %p57 = por %p55, %p56
      %p59 = scmp.ne.s32.totalorder %s44, %s58
      %p60 = scmp.eq.s32.totalorder %s13, 0
      %p61 = por %p59, %p60
      %p62 = scmp.le.s32.totalorder 1, %s7
      %p63 = scmp.lt.s32.totalorder %s7, 3
      %p64 = pnand %p62, %p63
      %p65 = pneg %p64
      // Predicated region
      $region9: #{aspp_forward.11} parent=5 // pred_check
        _
      $region10: #{aspp_forward.11} parent=5 // pred_check_branch
        %67 = sbr.rel (%p64) target = $region12
      $region11: #{aspp_forward.11} parent=5 // pred_region
        %s68 = ssub.s32 %s7, 1
      $region12: #{aspp_forward.11} parent=5 // pred_fallthru
        _
      %p69 = scmp.lt.s32.totalorder %s7, 2
      // Predicated region
      $region13: #{aspp_forward.11} parent=5 // pred_check
        %p70 = pneg %p69
      $region14: #{aspp_forward.11} parent=5 // pred_check_branch
        %72 = sbr.rel (%p70) target = $region16
      $region15: #{aspp_forward.11} parent=5 // pred_region
        // Predicated region
        $region17: #{aspp_forward.11} parent=15 // pred_check
          %p73 = pneg %p27
        $region18: #{aspp_forward.11} parent=15 // pred_check_branch
          %75 = sbr.rel (%p73) target = $region20
        $region19: #{aspp_forward.11} parent=15 // pred_region
          %s76 = sand.u32 %s17, 1
          %s77 = sand.u32 %s17, 1
          %s78 = smul.addr %s77, 256
          %s79 = scalar_lea.vmem [#allocation2], %s78
          %s80 = smul.u32 16, %s7
          %s81 = smul.addr %s80, 8
          %s82 = scalar_lea.vmem %s0, %s81
          // Predicated region
          $region21: #{aspp_forward.11} parent=19 // pred_check
            _
          $region22: #{aspp_forward.11} parent=19 // pred_check_branch
            %84 = sbr.rel (0) target = $region24
          $region23: #{aspp_forward.11} parent=19 // pred_region
            // Predicated region
            $region25: #{aspp_forward.11} parent=23 // pred_check
              _
            $region26: #{aspp_forward.11} parent=23 // pred_check_branch
              %86 = sbr.rel (0) target = $region28
            $region27: #{aspp_forward.11} parent=23 // pred_region
              // Predicated region
              $region40: #{aspp_forward.11} parent=27 // pred_check
                _
              $region41: #{aspp_forward.11} parent=27 // pred_check_branch
                %163 = sbr.rel (0) target = $region43
              $region42: #{aspp_forward.11} parent=27 // pred_region
                loop: start=0, step=1, limit=1
                $region44: #{aspp_forward.11} parent=42 // loop_pre_header
                  _
                $region45: #{aspp_forward.11} parent=42 // loop_header
                  %s165 = sphi 0, %s169
                  %p166 = scmp.ge.s32.totalorder %s165, 1
                  %s170 = sphi %s82, %s82
                  %s171 = sphi %s79, %s79
                $region46: #{aspp_forward.11} parent=42 // loop_header_branch
                  %168 = sbr.rel (%p166) target = $region50
                $region47: #{aspp_forward.11} parent=42 // loop_body
                  %v172 = vld [vmem:[%s170] sm:$0xff]
                  %173 = vst [vmem:[%s171] sm:$0xff] %v172
                  %v174 = vld [vmem:[%s170 + $0x8] sm:$0xff]
                  %175 = vst [vmem:[%s171 + $0x8] sm:$0xff] %v174
                  %v176 = vld [vmem:[%s170 + $0x10] sm:$0xff]
                  %177 = vst [vmem:[%s171 + $0x10] sm:$0xff] %v176
                  %v178 = vld [vmem:[%s170 + $0x18] sm:$0xff]
                  %179 = vst [vmem:[%s171 + $0x18] sm:$0xff] %v178
                  %v180 = vld [vmem:[%s170 + $0x20] sm:$0xff]
                  %181 = vst [vmem:[%s171 + $0x20] sm:$0xff] %v180
                  %v182 = vld [vmem:[%s170 + $0x28] sm:$0xff]
                  %183 = vst [vmem:[%s171 + $0x28] sm:$0xff] %v182
                  %v184 = vld [vmem:[%s170 + $0x30] sm:$0xff]
                  %185 = vst [vmem:[%s171 + $0x30] sm:$0xff] %v184
                  %v186 = vld [vmem:[%s170 + $0x38] sm:$0xff]
                  %187 = vst [vmem:[%s171 + $0x38] sm:$0xff] %v186
                  %v188 = vld [vmem:[%s170 + $0x40] sm:$0xff]
                  %189 = vst [vmem:[%s171 + $0x40] sm:$0xff] %v188
                  %v190 = vld [vmem:[%s170 + $0x48] sm:$0xff]
                  %191 = vst [vmem:[%s171 + $0x48] sm:$0xff] %v190
                  %v192 = vld [vmem:[%s170 + $0x50] sm:$0xff]
                  %193 = vst [vmem:[%s171 + $0x50] sm:$0xff] %v192
                  %v194 = vld [vmem:[%s170 + $0x58] sm:$0xff]
                  %195 = vst [vmem:[%s171 + $0x58] sm:$0xff] %v194
                  %v196 = vld [vmem:[%s170 + $0x60] sm:$0xff]
                  %197 = vst [vmem:[%s171 + $0x60] sm:$0xff] %v196
                  %v198 = vld [vmem:[%s170 + $0x68] sm:$0xff]
                  %199 = vst [vmem:[%s171 + $0x68] sm:$0xff] %v198
                  %v200 = vld [vmem:[%s170 + $0x70] sm:$0xff]
                  %201 = vst [vmem:[%s171 + $0x70] sm:$0xff] %v200
                  %v202 = vld [vmem:[%s170 + $0x78] sm:$0xff]
                  %203 = vst [vmem:[%s171 + $0x78] sm:$0xff] %v202
                  %v204 = vld [vmem:[%s170 + $0x100] sm:$0xff]
                  %205 = vst [vmem:[%s171 + $0x80] sm:$0xff] %v204
                  %v206 = vld [vmem:[%s170 + $0x108] sm:$0xff]
                  %207 = vst [vmem:[%s171 + $0x88] sm:$0xff] %v206
                  %v208 = vld [vmem:[%s170 + $0x110] sm:$0xff]
                  %209 = vst [vmem:[%s171 + $0x90] sm:$0xff] %v208
                  %v210 = vld [vmem:[%s170 + $0x118] sm:$0xff]
                  %211 = vst [vmem:[%s171 + $0x98] sm:$0xff] %v210
                  %v212 = vld [vmem:[%s170 + $0x120] sm:$0xff]
                  %213 = vst [vmem:[%s171 + $0xa0] sm:$0xff] %v212
                  %v214 = vld [vmem:[%s170 + $0x128] sm:$0xff]
                  %215 = vst [vmem:[%s171 + $0xa8] sm:$0xff] %v214
                  %v216 = vld [vmem:[%s170 + $0x130] sm:$0xff]
                  %217 = vst [vmem:[%s171 + $0xb0] sm:$0xff] %v216
                  %v218 = vld [vmem:[%s170 + $0x138] sm:$0xff]
                  %219 = vst [vmem:[%s171 + $0xb8] sm:$0xff] %v218
                  %v220 = vld [vmem:[%s170 + $0x140] sm:$0xff]
                  %221 = vst [vmem:[%s171 + $0xc0] sm:$0xff] %v220
                  %v222 = vld [vmem:[%s170 + $0x148] sm:$0xff]
                  %223 = vst [vmem:[%s171 + $0xc8] sm:$0xff] %v222
                  %v224 = vld [vmem:[%s170 + $0x150] sm:$0xff]
                  %225 = vst [vmem:[%s171 + $0xd0] sm:$0xff] %v224
                  %v226 = vld [vmem:[%s170 + $0x158] sm:$0xff]
                  %227 = vst [vmem:[%s171 + $0xd8] sm:$0xff] %v226
                  %v228 = vld [vmem:[%s170 + $0x160] sm:$0xff]
                  %229 = vst [vmem:[%s171 + $0xe0] sm:$0xff] %v228
                  %v230 = vld [vmem:[%s170 + $0x168] sm:$0xff]
                  %231 = vst [vmem:[%s171 + $0xe8] sm:$0xff] %v230
                  %v232 = vld [vmem:[%s170 + $0x170] sm:$0xff]
                  %233 = vst [vmem:[%s171 + $0xf0] sm:$0xff] %v232
                  %v234 = vld [vmem:[%s170 + $0x178] sm:$0xff]
                  %235 = vst [vmem:[%s171 + $0xf8] sm:$0xff] %v234
                $region48: #{aspp_forward.11} parent=42 // loop_footer
                  %s169 = sadd.s32 1, %s165
                $region49: #{aspp_forward.11} parent=42 // loop_footer_branch
                  %164 = sbr.rel target = $region45
                $region50: #{aspp_forward.11} parent=42 // loop_exit
                  _
              $region43: #{aspp_forward.11} parent=27 // pred_fallthru
                _
              // Predicated region
              $region51: #{aspp_forward.11} parent=27 // pred_check
                _
              $region52: #{aspp_forward.11} parent=27 // pred_check_branch
                %237 = sbr.rel target = $region54
              $region53: #{aspp_forward.11} parent=27 // pred_region
                _
              $region54: #{aspp_forward.11} parent=27 // pred_fallthru
                _
            $region28: #{aspp_forward.11} parent=23 // pred_fallthru
              _
            // Predicated region
            $region29: #{aspp_forward.11} parent=23 // pred_check
              _
            $region30: #{aspp_forward.11} parent=23 // pred_check_branch
              %88 = sbr.rel target = $region32
            $region31: #{aspp_forward.11} parent=23 // pred_region
              loop: start=0, step=1, limit=1
              $region33: #{aspp_forward.11} parent=31 // loop_pre_header
                _
              $region34: #{aspp_forward.11} parent=31 // loop_header
                %s91 = sphi 0, %s95
                %p92 = scmp.ge.s32.totalorder %s91, 1
                %s96 = sphi %s82, %s82
                %s97 = sphi %s79, %s79
              $region35: #{aspp_forward.11} parent=31 // loop_header_branch
                %94 = sbr.rel (%p92) target = $region39
              $region36: #{aspp_forward.11} parent=31 // loop_body
                %v98 = vld [vmem:[%s96] sm:$0xff]
                %99 = vst [vmem:[%s97] sm:$0xff] %v98
                %v100 = vld [vmem:[%s96 + $0x8] sm:$0xff]
                %101 = vst [vmem:[%s97 + $0x8] sm:$0xff] %v100
                %v102 = vld [vmem:[%s96 + $0x10] sm:$0xff]
                %103 = vst [vmem:[%s97 + $0x10] sm:$0xff] %v102
                %v104 = vld [vmem:[%s96 + $0x18] sm:$0xff]
                %105 = vst [vmem:[%s97 + $0x18] sm:$0xff] %v104
                %v106 = vld [vmem:[%s96 + $0x20] sm:$0xff]
                %107 = vst [vmem:[%s97 + $0x20] sm:$0xff] %v106
                %v108 = vld [vmem:[%s96 + $0x28] sm:$0xff]
                %109 = vst [vmem:[%s97 + $0x28] sm:$0xff] %v108
                %v110 = vld [vmem:[%s96 + $0x30] sm:$0xff]
                %111 = vst [vmem:[%s97 + $0x30] sm:$0xff] %v110
                %v112 = vld [vmem:[%s96 + $0x38] sm:$0xff]
                %113 = vst [vmem:[%s97 + $0x38] sm:$0xff] %v112
                %v114 = vld [vmem:[%s96 + $0x40] sm:$0xff]
                %115 = vst [vmem:[%s97 + $0x40] sm:$0xff] %v114
                %v116 = vld [vmem:[%s96 + $0x48] sm:$0xff]
                %117 = vst [vmem:[%s97 + $0x48] sm:$0xff] %v116
                %v118 = vld [vmem:[%s96 + $0x50] sm:$0xff]
                %119 = vst [vmem:[%s97 + $0x50] sm:$0xff] %v118
                %v120 = vld [vmem:[%s96 + $0x58] sm:$0xff]
                %121 = vst [vmem:[%s97 + $0x58] sm:$0xff] %v120
                %v122 = vld [vmem:[%s96 + $0x60] sm:$0xff]
                %123 = vst [vmem:[%s97 + $0x60] sm:$0xff] %v122
                %v124 = vld [vmem:[%s96 + $0x68] sm:$0xff]
                %125 = vst [vmem:[%s97 + $0x68] sm:$0xff] %v124
                %v126 = vld [vmem:[%s96 + $0x70] sm:$0xff]
                %127 = vst [vmem:[%s97 + $0x70] sm:$0xff] %v126
                %v128 = vld [vmem:[%s96 + $0x78] sm:$0xff]
                %129 = vst [vmem:[%s97 + $0x78] sm:$0xff] %v128
                %v130 = vld [vmem:[%s96 + $0x100] sm:$0xff]
                %131 = vst [vmem:[%s97 + $0x80] sm:$0xff] %v130
                %v132 = vld [vmem:[%s96 + $0x108] sm:$0xff]
                %133 = vst [vmem:[%s97 + $0x88] sm:$0xff] %v132
                %v134 = vld [vmem:[%s96 + $0x110] sm:$0xff]
                %135 = vst [vmem:[%s97 + $0x90] sm:$0xff] %v134
                %v136 = vld [vmem:[%s96 + $0x118] sm:$0xff]
                %137 = vst [vmem:[%s97 + $0x98] sm:$0xff] %v136
                %v138 = vld [vmem:[%s96 + $0x120] sm:$0xff]
                %139 = vst [vmem:[%s97 + $0xa0] sm:$0xff] %v138
                %v140 = vld [vmem:[%s96 + $0x128] sm:$0xff]
                %141 = vst [vmem:[%s97 + $0xa8] sm:$0xff] %v140
                %v142 = vld [vmem:[%s96 + $0x130] sm:$0xff]
                %143 = vst [vmem:[%s97 + $0xb0] sm:$0xff] %v142
                %v144 = vld [vmem:[%s96 + $0x138] sm:$0xff]
                %145 = vst [vmem:[%s97 + $0xb8] sm:$0xff] %v144
                %v146 = vld [vmem:[%s96 + $0x140] sm:$0xff]
                %147 = vst [vmem:[%s97 + $0xc0] sm:$0xff] %v146
                %v148 = vld [vmem:[%s96 + $0x148] sm:$0xff]
                %149 = vst [vmem:[%s97 + $0xc8] sm:$0xff] %v148
                %v150 = vld [vmem:[%s96 + $0x150] sm:$0xff]
                %151 = vst [vmem:[%s97 + $0xd0] sm:$0xff] %v150
                %v152 = vld [vmem:[%s96 + $0x158] sm:$0xff]
                %153 = vst [vmem:[%s97 + $0xd8] sm:$0xff] %v152
                %v154 = vld [vmem:[%s96 + $0x160] sm:$0xff]
                %155 = vst [vmem:[%s97 + $0xe0] sm:$0xff] %v154
                %v156 = vld [vmem:[%s96 + $0x168] sm:$0xff]
                %157 = vst [vmem:[%s97 + $0xe8] sm:$0xff] %v156
                %v158 = vld [vmem:[%s96 + $0x170] sm:$0xff]
                %159 = vst [vmem:[%s97 + $0xf0] sm:$0xff] %v158
                %v160 = vld [vmem:[%s96 + $0x178] sm:$0xff]
                %161 = vst [vmem:[%s97 + $0xf8] sm:$0xff] %v160
              $region37: #{aspp_forward.11} parent=31 // loop_footer
                %s95 = sadd.s32 1, %s91
              $region38: #{aspp_forward.11} parent=31 // loop_footer_branch
                %90 = sbr.rel target = $region34
              $region39: #{aspp_forward.11} parent=31 // loop_exit
                _
            $region32: #{aspp_forward.11} parent=23 // pred_fallthru
              _
          $region24: #{aspp_forward.11} parent=19 // pred_fallthru
            _
          %238 = vnop
        $region20: #{aspp_forward.11} parent=15 // pred_fallthru
          _
      $region16: #{aspp_forward.11} parent=5 // pred_fallthru
        _
      %p239 = scmp.le.s32.totalorder 1, %s7
      %p240 = scmp.lt.s32.totalorder %s7, 3
      %p241 = pnand %p239, %p240
      %p242 = pneg %p241
      // Predicated region
      $region55: #{aspp_forward.11} parent=5 // pred_check
        _
      $region56: #{aspp_forward.11} parent=5 // pred_check_branch
        %244 = sbr.rel (%p241) target = $region58
      $region57: #{aspp_forward.11} parent=5 // pred_region
        %s245 = ssub.s32 %s7, 1
        %s246 = sand.u32 %s20, 1
        %s247 = sand.u32 %s20, 1
        %s248 = smul.addr %s247, 256
        %s249 = scalar_lea.vmem [#allocation2], %s248
        // Predicated region
        $region59: #{aspp_forward.11} parent=57 // pred_check
          %p250 = pneg %p33
        $region60: #{aspp_forward.11} parent=57 // pred_check_branch
          %252 = sbr.rel (%p250) target = $region62
        $region61: #{aspp_forward.11} parent=57 // pred_region
          _
        $region62: #{aspp_forward.11} parent=57 // pred_fallthru
          _
        %s253 = sand.u32 %s20, 1
        %s254 = sand.u32 %s20, 1
        %s255 = smul.addr %s254, 256
        %s256 = scalar_lea.vmem [#allocation2], %s255
        %p257 = pneg %p33
        %p258 = pneg %p30
        %p259 = pneg %p54
        %p260 = pneg %p51
        %s261 = smul.u32 16, %s12
        %p262 = scmp.eq.s32.totalorder %s12, 0
        // Predicated region
        $region63: #{aspp_forward.11} parent=57 // pred_check
          %p263 = pneg %p262
        $region64: #{aspp_forward.11} parent=57 // pred_check_branch
          %265 = sbr.rel (%p263) target = $region66
        $region65: #{aspp_forward.11} parent=57 // pred_region
          %vm266 = vcmask 25600
          %267 = vst.msk [vmem:[%s1] sm:$0x3] %vm266, 0.0
        $region66: #{aspp_forward.11} parent=57 // pred_fallthru
          _
        %v268 = vld [vmem:[%s1] sm:$0x3]
        %v269 = vld [vmem:[%s249] sm:$0xff]
        %v270 = vld [vmem:[%s249 + $0x8] sm:$0xff]
        %v271 = vld [vmem:[%s249 + $0x10] sm:$0xff]
        %v272 = vld [vmem:[%s249 + $0x18] sm:$0xff]
        %v273 = vld [vmem:[%s249 + $0x20] sm:$0xff]
        %v274 = vld [vmem:[%s249 + $0x28] sm:$0xff]
        %v275 = vld [vmem:[%s249 + $0x30] sm:$0xff]
        %v276 = vld [vmem:[%s249 + $0x38] sm:$0xff]
        %v277 = vld [vmem:[%s249 + $0x40] sm:$0xff]
        %v278 = vld [vmem:[%s249 + $0x48] sm:$0xff]
        %v279 = vld [vmem:[%s249 + $0x50] sm:$0xff]
        %v280 = vld [vmem:[%s249 + $0x58] sm:$0xff]
        %v281 = vld [vmem:[%s249 + $0x60] sm:$0xff]
        %v282 = vld [vmem:[%s249 + $0x68] sm:$0xff]
        %v283 = vld [vmem:[%s249 + $0x70] sm:$0xff]
        %v284 = vld [vmem:[%s249 + $0x78] sm:$0xff]
        %v285 = vld [vmem:[%s249 + $0x80] sm:$0xff]
        %v286 = vld [vmem:[%s249 + $0x88] sm:$0xff]
        %v287 = vld [vmem:[%s249 + $0x90] sm:$0xff]
        %v288 = vld [vmem:[%s249 + $0x98] sm:$0xff]
        %v289 = vld [vmem:[%s249 + $0xa0] sm:$0xff]
        %v290 = vld [vmem:[%s249 + $0xa8] sm:$0xff]
        %v291 = vld [vmem:[%s249 + $0xb0] sm:$0xff]
        %v292 = vld [vmem:[%s249 + $0xb8] sm:$0xff]
        %v293 = vld [vmem:[%s249 + $0xc0] sm:$0xff]
        %v294 = vld [vmem:[%s249 + $0xc8] sm:$0xff]
        %v295 = vld [vmem:[%s249 + $0xd0] sm:$0xff]
        %v296 = vld [vmem:[%s249 + $0xd8] sm:$0xff]
        %v297 = vld [vmem:[%s249 + $0xe0] sm:$0xff]
        %v298 = vld [vmem:[%s249 + $0xe8] sm:$0xff]
        %v299 = vld [vmem:[%s249 + $0xf0] sm:$0xff]
        %v300 = vld [vmem:[%s249 + $0xf8] sm:$0xff]
        %vm301 = vcmask 31744
        %v302 = vsel %vm301, %v269, 0.0
        %v303 = vsel %vm301, %v270, 0.0
        %v304 = vadd.f32 %v302, %v303
        %v305 = vsel %vm301, %v271, 0.0
        %v306 = vadd.f32 %v304, %v305
        %v307 = vsel %vm301, %v272, 0.0
        %v308 = vadd.f32 %v306, %v307
        %v309 = vsel %vm301, %v273, 0.0
        %v310 = vadd.f32 %v308, %v309
        %v311 = vsel %vm301, %v274, 0.0
        %v312 = vadd.f32 %v310, %v311
        %v313 = vsel %vm301, %v275, 0.0
        %v314 = vadd.f32 %v312, %v313
        %v315 = vsel %vm301, %v276, 0.0
        %v316 = vadd.f32 %v314, %v315
        %v317 = vsel %vm301, %v277, 0.0
        %v318 = vadd.f32 %v316, %v317
        %v319 = vsel %vm301, %v278, 0.0
        %v320 = vadd.f32 %v318, %v319
        %v321 = vsel %vm301, %v279, 0.0
        %v322 = vadd.f32 %v320, %v321
        %v323 = vsel %vm301, %v280, 0.0
        %v324 = vadd.f32 %v322, %v323
        %v325 = vsel %vm301, %v281, 0.0
        %v326 = vadd.f32 %v324, %v325
        %v327 = vsel %vm301, %v282, 0.0
        %v328 = vadd.f32 %v326, %v327
        %v329 = vsel %vm301, %v283, 0.0
        %v330 = vadd.f32 %v328, %v329
        %v331 = vsel %vm301, %v284, 0.0
        %v332 = vadd.f32 %v330, %v331
        %v333 = vrot.slane %v332, 4
        %v334 = vadd.f32 %v332, %v333
        %v335 = vrot.slane %v334, 2
        %v336 = vadd.f32 %v334, %v335
        %v337 = vrot.slane %v336, 1
        %v338 = vadd.f32 %v336, %v337
        %v339 = vsel %vm301, %v285, 0.0
        %v340 = vsel %vm301, %v286, 0.0
        %v341 = vadd.f32 %v339, %v340
        %v342 = vsel %vm301, %v287, 0.0
        %v343 = vadd.f32 %v341, %v342
        %v344 = vsel %vm301, %v288, 0.0
        %v345 = vadd.f32 %v343, %v344
        %v346 = vsel %vm301, %v289, 0.0
        %v347 = vadd.f32 %v345, %v346
        %v348 = vsel %vm301, %v290, 0.0
        %v349 = vadd.f32 %v347, %v348
        %v350 = vsel %vm301, %v291, 0.0
        %v351 = vadd.f32 %v349, %v350
        %v352 = vsel %vm301, %v292, 0.0
        %v353 = vadd.f32 %v351, %v352
        %v354 = vsel %vm301, %v293, 0.0
        %v355 = vadd.f32 %v353, %v354
        %v356 = vsel %vm301, %v294, 0.0
        %v357 = vadd.f32 %v355, %v356
        %v358 = vsel %vm301, %v295, 0.0
        %v359 = vadd.f32 %v357, %v358
        %v360 = vsel %vm301, %v296, 0.0
        %v361 = vadd.f32 %v359, %v360
        %v362 = vsel %vm301, %v297, 0.0
        %v363 = vadd.f32 %v361, %v362
        %v364 = vsel %vm301, %v298, 0.0
        %v365 = vadd.f32 %v363, %v364
        %v366 = vsel %vm301, %v299, 0.0
        %v367 = vadd.f32 %v365, %v366
        %v368 = vsel %vm301, %v300, 0.0
        %v369 = vadd.f32 %v367, %v368
        %v370 = vrot.slane %v369, 4
        %v371 = vadd.f32 %v369, %v370
        %v372 = vrot.slane %v371, 2
        %v373 = vadd.f32 %v371, %v372
        %v374 = vrot.slane %v373, 1
        %v375 = vadd.f32 %v373, %v374
        %vm378 = vcmask 1041409
        %v379 = vsel %vm378, %v375, %v338
        %v381 = vadd.f32 %v268, %v379
        %vm382 = vcmask 25600
        %383 = vst.msk [vmem:[%s1] sm:$0x3] %vm382, %v381
        %p384 = scmp.eq.s32.totalorder %s12, 1
        // Predicated region
        $region67: #{aspp_forward.11} parent=57 // pred_check
          %p385 = pneg %p384
        $region68: #{aspp_forward.11} parent=57 // pred_check_branch
          %387 = sbr.rel (%p385) target = $region70
        $region69: #{aspp_forward.11} parent=57 // pred_region
          %v388 = vld [vmem:[%s1] sm:$0x3]
          %v389 = vmul.f32 %v388, 0.00390625
          %390 = vst.msk [vmem:[%s1] sm:$0x3] %vm382, %v389
        $region70: #{aspp_forward.11} parent=57 // pred_fallthru
          _
        // Predicated region
        $region71: #{aspp_forward.11} parent=57 // pred_check
          %p391 = pneg %p51
        $region72: #{aspp_forward.11} parent=57 // pred_check_branch
          %393 = sbr.rel (%p391) target = $region74
        $region73: #{aspp_forward.11} parent=57 // pred_region
          _
        $region74: #{aspp_forward.11} parent=57 // pred_fallthru
          _
        // Predicated region
        $region75: #{aspp_forward.11} parent=57 // pred_check
          %p394 = pneg %p51
        $region76: #{aspp_forward.11} parent=57 // pred_check_branch
          %396 = sbr.rel (%p394) target = $region78
        $region77: #{aspp_forward.11} parent=57 // pred_region
          _
        $region78: #{aspp_forward.11} parent=57 // pred_fallthru
          _
      $region58: #{aspp_forward.11} parent=5 // pred_fallthru
        _
      %p397 = scmp.le.s32.totalorder 2, %s7
      // Predicated region
      $region79: #{aspp_forward.11} parent=5 // pred_check
        %p398 = pneg %p397
      $region80: #{aspp_forward.11} parent=5 // pred_check_branch
        %400 = sbr.rel (%p398) target = $region82
      $region81: #{aspp_forward.11} parent=5 // pred_region
        %s401 = ssub.s32 %s7, 2
      $region82: #{aspp_forward.11} parent=5 // pred_fallthru
        _
    $region6: #{aspp_forward.11} parent=1 // loop_footer
      %s11 = sadd.s32 1, %s7
    $region7: #{aspp_forward.11} parent=1 // loop_footer_branch
      %6 = sbr.rel target = $region3
    $region8: #{aspp_forward.11} parent=1 // loop_exit
      _

// kernel: aspp_forward.12
$region0: #{aspp_forward.12}
  #allocation0 [shape = 'u32[]', space=smem, size = 0x4, offset = 0x4, fixed_abs, tag = 'smem constant byte address 0x4 - core index']
  #allocation1 [shape = 'u32[144,128]{1,0:T(1,128)}', space=vmem, size = 0x12000, scoped, tag = 'internal scratch']
  #allocation2 [shape = 'f32[256,256]{1,0:T(8,128)}', space=vmem, size = 0x40000, scoped, tag = 'scratch operand']
  %s0 = inlined_call_operand.vmem [shape: bf16[256,16], index: 0, kind: input, shape index: {}]
  %s1 = inlined_call_operand.vmem [shape: bf16[16,256], index: 1, kind: input, shape index: {}]
  %s2 = inlined_call_operand.vmem [shape: f32[1,256], index: 2, kind: input, shape index: {}]
  %s3 = inlined_call_operand.vmem [shape: f32[1,256], index: 3, kind: input, shape index: {}]
  %s4 = inlined_call_operand.vmem [shape: bf16[256,256], index: 4, kind: output, shape index: {}]
  %s5 = sld [smem:[#allocation0]]
  $region34: #{aspp_forward.12} parent=0
    _
  %s7 = ssub.s32 1, %s5
  %s8 = scalar_select 0, %s7, %s5
  // Predicated region
  $region2: #{aspp_forward.12} parent=0 // pred_check
    _
  $region3: #{aspp_forward.12} parent=0 // pred_check_branch
    %10 = sbr.rel (0) target = $region5
  $region4: #{aspp_forward.12} parent=0 // pred_region
    _
  $region5: #{aspp_forward.12} parent=0 // pred_fallthru
    _
  // Predicated region
  $region6: #{aspp_forward.12} parent=0 // pred_check
    _
  $region7: #{aspp_forward.12} parent=0 // pred_check_branch
    %12 = sbr.rel (0) target = $region9
  $region8: #{aspp_forward.12} parent=0 // pred_region
    _
  $region9: #{aspp_forward.12} parent=0 // pred_fallthru
    _
  // Predicated region
  $region10: #{aspp_forward.12} parent=0 // pred_check
    _
  $region11: #{aspp_forward.12} parent=0 // pred_check_branch
    %14 = sbr.rel (0) target = $region13
  $region12: #{aspp_forward.12} parent=0 // pred_region
    _
  $region13: #{aspp_forward.12} parent=0 // pred_fallthru
    _
  // Predicated region
  $region14: #{aspp_forward.12} parent=0 // pred_check
    _
  $region15: #{aspp_forward.12} parent=0 // pred_check_branch
    %16 = sbr.rel (0) target = $region17
  $region16: #{aspp_forward.12} parent=0 // pred_region
    _
  $region17: #{aspp_forward.12} parent=0 // pred_fallthru
    _
  %p18 = scmp.eq.s32.totalorder 0, 0
  // Predicated region
  $region18: #{aspp_forward.12} parent=0 // pred_check
    %p19 = pneg %p18
  $region19: #{aspp_forward.12} parent=0 // pred_check_branch
    %21 = sbr.rel (%p19) target = $region21
  $region20: #{aspp_forward.12} parent=0 // pred_region
    %22 = vst [vmem:[#allocation2] sm:$0xff] 0.0
    %23 = vst [vmem:[#allocation2 + $0x8] sm:$0xff] 0.0
    %24 = vst [vmem:[#allocation2 + $0x10] sm:$0xff] 0.0
    %25 = vst [vmem:[#allocation2 + $0x18] sm:$0xff] 0.0
    %26 = vst [vmem:[#allocation2 + $0x20] sm:$0xff] 0.0
    %27 = vst [vmem:[#allocation2 + $0x28] sm:$0xff] 0.0
    %28 = vst [vmem:[#allocation2 + $0x30] sm:$0xff] 0.0
    %29 = vst [vmem:[#allocation2 + $0x38] sm:$0xff] 0.0
    %30 = vst [vmem:[#allocation2 + $0x40] sm:$0xff] 0.0
    %31 = vst [vmem:[#allocation2 + $0x48] sm:$0xff] 0.0
    %32 = vst [vmem:[#allocation2 + $0x50] sm:$0xff] 0.0
    %33 = vst [vmem:[#allocation2 + $0x58] sm:$0xff] 0.0
    %34 = vst [vmem:[#allocation2 + $0x60] sm:$0xff] 0.0
    %35 = vst [vmem:[#allocation2 + $0x68] sm:$0xff] 0.0
    %36 = vst [vmem:[#allocation2 + $0x70] sm:$0xff] 0.0
    %37 = vst [vmem:[#allocation2 + $0x78] sm:$0xff] 0.0
    %38 = vst [vmem:[#allocation2 + $0x80] sm:$0xff] 0.0
    %39 = vst [vmem:[#allocation2 + $0x88] sm:$0xff] 0.0
    %40 = vst [vmem:[#allocation2 + $0x90] sm:$0xff] 0.0
    %41 = vst [vmem:[#allocation2 + $0x98] sm:$0xff] 0.0
    %42 = vst [vmem:[#allocation2 + $0xa0] sm:$0xff] 0.0
    %43 = vst [vmem:[#allocation2 + $0xa8] sm:$0xff] 0.0
    %44 = vst [vmem:[#allocation2 + $0xb0] sm:$0xff] 0.0
    %45 = vst [vmem:[#allocation2 + $0xb8] sm:$0xff] 0.0
    %46 = vst [vmem:[#allocation2 + $0xc0] sm:$0xff] 0.0
    %47 = vst [vmem:[#allocation2 + $0xc8] sm:$0xff] 0.0
    %48 = vst [vmem:[#allocation2 + $0xd0] sm:$0xff] 0.0
    %49 = vst [vmem:[#allocation2 + $0xd8] sm:$0xff] 0.0
    %50 = vst [vmem:[#allocation2 + $0xe0] sm:$0xff] 0.0
    %51 = vst [vmem:[#allocation2 + $0xe8] sm:$0xff] 0.0
    %52 = vst [vmem:[#allocation2 + $0xf0] sm:$0xff] 0.0
    %53 = vst [vmem:[#allocation2 + $0xf8] sm:$0xff] 0.0
    %54 = vst [vmem:[#allocation2 + $0x100] sm:$0xff] 0.0
    %55 = vst [vmem:[#allocation2 + $0x108] sm:$0xff] 0.0
    %56 = vst [vmem:[#allocation2 + $0x110] sm:$0xff] 0.0
    %57 = vst [vmem:[#allocation2 + $0x118] sm:$0xff] 0.0
    %58 = vst [vmem:[#allocation2 + $0x120] sm:$0xff] 0.0
    %59 = vst [vmem:[#allocation2 + $0x128] sm:$0xff] 0.0
    %60 = vst [vmem:[#allocation2 + $0x130] sm:$0xff] 0.0
    %61 = vst [vmem:[#allocation2 + $0x138] sm:$0xff] 0.0
    %62 = vst [vmem:[#allocation2 + $0x140] sm:$0xff] 0.0
    %63 = vst [vmem:[#allocation2 + $0x148] sm:$0xff] 0.0
    %64 = vst [vmem:[#allocation2 + $0x150] sm:$0xff] 0.0
    %65 = vst [vmem:[#allocation2 + $0x158] sm:$0xff] 0.0
    %66 = vst [vmem:[#allocation2 + $0x160] sm:$0xff] 0.0
    %67 = vst [vmem:[#allocation2 + $0x168] sm:$0xff] 0.0
    %68 = vst [vmem:[#allocation2 + $0x170] sm:$0xff] 0.0
    %69 = vst [vmem:[#allocation2 + $0x178] sm:$0xff] 0.0
    %70 = vst [vmem:[#allocation2 + $0x180] sm:$0xff] 0.0
    %71 = vst [vmem:[#allocation2 + $0x188] sm:$0xff] 0.0
    %72 = vst [vmem:[#allocation2 + $0x190] sm:$0xff] 0.0
    %73 = vst [vmem:[#allocation2 + $0x198] sm:$0xff] 0.0
    %74 = vst [vmem:[#allocation2 + $0x1a0] sm:$0xff] 0.0
    %75 = vst [vmem:[#allocation2 + $0x1a8] sm:$0xff] 0.0
    %76 = vst [vmem:[#allocation2 + $0x1b0] sm:$0xff] 0.0
    %77 = vst [vmem:[#allocation2 + $0x1b8] sm:$0xff] 0.0
    %78 = vst [vmem:[#allocation2 + $0x1c0] sm:$0xff] 0.0
    %79 = vst [vmem:[#allocation2 + $0x1c8] sm:$0xff] 0.0
    %80 = vst [vmem:[#allocation2 + $0x1d0] sm:$0xff] 0.0
    %81 = vst [vmem:[#allocation2 + $0x1d8] sm:$0xff] 0.0
    %82 = vst [vmem:[#allocation2 + $0x1e0] sm:$0xff] 0.0
    %83 = vst [vmem:[#allocation2 + $0x1e8] sm:$0xff] 0.0
    %84 = vst [vmem:[#allocation2 + $0x1f0] sm:$0xff] 0.0
    %85 = vst [vmem:[#allocation2 + $0x1f8] sm:$0xff] 0.0
  $region21: #{aspp_forward.12} parent=0 // pred_fallthru
    _
  %v86 = vld [vmem:[#allocation2] sm:$0xff]
  %v87 = vld [vmem:[#allocation2 + $0x8] sm:$0xff]
  %v88 = vld [vmem:[#allocation2 + $0x10] sm:$0xff]
  %v89 = vld [vmem:[#allocation2 + $0x18] sm:$0xff]
  %v90 = vld [vmem:[#allocation2 + $0x20] sm:$0xff]
  %v91 = vld [vmem:[#allocation2 + $0x28] sm:$0xff]
  %v92 = vld [vmem:[#allocation2 + $0x30] sm:$0xff]
  %v93 = vld [vmem:[#allocation2 + $0x38] sm:$0xff]
  %v94 = vld [vmem:[#allocation2 + $0x40] sm:$0xff]
  %v95 = vld [vmem:[#allocation2 + $0x48] sm:$0xff]
  %v96 = vld [vmem:[#allocation2 + $0x50] sm:$0xff]
  %v97 = vld [vmem:[#allocation2 + $0x58] sm:$0xff]
  %v98 = vld [vmem:[#allocation2 + $0x60] sm:$0xff]
  %v99 = vld [vmem:[#allocation2 + $0x68] sm:$0xff]
  %v100 = vld [vmem:[#allocation2 + $0x70] sm:$0xff]
  %v101 = vld [vmem:[#allocation2 + $0x78] sm:$0xff]
  %v102 = vld [vmem:[#allocation2 + $0x80] sm:$0xff]
  %v103 = vld [vmem:[#allocation2 + $0x88] sm:$0xff]
  %v104 = vld [vmem:[#allocation2 + $0x90] sm:$0xff]
  %v105 = vld [vmem:[#allocation2 + $0x98] sm:$0xff]
  %v106 = vld [vmem:[#allocation2 + $0xa0] sm:$0xff]
  %v107 = vld [vmem:[#allocation2 + $0xa8] sm:$0xff]
  %v108 = vld [vmem:[#allocation2 + $0xb0] sm:$0xff]
  %v109 = vld [vmem:[#allocation2 + $0xb8] sm:$0xff]
  %v110 = vld [vmem:[#allocation2 + $0xc0] sm:$0xff]
  %v111 = vld [vmem:[#allocation2 + $0xc8] sm:$0xff]
  %v112 = vld [vmem:[#allocation2 + $0xd0] sm:$0xff]
  %v113 = vld [vmem:[#allocation2 + $0xd8] sm:$0xff]
  %v114 = vld [vmem:[#allocation2 + $0xe0] sm:$0xff]
  %v115 = vld [vmem:[#allocation2 + $0xe8] sm:$0xff]
  %v116 = vld [vmem:[#allocation2 + $0xf0] sm:$0xff]
  %v117 = vld [vmem:[#allocation2 + $0xf8] sm:$0xff]
  %v118 = vld [vmem:[#allocation2 + $0x100] sm:$0xff]
  %v119 = vld [vmem:[#allocation2 + $0x108] sm:$0xff]
  %v120 = vld [vmem:[#allocation2 + $0x110] sm:$0xff]
  %v121 = vld [vmem:[#allocation2 + $0x118] sm:$0xff]
  %v122 = vld [vmem:[#allocation2 + $0x120] sm:$0xff]
  %v123 = vld [vmem:[#allocation2 + $0x128] sm:$0xff]
  %v124 = vld [vmem:[#allocation2 + $0x130] sm:$0xff]
  %v125 = vld [vmem:[#allocation2 + $0x138] sm:$0xff]
  %v126 = vld [vmem:[#allocation2 + $0x140] sm:$0xff]
  %v127 = vld [vmem:[#allocation2 + $0x148] sm:$0xff]
  %v128 = vld [vmem:[#allocation2 + $0x150] sm:$0xff]
  %v129 = vld [vmem:[#allocation2 + $0x158] sm:$0xff]
  %v130 = vld [vmem:[#allocation2 + $0x160] sm:$0xff]
  %v131 = vld [vmem:[#allocation2 + $0x168] sm:$0xff]
  %v132 = vld [vmem:[#allocation2 + $0x170] sm:$0xff]
  %v133 = vld [vmem:[#allocation2 + $0x178] sm:$0xff]
  %v134 = vld [vmem:[#allocation2 + $0x180] sm:$0xff]
  %v135 = vld [vmem:[#allocation2 + $0x188] sm:$0xff]
  %v136 = vld [vmem:[#allocation2 + $0x190] sm:$0xff]
  %v137 = vld [vmem:[#allocation2 + $0x198] sm:$0xff]
  %v138 = vld [vmem:[#allocation2 + $0x1a0] sm:$0xff]
  %v139 = vld [vmem:[#allocation2 + $0x1a8] sm:$0xff]
  %v140 = vld [vmem:[#allocation2 + $0x1b0] sm:$0xff]
  %v141 = vld [vmem:[#allocation2 + $0x1b8] sm:$0xff]
  %v142 = vld [vmem:[#allocation2 + $0x1c0] sm:$0xff]
  %v143 = vld [vmem:[#allocation2 + $0x1c8] sm:$0xff]
  %v144 = vld [vmem:[#allocation2 + $0x1d0] sm:$0xff]
  %v145 = vld [vmem:[#allocation2 + $0x1d8] sm:$0xff]
  %v146 = vld [vmem:[#allocation2 + $0x1e0] sm:$0xff]
  %v147 = vld [vmem:[#allocation2 + $0x1e8] sm:$0xff]
  %v148 = vld [vmem:[#allocation2 + $0x1f0] sm:$0xff]
  %v149 = vld [vmem:[#allocation2 + $0x1f8] sm:$0xff]
  %v150 = vld [vmem:[%s0] sm:$0xf]
  %v151 = vld [vmem:[%s0 + $0x4] sm:$0xf]
  %v152 = vld [vmem:[%s0 + $0x8] sm:$0xf]
  %v153 = vld [vmem:[%s0 + $0xc] sm:$0xf]
  %v154 = vld [vmem:[%s0 + $0x10] sm:$0xf]
  %v155 = vld [vmem:[%s0 + $0x14] sm:$0xf]
  %v156 = vld [vmem:[%s0 + $0x18] sm:$0xf]
  %v157 = vld [vmem:[%s0 + $0x1c] sm:$0xf]
  %v158 = vld [vmem:[%s0 + $0x20] sm:$0xf]
  %v159 = vld [vmem:[%s0 + $0x24] sm:$0xf]
  %v160 = vld [vmem:[%s0 + $0x28] sm:$0xf]
  %v161 = vld [vmem:[%s0 + $0x2c] sm:$0xf]
  %v162 = vld [vmem:[%s0 + $0x30] sm:$0xf]
  %v163 = vld [vmem:[%s0 + $0x34] sm:$0xf]
  %v164 = vld [vmem:[%s0 + $0x38] sm:$0xf]
  %v165 = vld [vmem:[%s0 + $0x3c] sm:$0xf]
  %v166 = vld [vmem:[%s0 + $0x40] sm:$0xf]
  %v167 = vld [vmem:[%s0 + $0x44] sm:$0xf]
  %v168 = vld [vmem:[%s0 + $0x48] sm:$0xf]
  %v169 = vld [vmem:[%s0 + $0x4c] sm:$0xf]
  %v170 = vld [vmem:[%s0 + $0x50] sm:$0xf]
  %v171 = vld [vmem:[%s0 + $0x54] sm:$0xf]
  %v172 = vld [vmem:[%s0 + $0x58] sm:$0xf]
  %v173 = vld [vmem:[%s0 + $0x5c] sm:$0xf]
  %v174 = vld [vmem:[%s0 + $0x60] sm:$0xf]
  %v175 = vld [vmem:[%s0 + $0x64] sm:$0xf]
  %v176 = vld [vmem:[%s0 + $0x68] sm:$0xf]
  %v177 = vld [vmem:[%s0 + $0x6c] sm:$0xf]
  %v178 = vld [vmem:[%s0 + $0x70] sm:$0xf]
  %v179 = vld [vmem:[%s0 + $0x74] sm:$0xf]
  %v180 = vld [vmem:[%s0 + $0x78] sm:$0xf]
  %v181 = vld [vmem:[%s0 + $0x7c] sm:$0xf]
  %v182 = vld [vmem:[%s1] sm:$0xff]
  %v183 = vld [vmem:[%s1 + $0x8] sm:$0xff]
  %v216 = vunpack.c.l.b16 %v150
  %v217 = vunpack.c.l.b16 %v151
  %v218 = vunpack.c.l.b16 %v152
  %v219 = vunpack.c.l.b16 %v153
  %v220 = vunpack.c.l.b16 %v154
  %v221 = vunpack.c.l.b16 %v155
  %v222 = vunpack.c.l.b16 %v156
  %v223 = vunpack.c.l.b16 %v157
  %v224 = vunpack.c.l.b16 %v158
  %v225 = vunpack.c.l.b16 %v159
  %v226 = vunpack.c.l.b16 %v160
  %v227 = vunpack.c.l.b16 %v161
  %v228 = vunpack.c.l.b16 %v162
  %v229 = vunpack.c.l.b16 %v163
  %v230 = vunpack.c.l.b16 %v164
  %v231 = vunpack.c.l.b16 %v165
  %v232 = vunpack.c.l.b16 %v166
  %v233 = vunpack.c.l.b16 %v167
  %v234 = vunpack.c.l.b16 %v168
  %v235 = vunpack.c.l.b16 %v169
  %v236 = vunpack.c.l.b16 %v170
  %v237 = vunpack.c.l.b16 %v171
  %v238 = vunpack.c.l.b16 %v172
  %v239 = vunpack.c.l.b16 %v173
  %v240 = vunpack.c.l.b16 %v174
  %v241 = vunpack.c.l.b16 %v175
  %v242 = vunpack.c.l.b16 %v176
  %v243 = vunpack.c.l.b16 %v177
  %v244 = vunpack.c.l.b16 %v178
  %v245 = vunpack.c.l.b16 %v179
  %v246 = vunpack.c.l.b16 %v180
  %v247 = vunpack.c.l.b16 %v181
  %v248 = vpack.c.b16 %v217, %v216
  %v249 = vpack.c.b16 %v219, %v218
  %v250 = vpack.c.b16 %v221, %v220
  %v251 = vpack.c.b16 %v223, %v222
  %v252 = vpack.c.b16 %v225, %v224
  %v253 = vpack.c.b16 %v227, %v226
  %v254 = vpack.c.b16 %v229, %v228
  %v255 = vpack.c.b16 %v231, %v230
  %v256 = vpack.c.b16 %v233, %v232
  %v257 = vpack.c.b16 %v235, %v234
  %v258 = vpack.c.b16 %v237, %v236
  %v259 = vpack.c.b16 %v239, %v238
  %v260 = vpack.c.b16 %v241, %v240
  %v261 = vpack.c.b16 %v243, %v242
  %v262 = vpack.c.b16 %v245, %v244
  %v263 = vpack.c.b16 %v247, %v246
  %v266 = vunpack.c.l.b16 %v182
  %v267 = vunpack.c.h.b16 %v182
  %v268 = vunpack.c.l.b16 %v183
  %v269 = vunpack.c.h.b16 %v183
  %v270 = vpack.c.b16 %v268, %v266
  %v271 = vpack.c.b16 %v269, %v267
  %vm274 = vcmask 130048
  %v276 = vsel %vm274, %v248, 0
  %v279 = vsel %vm274, %v249, 0
  %v282 = vsel %vm274, %v250, 0
  %v285 = vsel %vm274, %v251, 0
  %v288 = vsel %vm274, %v252, 0
  %v291 = vsel %vm274, %v253, 0
  %v294 = vsel %vm274, %v254, 0
  %v297 = vsel %vm274, %v255, 0
  %v300 = vsel %vm274, %v256, 0
  %v303 = vsel %vm274, %v257, 0
  %v306 = vsel %vm274, %v258, 0
  %v309 = vsel %vm274, %v259, 0
  %v312 = vsel %vm274, %v260, 0
  %v315 = vsel %vm274, %v261, 0
  %v318 = vsel %vm274, %v262, 0
  %v321 = vsel %vm274, %v263, 0
  %323 = vmatprep.subr.bf16.mxu0 %v271
  %324 = vmatpush1.bf16.msra.mxu0 %v270
  %325 = vmatprep.subr.bf16.mxu0 0
  %326 = vmatpush1.bf16.msra.mxu0 0
  %327 = vmatprep.subr.bf16.mxu0 0
  %328 = vmatpush1.bf16.msra.mxu0 0
  %329 = vmatprep.subr.bf16.mxu0 0
  %330 = vmatpush1.bf16.msra.mxu0 0
  %331 = vmatprep.subr.bf16.mxu0 0
  %332 = vmatpush1.bf16.msra.mxu0 0
  %333 = vmatprep.subr.bf16.mxu0 0
  %334 = vmatpush1.bf16.msra.mxu0 0
  %335 = vmatprep.subr.bf16.mxu0 0
  %336 = vmatpush1.bf16.msra.mxu0 0
  %337 = vmatprep.subr.bf16.mxu0 0
  %338 = vmatpush1.bf16.msra.mxu0 0
  %339 = vmatprep.subr.bf16.mxu0 0
  %340 = vmatpush1.bf16.msra.mxu0 0
  %341 = vmatprep.subr.bf16.mxu0 0
  %342 = vmatpush1.bf16.msra.mxu0 0
  %343 = vmatprep.subr.bf16.mxu0 0
  %344 = vmatpush1.bf16.msra.mxu0 0
  %345 = vmatprep.subr.bf16.mxu0 0
  %346 = vmatpush1.bf16.msra.mxu0 0
  %347 = vmatprep.subr.bf16.mxu0 0
  %348 = vmatpush1.bf16.msra.mxu0 0
  %349 = vmatprep.subr.bf16.mxu0 0
  %350 = vmatpush1.bf16.msra.mxu0 0
  %351 = vmatprep.subr.bf16.mxu0 0
  %352 = vmatpush1.bf16.msra.mxu0 0
  %353 = vmatprep.subr.bf16.mxu0 0
  %354 = vmatpush1.bf16.msra.mxu0 0
  %355 = vmatprep.mubr.bf16.mxu0 0
  %356 = vmatmul.mubr.bf16.gmra.mrb[0].mxu0 %v276
  %v357 = vpop.f32.mrb[0].mxu0
  %v358 = vadd.f32 0.0, %v357
  %v359 = vpop.f32.mrb[0].mxu0
  %v360 = vadd.f32 0.0, %v359
  %v361 = vpop.f32.mrb[0].mxu0
  %v362 = vadd.f32 0.0, %v361
  %v363 = vpop.f32.mrb[0].mxu0
  %v364 = vadd.f32 0.0, %v363
  %365 = vmatprep.mubr.bf16.mxu0 0
  %366 = vmatmul.mubr.bf16.gmra.mrb[0].mxu0 %v279
  %v367 = vpop.f32.mrb[0].mxu0
  %v368 = vadd.f32 0.0, %v367
  %v369 = vpop.f32.mrb[0].mxu0
  %v370 = vadd.f32 0.0, %v369
  %v371 = vpop.f32.mrb[0].mxu0
  %v372 = vadd.f32 0.0, %v371
  %v373 = vpop.f32.mrb[0].mxu0
  %v374 = vadd.f32 0.0, %v373
  %375 = vmatprep.mubr.bf16.mxu0 0
  %376 = vmatmul.mubr.bf16.gmra.mrb[0].mxu0 %v282
  %v377 = vpop.f32.mrb[0].mxu0
  %v378 = vadd.f32 0.0, %v377
  %v379 = vpop.f32.mrb[0].mxu0
  %v380 = vadd.f32 0.0, %v379
  %v381 = vpop.f32.mrb[0].mxu0
  %v382 = vadd.f32 0.0, %v381
  %v383 = vpop.f32.mrb[0].mxu0
  %v384 = vadd.f32 0.0, %v383
  %385 = vmatprep.mubr.bf16.mxu0 0
  %386 = vmatmul.mubr.bf16.gmra.mrb[0].mxu0 %v285
  %v387 = vpop.f32.mrb[0].mxu0
  %v388 = vadd.f32 0.0, %v387
  %v389 = vpop.f32.mrb[0].mxu0
  %v390 = vadd.f32 0.0, %v389
  %v391 = vpop.f32.mrb[0].mxu0
  %v392 = vadd.f32 0.0, %v391
  %v393 = vpop.f32.mrb[0].mxu0
  %v394 = vadd.f32 0.0, %v393
  %395 = vmatprep.mubr.bf16.mxu0 0
  %396 = vmatmul.mubr.bf16.gmra.mrb[0].mxu0 %v288
  %v397 = vpop.f32.mrb[0].mxu0
  %v398 = vadd.f32 0.0, %v397
  %v399 = vpop.f32.mrb[0].mxu0
  %v400 = vadd.f32 0.0, %v399
  %v401 = vpop.f32.mrb[0].mxu0
  %v402 = vadd.f32 0.0, %v401
  %v403 = vpop.f32.mrb[0].mxu0
  %v404 = vadd.f32 0.0, %v403
  %405 = vmatprep.mubr.bf16.mxu0 0
  %406 = vmatmul.mubr.bf16.gmra.mrb[0].mxu0 %v291
  %v407 = vpop.f32.mrb[0].mxu0
  %v408 = vadd.f32 0.0, %v407
  %v409 = vpop.f32.mrb[0].mxu0
  %v410 = vadd.f32 0.0, %v409
  %v411 = vpop.f32.mrb[0].mxu0
  %v412 = vadd.f32 0.0, %v411
  %v413 = vpop.f32.mrb[0].mxu0
  %v414 = vadd.f32 0.0, %v413
  %415 = vmatprep.mubr.bf16.mxu0 0
  %416 = vmatmul.mubr.bf16.gmra.mrb[0].mxu0 %v294
  %v417 = vpop.f32.mrb[0].mxu0
  %v418 = vadd.f32 0.0, %v417
  %v419 = vpop.f32.mrb[0].mxu0
  %v420 = vadd.f32 0.0, %v419
  %v421 = vpop.f32.mrb[0].mxu0
  %v422 = vadd.f32 0.0, %v421
  %v423 = vpop.f32.mrb[0].mxu0
  %v424 = vadd.f32 0.0, %v423
  %425 = vmatprep.mubr.bf16.mxu0 0
  %426 = vmatmul.mubr.bf16.gmra.mrb[0].mxu0 %v297
  %v427 = vpop.f32.mrb[0].mxu0
  %v428 = vadd.f32 0.0, %v427
  %v429 = vpop.f32.mrb[0].mxu0
  %v430 = vadd.f32 0.0, %v429
  %v431 = vpop.f32.mrb[0].mxu0
  %v432 = vadd.f32 0.0, %v431
  %v433 = vpop.f32.mrb[0].mxu0
  %v434 = vadd.f32 0.0, %v433
  %435 = vmatprep.mubr.bf16.mxu0 0
  %436 = vmatmul.mubr.bf16.gmra.mrb[0].mxu0 %v300
  %v437 = vpop.f32.mrb[0].mxu0
  %v438 = vadd.f32 0.0, %v437
  %v439 = vpop.f32.mrb[0].mxu0
  %v440 = vadd.f32 0.0, %v439
  %v441 = vpop.f32.mrb[0].mxu0
  %v442 = vadd.f32 0.0, %v441
  %v443 = vpop.f32.mrb[0].mxu0
  %v444 = vadd.f32 0.0, %v443
  %445 = vmatprep.mubr.bf16.mxu0 0
  %446 = vmatmul.mubr.bf16.gmra.mrb[0].mxu0 %v303
  %v447 = vpop.f32.mrb[0].mxu0
  %v448 = vadd.f32 0.0, %v447
  %v449 = vpop.f32.mrb[0].mxu0
  %v450 = vadd.f32 0.0, %v449
  %v451 = vpop.f32.mrb[0].mxu0
  %v452 = vadd.f32 0.0, %v451
  %v453 = vpop.f32.mrb[0].mxu0
  %v454 = vadd.f32 0.0, %v453
  %455 = vmatprep.mubr.bf16.mxu0 0
  %456 = vmatmul.mubr.bf16.gmra.mrb[0].mxu0 %v306
  %v457 = vpop.f32.mrb[0].mxu0
  %v458 = vadd.f32 0.0, %v457
  %v459 = vpop.f32.mrb[0].mxu0
  %v460 = vadd.f32 0.0, %v459
  %v461 = vpop.f32.mrb[0].mxu0
  %v462 = vadd.f32 0.0, %v461
  %v463 = vpop.f32.mrb[0].mxu0
  %v464 = vadd.f32 0.0, %v463
  %465 = vmatprep.mubr.bf16.mxu0 0
  %466 = vmatmul.mubr.bf16.gmra.mrb[0].mxu0 %v309
  %v467 = vpop.f32.mrb[0].mxu0
  %v468 = vadd.f32 0.0, %v467
  %v469 = vpop.f32.mrb[0].mxu0
  %v470 = vadd.f32 0.0, %v469
  %v471 = vpop.f32.mrb[0].mxu0
  %v472 = vadd.f32 0.0, %v471
  %v473 = vpop.f32.mrb[0].mxu0
  %v474 = vadd.f32 0.0, %v473
  %475 = vmatprep.mubr.bf16.mxu0 0
  %476 = vmatmul.mubr.bf16.gmra.mrb[0].mxu0 %v312
  %v477 = vpop.f32.mrb[0].mxu0
  %v478 = vadd.f32 0.0, %v477
  %v479 = vpop.f32.mrb[0].mxu0
  %v480 = vadd.f32 0.0, %v479
  %v481 = vpop.f32.mrb[0].mxu0
  %v482 = vadd.f32 0.0, %v481
  %v483 = vpop.f32.mrb[0].mxu0
  %v484 = vadd.f32 0.0, %v483
  %485 = vmatprep.mubr.bf16.mxu0 0
  %486 = vmatmul.mubr.bf16.gmra.mrb[0].mxu0 %v315
  %v487 = vpop.f32.mrb[0].mxu0
  %v488 = vadd.f32 0.0, %v487
  %v489 = vpop.f32.mrb[0].mxu0
  %v490 = vadd.f32 0.0, %v489
  %v491 = vpop.f32.mrb[0].mxu0
  %v492 = vadd.f32 0.0, %v491
  %v493 = vpop.f32.mrb[0].mxu0
  %v494 = vadd.f32 0.0, %v493
  %495 = vmatprep.mubr.bf16.mxu0 0
  %496 = vmatmul.mubr.bf16.gmra.mrb[0].mxu0 %v318
  %v497 = vpop.f32.mrb[0].mxu0
  %v498 = vadd.f32 0.0, %v497
  %v499 = vpop.f32.mrb[0].mxu0
  %v500 = vadd.f32 0.0, %v499
  %v501 = vpop.f32.mrb[0].mxu0
  %v502 = vadd.f32 0.0, %v501
  %v503 = vpop.f32.mrb[0].mxu0
  %v504 = vadd.f32 0.0, %v503
  %505 = vmatprep.mubr.bf16.mxu0 0
  %506 = vmatmul.mubr.bf16.gmra.mrb[0].mxu0 %v321
  %v507 = vpop.f32.mrb[0].mxu0
  %v508 = vadd.f32 0.0, %v507
  %v509 = vpop.f32.mrb[0].mxu0
  %v510 = vadd.f32 0.0, %v509
  %v511 = vpop.f32.mrb[0].mxu0
  %v512 = vadd.f32 0.0, %v511
  %v513 = vpop.f32.mrb[0].mxu0
  %v514 = vadd.f32 0.0, %v513
  %515 = vdwg.mxu0
  %v516 = vadd.f32 %v86, %v358
  %v517 = vadd.f32 %v87, %v360
  %v518 = vadd.f32 %v88, %v362
  %v519 = vadd.f32 %v89, %v364
  %v520 = vadd.f32 %v90, %v368
  %v521 = vadd.f32 %v91, %v370
  %v522 = vadd.f32 %v92, %v372
  %v523 = vadd.f32 %v93, %v374
  %v524 = vadd.f32 %v94, %v378
  %v525 = vadd.f32 %v95, %v380
  %v526 = vadd.f32 %v96, %v382
  %v527 = vadd.f32 %v97, %v384
  %v528 = vadd.f32 %v98, %v388
  %v529 = vadd.f32 %v99, %v390
  %v530 = vadd.f32 %v100, %v392
  %v531 = vadd.f32 %v101, %v394
  %v532 = vadd.f32 %v102, %v398
  %v533 = vadd.f32 %v103, %v400
  %v534 = vadd.f32 %v104, %v402
  %v535 = vadd.f32 %v105, %v404
  %v536 = vadd.f32 %v106, %v408
  %v537 = vadd.f32 %v107, %v410
  %v538 = vadd.f32 %v108, %v412
  %v539 = vadd.f32 %v109, %v414
  %v540 = vadd.f32 %v110, %v418
  %v541 = vadd.f32 %v111, %v420
  %v542 = vadd.f32 %v112, %v422
  %v543 = vadd.f32 %v113, %v424
  %v544 = vadd.f32 %v114, %v428
  %v545 = vadd.f32 %v115, %v430
  %v546 = vadd.f32 %v116, %v432
  %v547 = vadd.f32 %v117, %v434
  %v548 = vadd.f32 %v118, %v438
  %v549 = vadd.f32 %v119, %v440
  %v550 = vadd.f32 %v120, %v442
  %v551 = vadd.f32 %v121, %v444
  %v552 = vadd.f32 %v122, %v448
  %v553 = vadd.f32 %v123, %v450
  %v554 = vadd.f32 %v124, %v452
  %v555 = vadd.f32 %v125, %v454
  %v556 = vadd.f32 %v126, %v458
  %v557 = vadd.f32 %v127, %v460
  %v558 = vadd.f32 %v128, %v462
  %v559 = vadd.f32 %v129, %v464
  %v560 = vadd.f32 %v130, %v468
  %v561 = vadd.f32 %v131, %v470
  %v562 = vadd.f32 %v132, %v472
  %v563 = vadd.f32 %v133, %v474
  %v564 = vadd.f32 %v134, %v478
  %v565 = vadd.f32 %v135, %v480
  %v566 = vadd.f32 %v136, %v482
  %v567 = vadd.f32 %v137, %v484
  %v568 = vadd.f32 %v138, %v488
  %v569 = vadd.f32 %v139, %v490
  %v570 = vadd.f32 %v140, %v492
  %v571 = vadd.f32 %v141, %v494
  %v572 = vadd.f32 %v142, %v498
  %v573 = vadd.f32 %v143, %v500
  %v574 = vadd.f32 %v144, %v502
  %v575 = vadd.f32 %v145, %v504
  %v576 = vadd.f32 %v146, %v508
  %v577 = vadd.f32 %v147, %v510
  %v578 = vadd.f32 %v148, %v512
  %v579 = vadd.f32 %v149, %v514
  %580 = vst [vmem:[#allocation2] sm:$0xff] %v516
  %581 = vst [vmem:[#allocation2 + $0x8] sm:$0xff] %v517
  %582 = vst [vmem:[#allocation2 + $0x10] sm:$0xff] %v518
  %583 = vst [vmem:[#allocation2 + $0x18] sm:$0xff] %v519
  %584 = vst [vmem:[#allocation2 + $0x20] sm:$0xff] %v520
  %585 = vst [vmem:[#allocation2 + $0x28] sm:$0xff] %v521
  %586 = vst [vmem:[#allocation2 + $0x30] sm:$0xff] %v522
  %587 = vst [vmem:[#allocation2 + $0x38] sm:$0xff] %v523
  %588 = vst [vmem:[#allocation2 + $0x40] sm:$0xff] %v524
  %589 = vst [vmem:[#allocation2 + $0x48] sm:$0xff] %v525
  %590 = vst [vmem:[#allocation2 + $0x50] sm:$0xff] %v526
  %591 = vst [vmem:[#allocation2 + $0x58] sm:$0xff] %v527
  %592 = vst [vmem:[#allocation2 + $0x60] sm:$0xff] %v528
  %593 = vst [vmem:[#allocation2 + $0x68] sm:$0xff] %v529
  %594 = vst [vmem:[#allocation2 + $0x70] sm:$0xff] %v530
  %595 = vst [vmem:[#allocation2 + $0x78] sm:$0xff] %v531
  %596 = vst [vmem:[#allocation2 + $0x80] sm:$0xff] %v532
  %597 = vst [vmem:[#allocation2 + $0x88] sm:$0xff] %v533
  %598 = vst [vmem:[#allocation2 + $0x90] sm:$0xff] %v534
  %599 = vst [vmem:[#allocation2 + $0x98] sm:$0xff] %v535
  %600 = vst [vmem:[#allocation2 + $0xa0] sm:$0xff] %v536
  %601 = vst [vmem:[#allocation2 + $0xa8] sm:$0xff] %v537
  %602 = vst [vmem:[#allocation2 + $0xb0] sm:$0xff] %v538
  %603 = vst [vmem:[#allocation2 + $0xb8] sm:$0xff] %v539
  %604 = vst [vmem:[#allocation2 + $0xc0] sm:$0xff] %v540
  %605 = vst [vmem:[#allocation2 + $0xc8] sm:$0xff] %v541
  %606 = vst [vmem:[#allocation2 + $0xd0] sm:$0xff] %v542
  %607 = vst [vmem:[#allocation2 + $0xd8] sm:$0xff] %v543
  %608 = vst [vmem:[#allocation2 + $0xe0] sm:$0xff] %v544
  %609 = vst [vmem:[#allocation2 + $0xe8] sm:$0xff] %v545
  %610 = vst [vmem:[#allocation2 + $0xf0] sm:$0xff] %v546
  %611 = vst [vmem:[#allocation2 + $0xf8] sm:$0xff] %v547
  %612 = vst [vmem:[#allocation2 + $0x100] sm:$0xff] %v548
  %613 = vst [vmem:[#allocation2 + $0x108] sm:$0xff] %v549
  %614 = vst [vmem:[#allocation2 + $0x110] sm:$0xff] %v550
  %615 = vst [vmem:[#allocation2 + $0x118] sm:$0xff] %v551
  %616 = vst [vmem:[#allocation2 + $0x120] sm:$0xff] %v552
  %617 = vst [vmem:[#allocation2 + $0x128] sm:$0xff] %v553
  %618 = vst [vmem:[#allocation2 + $0x130] sm:$0xff] %v554
  %619 = vst [vmem:[#allocation2 + $0x138] sm:$0xff] %v555
  %620 = vst [vmem:[#allocation2 + $0x140] sm:$0xff] %v556
  %621 = vst [vmem:[#allocation2 + $0x148] sm:$0xff] %v557
  %622 = vst [vmem:[#allocation2 + $0x150] sm:$0xff] %v558
  %623 = vst [vmem:[#allocation2 + $0x158] sm:$0xff] %v559
  %624 = vst [vmem:[#allocation2 + $0x160] sm:$0xff] %v560
  %625 = vst [vmem:[#allocation2 + $0x168] sm:$0xff] %v561
  %626 = vst [vmem:[#allocation2 + $0x170] sm:$0xff] %v562
  %627 = vst [vmem:[#allocation2 + $0x178] sm:$0xff] %v563
  %628 = vst [vmem:[#allocation2 + $0x180] sm:$0xff] %v564
  %629 = vst [vmem:[#allocation2 + $0x188] sm:$0xff] %v565
  %630 = vst [vmem:[#allocation2 + $0x190] sm:$0xff] %v566
  %631 = vst [vmem:[#allocation2 + $0x198] sm:$0xff] %v567
  %632 = vst [vmem:[#allocation2 + $0x1a0] sm:$0xff] %v568
  %633 = vst [vmem:[#allocation2 + $0x1a8] sm:$0xff] %v569
  %634 = vst [vmem:[#allocation2 + $0x1b0] sm:$0xff] %v570
  %635 = vst [vmem:[#allocation2 + $0x1b8] sm:$0xff] %v571
  %636 = vst [vmem:[#allocation2 + $0x1c0] sm:$0xff] %v572
  %637 = vst [vmem:[#allocation2 + $0x1c8] sm:$0xff] %v573
  %638 = vst [vmem:[#allocation2 + $0x1d0] sm:$0xff] %v574
  %639 = vst [vmem:[#allocation2 + $0x1d8] sm:$0xff] %v575
  %640 = vst [vmem:[#allocation2 + $0x1e0] sm:$0xff] %v576
  %641 = vst [vmem:[#allocation2 + $0x1e8] sm:$0xff] %v577
  %642 = vst [vmem:[#allocation2 + $0x1f0] sm:$0xff] %v578
  %643 = vst [vmem:[#allocation2 + $0x1f8] sm:$0xff] %v579
  // Predicated region
  $region22: #{aspp_forward.12} parent=0 // pred_check
    %p644 = pneg %p18
  $region23: #{aspp_forward.12} parent=0 // pred_check_branch
    %646 = sbr.rel (%p644) target = $region25
  $region24: #{aspp_forward.12} parent=0 // pred_region
    %v647 = vld [vmem:[#allocation2] sm:$0xff]
    %v648 = vld [vmem:[#allocation2 + $0x8] sm:$0xff]
    %v649 = vld [vmem:[#allocation2 + $0x10] sm:$0xff]
    %v650 = vld [vmem:[#allocation2 + $0x18] sm:$0xff]
    %v651 = vld [vmem:[#allocation2 + $0x20] sm:$0xff]
    %v652 = vld [vmem:[#allocation2 + $0x28] sm:$0xff]
    %v653 = vld [vmem:[#allocation2 + $0x30] sm:$0xff]
    %v654 = vld [vmem:[#allocation2 + $0x38] sm:$0xff]
    %v655 = vld [vmem:[#allocation2 + $0x40] sm:$0xff]
    %v656 = vld [vmem:[#allocation2 + $0x48] sm:$0xff]
    %v657 = vld [vmem:[#allocation2 + $0x50] sm:$0xff]
    %v658 = vld [vmem:[#allocation2 + $0x58] sm:$0xff]
    %v659 = vld [vmem:[#allocation2 + $0x60] sm:$0xff]
    %v660 = vld [vmem:[#allocation2 + $0x68] sm:$0xff]
    %v661 = vld [vmem:[#allocation2 + $0x70] sm:$0xff]
    %v662 = vld [vmem:[#allocation2 + $0x78] sm:$0xff]
    %v663 = vld [vmem:[#allocation2 + $0x80] sm:$0xff]
    %v664 = vld [vmem:[#allocation2 + $0x88] sm:$0xff]
    %v665 = vld [vmem:[#allocation2 + $0x90] sm:$0xff]
    %v666 = vld [vmem:[#allocation2 + $0x98] sm:$0xff]
    %v667 = vld [vmem:[#allocation2 + $0xa0] sm:$0xff]
    %v668 = vld [vmem:[#allocation2 + $0xa8] sm:$0xff]
    %v669 = vld [vmem:[#allocation2 + $0xb0] sm:$0xff]
    %v670 = vld [vmem:[#allocation2 + $0xb8] sm:$0xff]
    %v671 = vld [vmem:[#allocation2 + $0xc0] sm:$0xff]
    %v672 = vld [vmem:[#allocation2 + $0xc8] sm:$0xff]
    %v673 = vld [vmem:[#allocation2 + $0xd0] sm:$0xff]
    %v674 = vld [vmem:[#allocation2 + $0xd8] sm:$0xff]
    %v675 = vld [vmem:[#allocation2 + $0xe0] sm:$0xff]
    %v676 = vld [vmem:[#allocation2 + $0xe8] sm:$0xff]
    %v677 = vld [vmem:[#allocation2 + $0xf0] sm:$0xff]
    %v678 = vld [vmem:[#allocation2 + $0xf8] sm:$0xff]
    %v679 = vld [vmem:[#allocation2 + $0x100] sm:$0xff]
    %v680 = vld [vmem:[#allocation2 + $0x108] sm:$0xff]
    %v681 = vld [vmem:[#allocation2 + $0x110] sm:$0xff]
    %v682 = vld [vmem:[#allocation2 + $0x118] sm:$0xff]
    %v683 = vld [vmem:[#allocation2 + $0x120] sm:$0xff]
    %v684 = vld [vmem:[#allocation2 + $0x128] sm:$0xff]
    %v685 = vld [vmem:[#allocation2 + $0x130] sm:$0xff]
    %v686 = vld [vmem:[#allocation2 + $0x138] sm:$0xff]
    %v687 = vld [vmem:[#allocation2 + $0x140] sm:$0xff]
    %v688 = vld [vmem:[#allocation2 + $0x148] sm:$0xff]
    %v689 = vld [vmem:[#allocation2 + $0x150] sm:$0xff]
    %v690 = vld [vmem:[#allocation2 + $0x158] sm:$0xff]
    %v691 = vld [vmem:[#allocation2 + $0x160] sm:$0xff]
    %v692 = vld [vmem:[#allocation2 + $0x168] sm:$0xff]
    %v693 = vld [vmem:[#allocation2 + $0x170] sm:$0xff]
    %v694 = vld [vmem:[#allocation2 + $0x178] sm:$0xff]
    %v695 = vld [vmem:[#allocation2 + $0x180] sm:$0xff]
    %v696 = vld [vmem:[#allocation2 + $0x188] sm:$0xff]
    %v697 = vld [vmem:[#allocation2 + $0x190] sm:$0xff]
    %v698 = vld [vmem:[#allocation2 + $0x198] sm:$0xff]
    %v699 = vld [vmem:[#allocation2 + $0x1a0] sm:$0xff]
    %v700 = vld [vmem:[#allocation2 + $0x1a8] sm:$0xff]
    %v701 = vld [vmem:[#allocation2 + $0x1b0] sm:$0xff]
    %v702 = vld [vmem:[#allocation2 + $0x1b8] sm:$0xff]
    %v703 = vld [vmem:[#allocation2 + $0x1c0] sm:$0xff]
    %v704 = vld [vmem:[#allocation2 + $0x1c8] sm:$0xff]
    %v705 = vld [vmem:[#allocation2 + $0x1d0] sm:$0xff]
    %v706 = vld [vmem:[#allocation2 + $0x1d8] sm:$0xff]
    %v707 = vld [vmem:[#allocation2 + $0x1e0] sm:$0xff]
    %v708 = vld [vmem:[#allocation2 + $0x1e8] sm:$0xff]
    %v709 = vld [vmem:[#allocation2 + $0x1f0] sm:$0xff]
    %v710 = vld [vmem:[#allocation2 + $0x1f8] sm:$0xff]
    %v711 = vld [vmem:[%s2] sm:$0x3]
    %v713 = vlaneseq
    %v714 = vshrl.u32 %v713, 7
    %v715 = vsub.s32 0, %v714
    %v716 = vrot.slane %v711, %v715
    %v717 = vlaneseq
    %v718 = vshrl.u32 %v717, 7
    %v719 = vsub.s32 1, %v718
    %v720 = vrot.slane %v711, %v719
    %v723 = vmul.f32 %v647, %v716
    %v724 = vmul.f32 %v648, %v720
    %v725 = vmul.f32 %v649, %v716
    %v726 = vmul.f32 %v650, %v720
    %v727 = vmul.f32 %v651, %v716
    %v728 = vmul.f32 %v652, %v720
    %v729 = vmul.f32 %v653, %v716
    %v730 = vmul.f32 %v654, %v720
    %v731 = vmul.f32 %v655, %v716
    %v732 = vmul.f32 %v656, %v720
    %v733 = vmul.f32 %v657, %v716
    %v734 = vmul.f32 %v658, %v720
    %v735 = vmul.f32 %v659, %v716
    %v736 = vmul.f32 %v660, %v720
    %v737 = vmul.f32 %v661, %v716
    %v738 = vmul.f32 %v662, %v720
    %v739 = vmul.f32 %v663, %v716
    %v740 = vmul.f32 %v664, %v720
    %v741 = vmul.f32 %v665, %v716
    %v742 = vmul.f32 %v666, %v720
    %v743 = vmul.f32 %v667, %v716
    %v744 = vmul.f32 %v668, %v720
    %v745 = vmul.f32 %v669, %v716
    %v746 = vmul.f32 %v670, %v720
    %v747 = vmul.f32 %v671, %v716
    %v748 = vmul.f32 %v672, %v720
    %v749 = vmul.f32 %v673, %v716
    %v750 = vmul.f32 %v674, %v720
    %v751 = vmul.f32 %v675, %v716
    %v752 = vmul.f32 %v676, %v720
    %v753 = vmul.f32 %v677, %v716
    %v754 = vmul.f32 %v678, %v720
    %v755 = vmul.f32 %v679, %v716
    %v756 = vmul.f32 %v680, %v720
    %v757 = vmul.f32 %v681, %v716
    %v758 = vmul.f32 %v682, %v720
    %v759 = vmul.f32 %v683, %v716
    %v760 = vmul.f32 %v684, %v720
    %v761 = vmul.f32 %v685, %v716
    %v762 = vmul.f32 %v686, %v720
    %v763 = vmul.f32 %v687, %v716
    %v764 = vmul.f32 %v688, %v720
    %v765 = vmul.f32 %v689, %v716
    %v766 = vmul.f32 %v690, %v720
    %v767 = vmul.f32 %v691, %v716
    %v768 = vmul.f32 %v692, %v720
    %v769 = vmul.f32 %v693, %v716
    %v770 = vmul.f32 %v694, %v720
    %v771 = vmul.f32 %v695, %v716
    %v772 = vmul.f32 %v696, %v720
    %v773 = vmul.f32 %v697, %v716
    %v774 = vmul.f32 %v698, %v720
    %v775 = vmul.f32 %v699, %v716
    %v776 = vmul.f32 %v700, %v720
    %v777 = vmul.f32 %v701, %v716
    %v778 = vmul.f32 %v702, %v720
    %v779 = vmul.f32 %v703, %v716
    %v780 = vmul.f32 %v704, %v720
    %v781 = vmul.f32 %v705, %v716
    %v782 = vmul.f32 %v706, %v720
    %v783 = vmul.f32 %v707, %v716
    %v784 = vmul.f32 %v708, %v720
    %v785 = vmul.f32 %v709, %v716
    %v786 = vmul.f32 %v710, %v720
    %v787 = vld [vmem:[%s3] sm:$0x3]
    %v789 = vlaneseq
    %v790 = vshrl.u32 %v789, 7
    %v791 = vsub.s32 0, %v790
    %v792 = vrot.slane %v787, %v791
    %v793 = vlaneseq
    %v794 = vshrl.u32 %v793, 7
    %v795 = vsub.s32 1, %v794
    %v796 = vrot.slane %v787, %v795
    %v799 = vadd.f32 %v723, %v792
    %v800 = vadd.f32 %v724, %v796
    %v801 = vadd.f32 %v725, %v792
    %v802 = vadd.f32 %v726, %v796
    %v803 = vadd.f32 %v727, %v792
    %v804 = vadd.f32 %v728, %v796
    %v805 = vadd.f32 %v729, %v792
    %v806 = vadd.f32 %v730, %v796
    %v807 = vadd.f32 %v731, %v792
    %v808 = vadd.f32 %v732, %v796
    %v809 = vadd.f32 %v733, %v792
    %v810 = vadd.f32 %v734, %v796
    %v811 = vadd.f32 %v735, %v792
    %v812 = vadd.f32 %v736, %v796
    %v813 = vadd.f32 %v737, %v792
    %v814 = vadd.f32 %v738, %v796
    %v815 = vadd.f32 %v739, %v792
    %v816 = vadd.f32 %v740, %v796
    %v817 = vadd.f32 %v741, %v792
    %v818 = vadd.f32 %v742, %v796
    %v819 = vadd.f32 %v743, %v792
    %v820 = vadd.f32 %v744, %v796
    %v821 = vadd.f32 %v745, %v792
    %v822 = vadd.f32 %v746, %v796
    %v823 = vadd.f32 %v747, %v792
    %v824 = vadd.f32 %v748, %v796
    %v825 = vadd.f32 %v749, %v792
    %v826 = vadd.f32 %v750, %v796
    %v827 = vadd.f32 %v751, %v792
    %v828 = vadd.f32 %v752, %v796
    %v829 = vadd.f32 %v753, %v792
    %v830 = vadd.f32 %v754, %v796
    %v831 = vadd.f32 %v755, %v792
    %v832 = vadd.f32 %v756, %v796
    %v833 = vadd.f32 %v757, %v792
    %v834 = vadd.f32 %v758, %v796
    %v835 = vadd.f32 %v759, %v792
    %v836 = vadd.f32 %v760, %v796
    %v837 = vadd.f32 %v761, %v792
    %v838 = vadd.f32 %v762, %v796
    %v839 = vadd.f32 %v763, %v792
    %v840 = vadd.f32 %v764, %v796
    %v841 = vadd.f32 %v765, %v792
    %v842 = vadd.f32 %v766, %v796
    %v843 = vadd.f32 %v767, %v792
    %v844 = vadd.f32 %v768, %v796
    %v845 = vadd.f32 %v769, %v792
    %v846 = vadd.f32 %v770, %v796
    %v847 = vadd.f32 %v771, %v792
    %v848 = vadd.f32 %v772, %v796
    %v849 = vadd.f32 %v773, %v792
    %v850 = vadd.f32 %v774, %v796
    %v851 = vadd.f32 %v775, %v792
    %v852 = vadd.f32 %v776, %v796
    %v853 = vadd.f32 %v777, %v792
    %v854 = vadd.f32 %v778, %v796
    %v855 = vadd.f32 %v779, %v792
    %v856 = vadd.f32 %v780, %v796
    %v857 = vadd.f32 %v781, %v792
    %v858 = vadd.f32 %v782, %v796
    %v859 = vadd.f32 %v783, %v792
    %v860 = vadd.f32 %v784, %v796
    %v861 = vadd.f32 %v785, %v792
    %v862 = vadd.f32 %v786, %v796
    %v863 = vmax.f32 %v799, 0.0
    %v864 = vmax.f32 %v800, 0.0
    %v865 = vmax.f32 %v801, 0.0
    %v866 = vmax.f32 %v802, 0.0
    %v867 = vmax.f32 %v803, 0.0
    %v868 = vmax.f32 %v804, 0.0
    %v869 = vmax.f32 %v805, 0.0
    %v870 = vmax.f32 %v806, 0.0
    %v871 = vmax.f32 %v807, 0.0
    %v872 = vmax.f32 %v808, 0.0
    %v873 = vmax.f32 %v809, 0.0
    %v874 = vmax.f32 %v810, 0.0
    %v875 = vmax.f32 %v811, 0.0
    %v876 = vmax.f32 %v812, 0.0
    %v877 = vmax.f32 %v813, 0.0
    %v878 = vmax.f32 %v814, 0.0
    %v879 = vmax.f32 %v815, 0.0
    %v880 = vmax.f32 %v816, 0.0
    %v881 = vmax.f32 %v817, 0.0
    %v882 = vmax.f32 %v818, 0.0
    %v883 = vmax.f32 %v819, 0.0
    %v884 = vmax.f32 %v820, 0.0
    %v885 = vmax.f32 %v821, 0.0
    %v886 = vmax.f32 %v822, 0.0
    %v887 = vmax.f32 %v823, 0.0
    %v888 = vmax.f32 %v824, 0.0
    %v889 = vmax.f32 %v825, 0.0
    %v890 = vmax.f32 %v826, 0.0
    %v891 = vmax.f32 %v827, 0.0
    %v892 = vmax.f32 %v828, 0.0
    %v893 = vmax.f32 %v829, 0.0
    %v894 = vmax.f32 %v830, 0.0
    %v895 = vmax.f32 %v831, 0.0
    %v896 = vmax.f32 %v832, 0.0
    %v897 = vmax.f32 %v833, 0.0
    %v898 = vmax.f32 %v834, 0.0
    %v899 = vmax.f32 %v835, 0.0
    %v900 = vmax.f32 %v836, 0.0
    %v901 = vmax.f32 %v837, 0.0
    %v902 = vmax.f32 %v838, 0.0
    %v903 = vmax.f32 %v839, 0.0
    %v904 = vmax.f32 %v840, 0.0
    %v905 = vmax.f32 %v841, 0.0
    %v906 = vmax.f32 %v842, 0.0
    %v907 = vmax.f32 %v843, 0.0
    %v908 = vmax.f32 %v844, 0.0
    %v909 = vmax.f32 %v845, 0.0
    %v910 = vmax.f32 %v846, 0.0
    %v911 = vmax.f32 %v847, 0.0
    %v912 = vmax.f32 %v848, 0.0
    %v913 = vmax.f32 %v849, 0.0
    %v914 = vmax.f32 %v850, 0.0
    %v915 = vmax.f32 %v851, 0.0
    %v916 = vmax.f32 %v852, 0.0
    %v917 = vmax.f32 %v853, 0.0
    %v918 = vmax.f32 %v854, 0.0
    %v919 = vmax.f32 %v855, 0.0
    %v920 = vmax.f32 %v856, 0.0
    %v921 = vmax.f32 %v857, 0.0
    %v922 = vmax.f32 %v858, 0.0
    %v923 = vmax.f32 %v859, 0.0
    %v924 = vmax.f32 %v860, 0.0
    %v925 = vmax.f32 %v861, 0.0
    %v926 = vmax.f32 %v862, 0.0
    %v927 = vpack.c.bf16 %v865, %v863
    %v928 = vpack.c.bf16 %v866, %v864
    %v929 = vpack.c.bf16 %v869, %v867
    %v930 = vpack.c.bf16 %v870, %v868
    %v931 = vpack.c.bf16 %v873, %v871
    %v932 = vpack.c.bf16 %v874, %v872
    %v933 = vpack.c.bf16 %v877, %v875
    %v934 = vpack.c.bf16 %v878, %v876
    %v935 = vpack.c.bf16 %v881, %v879
    %v936 = vpack.c.bf16 %v882, %v880
    %v937 = vpack.c.bf16 %v885, %v883
    %v938 = vpack.c.bf16 %v886, %v884
    %v939 = vpack.c.bf16 %v889, %v887
    %v940 = vpack.c.bf16 %v890, %v888
    %v941 = vpack.c.bf16 %v893, %v891
    %v942 = vpack.c.bf16 %v894, %v892
    %v943 = vpack.c.bf16 %v897, %v895
    %v944 = vpack.c.bf16 %v898, %v896
    %v945 = vpack.c.bf16 %v901, %v899
    %v946 = vpack.c.bf16 %v902, %v900
    %v947 = vpack.c.bf16 %v905, %v903
    %v948 = vpack.c.bf16 %v906, %v904
    %v949 = vpack.c.bf16 %v909, %v907
    %v950 = vpack.c.bf16 %v910, %v908
    %v951 = vpack.c.bf16 %v913, %v911
    %v952 = vpack.c.bf16 %v914, %v912
    %v953 = vpack.c.bf16 %v917, %v915
    %v954 = vpack.c.bf16 %v918, %v916
    %v955 = vpack.c.bf16 %v921, %v919
    %v956 = vpack.c.bf16 %v922, %v920
    %v957 = vpack.c.bf16 %v925, %v923
    %v958 = vpack.c.bf16 %v926, %v924
    %v991 = vunpack.c.l.b16 %v927
    %v992 = vunpack.c.l.b16 %v928
    %v993 = vunpack.c.h.b16 %v927
    %v994 = vunpack.c.h.b16 %v928
    %v995 = vunpack.c.l.b16 %v929
    %v996 = vunpack.c.l.b16 %v930
    %v997 = vunpack.c.h.b16 %v929
    %v998 = vunpack.c.h.b16 %v930
    %v999 = vunpack.c.l.b16 %v931
    %v1000 = vunpack.c.l.b16 %v932
    %v1001 = vunpack.c.h.b16 %v931
    %v1002 = vunpack.c.h.b16 %v932
    %v1003 = vunpack.c.l.b16 %v933
    %v1004 = vunpack.c.l.b16 %v934
    %v1005 = vunpack.c.h.b16 %v933
    %v1006 = vunpack.c.h.b16 %v934
    %v1007 = vunpack.c.l.b16 %v935
    %v1008 = vunpack.c.l.b16 %v936
    %v1009 = vunpack.c.h.b16 %v935
    %v1010 = vunpack.c.h.b16 %v936
    %v1011 = vunpack.c.l.b16 %v937
    %v1012 = vunpack.c.l.b16 %v938
    %v1013 = vunpack.c.h.b16 %v937
    %v1014 = vunpack.c.h.b16 %v938
    %v1015 = vunpack.c.l.b16 %v939
    %v1016 = vunpack.c.l.b16 %v940
    %v1017 = vunpack.c.h.b16 %v939
    %v1018 = vunpack.c.h.b16 %v940
    %v1019 = vunpack.c.l.b16 %v941
    %v1020 = vunpack.c.l.b16 %v942
    %v1021 = vunpack.c.h.b16 %v941
    %v1022 = vunpack.c.h.b16 %v942
    %v1023 = vunpack.c.l.b16 %v943
    %v1024 = vunpack.c.l.b16 %v944
    %v1025 = vunpack.c.h.b16 %v943
    %v1026 = vunpack.c.h.b16 %v944
    %v1027 = vunpack.c.l.b16 %v945
    %v1028 = vunpack.c.l.b16 %v946
    %v1029 = vunpack.c.h.b16 %v945
    %v1030 = vunpack.c.h.b16 %v946
    %v1031 = vunpack.c.l.b16 %v947
    %v1032 = vunpack.c.l.b16 %v948
    %v1033 = vunpack.c.h.b16 %v947
    %v1034 = vunpack.c.h.b16 %v948
    %v1035 = vunpack.c.l.b16 %v949
    %v1036 = vunpack.c.l.b16 %v950
    %v1037 = vunpack.c.h.b16 %v949
    %v1038 = vunpack.c.h.b16 %v950
    %v1039 = vunpack.c.l.b16 %v951
    %v1040 = vunpack.c.l.b16 %v952
    %v1041 = vunpack.c.h.b16 %v951
    %v1042 = vunpack.c.h.b16 %v952
    %v1043 = vunpack.c.l.b16 %v953
    %v1044 = vunpack.c.l.b16 %v954
    %v1045 = vunpack.c.h.b16 %v953
    %v1046 = vunpack.c.h.b16 %v954
    %v1047 = vunpack.c.l.b16 %v955
    %v1048 = vunpack.c.l.b16 %v956
    %v1049 = vunpack.c.h.b16 %v955
    %v1050 = vunpack.c.h.b16 %v956
    %v1051 = vunpack.c.l.b16 %v957
    %v1052 = vunpack.c.l.b16 %v958
    %v1053 = vunpack.c.h.b16 %v957
    %v1054 = vunpack.c.h.b16 %v958
    %v1055 = vpack.c.b16 %v992, %v991
    %v1056 = vpack.c.b16 %v994, %v993
    %v1057 = vpack.c.b16 %v996, %v995
    %v1058 = vpack.c.b16 %v998, %v997
    %v1059 = vpack.c.b16 %v1000, %v999
    %v1060 = vpack.c.b16 %v1002, %v1001
    %v1061 = vpack.c.b16 %v1004, %v1003
    %v1062 = vpack.c.b16 %v1006, %v1005
    %v1063 = vpack.c.b16 %v1008, %v1007
    %v1064 = vpack.c.b16 %v1010, %v1009
    %v1065 = vpack.c.b16 %v1012, %v1011
    %v1066 = vpack.c.b16 %v1014, %v1013
    %v1067 = vpack.c.b16 %v1016, %v1015
    %v1068 = vpack.c.b16 %v1018, %v1017
    %v1069 = vpack.c.b16 %v1020, %v1019
    %v1070 = vpack.c.b16 %v1022, %v1021
    %v1071 = vpack.c.b16 %v1024, %v1023
    %v1072 = vpack.c.b16 %v1026, %v1025
    %v1073 = vpack.c.b16 %v1028, %v1027
    %v1074 = vpack.c.b16 %v1030, %v1029
    %v1075 = vpack.c.b16 %v1032, %v1031
    %v1076 = vpack.c.b16 %v1034, %v1033
    %v1077 = vpack.c.b16 %v1036, %v1035
    %v1078 = vpack.c.b16 %v1038, %v1037
    %v1079 = vpack.c.b16 %v1040, %v1039
    %v1080 = vpack.c.b16 %v1042, %v1041
    %v1081 = vpack.c.b16 %v1044, %v1043
    %v1082 = vpack.c.b16 %v1046, %v1045
    %v1083 = vpack.c.b16 %v1048, %v1047
    %v1084 = vpack.c.b16 %v1050, %v1049
    %v1085 = vpack.c.b16 %v1052, %v1051
    %v1086 = vpack.c.b16 %v1054, %v1053
    %1119 = vst [vmem:[%s4] sm:$0xff] %v1055
    %1120 = vst [vmem:[%s4 + $0x8] sm:$0xff] %v1056
    %1121 = vst [vmem:[%s4 + $0x10] sm:$0xff] %v1057
    %1122 = vst [vmem:[%s4 + $0x18] sm:$0xff] %v1058
    %1123 = vst [vmem:[%s4 + $0x20] sm:$0xff] %v1059
    %1124 = vst [vmem:[%s4 + $0x28] sm:$0xff] %v1060
    %1125 = vst [vmem:[%s4 + $0x30] sm:$0xff] %v1061
    %1126 = vst [vmem:[%s4 + $0x38] sm:$0xff] %v1062
    %1127 = vst [vmem:[%s4 + $0x40] sm:$0xff] %v1063
    %1128 = vst [vmem:[%s4 + $0x48] sm:$0xff] %v1064
    %1129 = vst [vmem:[%s4 + $0x50] sm:$0xff] %v1065
    %1130 = vst [vmem:[%s4 + $0x58] sm:$0xff] %v1066
    %1131 = vst [vmem:[%s4 + $0x60] sm:$0xff] %v1067
    %1132 = vst [vmem:[%s4 + $0x68] sm:$0xff] %v1068
    %1133 = vst [vmem:[%s4 + $0x70] sm:$0xff] %v1069
    %1134 = vst [vmem:[%s4 + $0x78] sm:$0xff] %v1070
    %1135 = vst [vmem:[%s4 + $0x80] sm:$0xff] %v1071
    %1136 = vst [vmem:[%s4 + $0x88] sm:$0xff] %v1072
    %1137 = vst [vmem:[%s4 + $0x90] sm:$0xff] %v1073
    %1138 = vst [vmem:[%s4 + $0x98] sm:$0xff] %v1074
    %1139 = vst [vmem:[%s4 + $0xa0] sm:$0xff] %v1075
    %1140 = vst [vmem:[%s4 + $0xa8] sm:$0xff] %v1076
    %1141 = vst [vmem:[%s4 + $0xb0] sm:$0xff] %v1077
    %1142 = vst [vmem:[%s4 + $0xb8] sm:$0xff] %v1078
    %1143 = vst [vmem:[%s4 + $0xc0] sm:$0xff] %v1079
    %1144 = vst [vmem:[%s4 + $0xc8] sm:$0xff] %v1080
    %1145 = vst [vmem:[%s4 + $0xd0] sm:$0xff] %v1081
    %1146 = vst [vmem:[%s4 + $0xd8] sm:$0xff] %v1082
    %1147 = vst [vmem:[%s4 + $0xe0] sm:$0xff] %v1083
    %1148 = vst [vmem:[%s4 + $0xe8] sm:$0xff] %v1084
    %1149 = vst [vmem:[%s4 + $0xf0] sm:$0xff] %v1085
    %1150 = vst [vmem:[%s4 + $0xf8] sm:$0xff] %v1086
  $region25: #{aspp_forward.12} parent=0 // pred_fallthru
    _
  // Predicated region
  $region26: #{aspp_forward.12} parent=0 // pred_check
    _
  $region27: #{aspp_forward.12} parent=0 // pred_check_branch
    %1152 = sbr.rel (0) target = $region29
  $region28: #{aspp_forward.12} parent=0 // pred_region
    _
  $region29: #{aspp_forward.12} parent=0 // pred_fallthru
    _
  // Predicated region
  $region30: #{aspp_forward.12} parent=0 // pred_check
    _
  $region31: #{aspp_forward.12} parent=0 // pred_check_branch
    %1154 = sbr.rel (0) target = $region33
  $region32: #{aspp_forward.12} parent=0 // pred_region
    _
  $region33: #{aspp_forward.12} parent=0 // pred_fallthru
    _

// kernel: aspp_forward.13
$region0: #{aspp_forward.13}
  #allocation0 [shape = 'u32[]', space=smem, size = 0x4, offset = 0x4, fixed_abs, tag = 'smem constant byte address 0x4 - core index']
  #allocation1 [shape = 'u32[144,128]{1,0:T(1,128)}', space=vmem, size = 0x12000, scoped, tag = 'internal scratch']
  %s0 = inlined_call_operand.vmem [shape: bf16[512,256], index: 0, kind: input, shape index: {}]
  %s1 = inlined_call_operand.vmem [shape: bf16[512,256], index: 1, kind: input, shape index: {}]
  %s2 = inlined_call_operand.vmem [shape: bf16[512,256], index: 2, kind: input, shape index: {}]
  %s3 = inlined_call_operand.vmem [shape: bf16[512,256], index: 3, kind: input, shape index: {}]
  %s4 = inlined_call_operand.vmem [shape: bf16[512,256], index: 4, kind: input, shape index: {}]
  %s5 = inlined_call_operand.vmem [shape: bf16[256,256], index: 5, kind: input, shape index: {}]
  %s6 = inlined_call_operand.vmem [shape: bf16[256,256], index: 6, kind: input, shape index: {}]
  %s7 = inlined_call_operand.vmem [shape: bf16[256,256], index: 7, kind: input, shape index: {}]
  %s8 = inlined_call_operand.vmem [shape: bf16[256,256], index: 8, kind: input, shape index: {}]
  %s9 = inlined_call_operand.vmem [shape: bf16[256,256], index: 9, kind: input, shape index: {}]
  %s10 = inlined_call_operand.vmem [shape: f32[1,256], index: 10, kind: input, shape index: {}]
  %s11 = inlined_call_operand.vmem [shape: f32[1,256], index: 11, kind: input, shape index: {}]
  %s12 = inlined_call_operand.hbm [shape: f32[512,256], index: 12, kind: output, shape index: {}]
  %s13 = sld [smem:[#allocation0]]
  $region81: #{aspp_forward.13} parent=0
    _
  %s15 = ssub.s32 1, %s13
  %s16 = scalar_select 0, %s15, %s13
  $region1: #{aspp_forward.13} parent=0
    #allocation2 [shape = 'u8[524288]{0}', space=vmem, size = 0x80000, scoped, tag = 'output window, operand 0']
    #allocation3 [shape = 's32[2]{0}', space=sflag, size = 0x8, scoped, tag = 'scoped memory for aspp_forward.13']
    %17 = vsyncpa [#allocation3], 0
    %s18 = scalar_lea.sflag [#allocation3], 1
    %19 = vsyncpa %s18, 0
    loop: start=0, step=1, limit=4
    $region2: #{aspp_forward.13} parent=1 // loop_pre_header
      _
    $region3: #{aspp_forward.13} parent=1 // loop_header
      %s21 = sphi 0, %s25
      %p22 = scmp.ge.s32.totalorder %s21, 4
      %s31 = sphi 0, %s33
      %s34 = sphi 0, %s31
      %s35 = sphi 0, %s34
      %s51 = sphi 0, %s35
      %s57 = sphi 0, %s59
      %s60 = sphi 0, %s57
      %s61 = sphi 0, %s60
      %s77 = sphi 0, %s61
      %s83 = sphi 0, %s85
      %s86 = sphi 0, %s83
      %s87 = sphi 0, %s86
      %s103 = sphi 0, %s87
      %s109 = sphi 0, %s111
      %s112 = sphi 0, %s109
      %s113 = sphi 0, %s112
      %s129 = sphi 0, %s113
      %s135 = sphi 0, %s137
      %s138 = sphi 0, %s135
      %s139 = sphi 0, %s138
      %s155 = sphi 0, %s139
      %s159 = sphi 0, %s159
      %s161 = sphi 0, %s159
      %s162 = sphi 0, %s161
      %s176 = sphi 0, %s162
      %s180 = sphi 0, %s180
      %s182 = sphi 0, %s180
      %s183 = sphi 0, %s182
      %s197 = sphi 0, %s183
      %s201 = sphi 0, %s201
      %s203 = sphi 0, %s201
      %s204 = sphi 0, %s203
      %s218 = sphi 0, %s204
      %s222 = sphi 0, %s222
      %s224 = sphi 0, %s222
      %s225 = sphi 0, %s224
      %s239 = sphi 0, %s225
      %s243 = sphi 0, %s243
      %s245 = sphi 0, %s243
      %s246 = sphi 0, %s245
      %s260 = sphi 0, %s246
      %s264 = sphi 0, %s264
      %s266 = sphi 0, %s264
      %s267 = sphi 0, %s266
      %s281 = sphi 0, %s267
      %s285 = sphi 0, %s285
      %s287 = sphi 0, %s285
      %s288 = sphi 0, %s287
      %s302 = sphi 0, %s288
      %s308 = sphi 0, %s310
      %s311 = sphi 0, %s308
      %s312 = sphi 0, %s311
      %s328 = sphi 0, %s312
    $region4: #{aspp_forward.13} parent=1 // loop_header_branch
      %24 = sbr.rel (%p22) target = $region8
    $region5: #{aspp_forward.13} parent=1 // loop_body
      %s26 = ssub.s32 %s21, 1
      %s27 = ssub.s32 %s21, 2
      %s28 = sadd.s32 %s21, 1
      %s29 = ssub.s32 %s21, %s28
      %p30 = scmp.eq.s32.totalorder %s29, 0
      %s32 = sadd.s32 %s31, 1
      %s33 = scalar_select %p30, %s31, %s32
      %p36 = pneg %p30
      %p37 = scmp.eq.s32.totalorder %s21, 1
      %p38 = por %p36, %p37
      %p39 = scmp.ne.s32.totalorder %s31, %s34
      %p40 = scmp.eq.s32.totalorder %s21, 0
      %p41 = por %p39, %p40
      %p42 = scmp.ne.s32.totalorder %s31, %s34
      %p43 = scmp.eq.s32.totalorder %s26, 1
      %p44 = por %p42, %p43
      %p45 = scmp.ne.s32.totalorder %s34, %s35
      %p46 = scmp.eq.s32.totalorder %s26, 0
      %p47 = por %p45, %p46
      %p48 = scmp.ne.s32.totalorder %s34, %s35
      %p49 = scmp.eq.s32.totalorder %s27, 1
      %p50 = por %p48, %p49
      %p52 = scmp.ne.s32.totalorder %s35, %s51
      %p53 = scmp.eq.s32.totalorder %s27, 0
      %p54 = por %p52, %p53
      %s55 = ssub.s32 %s21, %s28
      %p56 = scmp.eq.s32.totalorder %s55, 0
      %s58 = sadd.s32 %s57, 1
      %s59 = scalar_select %p56, %s57, %s58
      %p62 = pneg %p56
      %p63 = scmp.eq.s32.totalorder %s21, 1
      %p64 = por %p62, %p63
      %p65 = scmp.ne.s32.totalorder %s57, %s60
      %p66 = scmp.eq.s32.totalorder %s21, 0
      %p67 = por %p65, %p66
      %p68 = scmp.ne.s32.totalorder %s57, %s60
      %p69 = scmp.eq.s32.totalorder %s26, 1
      %p70 = por %p68, %p69
      %p71 = scmp.ne.s32.totalorder %s60, %s61
      %p72 = scmp.eq.s32.totalorder %s26, 0
      %p73 = por %p71, %p72
      %p74 = scmp.ne.s32.totalorder %s60, %s61
      %p75 = scmp.eq.s32.totalorder %s27, 1
      %p76 = por %p74, %p75
      %p78 = scmp.ne.s32.totalorder %s61, %s77
      %p79 = scmp.eq.s32.totalorder %s27, 0
      %p80 = por %p78, %p79
      %s81 = ssub.s32 %s21, %s28
      %p82 = scmp.eq.s32.totalorder %s81, 0
      %s84 = sadd.s32 %s83, 1
      %s85 = scalar_select %p82, %s83, %s84
      %p88 = pneg %p82
      %p89 = scmp.eq.s32.totalorder %s21, 1
      %p90 = por %p88, %p89
      %p91 = scmp.ne.s32.totalorder %s83, %s86
      %p92 = scmp.eq.s32.totalorder %s21, 0
      %p93 = por %p91, %p92
      %p94 = scmp.ne.s32.totalorder %s83, %s86
      %p95 = scmp.eq.s32.totalorder %s26, 1
      %p96 = por %p94, %p95
      %p97 = scmp.ne.s32.totalorder %s86, %s87
      %p98 = scmp.eq.s32.totalorder %s26, 0
      %p99 = por %p97, %p98
      %p100 = scmp.ne.s32.totalorder %s86, %s87
      %p101 = scmp.eq.s32.totalorder %s27, 1
      %p102 = por %p100, %p101
      %p104 = scmp.ne.s32.totalorder %s87, %s103
      %p105 = scmp.eq.s32.totalorder %s27, 0
      %p106 = por %p104, %p105
      %s107 = ssub.s32 %s21, %s28
      %p108 = scmp.eq.s32.totalorder %s107, 0
      %s110 = sadd.s32 %s109, 1
      %s111 = scalar_select %p108, %s109, %s110
      %p114 = pneg %p108
      %p115 = scmp.eq.s32.totalorder %s21, 1
      %p116 = por %p114, %p115
      %p117 = scmp.ne.s32.totalorder %s109, %s112
      %p118 = scmp.eq.s32.totalorder %s21, 0
      %p119 = por %p117, %p118
      %p120 = scmp.ne.s32.totalorder %s109, %s112
      %p121 = scmp.eq.s32.totalorder %s26, 1
      %p122 = por %p120, %p121
      %p123 = scmp.ne.s32.totalorder %s112, %s113
      %p124 = scmp.eq.s32.totalorder %s26, 0
      %p125 = por %p123, %p124
      %p126 = scmp.ne.s32.totalorder %s112, %s113
      %p127 = scmp.eq.s32.totalorder %s27, 1
      %p128 = por %p126, %p127
      %p130 = scmp.ne.s32.totalorder %s113, %s129
      %p131 = scmp.eq.s32.totalorder %s27, 0
      %p132 = por %p130, %p131
      %s133 = ssub.s32 %s21, %s28
      %p134 = scmp.eq.s32.totalorder %s133, 0
      %s136 = sadd.s32 %s135, 1
      %s137 = scalar_select %p134, %s135, %s136
      %p140 = pneg %p134
      %p141 = scmp.eq.s32.totalorder %s21, 1
      %p142 = por %p140, %p141
      %p143 = scmp.ne.s32.totalorder %s135, %s138
      %p144 = scmp.eq.s32.totalorder %s21, 0
      %p145 = por %p143, %p144
      %p146 = scmp.ne.s32.totalorder %s135, %s138
      %p147 = scmp.eq.s32.totalorder %s26, 1
      %p148 = por %p146, %p147
      %p149 = scmp.ne.s32.totalorder %s138, %s139
      %p150 = scmp.eq.s32.totalorder %s26, 0
      %p151 = por %p149, %p150
      %p152 = scmp.ne.s32.totalorder %s138, %s139
      %p153 = scmp.eq.s32.totalorder %s27, 1
      %p154 = por %p152, %p153
      %p156 = scmp.ne.s32.totalorder %s139, %s155
      %p157 = scmp.eq.s32.totalorder %s27, 0
      %p158 = por %p156, %p157
      %s160 = sadd.s32 %s159, 1
      %p163 = scmp.eq.s32.totalorder %s21, 1
      %p164 = scmp.ne.s32.totalorder %s159, %s161
      %p165 = scmp.eq.s32.totalorder %s21, 0
      %p166 = por %p164, %p165
      %p167 = scmp.ne.s32.totalorder %s159, %s161
      %p168 = scmp.eq.s32.totalorder %s26, 1
      %p169 = por %p167, %p168
      %p170 = scmp.ne.s32.totalorder %s161, %s162
      %p171 = scmp.eq.s32.totalorder %s26, 0
      %p172 = por %p170, %p171
      %p173 = scmp.ne.s32.totalorder %s161, %s162
      %p174 = scmp.eq.s32.totalorder %s27, 1
      %p175 = por %p173, %p174
      %p177 = scmp.ne.s32.totalorder %s162, %s176
      %p178 = scmp.eq.s32.totalorder %s27, 0
      %p179 = por %p177, %p178
      %s181 = sadd.s32 %s180, 1
      %p184 = scmp.eq.s32.totalorder %s21, 1
      %p185 = scmp.ne.s32.totalorder %s180, %s182
      %p186 = scmp.eq.s32.totalorder %s21, 0
      %p187 = por %p185, %p186
      %p188 = scmp.ne.s32.totalorder %s180, %s182
      %p189 = scmp.eq.s32.totalorder %s26, 1
      %p190 = por %p188, %p189
      %p191 = scmp.ne.s32.totalorder %s182, %s183
      %p192 = scmp.eq.s32.totalorder %s26, 0
      %p193 = por %p191, %p192
      %p194 = scmp.ne.s32.totalorder %s182, %s183
      %p195 = scmp.eq.s32.totalorder %s27, 1
      %p196 = por %p194, %p195
      %p198 = scmp.ne.s32.totalorder %s183, %s197
      %p199 = scmp.eq.s32.totalorder %s27, 0
      %p200 = por %p198, %p199
      %s202 = sadd.s32 %s201, 1
      %p205 = scmp.eq.s32.totalorder %s21, 1
      %p206 = scmp.ne.s32.totalorder %s201, %s203
      %p207 = scmp.eq.s32.totalorder %s21, 0
      %p208 = por %p206, %p207
      %p209 = scmp.ne.s32.totalorder %s201, %s203
      %p210 = scmp.eq.s32.totalorder %s26, 1
      %p211 = por %p209, %p210
      %p212 = scmp.ne.s32.totalorder %s203, %s204
      %p213 = scmp.eq.s32.totalorder %s26, 0
      %p214 = por %p212, %p213
      %p215 = scmp.ne.s32.totalorder %s203, %s204
      %p216 = scmp.eq.s32.totalorder %s27, 1
      %p217 = por %p215, %p216
      %p219 = scmp.ne.s32.totalorder %s204, %s218
      %p220 = scmp.eq.s32.totalorder %s27, 0
      %p221 = por %p219, %p220
      %s223 = sadd.s32 %s222, 1
      %p226 = scmp.eq.s32.totalorder %s21, 1
      %p227 = scmp.ne.s32.totalorder %s222, %s224
      %p228 = scmp.eq.s32.totalorder %s21, 0
      %p229 = por %p227, %p228
      %p230 = scmp.ne.s32.totalorder %s222, %s224
      %p231 = scmp.eq.s32.totalorder %s26, 1
      %p232 = por %p230, %p231
      %p233 = scmp.ne.s32.totalorder %s224, %s225
      %p234 = scmp.eq.s32.totalorder %s26, 0
      %p235 = por %p233, %p234
      %p236 = scmp.ne.s32.totalorder %s224, %s225
      %p237 = scmp.eq.s32.totalorder %s27, 1
      %p238 = por %p236, %p237
      %p240 = scmp.ne.s32.totalorder %s225, %s239
      %p241 = scmp.eq.s32.totalorder %s27, 0
      %p242 = por %p240, %p241
      %s244 = sadd.s32 %s243, 1
      %p247 = scmp.eq.s32.totalorder %s21, 1
      %p248 = scmp.ne.s32.totalorder %s243, %s245
      %p249 = scmp.eq.s32.totalorder %s21, 0
      %p250 = por %p248, %p249
      %p251 = scmp.ne.s32.totalorder %s243, %s245
      %p252 = scmp.eq.s32.totalorder %s26, 1
      %p253 = por %p251, %p252
      %p254 = scmp.ne.s32.totalorder %s245, %s246
      %p255 = scmp.eq.s32.totalorder %s26, 0
      %p256 = por %p254, %p255
      %p257 = scmp.ne.s32.totalorder %s245, %s246
      %p258 = scmp.eq.s32.totalorder %s27, 1
      %p259 = por %p257, %p258
      %p261 = scmp.ne.s32.totalorder %s246, %s260
      %p262 = scmp.eq.s32.totalorder %s27, 0
      %p263 = por %p261, %p262
      %s265 = sadd.s32 %s264, 1
      %p268 = scmp.eq.s32.totalorder %s21, 1
      %p269 = scmp.ne.s32.totalorder %s264, %s266
      %p270 = scmp.eq.s32.totalorder %s21, 0
      %p271 = por %p269, %p270
      %p272 = scmp.ne.s32.totalorder %s264, %s266
      %p273 = scmp.eq.s32.totalorder %s26, 1
      %p274 = por %p272, %p273
      %p275 = scmp.ne.s32.totalorder %s266, %s267
      %p276 = scmp.eq.s32.totalorder %s26, 0
      %p277 = por %p275, %p276
      %p278 = scmp.ne.s32.totalorder %s266, %s267
      %p279 = scmp.eq.s32.totalorder %s27, 1
      %p280 = por %p278, %p279
      %p282 = scmp.ne.s32.totalorder %s267, %s281
      %p283 = scmp.eq.s32.totalorder %s27, 0
      %p284 = por %p282, %p283
      %s286 = sadd.s32 %s285, 1
      %p289 = scmp.eq.s32.totalorder %s21, 1
      %p290 = scmp.ne.s32.totalorder %s285, %s287
      %p291 = scmp.eq.s32.totalorder %s21, 0
      %p292 = por %p290, %p291
      %p293 = scmp.ne.s32.totalorder %s285, %s287
      %p294 = scmp.eq.s32.totalorder %s26, 1
      %p295 = por %p293, %p294
      %p296 = scmp.ne.s32.totalorder %s287, %s288
      %p297 = scmp.eq.s32.totalorder %s26, 0
      %p298 = por %p296, %p297
      %p299 = scmp.ne.s32.totalorder %s287, %s288
      %p300 = scmp.eq.s32.totalorder %s27, 1
      %p301 = por %p299, %p300
      %p303 = scmp.ne.s32.totalorder %s288, %s302
      %p304 = scmp.eq.s32.totalorder %s27, 0
      %p305 = por %p303, %p304
      %s306 = ssub.s32 %s21, %s28
      %p307 = scmp.eq.s32.totalorder %s306, 0
      %s309 = sadd.s32 %s308, 1
      %s310 = scalar_select %p307, %s308, %s309
      %p313 = pneg %p307
      %p314 = scmp.eq.s32.totalorder %s21, 1
      %p315 = por %p313, %p314
      %p316 = scmp.ne.s32.totalorder %s308, %s311
      %p317 = scmp.eq.s32.totalorder %s21, 0
      %p318 = por %p316, %p317
      %p319 = scmp.ne.s32.totalorder %s308, %s311
      %p320 = scmp.eq.s32.totalorder %s26, 1
      %p321 = por %p319, %p320
      %p322 = scmp.ne.s32.totalorder %s311, %s312
      %p323 = scmp.eq.s32.totalorder %s26, 0
      %p324 = por %p322, %p323
      %p325 = scmp.ne.s32.totalorder %s311, %s312
      %p326 = scmp.eq.s32.totalorder %s27, 1
      %p327 = por %p325, %p326
      %p329 = scmp.ne.s32.totalorder %s312, %s328
      %p330 = scmp.eq.s32.totalorder %s27, 0
      %p331 = por %p329, %p330
      %p332 = scmp.le.s32.totalorder 1, %s21
      %p333 = scmp.lt.s32.totalorder %s21, 3
      %p334 = pnand %p332, %p333
      %p335 = pneg %p334
      // Predicated region
      $region9: #{aspp_forward.13} parent=5 // pred_check
        _
      $region10: #{aspp_forward.13} parent=5 // pred_check_branch
        %337 = sbr.rel (%p334) target = $region12
      $region11: #{aspp_forward.13} parent=5 // pred_region
        %s338 = ssub.s32 %s21, 1
        // Predicated region
        $region13: #{aspp_forward.13} parent=11 // pred_check
          %p339 = pneg %p172
        $region14: #{aspp_forward.13} parent=11 // pred_check_branch
          %341 = sbr.rel (%p339) target = $region16
        $region15: #{aspp_forward.13} parent=11 // pred_region
          _
        $region16: #{aspp_forward.13} parent=11 // pred_fallthru
          _
        // Predicated region
        $region17: #{aspp_forward.13} parent=11 // pred_check
          %p342 = pneg %p193
        $region18: #{aspp_forward.13} parent=11 // pred_check_branch
          %344 = sbr.rel (%p342) target = $region20
        $region19: #{aspp_forward.13} parent=11 // pred_region
          _
        $region20: #{aspp_forward.13} parent=11 // pred_fallthru
          _
        // Predicated region
        $region21: #{aspp_forward.13} parent=11 // pred_check
          %p345 = pneg %p214
        $region22: #{aspp_forward.13} parent=11 // pred_check_branch
          %347 = sbr.rel (%p345) target = $region24
        $region23: #{aspp_forward.13} parent=11 // pred_region
          _
        $region24: #{aspp_forward.13} parent=11 // pred_fallthru
          _
        // Predicated region
        $region25: #{aspp_forward.13} parent=11 // pred_check
          %p348 = pneg %p235
        $region26: #{aspp_forward.13} parent=11 // pred_check_branch
          %350 = sbr.rel (%p348) target = $region28
        $region27: #{aspp_forward.13} parent=11 // pred_region
          _
        $region28: #{aspp_forward.13} parent=11 // pred_fallthru
          _
        // Predicated region
        $region29: #{aspp_forward.13} parent=11 // pred_check
          %p351 = pneg %p256
        $region30: #{aspp_forward.13} parent=11 // pred_check_branch
          %353 = sbr.rel (%p351) target = $region32
        $region31: #{aspp_forward.13} parent=11 // pred_region
          _
        $region32: #{aspp_forward.13} parent=11 // pred_fallthru
          _
        // Predicated region
        $region33: #{aspp_forward.13} parent=11 // pred_check
          %p354 = pneg %p277
        $region34: #{aspp_forward.13} parent=11 // pred_check_branch
          %356 = sbr.rel (%p354) target = $region36
        $region35: #{aspp_forward.13} parent=11 // pred_region
          _
        $region36: #{aspp_forward.13} parent=11 // pred_fallthru
          _
        // Predicated region
        $region37: #{aspp_forward.13} parent=11 // pred_check
          %p357 = pneg %p298
        $region38: #{aspp_forward.13} parent=11 // pred_check_branch
          %359 = sbr.rel (%p357) target = $region40
        $region39: #{aspp_forward.13} parent=11 // pred_region
          _
        $region40: #{aspp_forward.13} parent=11 // pred_fallthru
          _
      $region12: #{aspp_forward.13} parent=5 // pred_fallthru
        _
      %p360 = scmp.lt.s32.totalorder %s21, 2
      // Predicated region
      $region41: #{aspp_forward.13} parent=5 // pred_check
        %p361 = pneg %p360
      $region42: #{aspp_forward.13} parent=5 // pred_check_branch
        %363 = sbr.rel (%p361) target = $region44
      $region43: #{aspp_forward.13} parent=5 // pred_region
        // Predicated region
        $region45: #{aspp_forward.13} parent=43 // pred_check
          %p364 = pneg %p41
        $region46: #{aspp_forward.13} parent=43 // pred_check_branch
          %366 = sbr.rel (%p364) target = $region48
        $region47: #{aspp_forward.13} parent=43 // pred_region
          %s367 = smul.u32 32, %s21
          %p368 = scmp.lt.s32.totalorder %s367, 63
          %s369 = scalar_select %p368, %s367, 63
          %s370 = smul.addr %s369, 2
          %s371 = smul.addr %s370, 4
          %s372 = scalar_lea.vmem %s0, %s371
          %s373 = smul.u32 32, %s21
        $region48: #{aspp_forward.13} parent=43 // pred_fallthru
          _
        // Predicated region
        $region49: #{aspp_forward.13} parent=43 // pred_check
          %p374 = pneg %p67
        $region50: #{aspp_forward.13} parent=43 // pred_check_branch
          %376 = sbr.rel (%p374) target = $region52
        $region51: #{aspp_forward.13} parent=43 // pred_region
          %s377 = smul.u32 32, %s21
          %p378 = scmp.lt.s32.totalorder %s377, 63
          %s379 = scalar_select %p378, %s377, 63
          %s380 = smul.addr %s379, 2
          %s381 = smul.addr %s380, 4
          %s382 = scalar_lea.vmem %s1, %s381
          %s383 = smul.u32 32, %s21
        $region52: #{aspp_forward.13} parent=43 // pred_fallthru
          _
        // Predicated region
        $region53: #{aspp_forward.13} parent=43 // pred_check
          %p384 = pneg %p93
        $region54: #{aspp_forward.13} parent=43 // pred_check_branch
          %386 = sbr.rel (%p384) target = $region56
        $region55: #{aspp_forward.13} parent=43 // pred_region
          %s387 = smul.u32 32, %s21
          %p388 = scmp.lt.s32.totalorder %s387, 63
          %s389 = scalar_select %p388, %s387, 63
          %s390 = smul.addr %s389, 2
          %s391 = smul.addr %s390, 4
          %s392 = scalar_lea.vmem %s2, %s391
          %s393 = smul.u32 32, %s21
        $region56: #{aspp_forward.13} parent=43 // pred_fallthru
          _
        // Predicated region
        $region57: #{aspp_forward.13} parent=43 // pred_check
          %p394 = pneg %p119
        $region58: #{aspp_forward.13} parent=43 // pred_check_branch
          %396 = sbr.rel (%p394) target = $region60
        $region59: #{aspp_forward.13} parent=43 // pred_region
          %s397 = smul.u32 32, %s21
          %p398 = scmp.lt.s32.totalorder %s397, 63
          %s399 = scalar_select %p398, %s397, 63
          %s400 = smul.addr %s399, 2
          %s401 = smul.addr %s400, 4
          %s402 = scalar_lea.vmem %s3, %s401
          %s403 = smul.u32 32, %s21
        $region60: #{aspp_forward.13} parent=43 // pred_fallthru
          _
        // Predicated region
        $region61: #{aspp_forward.13} parent=43 // pred_check
          %p404 = pneg %p145
        $region62: #{aspp_forward.13} parent=43 // pred_check_branch
          %406 = sbr.rel (%p404) target = $region64
        $region63: #{aspp_forward.13} parent=43 // pred_region
          %s407 = smul.u32 32, %s21
          %p408 = scmp.lt.s32.totalorder %s407, 63
          %s409 = scalar_select %p408, %s407, 63
          %s410 = smul.addr %s409, 2
          %s411 = smul.addr %s410, 4
          %s412 = scalar_lea.vmem %s4, %s411
          %s413 = smul.u32 32, %s21
        $region64: #{aspp_forward.13} parent=43 // pred_fallthru
          _
      $region44: #{aspp_forward.13} parent=5 // pred_fallthru
        _
      %p414 = scmp.le.s32.totalorder 1, %s21
      %p415 = scmp.lt.s32.totalorder %s21, 3
      %p416 = pnand %p414, %p415
      %p417 = pneg %p416
      // Predicated region
      $region65: #{aspp_forward.13} parent=5 // pred_check
        _
      $region66: #{aspp_forward.13} parent=5 // pred_check_branch
        %419 = sbr.rel (%p416) target = $region68
      $region67: #{aspp_forward.13} parent=5 // pred_region
        %s420 = ssub.s32 %s21, 1
        %s421 = smul.u32 32, %s26
        %p422 = scmp.lt.s32.totalorder %s421, 63
        %s423 = scalar_select %p422, %s421, 63
        %s424 = smul.addr %s423, 2
        %s425 = smul.addr %s424, 4
        %s426 = scalar_lea.vmem %s0, %s425
        %p427 = pneg %p47
        %p428 = pneg %p44
        %s429 = smul.u32 32, %s26
        %p430 = scmp.lt.s32.totalorder %s429, 63
        %s431 = scalar_select %p430, %s429, 63
        %s432 = smul.addr %s431, 2
        %s433 = smul.addr %s432, 4
        %s434 = scalar_lea.vmem %s1, %s433
        %p435 = pneg %p73
        %p436 = pneg %p70
        %s437 = smul.u32 32, %s26
        %p438 = scmp.lt.s32.totalorder %s437, 63
        %s439 = scalar_select %p438, %s437, 63
        %s440 = smul.addr %s439, 2
        %s441 = smul.addr %s440, 4
        %s442 = scalar_lea.vmem %s2, %s441
        %p443 = pneg %p99
        %p444 = pneg %p96
        %s445 = smul.u32 32, %s26
        %p446 = scmp.lt.s32.totalorder %s445, 63
        %s447 = scalar_select %p446, %s445, 63
        %s448 = smul.addr %s447, 2
        %s449 = smul.addr %s448, 4
        %s450 = scalar_lea.vmem %s3, %s449
        %p451 = pneg %p125
        %p452 = pneg %p122
        %s453 = smul.u32 32, %s26
        %p454 = scmp.lt.s32.totalorder %s453, 63
        %s455 = scalar_select %p454, %s453, 63
        %s456 = smul.addr %s455, 2
        %s457 = smul.addr %s456, 4
        %s458 = scalar_lea.vmem %s4, %s457
        %p459 = pneg %p151
        %p460 = pneg %p148
        %p461 = pneg %p172
        %p462 = pneg %p169
        %p463 = pneg %p193
        %p464 = pneg %p190
        %p465 = pneg %p214
        %p466 = pneg %p211
        %p467 = pneg %p235
        %p468 = pneg %p232
        %p469 = pneg %p256
        %p470 = pneg %p253
        %p471 = pneg %p277
        %p472 = pneg %p274
        %p473 = pneg %p298
        %p474 = pneg %p295
        %p475 = pneg %p324
        %p476 = pneg %p321
        %s477 = sand.u32 %s311, 1
        %s478 = scalar_lea.sflag [#allocation3], %s477
        %s479 = sand.u32 %s311, 1
        %s480 = smul.addr %s479, 512
        %s481 = scalar_lea.vmem [#allocation2], %s480
        %s482 = smul.u32 32, %s26
        %p483 = scmp.lt.s32.totalorder %s482, 63
        %s484 = scalar_select %p483, %s482, 63
        %s485 = smul.addr %s484, 2
        %s486 = smul.addr %s485, 4
        %s487 = scalar_lea.vmem %s0, %s486
        %s488 = smul.u32 32, %s26
        %s489 = smul.u32 32, %s26
        %p490 = scmp.lt.s32.totalorder %s489, 63
        %s491 = scalar_select %p490, %s489, 63
        %s492 = smul.addr %s491, 2
        %s493 = smul.addr %s492, 4
        %s494 = scalar_lea.vmem %s1, %s493
        %s495 = smul.u32 32, %s26
        %s496 = smul.u32 32, %s26
        %p497 = scmp.lt.s32.totalorder %s496, 63
        %s498 = scalar_select %p497, %s496, 63
        %s499 = smul.addr %s498, 2
        %s500 = smul.addr %s499, 4
        %s501 = scalar_lea.vmem %s2, %s500
        %s502 = smul.u32 32, %s26
        %s503 = smul.u32 32, %s26
        %p504 = scmp.lt.s32.totalorder %s503, 63
        %s505 = scalar_select %p504, %s503, 63
        %s506 = smul.addr %s505, 2
        %s507 = smul.addr %s506, 4
        %s508 = scalar_lea.vmem %s3, %s507
        %s509 = smul.u32 32, %s26
        %s510 = smul.u32 32, %s26
        %p511 = scmp.lt.s32.totalorder %s510, 63
        %s512 = scalar_select %p511, %s510, 63
        %s513 = smul.addr %s512, 2
        %s514 = smul.addr %s513, 4
        %s515 = scalar_lea.vmem %s4, %s514
        %s516 = smul.u32 32, %s26
        %s517 = smul.u32 32, %s26
        %v518 = vld [vmem:[%s487] sm:$0xff]
        %v519 = vld [vmem:[%s487 + $0x8] sm:$0xff]
        %v520 = vld [vmem:[%s487 + $0x10] sm:$0xff]
        %v521 = vld [vmem:[%s487 + $0x18] sm:$0xff]
        %v522 = vld [vmem:[%s487 + $0x20] sm:$0xff]
        %v523 = vld [vmem:[%s487 + $0x28] sm:$0xff]
        %v524 = vld [vmem:[%s487 + $0x30] sm:$0xff]
        %v525 = vld [vmem:[%s487 + $0x38] sm:$0xff]
        %v526 = vld [vmem:[%s487 + $0x40] sm:$0xff]
        %v527 = vld [vmem:[%s487 + $0x48] sm:$0xff]
        %v528 = vld [vmem:[%s487 + $0x50] sm:$0xff]
        %v529 = vld [vmem:[%s487 + $0x58] sm:$0xff]
        %v530 = vld [vmem:[%s487 + $0x60] sm:$0xff]
        %v531 = vld [vmem:[%s487 + $0x68] sm:$0xff]
        %v532 = vld [vmem:[%s487 + $0x70] sm:$0xff]
        %v533 = vld [vmem:[%s487 + $0x78] sm:$0xff]
        %v534 = vld [vmem:[%s487 + $0x80] sm:$0xff]
        %v535 = vld [vmem:[%s487 + $0x88] sm:$0xff]
        %v536 = vld [vmem:[%s487 + $0x90] sm:$0xff]
        %v537 = vld [vmem:[%s487 + $0x98] sm:$0xff]
        %v538 = vld [vmem:[%s487 + $0xa0] sm:$0xff]
        %v539 = vld [vmem:[%s487 + $0xa8] sm:$0xff]
        %v540 = vld [vmem:[%s487 + $0xb0] sm:$0xff]
        %v541 = vld [vmem:[%s487 + $0xb8] sm:$0xff]
        %v542 = vld [vmem:[%s487 + $0xc0] sm:$0xff]
        %v543 = vld [vmem:[%s487 + $0xc8] sm:$0xff]
        %v544 = vld [vmem:[%s487 + $0xd0] sm:$0xff]
        %v545 = vld [vmem:[%s487 + $0xd8] sm:$0xff]
        %v546 = vld [vmem:[%s487 + $0xe0] sm:$0xff]
        %v547 = vld [vmem:[%s487 + $0xe8] sm:$0xff]
        %v548 = vld [vmem:[%s487 + $0xf0] sm:$0xff]
        %v549 = vld [vmem:[%s487 + $0xf8] sm:$0xff]
        %v550 = vld [vmem:[%s5] sm:$0xff]
        %v551 = vld [vmem:[%s5 + $0x8] sm:$0xff]
        %v552 = vld [vmem:[%s5 + $0x10] sm:$0xff]
        %v553 = vld [vmem:[%s5 + $0x18] sm:$0xff]
        %v554 = vld [vmem:[%s5 + $0x20] sm:$0xff]
        %v555 = vld [vmem:[%s5 + $0x28] sm:$0xff]
        %v556 = vld [vmem:[%s5 + $0x30] sm:$0xff]
        %v557 = vld [vmem:[%s5 + $0x38] sm:$0xff]
        %v558 = vld [vmem:[%s5 + $0x40] sm:$0xff]
        %v559 = vld [vmem:[%s5 + $0x48] sm:$0xff]
        %v560 = vld [vmem:[%s5 + $0x50] sm:$0xff]
        %v561 = vld [vmem:[%s5 + $0x58] sm:$0xff]
        %v562 = vld [vmem:[%s5 + $0x60] sm:$0xff]
        %v563 = vld [vmem:[%s5 + $0x68] sm:$0xff]
        %v564 = vld [vmem:[%s5 + $0x70] sm:$0xff]
        %v565 = vld [vmem:[%s5 + $0x78] sm:$0xff]
        %v566 = vld [vmem:[%s5 + $0x80] sm:$0xff]
        %v567 = vld [vmem:[%s5 + $0x88] sm:$0xff]
        %v568 = vld [vmem:[%s5 + $0x90] sm:$0xff]
        %v569 = vld [vmem:[%s5 + $0x98] sm:$0xff]
        %v570 = vld [vmem:[%s5 + $0xa0] sm:$0xff]
        %v571 = vld [vmem:[%s5 + $0xa8] sm:$0xff]
        %v572 = vld [vmem:[%s5 + $0xb0] sm:$0xff]
        %v573 = vld [vmem:[%s5 + $0xb8] sm:$0xff]
        %v574 = vld [vmem:[%s5 + $0xc0] sm:$0xff]
        %v575 = vld [vmem:[%s5 + $0xc8] sm:$0xff]
        %v576 = vld [vmem:[%s5 + $0xd0] sm:$0xff]
        %v577 = vld [vmem:[%s5 + $0xd8] sm:$0xff]
        %v578 = vld [vmem:[%s5 + $0xe0] sm:$0xff]
        %v579 = vld [vmem:[%s5 + $0xe8] sm:$0xff]
        %v580 = vld [vmem:[%s5 + $0xf0] sm:$0xff]
        %v581 = vld [vmem:[%s5 + $0xf8] sm:$0xff]
        %v582 = vld [vmem:[%s494] sm:$0xff]
        %v583 = vld [vmem:[%s494 + $0x8] sm:$0xff]
        %v584 = vld [vmem:[%s494 + $0x10] sm:$0xff]
        %v585 = vld [vmem:[%s494 + $0x18] sm:$0xff]
        %v586 = vld [vmem:[%s494 + $0x20] sm:$0xff]
        %v587 = vld [vmem:[%s494 + $0x28] sm:$0xff]
        %v588 = vld [vmem:[%s494 + $0x30] sm:$0xff]
        %v589 = vld [vmem:[%s494 + $0x38] sm:$0xff]
        %v590 = vld [vmem:[%s494 + $0x40] sm:$0xff]
        %v591 = vld [vmem:[%s494 + $0x48] sm:$0xff]
        %v592 = vld [vmem:[%s494 + $0x50] sm:$0xff]
        %v593 = vld [vmem:[%s494 + $0x58] sm:$0xff]
        %v594 = vld [vmem:[%s494 + $0x60] sm:$0xff]
        %v595 = vld [vmem:[%s494 + $0x68] sm:$0xff]
        %v596 = vld [vmem:[%s494 + $0x70] sm:$0xff]
        %v597 = vld [vmem:[%s494 + $0x78] sm:$0xff]
        %v598 = vld [vmem:[%s494 + $0x80] sm:$0xff]
        %v599 = vld [vmem:[%s494 + $0x88] sm:$0xff]
        %v600 = vld [vmem:[%s494 + $0x90] sm:$0xff]
        %v601 = vld [vmem:[%s494 + $0x98] sm:$0xff]
        %v602 = vld [vmem:[%s494 + $0xa0] sm:$0xff]
        %v603 = vld [vmem:[%s494 + $0xa8] sm:$0xff]
        %v604 = vld [vmem:[%s494 + $0xb0] sm:$0xff]
        %v605 = vld [vmem:[%s494 + $0xb8] sm:$0xff]
        %v606 = vld [vmem:[%s494 + $0xc0] sm:$0xff]
        %v607 = vld [vmem:[%s494 + $0xc8] sm:$0xff]
        %v608 = vld [vmem:[%s494 + $0xd0] sm:$0xff]
        %v609 = vld [vmem:[%s494 + $0xd8] sm:$0xff]
        %v610 = vld [vmem:[%s494 + $0xe0] sm:$0xff]
        %v611 = vld [vmem:[%s494 + $0xe8] sm:$0xff]
        %v612 = vld [vmem:[%s494 + $0xf0] sm:$0xff]
        %v613 = vld [vmem:[%s494 + $0xf8] sm:$0xff]
        %v614 = vld [vmem:[%s6] sm:$0xff]
        %v615 = vld [vmem:[%s6 + $0x8] sm:$0xff]
        %v616 = vld [vmem:[%s6 + $0x10] sm:$0xff]
        %v617 = vld [vmem:[%s6 + $0x18] sm:$0xff]
        %v618 = vld [vmem:[%s6 + $0x20] sm:$0xff]
        %v619 = vld [vmem:[%s6 + $0x28] sm:$0xff]
        %v620 = vld [vmem:[%s6 + $0x30] sm:$0xff]
        %v621 = vld [vmem:[%s6 + $0x38] sm:$0xff]
        %v622 = vld [vmem:[%s6 + $0x40] sm:$0xff]
        %v623 = vld [vmem:[%s6 + $0x48] sm:$0xff]
        %v624 = vld [vmem:[%s6 + $0x50] sm:$0xff]
        %v625 = vld [vmem:[%s6 + $0x58] sm:$0xff]
        %v626 = vld [vmem:[%s6 + $0x60] sm:$0xff]
        %v627 = vld [vmem:[%s6 + $0x68] sm:$0xff]
        %v628 = vld [vmem:[%s6 + $0x70] sm:$0xff]
        %v629 = vld [vmem:[%s6 + $0x78] sm:$0xff]
        %v630 = vld [vmem:[%s6 + $0x80] sm:$0xff]
        %v631 = vld [vmem:[%s6 + $0x88] sm:$0xff]
        %v632 = vld [vmem:[%s6 + $0x90] sm:$0xff]
        %v633 = vld [vmem:[%s6 + $0x98] sm:$0xff]
        %v634 = vld [vmem:[%s6 + $0xa0] sm:$0xff]
        %v635 = vld [vmem:[%s6 + $0xa8] sm:$0xff]
        %v636 = vld [vmem:[%s6 + $0xb0] sm:$0xff]
        %v637 = vld [vmem:[%s6 + $0xb8] sm:$0xff]
        %v638 = vld [vmem:[%s6 + $0xc0] sm:$0xff]
        %v639 = vld [vmem:[%s6 + $0xc8] sm:$0xff]
        %v640 = vld [vmem:[%s6 + $0xd0] sm:$0xff]
        %v641 = vld [vmem:[%s6 + $0xd8] sm:$0xff]
        %v642 = vld [vmem:[%s6 + $0xe0] sm:$0xff]
        %v643 = vld [vmem:[%s6 + $0xe8] sm:$0xff]
        %v644 = vld [vmem:[%s6 + $0xf0] sm:$0xff]
        %v645 = vld [vmem:[%s6 + $0xf8] sm:$0xff]
        %v678 = vunpack.c.l.b16 %v582
        %v679 = vunpack.c.h.b16 %v582
        %v680 = vunpack.c.l.b16 %v583
        %v681 = vunpack.c.h.b16 %v583
        %v682 = vunpack.c.l.b16 %v584
        %v683 = vunpack.c.h.b16 %v584
        %v684 = vunpack.c.l.b16 %v585
        %v685 = vunpack.c.h.b16 %v585
        %v686 = vunpack.c.l.b16 %v586
        %v687 = vunpack.c.h.b16 %v586
        %v688 = vunpack.c.l.b16 %v587
        %v689 = vunpack.c.h.b16 %v587
        %v690 = vunpack.c.l.b16 %v588
        %v691 = vunpack.c.h.b16 %v588
        %v692 = vunpack.c.l.b16 %v589
        %v693 = vunpack.c.h.b16 %v589
        %v694 = vunpack.c.l.b16 %v590
        %v695 = vunpack.c.h.b16 %v590
        %v696 = vunpack.c.l.b16 %v591
        %v697 = vunpack.c.h.b16 %v591
        %v698 = vunpack.c.l.b16 %v592
        %v699 = vunpack.c.h.b16 %v592
        %v700 = vunpack.c.l.b16 %v593
        %v701 = vunpack.c.h.b16 %v593
        %v702 = vunpack.c.l.b16 %v594
        %v703 = vunpack.c.h.b16 %v594
        %v704 = vunpack.c.l.b16 %v595
        %v705 = vunpack.c.h.b16 %v595
        %v706 = vunpack.c.l.b16 %v596
        %v707 = vunpack.c.h.b16 %v596
        %v708 = vunpack.c.l.b16 %v597
        %v709 = vunpack.c.h.b16 %v597
        %v710 = vunpack.c.l.b16 %v598
        %v711 = vunpack.c.h.b16 %v598
        %v712 = vunpack.c.l.b16 %v599
        %v713 = vunpack.c.h.b16 %v599
        %v714 = vunpack.c.l.b16 %v600
        %v715 = vunpack.c.h.b16 %v600
        %v716 = vunpack.c.l.b16 %v601
        %v717 = vunpack.c.h.b16 %v601
        %v718 = vunpack.c.l.b16 %v602
        %v719 = vunpack.c.h.b16 %v602
        %v720 = vunpack.c.l.b16 %v603
        %v721 = vunpack.c.h.b16 %v603
        %v722 = vunpack.c.l.b16 %v604
        %v723 = vunpack.c.h.b16 %v604
        %v724 = vunpack.c.l.b16 %v605
        %v725 = vunpack.c.h.b16 %v605
        %v726 = vunpack.c.l.b16 %v606
        %v727 = vunpack.c.h.b16 %v606
        %v728 = vunpack.c.l.b16 %v607
        %v729 = vunpack.c.h.b16 %v607
        %v730 = vunpack.c.l.b16 %v608
        %v731 = vunpack.c.h.b16 %v608
        %v732 = vunpack.c.l.b16 %v609
        %v733 = vunpack.c.h.b16 %v609
        %v734 = vunpack.c.l.b16 %v610
        %v735 = vunpack.c.h.b16 %v610
        %v736 = vunpack.c.l.b16 %v611
        %v737 = vunpack.c.h.b16 %v611
        %v738 = vunpack.c.l.b16 %v612
        %v739 = vunpack.c.h.b16 %v612
        %v740 = vunpack.c.l.b16 %v613
        %v741 = vunpack.c.h.b16 %v613
        %v742 = vpack.c.b16 %v680, %v678
        %v743 = vpack.c.b16 %v681, %v679
        %v744 = vpack.c.b16 %v684, %v682
        %v745 = vpack.c.b16 %v685, %v683
        %v746 = vpack.c.b16 %v688, %v686
        %v747 = vpack.c.b16 %v689, %v687
        %v748 = vpack.c.b16 %v692, %v690
        %v749 = vpack.c.b16 %v693, %v691
        %v750 = vpack.c.b16 %v696, %v694
        %v751 = vpack.c.b16 %v697, %v695
        %v752 = vpack.c.b16 %v700, %v698
        %v753 = vpack.c.b16 %v701, %v699
        %v754 = vpack.c.b16 %v704, %v702
        %v755 = vpack.c.b16 %v705, %v703
        %v756 = vpack.c.b16 %v708, %v706
        %v757 = vpack.c.b16 %v709, %v707
        %v758 = vpack.c.b16 %v712, %v710
        %v759 = vpack.c.b16 %v713, %v711
        %v760 = vpack.c.b16 %v716, %v714
        %v761 = vpack.c.b16 %v717, %v715
        %v762 = vpack.c.b16 %v720, %v718
        %v763 = vpack.c.b16 %v721, %v719
        %v764 = vpack.c.b16 %v724, %v722
        %v765 = vpack.c.b16 %v725, %v723
        %v766 = vpack.c.b16 %v728, %v726
        %v767 = vpack.c.b16 %v729, %v727
        %v768 = vpack.c.b16 %v732, %v730
        %v769 = vpack.c.b16 %v733, %v731
        %v770 = vpack.c.b16 %v736, %v734
        %v771 = vpack.c.b16 %v737, %v735
        %v772 = vpack.c.b16 %v740, %v738
        %v773 = vpack.c.b16 %v741, %v739
        %v838 = vunpack.c.l.b16 %v614
        %v839 = vunpack.c.h.b16 %v614
        %v840 = vunpack.c.l.b16 %v615
        %v841 = vunpack.c.h.b16 %v615
        %v842 = vunpack.c.l.b16 %v616
        %v843 = vunpack.c.h.b16 %v616
        %v844 = vunpack.c.l.b16 %v617
        %v845 = vunpack.c.h.b16 %v617
        %v846 = vunpack.c.l.b16 %v618
        %v847 = vunpack.c.h.b16 %v618
        %v848 = vunpack.c.l.b16 %v619
        %v849 = vunpack.c.h.b16 %v619
        %v850 = vunpack.c.l.b16 %v620
        %v851 = vunpack.c.h.b16 %v620
        %v852 = vunpack.c.l.b16 %v621
        %v853 = vunpack.c.h.b16 %v621
        %v854 = vunpack.c.l.b16 %v622
        %v855 = vunpack.c.h.b16 %v622
        %v856 = vunpack.c.l.b16 %v623
        %v857 = vunpack.c.h.b16 %v623
        %v858 = vunpack.c.l.b16 %v624
        %v859 = vunpack.c.h.b16 %v624
        %v860 = vunpack.c.l.b16 %v625
        %v861 = vunpack.c.h.b16 %v625
        %v862 = vunpack.c.l.b16 %v626
        %v863 = vunpack.c.h.b16 %v626
        %v864 = vunpack.c.l.b16 %v627
        %v865 = vunpack.c.h.b16 %v627
        %v866 = vunpack.c.l.b16 %v628
        %v867 = vunpack.c.h.b16 %v628
        %v868 = vunpack.c.l.b16 %v629
        %v869 = vunpack.c.h.b16 %v629
        %v870 = vunpack.c.l.b16 %v630
        %v871 = vunpack.c.h.b16 %v630
        %v872 = vunpack.c.l.b16 %v631
        %v873 = vunpack.c.h.b16 %v631
        %v874 = vunpack.c.l.b16 %v632
        %v875 = vunpack.c.h.b16 %v632
        %v876 = vunpack.c.l.b16 %v633
        %v877 = vunpack.c.h.b16 %v633
        %v878 = vunpack.c.l.b16 %v634
        %v879 = vunpack.c.h.b16 %v634
        %v880 = vunpack.c.l.b16 %v635
        %v881 = vunpack.c.h.b16 %v635
        %v882 = vunpack.c.l.b16 %v636
        %v883 = vunpack.c.h.b16 %v636
        %v884 = vunpack.c.l.b16 %v637
        %v885 = vunpack.c.h.b16 %v637
        %v886 = vunpack.c.l.b16 %v638
        %v887 = vunpack.c.h.b16 %v638
        %v888 = vunpack.c.l.b16 %v639
        %v889 = vunpack.c.h.b16 %v639
        %v890 = vunpack.c.l.b16 %v640
        %v891 = vunpack.c.h.b16 %v640
        %v892 = vunpack.c.l.b16 %v641
        %v893 = vunpack.c.h.b16 %v641
        %v894 = vunpack.c.l.b16 %v642
        %v895 = vunpack.c.h.b16 %v642
        %v896 = vunpack.c.l.b16 %v643
        %v897 = vunpack.c.h.b16 %v643
        %v898 = vunpack.c.l.b16 %v644
        %v899 = vunpack.c.h.b16 %v644
        %v900 = vunpack.c.l.b16 %v645
        %v901 = vunpack.c.h.b16 %v645
        %v902 = vpack.c.b16 %v840, %v838
        %v903 = vpack.c.b16 %v841, %v839
        %v904 = vpack.c.b16 %v844, %v842
        %v905 = vpack.c.b16 %v845, %v843
        %v906 = vpack.c.b16 %v848, %v846
        %v907 = vpack.c.b16 %v849, %v847
        %v908 = vpack.c.b16 %v852, %v850
        %v909 = vpack.c.b16 %v853, %v851
        %v910 = vpack.c.b16 %v856, %v854
        %v911 = vpack.c.b16 %v857, %v855
        %v912 = vpack.c.b16 %v860, %v858
        %v913 = vpack.c.b16 %v861, %v859
        %v914 = vpack.c.b16 %v864, %v862
        %v915 = vpack.c.b16 %v865, %v863
        %v916 = vpack.c.b16 %v868, %v866
        %v917 = vpack.c.b16 %v869, %v867
        %v918 = vpack.c.b16 %v872, %v870
        %v919 = vpack.c.b16 %v873, %v871
        %v920 = vpack.c.b16 %v876, %v874
        %v921 = vpack.c.b16 %v877, %v875
        %v922 = vpack.c.b16 %v880, %v878
        %v923 = vpack.c.b16 %v881, %v879
        %v924 = vpack.c.b16 %v884, %v882
        %v925 = vpack.c.b16 %v885, %v883
        %v926 = vpack.c.b16 %v888, %v886
        %v927 = vpack.c.b16 %v889, %v887
        %v928 = vpack.c.b16 %v892, %v890
        %v929 = vpack.c.b16 %v893, %v891
        %v930 = vpack.c.b16 %v896, %v894
        %v931 = vpack.c.b16 %v897, %v895
        %v932 = vpack.c.b16 %v900, %v898
        %v933 = vpack.c.b16 %v901, %v899
        %966 = vmatprep.subr.bf16.mxu0 %v903
        %967 = vmatpush1.bf16.msra.mxu0 %v902
        %968 = vmatprep.subr.bf16.mxu0 %v905
        %969 = vmatpush1.bf16.msra.mxu0 %v904
        %970 = vmatprep.subr.bf16.mxu0 %v907
        %971 = vmatpush1.bf16.msra.mxu0 %v906
        %972 = vmatprep.subr.bf16.mxu0 %v909
        %973 = vmatpush1.bf16.msra.mxu0 %v908
        %974 = vmatprep.subr.bf16.mxu0 %v911
        %975 = vmatpush1.bf16.msra.mxu0 %v910
        %976 = vmatprep.subr.bf16.mxu0 %v913
        %977 = vmatpush1.bf16.msra.mxu0 %v912
        %978 = vmatprep.subr.bf16.mxu0 %v915
        %979 = vmatpush1.bf16.msra.mxu0 %v914
        %980 = vmatprep.subr.bf16.mxu0 %v917
        %981 = vmatpush1.bf16.msra.mxu0 %v916
        %982 = vmatprep.subr.bf16.mxu0 %v919
        %983 = vmatpush1.bf16.msra.mxu0 %v918
        %984 = vmatprep.subr.bf16.mxu0 %v921
        %985 = vmatpush1.bf16.msra.mxu0 %v920
        %986 = vmatprep.subr.bf16.mxu0 %v923
        %987 = vmatpush1.bf16.msra.mxu0 %v922
        %988 = vmatprep.subr.bf16.mxu0 %v925
        %989 = vmatpush1.bf16.msra.mxu0 %v924
        %990 = vmatprep.subr.bf16.mxu0 %v927
        %991 = vmatpush1.bf16.msra.mxu0 %v926
        %992 = vmatprep.subr.bf16.mxu0 %v929
        %993 = vmatpush1.bf16.msra.mxu0 %v928
        %994 = vmatprep.subr.bf16.mxu0 %v931
        %995 = vmatpush1.bf16.msra.mxu0 %v930
        %996 = vmatprep.subr.bf16.mxu0 %v933
        %997 = vmatpush1.bf16.msra.mxu0 %v932
        %998 = vmatprep.mubr.bf16.mxu0 %v743
        %999 = vmatmul.mubr.bf16.gmra.mrb[0].mxu0 %v742
        %v1000 = vpop.f32.mrb[0].mxu0
        %v1001 = vadd.f32 0.0, %v1000
        %v1002 = vpop.f32.mrb[0].mxu0
        %v1003 = vadd.f32 0.0, %v1002
        %v1004 = vpop.f32.mrb[0].mxu0
        %v1005 = vadd.f32 0.0, %v1004
        %v1006 = vpop.f32.mrb[0].mxu0
        %v1007 = vadd.f32 0.0, %v1006
        %1008 = vmatprep.mubr.bf16.mxu0 %v745
        %1009 = vmatmul.mubr.bf16.gmra.mrb[0].mxu0 %v744
        %v1010 = vpop.f32.mrb[0].mxu0
        %v1011 = vadd.f32 0.0, %v1010
        %v1012 = vpop.f32.mrb[0].mxu0
        %v1013 = vadd.f32 0.0, %v1012
        %v1014 = vpop.f32.mrb[0].mxu0
        %v1015 = vadd.f32 0.0, %v1014
        %v1016 = vpop.f32.mrb[0].mxu0
        %v1017 = vadd.f32 0.0, %v1016
        %1018 = vmatprep.mubr.bf16.mxu0 %v747
        %1019 = vmatmul.mubr.bf16.gmra.mrb[0].mxu0 %v746
        %v1020 = vpop.f32.mrb[0].mxu0
        %v1021 = vadd.f32 0.0, %v1020
        %v1022 = vpop.f32.mrb[0].mxu0
        %v1023 = vadd.f32 0.0, %v1022
        %v1024 = vpop.f32.mrb[0].mxu0
        %v1025 = vadd.f32 0.0, %v1024
        %v1026 = vpop.f32.mrb[0].mxu0
        %v1027 = vadd.f32 0.0, %v1026
        %1028 = vmatprep.mubr.bf16.mxu0 %v749
        %1029 = vmatmul.mubr.bf16.gmra.mrb[0].mxu0 %v748
        %v1030 = vpop.f32.mrb[0].mxu0
        %v1031 = vadd.f32 0.0, %v1030
        %v1032 = vpop.f32.mrb[0].mxu0
        %v1033 = vadd.f32 0.0, %v1032
        %v1034 = vpop.f32.mrb[0].mxu0
        %v1035 = vadd.f32 0.0, %v1034
        %v1036 = vpop.f32.mrb[0].mxu0
        %v1037 = vadd.f32 0.0, %v1036
        %1038 = vmatprep.mubr.bf16.mxu0 %v751
        %1039 = vmatmul.mubr.bf16.gmra.mrb[0].mxu0 %v750
        %v1040 = vpop.f32.mrb[0].mxu0
        %v1041 = vadd.f32 0.0, %v1040
        %v1042 = vpop.f32.mrb[0].mxu0
        %v1043 = vadd.f32 0.0, %v1042
        %v1044 = vpop.f32.mrb[0].mxu0
        %v1045 = vadd.f32 0.0, %v1044
        %v1046 = vpop.f32.mrb[0].mxu0
        %v1047 = vadd.f32 0.0, %v1046
        %1048 = vmatprep.mubr.bf16.mxu0 %v753
        %1049 = vmatmul.mubr.bf16.gmra.mrb[0].mxu0 %v752
        %v1050 = vpop.f32.mrb[0].mxu0
        %v1051 = vadd.f32 0.0, %v1050
        %v1052 = vpop.f32.mrb[0].mxu0
        %v1053 = vadd.f32 0.0, %v1052
        %v1054 = vpop.f32.mrb[0].mxu0
        %v1055 = vadd.f32 0.0, %v1054
        %v1056 = vpop.f32.mrb[0].mxu0
        %v1057 = vadd.f32 0.0, %v1056
        %1058 = vmatprep.mubr.bf16.mxu0 %v755
        %1059 = vmatmul.mubr.bf16.gmra.mrb[0].mxu0 %v754
        %v1060 = vpop.f32.mrb[0].mxu0
        %v1061 = vadd.f32 0.0, %v1060
        %v1062 = vpop.f32.mrb[0].mxu0
        %v1063 = vadd.f32 0.0, %v1062
        %v1064 = vpop.f32.mrb[0].mxu0
        %v1065 = vadd.f32 0.0, %v1064
        %v1066 = vpop.f32.mrb[0].mxu0
        %v1067 = vadd.f32 0.0, %v1066
        %1068 = vmatprep.mubr.bf16.mxu0 %v757
        %1069 = vmatmul.mubr.bf16.gmra.mrb[0].mxu0 %v756
        %v1070 = vpop.f32.mrb[0].mxu0
        %v1071 = vadd.f32 0.0, %v1070
        %v1072 = vpop.f32.mrb[0].mxu0
        %v1073 = vadd.f32 0.0, %v1072
        %v1074 = vpop.f32.mrb[0].mxu0
        %v1075 = vadd.f32 0.0, %v1074
        %v1076 = vpop.f32.mrb[0].mxu0
        %v1077 = vadd.f32 0.0, %v1076
        %1078 = vmatprep.mubr.bf16.mxu0 %v759
        %1079 = vmatmul.mubr.bf16.gmra.mrb[0].mxu0 %v758
        %v1080 = vpop.f32.mrb[0].mxu0
        %v1081 = vadd.f32 0.0, %v1080
        %v1082 = vpop.f32.mrb[0].mxu0
        %v1083 = vadd.f32 0.0, %v1082
        %v1084 = vpop.f32.mrb[0].mxu0
        %v1085 = vadd.f32 0.0, %v1084
        %v1086 = vpop.f32.mrb[0].mxu0
        %v1087 = vadd.f32 0.0, %v1086
        %1088 = vmatprep.mubr.bf16.mxu0 %v761
        %1089 = vmatmul.mubr.bf16.gmra.mrb[0].mxu0 %v760
        %v1090 = vpop.f32.mrb[0].mxu0
        %v1091 = vadd.f32 0.0, %v1090
        %v1092 = vpop.f32.mrb[0].mxu0
        %v1093 = vadd.f32 0.0, %v1092
        %v1094 = vpop.f32.mrb[0].mxu0
        %v1095 = vadd.f32 0.0, %v1094
        %v1096 = vpop.f32.mrb[0].mxu0
        %v1097 = vadd.f32 0.0, %v1096
        %1098 = vmatprep.mubr.bf16.mxu0 %v763
        %1099 = vmatmul.mubr.bf16.gmra.mrb[0].mxu0 %v762
        %v1100 = vpop.f32.mrb[0].mxu0
        %v1101 = vadd.f32 0.0, %v1100
        %v1102 = vpop.f32.mrb[0].mxu0
        %v1103 = vadd.f32 0.0, %v1102
        %v1104 = vpop.f32.mrb[0].mxu0
        %v1105 = vadd.f32 0.0, %v1104
        %v1106 = vpop.f32.mrb[0].mxu0
        %v1107 = vadd.f32 0.0, %v1106
        %1108 = vmatprep.mubr.bf16.mxu0 %v765
        %1109 = vmatmul.mubr.bf16.gmra.mrb[0].mxu0 %v764
        %v1110 = vpop.f32.mrb[0].mxu0
        %v1111 = vadd.f32 0.0, %v1110
        %v1112 = vpop.f32.mrb[0].mxu0
        %v1113 = vadd.f32 0.0, %v1112
        %v1114 = vpop.f32.mrb[0].mxu0
        %v1115 = vadd.f32 0.0, %v1114
        %v1116 = vpop.f32.mrb[0].mxu0
        %v1117 = vadd.f32 0.0, %v1116
        %1118 = vmatprep.mubr.bf16.mxu0 %v767
        %1119 = vmatmul.mubr.bf16.gmra.mrb[0].mxu0 %v766
        %v1120 = vpop.f32.mrb[0].mxu0
        %v1121 = vadd.f32 0.0, %v1120
        %v1122 = vpop.f32.mrb[0].mxu0
        %v1123 = vadd.f32 0.0, %v1122
        %v1124 = vpop.f32.mrb[0].mxu0
        %v1125 = vadd.f32 0.0, %v1124
        %v1126 = vpop.f32.mrb[0].mxu0
        %v1127 = vadd.f32 0.0, %v1126
        %1128 = vmatprep.mubr.bf16.mxu0 %v769
        %1129 = vmatmul.mubr.bf16.gmra.mrb[0].mxu0 %v768
        %v1130 = vpop.f32.mrb[0].mxu0
        %v1131 = vadd.f32 0.0, %v1130
        %v1132 = vpop.f32.mrb[0].mxu0
        %v1133 = vadd.f32 0.0, %v1132
        %v1134 = vpop.f32.mrb[0].mxu0
        %v1135 = vadd.f32 0.0, %v1134
        %v1136 = vpop.f32.mrb[0].mxu0
        %v1137 = vadd.f32 0.0, %v1136
        %1138 = vmatprep.mubr.bf16.mxu0 %v771
        %1139 = vmatmul.mubr.bf16.gmra.mrb[0].mxu0 %v770
        %v1140 = vpop.f32.mrb[0].mxu0
        %v1141 = vadd.f32 0.0, %v1140
        %v1142 = vpop.f32.mrb[0].mxu0
        %v1143 = vadd.f32 0.0, %v1142
        %v1144 = vpop.f32.mrb[0].mxu0
        %v1145 = vadd.f32 0.0, %v1144
        %v1146 = vpop.f32.mrb[0].mxu0
        %v1147 = vadd.f32 0.0, %v1146
        %1148 = vmatprep.mubr.bf16.mxu0 %v773
        %1149 = vmatmul.mubr.bf16.gmra.mrb[0].mxu0 %v772
        %v1150 = vpop.f32.mrb[0].mxu0
        %v1151 = vadd.f32 0.0, %v1150
        %v1152 = vpop.f32.mrb[0].mxu0
        %v1153 = vadd.f32 0.0, %v1152
        %v1154 = vpop.f32.mrb[0].mxu0
        %v1155 = vadd.f32 0.0, %v1154
        %v1156 = vpop.f32.mrb[0].mxu0
        %v1157 = vadd.f32 0.0, %v1156
        %1158 = vdwg.mxu0
        %v1191 = vunpack.c.l.b16 %v518
        %v1192 = vunpack.c.h.b16 %v518
        %v1193 = vunpack.c.l.b16 %v519
        %v1194 = vunpack.c.h.b16 %v519
        %v1195 = vunpack.c.l.b16 %v520
        %v1196 = vunpack.c.h.b16 %v520
        %v1197 = vunpack.c.l.b16 %v521
        %v1198 = vunpack.c.h.b16 %v521
        %v1199 = vunpack.c.l.b16 %v522
        %v1200 = vunpack.c.h.b16 %v522
        %v1201 = vunpack.c.l.b16 %v523
        %v1202 = vunpack.c.h.b16 %v523
        %v1203 = vunpack.c.l.b16 %v524
        %v1204 = vunpack.c.h.b16 %v524
        %v1205 = vunpack.c.l.b16 %v525
        %v1206 = vunpack.c.h.b16 %v525
        %v1207 = vunpack.c.l.b16 %v526
        %v1208 = vunpack.c.h.b16 %v526
        %v1209 = vunpack.c.l.b16 %v527
        %v1210 = vunpack.c.h.b16 %v527
        %v1211 = vunpack.c.l.b16 %v528
        %v1212 = vunpack.c.h.b16 %v528
        %v1213 = vunpack.c.l.b16 %v529
        %v1214 = vunpack.c.h.b16 %v529
        %v1215 = vunpack.c.l.b16 %v530
        %v1216 = vunpack.c.h.b16 %v530
        %v1217 = vunpack.c.l.b16 %v531
        %v1218 = vunpack.c.h.b16 %v531
        %v1219 = vunpack.c.l.b16 %v532
        %v1220 = vunpack.c.h.b16 %v532
        %v1221 = vunpack.c.l.b16 %v533
        %v1222 = vunpack.c.h.b16 %v533
        %v1223 = vunpack.c.l.b16 %v534
        %v1224 = vunpack.c.h.b16 %v534
        %v1225 = vunpack.c.l.b16 %v535
        %v1226 = vunpack.c.h.b16 %v535
        %v1227 = vunpack.c.l.b16 %v536
        %v1228 = vunpack.c.h.b16 %v536
        %v1229 = vunpack.c.l.b16 %v537
        %v1230 = vunpack.c.h.b16 %v537
        %v1231 = vunpack.c.l.b16 %v538
        %v1232 = vunpack.c.h.b16 %v538
        %v1233 = vunpack.c.l.b16 %v539
        %v1234 = vunpack.c.h.b16 %v539
        %v1235 = vunpack.c.l.b16 %v540
        %v1236 = vunpack.c.h.b16 %v540
        %v1237 = vunpack.c.l.b16 %v541
        %v1238 = vunpack.c.h.b16 %v541
        %v1239 = vunpack.c.l.b16 %v542
        %v1240 = vunpack.c.h.b16 %v542
        %v1241 = vunpack.c.l.b16 %v543
        %v1242 = vunpack.c.h.b16 %v543
        %v1243 = vunpack.c.l.b16 %v544
        %v1244 = vunpack.c.h.b16 %v544
        %v1245 = vunpack.c.l.b16 %v545
        %v1246 = vunpack.c.h.b16 %v545
        %v1247 = vunpack.c.l.b16 %v546
        %v1248 = vunpack.c.h.b16 %v546
        %v1249 = vunpack.c.l.b16 %v547
        %v1250 = vunpack.c.h.b16 %v547
        %v1251 = vunpack.c.l.b16 %v548
        %v1252 = vunpack.c.h.b16 %v548
        %v1253 = vunpack.c.l.b16 %v549
        %v1254 = vunpack.c.h.b16 %v549
        %v1255 = vpack.c.b16 %v1193, %v1191
        %v1256 = vpack.c.b16 %v1194, %v1192
        %v1257 = vpack.c.b16 %v1197, %v1195
        %v1258 = vpack.c.b16 %v1198, %v1196
        %v1259 = vpack.c.b16 %v1201, %v1199
        %v1260 = vpack.c.b16 %v1202, %v1200
        %v1261 = vpack.c.b16 %v1205, %v1203
        %v1262 = vpack.c.b16 %v1206, %v1204
        %v1263 = vpack.c.b16 %v1209, %v1207
        %v1264 = vpack.c.b16 %v1210, %v1208
        %v1265 = vpack.c.b16 %v1213, %v1211
        %v1266 = vpack.c.b16 %v1214, %v1212
        %v1267 = vpack.c.b16 %v1217, %v1215
        %v1268 = vpack.c.b16 %v1218, %v1216
        %v1269 = vpack.c.b16 %v1221, %v1219
        %v1270 = vpack.c.b16 %v1222, %v1220
        %v1271 = vpack.c.b16 %v1225, %v1223
        %v1272 = vpack.c.b16 %v1226, %v1224
        %v1273 = vpack.c.b16 %v1229, %v1227
        %v1274 = vpack.c.b16 %v1230, %v1228
        %v1275 = vpack.c.b16 %v1233, %v1231
        %v1276 = vpack.c.b16 %v1234, %v1232
        %v1277 = vpack.c.b16 %v1237, %v1235
        %v1278 = vpack.c.b16 %v1238, %v1236
        %v1279 = vpack.c.b16 %v1241, %v1239
        %v1280 = vpack.c.b16 %v1242, %v1240
        %v1281 = vpack.c.b16 %v1245, %v1243
        %v1282 = vpack.c.b16 %v1246, %v1244
        %v1283 = vpack.c.b16 %v1249, %v1247
        %v1284 = vpack.c.b16 %v1250, %v1248
        %v1285 = vpack.c.b16 %v1253, %v1251
        %v1286 = vpack.c.b16 %v1254, %v1252
        %v1351 = vunpack.c.l.b16 %v550
        %v1352 = vunpack.c.h.b16 %v550
        %v1353 = vunpack.c.l.b16 %v551
        %v1354 = vunpack.c.h.b16 %v551
        %v1355 = vunpack.c.l.b16 %v552
        %v1356 = vunpack.c.h.b16 %v552
        %v1357 = vunpack.c.l.b16 %v553
        %v1358 = vunpack.c.h.b16 %v553
        %v1359 = vunpack.c.l.b16 %v554
        %v1360 = vunpack.c.h.b16 %v554
        %v1361 = vunpack.c.l.b16 %v555
        %v1362 = vunpack.c.h.b16 %v555
        %v1363 = vunpack.c.l.b16 %v556
        %v1364 = vunpack.c.h.b16 %v556
        %v1365 = vunpack.c.l.b16 %v557
        %v1366 = vunpack.c.h.b16 %v557
        %v1367 = vunpack.c.l.b16 %v558
        %v1368 = vunpack.c.h.b16 %v558
        %v1369 = vunpack.c.l.b16 %v559
        %v1370 = vunpack.c.h.b16 %v559
        %v1371 = vunpack.c.l.b16 %v560
        %v1372 = vunpack.c.h.b16 %v560
        %v1373 = vunpack.c.l.b16 %v561
        %v1374 = vunpack.c.h.b16 %v561
        %v1375 = vunpack.c.l.b16 %v562
        %v1376 = vunpack.c.h.b16 %v562
        %v1377 = vunpack.c.l.b16 %v563
        %v1378 = vunpack.c.h.b16 %v563
        %v1379 = vunpack.c.l.b16 %v564
        %v1380 = vunpack.c.h.b16 %v564
        %v1381 = vunpack.c.l.b16 %v565
        %v1382 = vunpack.c.h.b16 %v565
        %v1383 = vunpack.c.l.b16 %v566
        %v1384 = vunpack.c.h.b16 %v566
        %v1385 = vunpack.c.l.b16 %v567
        %v1386 = vunpack.c.h.b16 %v567
        %v1387 = vunpack.c.l.b16 %v568
        %v1388 = vunpack.c.h.b16 %v568
        %v1389 = vunpack.c.l.b16 %v569
        %v1390 = vunpack.c.h.b16 %v569
        %v1391 = vunpack.c.l.b16 %v570
        %v1392 = vunpack.c.h.b16 %v570
        %v1393 = vunpack.c.l.b16 %v571
        %v1394 = vunpack.c.h.b16 %v571
        %v1395 = vunpack.c.l.b16 %v572
        %v1396 = vunpack.c.h.b16 %v572
        %v1397 = vunpack.c.l.b16 %v573
        %v1398 = vunpack.c.h.b16 %v573
        %v1399 = vunpack.c.l.b16 %v574
        %v1400 = vunpack.c.h.b16 %v574
        %v1401 = vunpack.c.l.b16 %v575
        %v1402 = vunpack.c.h.b16 %v575
        %v1403 = vunpack.c.l.b16 %v576
        %v1404 = vunpack.c.h.b16 %v576
        %v1405 = vunpack.c.l.b16 %v577
        %v1406 = vunpack.c.h.b16 %v577
        %v1407 = vunpack.c.l.b16 %v578
        %v1408 = vunpack.c.h.b16 %v578
        %v1409 = vunpack.c.l.b16 %v579
        %v1410 = vunpack.c.h.b16 %v579
        %v1411 = vunpack.c.l.b16 %v580
        %v1412 = vunpack.c.h.b16 %v580
        %v1413 = vunpack.c.l.b16 %v581
        %v1414 = vunpack.c.h.b16 %v581
        %v1415 = vpack.c.b16 %v1353, %v1351
        %v1416 = vpack.c.b16 %v1354, %v1352
        %v1417 = vpack.c.b16 %v1357, %v1355
        %v1418 = vpack.c.b16 %v1358, %v1356
        %v1419 = vpack.c.b16 %v1361, %v1359
        %v1420 = vpack.c.b16 %v1362, %v1360
        %v1421 = vpack.c.b16 %v1365, %v1363
        %v1422 = vpack.c.b16 %v1366, %v1364
        %v1423 = vpack.c.b16 %v1369, %v1367
        %v1424 = vpack.c.b16 %v1370, %v1368
        %v1425 = vpack.c.b16 %v1373, %v1371
        %v1426 = vpack.c.b16 %v1374, %v1372
        %v1427 = vpack.c.b16 %v1377, %v1375
        %v1428 = vpack.c.b16 %v1378, %v1376
        %v1429 = vpack.c.b16 %v1381, %v1379
        %v1430 = vpack.c.b16 %v1382, %v1380
        %v1431 = vpack.c.b16 %v1385, %v1383
        %v1432 = vpack.c.b16 %v1386, %v1384
        %v1433 = vpack.c.b16 %v1389, %v1387
        %v1434 = vpack.c.b16 %v1390, %v1388
        %v1435 = vpack.c.b16 %v1393, %v1391
        %v1436 = vpack.c.b16 %v1394, %v1392
        %v1437 = vpack.c.b16 %v1397, %v1395
        %v1438 = vpack.c.b16 %v1398, %v1396
        %v1439 = vpack.c.b16 %v1401, %v1399
        %v1440 = vpack.c.b16 %v1402, %v1400
        %v1441 = vpack.c.b16 %v1405, %v1403
        %v1442 = vpack.c.b16 %v1406, %v1404
        %v1443 = vpack.c.b16 %v1409, %v1407
        %v1444 = vpack.c.b16 %v1410, %v1408
        %v1445 = vpack.c.b16 %v1413, %v1411
        %v1446 = vpack.c.b16 %v1414, %v1412
        %1479 = vmatprep.subr.bf16.mxu0 %v1416
        %1480 = vmatpush1.bf16.msra.mxu0 %v1415
        %1481 = vmatprep.subr.bf16.mxu0 %v1418
        %1482 = vmatpush1.bf16.msra.mxu0 %v1417
        %1483 = vmatprep.subr.bf16.mxu0 %v1420
        %1484 = vmatpush1.bf16.msra.mxu0 %v1419
        %1485 = vmatprep.subr.bf16.mxu0 %v1422
        %1486 = vmatpush1.bf16.msra.mxu0 %v1421
        %1487 = vmatprep.subr.bf16.mxu0 %v1424
        %1488 = vmatpush1.bf16.msra.mxu0 %v1423
        %1489 = vmatprep.subr.bf16.mxu0 %v1426
        %1490 = vmatpush1.bf16.msra.mxu0 %v1425
        %1491 = vmatprep.subr.bf16.mxu0 %v1428
        %1492 = vmatpush1.bf16.msra.mxu0 %v1427
        %1493 = vmatprep.subr.bf16.mxu0 %v1430
        %1494 = vmatpush1.bf16.msra.mxu0 %v1429
        %1495 = vmatprep.subr.bf16.mxu0 %v1432
        %1496 = vmatpush1.bf16.msra.mxu0 %v1431
        %1497 = vmatprep.subr.bf16.mxu0 %v1434
        %1498 = vmatpush1.bf16.msra.mxu0 %v1433
        %1499 = vmatprep.subr.bf16.mxu0 %v1436
        %1500 = vmatpush1.bf16.msra.mxu0 %v1435
        %1501 = vmatprep.subr.bf16.mxu0 %v1438
        %1502 = vmatpush1.bf16.msra.mxu0 %v1437
        %1503 = vmatprep.subr.bf16.mxu0 %v1440
        %1504 = vmatpush1.bf16.msra.mxu0 %v1439
        %1505 = vmatprep.subr.bf16.mxu0 %v1442
        %1506 = vmatpush1.bf16.msra.mxu0 %v1441
        %1507 = vmatprep.subr.bf16.mxu0 %v1444
        %1508 = vmatpush1.bf16.msra.mxu0 %v1443
        %1509 = vmatprep.subr.bf16.mxu0 %v1446
        %1510 = vmatpush1.bf16.msra.mxu0 %v1445
        %1511 = vmatprep.mubr.bf16.mxu0 %v1256
        %1512 = vmatmul.mubr.bf16.gmra.mrb[0].mxu0 %v1255
        %v1513 = vpop.f32.mrb[0].mxu0
        %v1514 = vadd.f32 %v1001, %v1513
        %v1515 = vpop.f32.mrb[0].mxu0
        %v1516 = vadd.f32 %v1003, %v1515
        %v1517 = vpop.f32.mrb[0].mxu0
        %v1518 = vadd.f32 %v1005, %v1517
        %v1519 = vpop.f32.mrb[0].mxu0
        %v1520 = vadd.f32 %v1007, %v1519
        %1521 = vmatprep.mubr.bf16.mxu0 %v1258
        %1522 = vmatmul.mubr.bf16.gmra.mrb[0].mxu0 %v1257
        %v1523 = vpop.f32.mrb[0].mxu0
        %v1524 = vadd.f32 %v1011, %v1523
        %v1525 = vpop.f32.mrb[0].mxu0
        %v1526 = vadd.f32 %v1013, %v1525
        %v1527 = vpop.f32.mrb[0].mxu0
        %v1528 = vadd.f32 %v1015, %v1527
        %v1529 = vpop.f32.mrb[0].mxu0
        %v1530 = vadd.f32 %v1017, %v1529
        %1531 = vmatprep.mubr.bf16.mxu0 %v1260
        %1532 = vmatmul.mubr.bf16.gmra.mrb[0].mxu0 %v1259
        %v1533 = vpop.f32.mrb[0].mxu0
        %v1534 = vadd.f32 %v1021, %v1533
        %v1535 = vpop.f32.mrb[0].mxu0
        %v1536 = vadd.f32 %v1023, %v1535
        %v1537 = vpop.f32.mrb[0].mxu0
        %v1538 = vadd.f32 %v1025, %v1537
        %v1539 = vpop.f32.mrb[0].mxu0
        %v1540 = vadd.f32 %v1027, %v1539
        %1541 = vmatprep.mubr.bf16.mxu0 %v1262
        %1542 = vmatmul.mubr.bf16.gmra.mrb[0].mxu0 %v1261
        %v1543 = vpop.f32.mrb[0].mxu0
        %v1544 = vadd.f32 %v1031, %v1543
        %v1545 = vpop.f32.mrb[0].mxu0
        %v1546 = vadd.f32 %v1033, %v1545
        %v1547 = vpop.f32.mrb[0].mxu0
        %v1548 = vadd.f32 %v1035, %v1547
        %v1549 = vpop.f32.mrb[0].mxu0
        %v1550 = vadd.f32 %v1037, %v1549
        %1551 = vmatprep.mubr.bf16.mxu0 %v1264
        %1552 = vmatmul.mubr.bf16.gmra.mrb[0].mxu0 %v1263
        %v1553 = vpop.f32.mrb[0].mxu0
        %v1554 = vadd.f32 %v1041, %v1553
        %v1555 = vpop.f32.mrb[0].mxu0
        %v1556 = vadd.f32 %v1043, %v1555
        %v1557 = vpop.f32.mrb[0].mxu0
        %v1558 = vadd.f32 %v1045, %v1557
        %v1559 = vpop.f32.mrb[0].mxu0
        %v1560 = vadd.f32 %v1047, %v1559
        %1561 = vmatprep.mubr.bf16.mxu0 %v1266
        %1562 = vmatmul.mubr.bf16.gmra.mrb[0].mxu0 %v1265
        %v1563 = vpop.f32.mrb[0].mxu0
        %v1564 = vadd.f32 %v1051, %v1563
        %v1565 = vpop.f32.mrb[0].mxu0
        %v1566 = vadd.f32 %v1053, %v1565
        %v1567 = vpop.f32.mrb[0].mxu0
        %v1568 = vadd.f32 %v1055, %v1567
        %v1569 = vpop.f32.mrb[0].mxu0
        %v1570 = vadd.f32 %v1057, %v1569
        %1571 = vmatprep.mubr.bf16.mxu0 %v1268
        %1572 = vmatmul.mubr.bf16.gmra.mrb[0].mxu0 %v1267
        %v1573 = vpop.f32.mrb[0].mxu0
        %v1574 = vadd.f32 %v1061, %v1573
        %v1575 = vpop.f32.mrb[0].mxu0
        %v1576 = vadd.f32 %v1063, %v1575
        %v1577 = vpop.f32.mrb[0].mxu0
        %v1578 = vadd.f32 %v1065, %v1577
        %v1579 = vpop.f32.mrb[0].mxu0
        %v1580 = vadd.f32 %v1067, %v1579
        %1581 = vmatprep.mubr.bf16.mxu0 %v1270
        %1582 = vmatmul.mubr.bf16.gmra.mrb[0].mxu0 %v1269
        %v1583 = vpop.f32.mrb[0].mxu0
        %v1584 = vadd.f32 %v1071, %v1583
        %v1585 = vpop.f32.mrb[0].mxu0
        %v1586 = vadd.f32 %v1073, %v1585
        %v1587 = vpop.f32.mrb[0].mxu0
        %v1588 = vadd.f32 %v1075, %v1587
        %v1589 = vpop.f32.mrb[0].mxu0
        %v1590 = vadd.f32 %v1077, %v1589
        %1591 = vmatprep.mubr.bf16.mxu0 %v1272
        %1592 = vmatmul.mubr.bf16.gmra.mrb[0].mxu0 %v1271
        %v1593 = vpop.f32.mrb[0].mxu0
        %v1594 = vadd.f32 %v1081, %v1593
        %v1595 = vpop.f32.mrb[0].mxu0
        %v1596 = vadd.f32 %v1083, %v1595
        %v1597 = vpop.f32.mrb[0].mxu0
        %v1598 = vadd.f32 %v1085, %v1597
        %v1599 = vpop.f32.mrb[0].mxu0
        %v1600 = vadd.f32 %v1087, %v1599
        %1601 = vmatprep.mubr.bf16.mxu0 %v1274
        %1602 = vmatmul.mubr.bf16.gmra.mrb[0].mxu0 %v1273
        %v1603 = vpop.f32.mrb[0].mxu0
        %v1604 = vadd.f32 %v1091, %v1603
        %v1605 = vpop.f32.mrb[0].mxu0
        %v1606 = vadd.f32 %v1093, %v1605
        %v1607 = vpop.f32.mrb[0].mxu0
        %v1608 = vadd.f32 %v1095, %v1607
        %v1609 = vpop.f32.mrb[0].mxu0
        %v1610 = vadd.f32 %v1097, %v1609
        %1611 = vmatprep.mubr.bf16.mxu0 %v1276
        %1612 = vmatmul.mubr.bf16.gmra.mrb[0].mxu0 %v1275
        %v1613 = vpop.f32.mrb[0].mxu0
        %v1614 = vadd.f32 %v1101, %v1613
        %v1615 = vpop.f32.mrb[0].mxu0
        %v1616 = vadd.f32 %v1103, %v1615
        %v1617 = vpop.f32.mrb[0].mxu0
        %v1618 = vadd.f32 %v1105, %v1617
        %v1619 = vpop.f32.mrb[0].mxu0
        %v1620 = vadd.f32 %v1107, %v1619
        %1621 = vmatprep.mubr.bf16.mxu0 %v1278
        %1622 = vmatmul.mubr.bf16.gmra.mrb[0].mxu0 %v1277
        %v1623 = vpop.f32.mrb[0].mxu0
        %v1624 = vadd.f32 %v1111, %v1623
        %v1625 = vpop.f32.mrb[0].mxu0
        %v1626 = vadd.f32 %v1113, %v1625
        %v1627 = vpop.f32.mrb[0].mxu0
        %v1628 = vadd.f32 %v1115, %v1627
        %v1629 = vpop.f32.mrb[0].mxu0
        %v1630 = vadd.f32 %v1117, %v1629
        %1631 = vmatprep.mubr.bf16.mxu0 %v1280
        %1632 = vmatmul.mubr.bf16.gmra.mrb[0].mxu0 %v1279
        %v1633 = vpop.f32.mrb[0].mxu0
        %v1634 = vadd.f32 %v1121, %v1633
        %v1635 = vpop.f32.mrb[0].mxu0
        %v1636 = vadd.f32 %v1123, %v1635
        %v1637 = vpop.f32.mrb[0].mxu0
        %v1638 = vadd.f32 %v1125, %v1637
        %v1639 = vpop.f32.mrb[0].mxu0
        %v1640 = vadd.f32 %v1127, %v1639
        %1641 = vmatprep.mubr.bf16.mxu0 %v1282
        %1642 = vmatmul.mubr.bf16.gmra.mrb[0].mxu0 %v1281
        %v1643 = vpop.f32.mrb[0].mxu0
        %v1644 = vadd.f32 %v1131, %v1643
        %v1645 = vpop.f32.mrb[0].mxu0
        %v1646 = vadd.f32 %v1133, %v1645
        %v1647 = vpop.f32.mrb[0].mxu0
        %v1648 = vadd.f32 %v1135, %v1647
        %v1649 = vpop.f32.mrb[0].mxu0
        %v1650 = vadd.f32 %v1137, %v1649
        %1651 = vmatprep.mubr.bf16.mxu0 %v1284
        %1652 = vmatmul.mubr.bf16.gmra.mrb[0].mxu0 %v1283
        %v1653 = vpop.f32.mrb[0].mxu0
        %v1654 = vadd.f32 %v1141, %v1653
        %v1655 = vpop.f32.mrb[0].mxu0
        %v1656 = vadd.f32 %v1143, %v1655
        %v1657 = vpop.f32.mrb[0].mxu0
        %v1658 = vadd.f32 %v1145, %v1657
        %v1659 = vpop.f32.mrb[0].mxu0
        %v1660 = vadd.f32 %v1147, %v1659
        %1661 = vmatprep.mubr.bf16.mxu0 %v1286
        %1662 = vmatmul.mubr.bf16.gmra.mrb[0].mxu0 %v1285
        %v1663 = vpop.f32.mrb[0].mxu0
        %v1664 = vadd.f32 %v1151, %v1663
        %v1665 = vpop.f32.mrb[0].mxu0
        %v1666 = vadd.f32 %v1153, %v1665
        %v1667 = vpop.f32.mrb[0].mxu0
        %v1668 = vadd.f32 %v1155, %v1667
        %v1669 = vpop.f32.mrb[0].mxu0
        %v1670 = vadd.f32 %v1157, %v1669
        %1671 = vdwg.mxu0
        %v1672 = vld [vmem:[%s501] sm:$0xff]
        %v1673 = vld [vmem:[%s501 + $0x8] sm:$0xff]
        %v1674 = vld [vmem:[%s501 + $0x10] sm:$0xff]
        %v1675 = vld [vmem:[%s501 + $0x18] sm:$0xff]
        %v1676 = vld [vmem:[%s501 + $0x20] sm:$0xff]
        %v1677 = vld [vmem:[%s501 + $0x28] sm:$0xff]
        %v1678 = vld [vmem:[%s501 + $0x30] sm:$0xff]
        %v1679 = vld [vmem:[%s501 + $0x38] sm:$0xff]
        %v1680 = vld [vmem:[%s501 + $0x40] sm:$0xff]
        %v1681 = vld [vmem:[%s501 + $0x48] sm:$0xff]
        %v1682 = vld [vmem:[%s501 + $0x50] sm:$0xff]
        %v1683 = vld [vmem:[%s501 + $0x58] sm:$0xff]
        %v1684 = vld [vmem:[%s501 + $0x60] sm:$0xff]
        %v1685 = vld [vmem:[%s501 + $0x68] sm:$0xff]
        %v1686 = vld [vmem:[%s501 + $0x70] sm:$0xff]
        %v1687 = vld [vmem:[%s501 + $0x78] sm:$0xff]
        %v1688 = vld [vmem:[%s501 + $0x80] sm:$0xff]
        %v1689 = vld [vmem:[%s501 + $0x88] sm:$0xff]
        %v1690 = vld [vmem:[%s501 + $0x90] sm:$0xff]
        %v1691 = vld [vmem:[%s501 + $0x98] sm:$0xff]
        %v1692 = vld [vmem:[%s501 + $0xa0] sm:$0xff]
        %v1693 = vld [vmem:[%s501 + $0xa8] sm:$0xff]
        %v1694 = vld [vmem:[%s501 + $0xb0] sm:$0xff]
        %v1695 = vld [vmem:[%s501 + $0xb8] sm:$0xff]
        %v1696 = vld [vmem:[%s501 + $0xc0] sm:$0xff]
        %v1697 = vld [vmem:[%s501 + $0xc8] sm:$0xff]
        %v1698 = vld [vmem:[%s501 + $0xd0] sm:$0xff]
        %v1699 = vld [vmem:[%s501 + $0xd8] sm:$0xff]
        %v1700 = vld [vmem:[%s501 + $0xe0] sm:$0xff]
        %v1701 = vld [vmem:[%s501 + $0xe8] sm:$0xff]
        %v1702 = vld [vmem:[%s501 + $0xf0] sm:$0xff]
        %v1703 = vld [vmem:[%s501 + $0xf8] sm:$0xff]
        %v1704 = vld [vmem:[%s7] sm:$0xff]
        %v1705 = vld [vmem:[%s7 + $0x8] sm:$0xff]
        %v1706 = vld [vmem:[%s7 + $0x10] sm:$0xff]
        %v1707 = vld [vmem:[%s7 + $0x18] sm:$0xff]
        %v1708 = vld [vmem:[%s7 + $0x20] sm:$0xff]
        %v1709 = vld [vmem:[%s7 + $0x28] sm:$0xff]
        %v1710 = vld [vmem:[%s7 + $0x30] sm:$0xff]
        %v1711 = vld [vmem:[%s7 + $0x38] sm:$0xff]
        %v1712 = vld [vmem:[%s7 + $0x40] sm:$0xff]
        %v1713 = vld [vmem:[%s7 + $0x48] sm:$0xff]
        %v1714 = vld [vmem:[%s7 + $0x50] sm:$0xff]
        %v1715 = vld [vmem:[%s7 + $0x58] sm:$0xff]
        %v1716 = vld [vmem:[%s7 + $0x60] sm:$0xff]
        %v1717 = vld [vmem:[%s7 + $0x68] sm:$0xff]
        %v1718 = vld [vmem:[%s7 + $0x70] sm:$0xff]
        %v1719 = vld [vmem:[%s7 + $0x78] sm:$0xff]
        %v1720 = vld [vmem:[%s7 + $0x80] sm:$0xff]
        %v1721 = vld [vmem:[%s7 + $0x88] sm:$0xff]
        %v1722 = vld [vmem:[%s7 + $0x90] sm:$0xff]
        %v1723 = vld [vmem:[%s7 + $0x98] sm:$0xff]
        %v1724 = vld [vmem:[%s7 + $0xa0] sm:$0xff]
        %v1725 = vld [vmem:[%s7 + $0xa8] sm:$0xff]
        %v1726 = vld [vmem:[%s7 + $0xb0] sm:$0xff]
        %v1727 = vld [vmem:[%s7 + $0xb8] sm:$0xff]
        %v1728 = vld [vmem:[%s7 + $0xc0] sm:$0xff]
        %v1729 = vld [vmem:[%s7 + $0xc8] sm:$0xff]
        %v1730 = vld [vmem:[%s7 + $0xd0] sm:$0xff]
        %v1731 = vld [vmem:[%s7 + $0xd8] sm:$0xff]
        %v1732 = vld [vmem:[%s7 + $0xe0] sm:$0xff]
        %v1733 = vld [vmem:[%s7 + $0xe8] sm:$0xff]
        %v1734 = vld [vmem:[%s7 + $0xf0] sm:$0xff]
        %v1735 = vld [vmem:[%s7 + $0xf8] sm:$0xff]
        %v1768 = vunpack.c.l.b16 %v1672
        %v1769 = vunpack.c.h.b16 %v1672
        %v1770 = vunpack.c.l.b16 %v1673
        %v1771 = vunpack.c.h.b16 %v1673
        %v1772 = vunpack.c.l.b16 %v1674
        %v1773 = vunpack.c.h.b16 %v1674
        %v1774 = vunpack.c.l.b16 %v1675
        %v1775 = vunpack.c.h.b16 %v1675
        %v1776 = vunpack.c.l.b16 %v1676
        %v1777 = vunpack.c.h.b16 %v1676
        %v1778 = vunpack.c.l.b16 %v1677
        %v1779 = vunpack.c.h.b16 %v1677
        %v1780 = vunpack.c.l.b16 %v1678
        %v1781 = vunpack.c.h.b16 %v1678
        %v1782 = vunpack.c.l.b16 %v1679
        %v1783 = vunpack.c.h.b16 %v1679
        %v1784 = vunpack.c.l.b16 %v1680
        %v1785 = vunpack.c.h.b16 %v1680
        %v1786 = vunpack.c.l.b16 %v1681
        %v1787 = vunpack.c.h.b16 %v1681
        %v1788 = vunpack.c.l.b16 %v1682
        %v1789 = vunpack.c.h.b16 %v1682
        %v1790 = vunpack.c.l.b16 %v1683
        %v1791 = vunpack.c.h.b16 %v1683
        %v1792 = vunpack.c.l.b16 %v1684
        %v1793 = vunpack.c.h.b16 %v1684
        %v1794 = vunpack.c.l.b16 %v1685
        %v1795 = vunpack.c.h.b16 %v1685
        %v1796 = vunpack.c.l.b16 %v1686
        %v1797 = vunpack.c.h.b16 %v1686
        %v1798 = vunpack.c.l.b16 %v1687
        %v1799 = vunpack.c.h.b16 %v1687
        %v1800 = vunpack.c.l.b16 %v1688
        %v1801 = vunpack.c.h.b16 %v1688
        %v1802 = vunpack.c.l.b16 %v1689
        %v1803 = vunpack.c.h.b16 %v1689
        %v1804 = vunpack.c.l.b16 %v1690
        %v1805 = vunpack.c.h.b16 %v1690
        %v1806 = vunpack.c.l.b16 %v1691
        %v1807 = vunpack.c.h.b16 %v1691
        %v1808 = vunpack.c.l.b16 %v1692
        %v1809 = vunpack.c.h.b16 %v1692
        %v1810 = vunpack.c.l.b16 %v1693
        %v1811 = vunpack.c.h.b16 %v1693
        %v1812 = vunpack.c.l.b16 %v1694
        %v1813 = vunpack.c.h.b16 %v1694
        %v1814 = vunpack.c.l.b16 %v1695
        %v1815 = vunpack.c.h.b16 %v1695
        %v1816 = vunpack.c.l.b16 %v1696
        %v1817 = vunpack.c.h.b16 %v1696
        %v1818 = vunpack.c.l.b16 %v1697
        %v1819 = vunpack.c.h.b16 %v1697
        %v1820 = vunpack.c.l.b16 %v1698
        %v1821 = vunpack.c.h.b16 %v1698
        %v1822 = vunpack.c.l.b16 %v1699
        %v1823 = vunpack.c.h.b16 %v1699
        %v1824 = vunpack.c.l.b16 %v1700
        %v1825 = vunpack.c.h.b16 %v1700
        %v1826 = vunpack.c.l.b16 %v1701
        %v1827 = vunpack.c.h.b16 %v1701
        %v1828 = vunpack.c.l.b16 %v1702
        %v1829 = vunpack.c.h.b16 %v1702
        %v1830 = vunpack.c.l.b16 %v1703
        %v1831 = vunpack.c.h.b16 %v1703
        %v1832 = vpack.c.b16 %v1770, %v1768
        %v1833 = vpack.c.b16 %v1771, %v1769
        %v1834 = vpack.c.b16 %v1774, %v1772
        %v1835 = vpack.c.b16 %v1775, %v1773
        %v1836 = vpack.c.b16 %v1778, %v1776
        %v1837 = vpack.c.b16 %v1779, %v1777
        %v1838 = vpack.c.b16 %v1782, %v1780
        %v1839 = vpack.c.b16 %v1783, %v1781
        %v1840 = vpack.c.b16 %v1786, %v1784
        %v1841 = vpack.c.b16 %v1787, %v1785
        %v1842 = vpack.c.b16 %v1790, %v1788
        %v1843 = vpack.c.b16 %v1791, %v1789
        %v1844 = vpack.c.b16 %v1794, %v1792
        %v1845 = vpack.c.b16 %v1795, %v1793
        %v1846 = vpack.c.b16 %v1798, %v1796
        %v1847 = vpack.c.b16 %v1799, %v1797
        %v1848 = vpack.c.b16 %v1802, %v1800
        %v1849 = vpack.c.b16 %v1803, %v1801
        %v1850 = vpack.c.b16 %v1806, %v1804
        %v1851 = vpack.c.b16 %v1807, %v1805
        %v1852 = vpack.c.b16 %v1810, %v1808
        %v1853 = vpack.c.b16 %v1811, %v1809
        %v1854 = vpack.c.b16 %v1814, %v1812
        %v1855 = vpack.c.b16 %v1815, %v1813
        %v1856 = vpack.c.b16 %v1818, %v1816
        %v1857 = vpack.c.b16 %v1819, %v1817
        %v1858 = vpack.c.b16 %v1822, %v1820
        %v1859 = vpack.c.b16 %v1823, %v1821
        %v1860 = vpack.c.b16 %v1826, %v1824
        %v1861 = vpack.c.b16 %v1827, %v1825
        %v1862 = vpack.c.b16 %v1830, %v1828
        %v1863 = vpack.c.b16 %v1831, %v1829
        %v1928 = vunpack.c.l.b16 %v1704
        %v1929 = vunpack.c.h.b16 %v1704
        %v1930 = vunpack.c.l.b16 %v1705
        %v1931 = vunpack.c.h.b16 %v1705
        %v1932 = vunpack.c.l.b16 %v1706
        %v1933 = vunpack.c.h.b16 %v1706
        %v1934 = vunpack.c.l.b16 %v1707
        %v1935 = vunpack.c.h.b16 %v1707
        %v1936 = vunpack.c.l.b16 %v1708
        %v1937 = vunpack.c.h.b16 %v1708
        %v1938 = vunpack.c.l.b16 %v1709
        %v1939 = vunpack.c.h.b16 %v1709
        %v1940 = vunpack.c.l.b16 %v1710
        %v1941 = vunpack.c.h.b16 %v1710
        %v1942 = vunpack.c.l.b16 %v1711
        %v1943 = vunpack.c.h.b16 %v1711
        %v1944 = vunpack.c.l.b16 %v1712
        %v1945 = vunpack.c.h.b16 %v1712
        %v1946 = vunpack.c.l.b16 %v1713
        %v1947 = vunpack.c.h.b16 %v1713
        %v1948 = vunpack.c.l.b16 %v1714
        %v1949 = vunpack.c.h.b16 %v1714
        %v1950 = vunpack.c.l.b16 %v1715
        %v1951 = vunpack.c.h.b16 %v1715
        %v1952 = vunpack.c.l.b16 %v1716
        %v1953 = vunpack.c.h.b16 %v1716
        %v1954 = vunpack.c.l.b16 %v1717
        %v1955 = vunpack.c.h.b16 %v1717
        %v1956 = vunpack.c.l.b16 %v1718
        %v1957 = vunpack.c.h.b16 %v1718
        %v1958 = vunpack.c.l.b16 %v1719
        %v1959 = vunpack.c.h.b16 %v1719
        %v1960 = vunpack.c.l.b16 %v1720
        %v1961 = vunpack.c.h.b16 %v1720
        %v1962 = vunpack.c.l.b16 %v1721
        %v1963 = vunpack.c.h.b16 %v1721
        %v1964 = vunpack.c.l.b16 %v1722
        %v1965 = vunpack.c.h.b16 %v1722
        %v1966 = vunpack.c.l.b16 %v1723
        %v1967 = vunpack.c.h.b16 %v1723
        %v1968 = vunpack.c.l.b16 %v1724
        %v1969 = vunpack.c.h.b16 %v1724
        %v1970 = vunpack.c.l.b16 %v1725
        %v1971 = vunpack.c.h.b16 %v1725
        %v1972 = vunpack.c.l.b16 %v1726
        %v1973 = vunpack.c.h.b16 %v1726
        %v1974 = vunpack.c.l.b16 %v1727
        %v1975 = vunpack.c.h.b16 %v1727
        %v1976 = vunpack.c.l.b16 %v1728
        %v1977 = vunpack.c.h.b16 %v1728
        %v1978 = vunpack.c.l.b16 %v1729
        %v1979 = vunpack.c.h.b16 %v1729
        %v1980 = vunpack.c.l.b16 %v1730
        %v1981 = vunpack.c.h.b16 %v1730
        %v1982 = vunpack.c.l.b16 %v1731
        %v1983 = vunpack.c.h.b16 %v1731
        %v1984 = vunpack.c.l.b16 %v1732
        %v1985 = vunpack.c.h.b16 %v1732
        %v1986 = vunpack.c.l.b16 %v1733
        %v1987 = vunpack.c.h.b16 %v1733
        %v1988 = vunpack.c.l.b16 %v1734
        %v1989 = vunpack.c.h.b16 %v1734
        %v1990 = vunpack.c.l.b16 %v1735
        %v1991 = vunpack.c.h.b16 %v1735
        %v1992 = vpack.c.b16 %v1930, %v1928
        %v1993 = vpack.c.b16 %v1931, %v1929
        %v1994 = vpack.c.b16 %v1934, %v1932
        %v1995 = vpack.c.b16 %v1935, %v1933
        %v1996 = vpack.c.b16 %v1938, %v1936
        %v1997 = vpack.c.b16 %v1939, %v1937
        %v1998 = vpack.c.b16 %v1942, %v1940
        %v1999 = vpack.c.b16 %v1943, %v1941
        %v2000 = vpack.c.b16 %v1946, %v1944
        %v2001 = vpack.c.b16 %v1947, %v1945
        %v2002 = vpack.c.b16 %v1950, %v1948
        %v2003 = vpack.c.b16 %v1951, %v1949
        %v2004 = vpack.c.b16 %v1954, %v1952
        %v2005 = vpack.c.b16 %v1955, %v1953
        %v2006 = vpack.c.b16 %v1958, %v1956
        %v2007 = vpack.c.b16 %v1959, %v1957
        %v2008 = vpack.c.b16 %v1962, %v1960
        %v2009 = vpack.c.b16 %v1963, %v1961
        %v2010 = vpack.c.b16 %v1966, %v1964
        %v2011 = vpack.c.b16 %v1967, %v1965
        %v2012 = vpack.c.b16 %v1970, %v1968
        %v2013 = vpack.c.b16 %v1971, %v1969
        %v2014 = vpack.c.b16 %v1974, %v1972
        %v2015 = vpack.c.b16 %v1975, %v1973
        %v2016 = vpack.c.b16 %v1978, %v1976
        %v2017 = vpack.c.b16 %v1979, %v1977
        %v2018 = vpack.c.b16 %v1982, %v1980
        %v2019 = vpack.c.b16 %v1983, %v1981
        %v2020 = vpack.c.b16 %v1986, %v1984
        %v2021 = vpack.c.b16 %v1987, %v1985
        %v2022 = vpack.c.b16 %v1990, %v1988
        %v2023 = vpack.c.b16 %v1991, %v1989
        %2056 = vmatprep.subr.bf16.mxu0 %v1993
        %2057 = vmatpush1.bf16.msra.mxu0 %v1992
        %2058 = vmatprep.subr.bf16.mxu0 %v1995
        %2059 = vmatpush1.bf16.msra.mxu0 %v1994
        %2060 = vmatprep.subr.bf16.mxu0 %v1997
        %2061 = vmatpush1.bf16.msra.mxu0 %v1996
        %2062 = vmatprep.subr.bf16.mxu0 %v1999
        %2063 = vmatpush1.bf16.msra.mxu0 %v1998
        %2064 = vmatprep.subr.bf16.mxu0 %v2001
        %2065 = vmatpush1.bf16.msra.mxu0 %v2000
        %2066 = vmatprep.subr.bf16.mxu0 %v2003
        %2067 = vmatpush1.bf16.msra.mxu0 %v2002
        %2068 = vmatprep.subr.bf16.mxu0 %v2005
        %2069 = vmatpush1.bf16.msra.mxu0 %v2004
        %2070 = vmatprep.subr.bf16.mxu0 %v2007
        %2071 = vmatpush1.bf16.msra.mxu0 %v2006
        %2072 = vmatprep.subr.bf16.mxu0 %v2009
        %2073 = vmatpush1.bf16.msra.mxu0 %v2008
        %2074 = vmatprep.subr.bf16.mxu0 %v2011
        %2075 = vmatpush1.bf16.msra.mxu0 %v2010
        %2076 = vmatprep.subr.bf16.mxu0 %v2013
        %2077 = vmatpush1.bf16.msra.mxu0 %v2012
        %2078 = vmatprep.subr.bf16.mxu0 %v2015
        %2079 = vmatpush1.bf16.msra.mxu0 %v2014
        %2080 = vmatprep.subr.bf16.mxu0 %v2017
        %2081 = vmatpush1.bf16.msra.mxu0 %v2016
        %2082 = vmatprep.subr.bf16.mxu0 %v2019
        %2083 = vmatpush1.bf16.msra.mxu0 %v2018
        %2084 = vmatprep.subr.bf16.mxu0 %v2021
        %2085 = vmatpush1.bf16.msra.mxu0 %v2020
        %2086 = vmatprep.subr.bf16.mxu0 %v2023
        %2087 = vmatpush1.bf16.msra.mxu0 %v2022
        %2088 = vmatprep.mubr.bf16.mxu0 %v1833
        %2089 = vmatmul.mubr.bf16.gmra.mrb[0].mxu0 %v1832
        %v2090 = vpop.f32.mrb[0].mxu0
        %v2091 = vadd.f32 0.0, %v2090
        %v2092 = vpop.f32.mrb[0].mxu0
        %v2093 = vadd.f32 0.0, %v2092
        %v2094 = vpop.f32.mrb[0].mxu0
        %v2095 = vadd.f32 0.0, %v2094
        %v2096 = vpop.f32.mrb[0].mxu0
        %v2097 = vadd.f32 0.0, %v2096
        %2098 = vmatprep.mubr.bf16.mxu0 %v1835
        %2099 = vmatmul.mubr.bf16.gmra.mrb[0].mxu0 %v1834
        %v2100 = vpop.f32.mrb[0].mxu0
        %v2101 = vadd.f32 0.0, %v2100
        %v2102 = vpop.f32.mrb[0].mxu0
        %v2103 = vadd.f32 0.0, %v2102
        %v2104 = vpop.f32.mrb[0].mxu0
        %v2105 = vadd.f32 0.0, %v2104
        %v2106 = vpop.f32.mrb[0].mxu0
        %v2107 = vadd.f32 0.0, %v2106
        %2108 = vmatprep.mubr.bf16.mxu0 %v1837
        %2109 = vmatmul.mubr.bf16.gmra.mrb[0].mxu0 %v1836
        %v2110 = vpop.f32.mrb[0].mxu0
        %v2111 = vadd.f32 0.0, %v2110
        %v2112 = vpop.f32.mrb[0].mxu0
        %v2113 = vadd.f32 0.0, %v2112
        %v2114 = vpop.f32.mrb[0].mxu0
        %v2115 = vadd.f32 0.0, %v2114
        %v2116 = vpop.f32.mrb[0].mxu0
        %v2117 = vadd.f32 0.0, %v2116
        %2118 = vmatprep.mubr.bf16.mxu0 %v1839
        %2119 = vmatmul.mubr.bf16.gmra.mrb[0].mxu0 %v1838
        %v2120 = vpop.f32.mrb[0].mxu0
        %v2121 = vadd.f32 0.0, %v2120
        %v2122 = vpop.f32.mrb[0].mxu0
        %v2123 = vadd.f32 0.0, %v2122
        %v2124 = vpop.f32.mrb[0].mxu0
        %v2125 = vadd.f32 0.0, %v2124
        %v2126 = vpop.f32.mrb[0].mxu0
        %v2127 = vadd.f32 0.0, %v2126
        %2128 = vmatprep.mubr.bf16.mxu0 %v1841
        %2129 = vmatmul.mubr.bf16.gmra.mrb[0].mxu0 %v1840
        %v2130 = vpop.f32.mrb[0].mxu0
        %v2131 = vadd.f32 0.0, %v2130
        %v2132 = vpop.f32.mrb[0].mxu0
        %v2133 = vadd.f32 0.0, %v2132
        %v2134 = vpop.f32.mrb[0].mxu0
        %v2135 = vadd.f32 0.0, %v2134
        %v2136 = vpop.f32.mrb[0].mxu0
        %v2137 = vadd.f32 0.0, %v2136
        %2138 = vmatprep.mubr.bf16.mxu0 %v1843
        %2139 = vmatmul.mubr.bf16.gmra.mrb[0].mxu0 %v1842
        %v2140 = vpop.f32.mrb[0].mxu0
        %v2141 = vadd.f32 0.0, %v2140
        %v2142 = vpop.f32.mrb[0].mxu0
        %v2143 = vadd.f32 0.0, %v2142
        %v2144 = vpop.f32.mrb[0].mxu0
        %v2145 = vadd.f32 0.0, %v2144
        %v2146 = vpop.f32.mrb[0].mxu0
        %v2147 = vadd.f32 0.0, %v2146
        %2148 = vmatprep.mubr.bf16.mxu0 %v1845
        %2149 = vmatmul.mubr.bf16.gmra.mrb[0].mxu0 %v1844
        %v2150 = vpop.f32.mrb[0].mxu0
        %v2151 = vadd.f32 0.0, %v2150
        %v2152 = vpop.f32.mrb[0].mxu0
        %v2153 = vadd.f32 0.0, %v2152
        %v2154 = vpop.f32.mrb[0].mxu0
        %v2155 = vadd.f32 0.0, %v2154
        %v2156 = vpop.f32.mrb[0].mxu0
        %v2157 = vadd.f32 0.0, %v2156
        %2158 = vmatprep.mubr.bf16.mxu0 %v1847
        %2159 = vmatmul.mubr.bf16.gmra.mrb[0].mxu0 %v1846
        %v2160 = vpop.f32.mrb[0].mxu0
        %v2161 = vadd.f32 0.0, %v2160
        %v2162 = vpop.f32.mrb[0].mxu0
        %v2163 = vadd.f32 0.0, %v2162
        %v2164 = vpop.f32.mrb[0].mxu0
        %v2165 = vadd.f32 0.0, %v2164
        %v2166 = vpop.f32.mrb[0].mxu0
        %v2167 = vadd.f32 0.0, %v2166
        %2168 = vmatprep.mubr.bf16.mxu0 %v1849
        %2169 = vmatmul.mubr.bf16.gmra.mrb[0].mxu0 %v1848
        %v2170 = vpop.f32.mrb[0].mxu0
        %v2171 = vadd.f32 0.0, %v2170
        %v2172 = vpop.f32.mrb[0].mxu0
        %v2173 = vadd.f32 0.0, %v2172
        %v2174 = vpop.f32.mrb[0].mxu0
        %v2175 = vadd.f32 0.0, %v2174
        %v2176 = vpop.f32.mrb[0].mxu0
        %v2177 = vadd.f32 0.0, %v2176
        %2178 = vmatprep.mubr.bf16.mxu0 %v1851
        %2179 = vmatmul.mubr.bf16.gmra.mrb[0].mxu0 %v1850
        %v2180 = vpop.f32.mrb[0].mxu0
        %v2181 = vadd.f32 0.0, %v2180
        %v2182 = vpop.f32.mrb[0].mxu0
        %v2183 = vadd.f32 0.0, %v2182
        %v2184 = vpop.f32.mrb[0].mxu0
        %v2185 = vadd.f32 0.0, %v2184
        %v2186 = vpop.f32.mrb[0].mxu0
        %v2187 = vadd.f32 0.0, %v2186
        %2188 = vmatprep.mubr.bf16.mxu0 %v1853
        %2189 = vmatmul.mubr.bf16.gmra.mrb[0].mxu0 %v1852
        %v2190 = vpop.f32.mrb[0].mxu0
        %v2191 = vadd.f32 0.0, %v2190
        %v2192 = vpop.f32.mrb[0].mxu0
        %v2193 = vadd.f32 0.0, %v2192
        %v2194 = vpop.f32.mrb[0].mxu0
        %v2195 = vadd.f32 0.0, %v2194
        %v2196 = vpop.f32.mrb[0].mxu0
        %v2197 = vadd.f32 0.0, %v2196
        %2198 = vmatprep.mubr.bf16.mxu0 %v1855
        %2199 = vmatmul.mubr.bf16.gmra.mrb[0].mxu0 %v1854
        %v2200 = vpop.f32.mrb[0].mxu0
        %v2201 = vadd.f32 0.0, %v2200
        %v2202 = vpop.f32.mrb[0].mxu0
        %v2203 = vadd.f32 0.0, %v2202
        %v2204 = vpop.f32.mrb[0].mxu0
        %v2205 = vadd.f32 0.0, %v2204
        %v2206 = vpop.f32.mrb[0].mxu0
        %v2207 = vadd.f32 0.0, %v2206
        %2208 = vmatprep.mubr.bf16.mxu0 %v1857
        %2209 = vmatmul.mubr.bf16.gmra.mrb[0].mxu0 %v1856
        %v2210 = vpop.f32.mrb[0].mxu0
        %v2211 = vadd.f32 0.0, %v2210
        %v2212 = vpop.f32.mrb[0].mxu0
        %v2213 = vadd.f32 0.0, %v2212
        %v2214 = vpop.f32.mrb[0].mxu0
        %v2215 = vadd.f32 0.0, %v2214
        %v2216 = vpop.f32.mrb[0].mxu0
        %v2217 = vadd.f32 0.0, %v2216
        %2218 = vmatprep.mubr.bf16.mxu0 %v1859
        %2219 = vmatmul.mubr.bf16.gmra.mrb[0].mxu0 %v1858
        %v2220 = vpop.f32.mrb[0].mxu0
        %v2221 = vadd.f32 0.0, %v2220
        %v2222 = vpop.f32.mrb[0].mxu0
        %v2223 = vadd.f32 0.0, %v2222
        %v2224 = vpop.f32.mrb[0].mxu0
        %v2225 = vadd.f32 0.0, %v2224
        %v2226 = vpop.f32.mrb[0].mxu0
        %v2227 = vadd.f32 0.0, %v2226
        %2228 = vmatprep.mubr.bf16.mxu0 %v1861
        %2229 = vmatmul.mubr.bf16.gmra.mrb[0].mxu0 %v1860
        %v2230 = vpop.f32.mrb[0].mxu0
        %v2231 = vadd.f32 0.0, %v2230
        %v2232 = vpop.f32.mrb[0].mxu0
        %v2233 = vadd.f32 0.0, %v2232
        %v2234 = vpop.f32.mrb[0].mxu0
        %v2235 = vadd.f32 0.0, %v2234
        %v2236 = vpop.f32.mrb[0].mxu0
        %v2237 = vadd.f32 0.0, %v2236
        %2238 = vmatprep.mubr.bf16.mxu0 %v1863
        %2239 = vmatmul.mubr.bf16.gmra.mrb[0].mxu0 %v1862
        %v2240 = vpop.f32.mrb[0].mxu0
        %v2241 = vadd.f32 0.0, %v2240
        %v2242 = vpop.f32.mrb[0].mxu0
        %v2243 = vadd.f32 0.0, %v2242
        %v2244 = vpop.f32.mrb[0].mxu0
        %v2245 = vadd.f32 0.0, %v2244
        %v2246 = vpop.f32.mrb[0].mxu0
        %v2247 = vadd.f32 0.0, %v2246
        %2248 = vdwg.mxu0
        %v2249 = vadd.f32 %v1514, %v2091
        %v2250 = vadd.f32 %v1516, %v2093
        %v2251 = vadd.f32 %v1518, %v2095
        %v2252 = vadd.f32 %v1520, %v2097
        %v2253 = vadd.f32 %v1524, %v2101
        %v2254 = vadd.f32 %v1526, %v2103
        %v2255 = vadd.f32 %v1528, %v2105
        %v2256 = vadd.f32 %v1530, %v2107
        %v2257 = vadd.f32 %v1534, %v2111
        %v2258 = vadd.f32 %v1536, %v2113
        %v2259 = vadd.f32 %v1538, %v2115
        %v2260 = vadd.f32 %v1540, %v2117
        %v2261 = vadd.f32 %v1544, %v2121
        %v2262 = vadd.f32 %v1546, %v2123
        %v2263 = vadd.f32 %v1548, %v2125
        %v2264 = vadd.f32 %v1550, %v2127
        %v2265 = vadd.f32 %v1554, %v2131
        %v2266 = vadd.f32 %v1556, %v2133
        %v2267 = vadd.f32 %v1558, %v2135
        %v2268 = vadd.f32 %v1560, %v2137
        %v2269 = vadd.f32 %v1564, %v2141
        %v2270 = vadd.f32 %v1566, %v2143
        %v2271 = vadd.f32 %v1568, %v2145
        %v2272 = vadd.f32 %v1570, %v2147
        %v2273 = vadd.f32 %v1574, %v2151
        %v2274 = vadd.f32 %v1576, %v2153
        %v2275 = vadd.f32 %v1578, %v2155
        %v2276 = vadd.f32 %v1580, %v2157
        %v2277 = vadd.f32 %v1584, %v2161
        %v2278 = vadd.f32 %v1586, %v2163
        %v2279 = vadd.f32 %v1588, %v2165
        %v2280 = vadd.f32 %v1590, %v2167
        %v2281 = vadd.f32 %v1594, %v2171
        %v2282 = vadd.f32 %v1596, %v2173
        %v2283 = vadd.f32 %v1598, %v2175
        %v2284 = vadd.f32 %v1600, %v2177
        %v2285 = vadd.f32 %v1604, %v2181
        %v2286 = vadd.f32 %v1606, %v2183
        %v2287 = vadd.f32 %v1608, %v2185
        %v2288 = vadd.f32 %v1610, %v2187
        %v2289 = vadd.f32 %v1614, %v2191
        %v2290 = vadd.f32 %v1616, %v2193
        %v2291 = vadd.f32 %v1618, %v2195
        %v2292 = vadd.f32 %v1620, %v2197
        %v2293 = vadd.f32 %v1624, %v2201
        %v2294 = vadd.f32 %v1626, %v2203
        %v2295 = vadd.f32 %v1628, %v2205
        %v2296 = vadd.f32 %v1630, %v2207
        %v2297 = vadd.f32 %v1634, %v2211
        %v2298 = vadd.f32 %v1636, %v2213
        %v2299 = vadd.f32 %v1638, %v2215
        %v2300 = vadd.f32 %v1640, %v2217
        %v2301 = vadd.f32 %v1644, %v2221
        %v2302 = vadd.f32 %v1646, %v2223
        %v2303 = vadd.f32 %v1648, %v2225
        %v2304 = vadd.f32 %v1650, %v2227
        %v2305 = vadd.f32 %v1654, %v2231
        %v2306 = vadd.f32 %v1656, %v2233
        %v2307 = vadd.f32 %v1658, %v2235
        %v2308 = vadd.f32 %v1660, %v2237
        %v2309 = vadd.f32 %v1664, %v2241
        %v2310 = vadd.f32 %v1666, %v2243
        %v2311 = vadd.f32 %v1668, %v2245
        %v2312 = vadd.f32 %v1670, %v2247
        %v2313 = vld [vmem:[%s508] sm:$0xff]
        %v2314 = vld [vmem:[%s508 + $0x8] sm:$0xff]
        %v2315 = vld [vmem:[%s508 + $0x10] sm:$0xff]
        %v2316 = vld [vmem:[%s508 + $0x18] sm:$0xff]
        %v2317 = vld [vmem:[%s508 + $0x20] sm:$0xff]
        %v2318 = vld [vmem:[%s508 + $0x28] sm:$0xff]
        %v2319 = vld [vmem:[%s508 + $0x30] sm:$0xff]
        %v2320 = vld [vmem:[%s508 + $0x38] sm:$0xff]
        %v2321 = vld [vmem:[%s508 + $0x40] sm:$0xff]
        %v2322 = vld [vmem:[%s508 + $0x48] sm:$0xff]
        %v2323 = vld [vmem:[%s508 + $0x50] sm:$0xff]
        %v2324 = vld [vmem:[%s508 + $0x58] sm:$0xff]
        %v2325 = vld [vmem:[%s508 + $0x60] sm:$0xff]
        %v2326 = vld [vmem:[%s508 + $0x68] sm:$0xff]
        %v2327 = vld [vmem:[%s508 + $0x70] sm:$0xff]
        %v2328 = vld [vmem:[%s508 + $0x78] sm:$0xff]
        %v2329 = vld [vmem:[%s508 + $0x80] sm:$0xff]
        %v2330 = vld [vmem:[%s508 + $0x88] sm:$0xff]
        %v2331 = vld [vmem:[%s508 + $0x90] sm:$0xff]
        %v2332 = vld [vmem:[%s508 + $0x98] sm:$0xff]
        %v2333 = vld [vmem:[%s508 + $0xa0] sm:$0xff]
        %v2334 = vld [vmem:[%s508 + $0xa8] sm:$0xff]
        %v2335 = vld [vmem:[%s508 + $0xb0] sm:$0xff]
        %v2336 = vld [vmem:[%s508 + $0xb8] sm:$0xff]
        %v2337 = vld [vmem:[%s508 + $0xc0] sm:$0xff]
        %v2338 = vld [vmem:[%s508 + $0xc8] sm:$0xff]
        %v2339 = vld [vmem:[%s508 + $0xd0] sm:$0xff]
        %v2340 = vld [vmem:[%s508 + $0xd8] sm:$0xff]
        %v2341 = vld [vmem:[%s508 + $0xe0] sm:$0xff]
        %v2342 = vld [vmem:[%s508 + $0xe8] sm:$0xff]
        %v2343 = vld [vmem:[%s508 + $0xf0] sm:$0xff]
        %v2344 = vld [vmem:[%s508 + $0xf8] sm:$0xff]
        %v2345 = vld [vmem:[%s8] sm:$0xff]
        %v2346 = vld [vmem:[%s8 + $0x8] sm:$0xff]
        %v2347 = vld [vmem:[%s8 + $0x10] sm:$0xff]
        %v2348 = vld [vmem:[%s8 + $0x18] sm:$0xff]
        %v2349 = vld [vmem:[%s8 + $0x20] sm:$0xff]
        %v2350 = vld [vmem:[%s8 + $0x28] sm:$0xff]
        %v2351 = vld [vmem:[%s8 + $0x30] sm:$0xff]
        %v2352 = vld [vmem:[%s8 + $0x38] sm:$0xff]
        %v2353 = vld [vmem:[%s8 + $0x40] sm:$0xff]
        %v2354 = vld [vmem:[%s8 + $0x48] sm:$0xff]
        %v2355 = vld [vmem:[%s8 + $0x50] sm:$0xff]
        %v2356 = vld [vmem:[%s8 + $0x58] sm:$0xff]
        %v2357 = vld [vmem:[%s8 + $0x60] sm:$0xff]
        %v2358 = vld [vmem:[%s8 + $0x68] sm:$0xff]
        %v2359 = vld [vmem:[%s8 + $0x70] sm:$0xff]
        %v2360 = vld [vmem:[%s8 + $0x78] sm:$0xff]
        %v2361 = vld [vmem:[%s8 + $0x80] sm:$0xff]
        %v2362 = vld [vmem:[%s8 + $0x88] sm:$0xff]
        %v2363 = vld [vmem:[%s8 + $0x90] sm:$0xff]
        %v2364 = vld [vmem:[%s8 + $0x98] sm:$0xff]
        %v2365 = vld [vmem:[%s8 + $0xa0] sm:$0xff]
        %v2366 = vld [vmem:[%s8 + $0xa8] sm:$0xff]
        %v2367 = vld [vmem:[%s8 + $0xb0] sm:$0xff]
        %v2368 = vld [vmem:[%s8 + $0xb8] sm:$0xff]
        %v2369 = vld [vmem:[%s8 + $0xc0] sm:$0xff]
        %v2370 = vld [vmem:[%s8 + $0xc8] sm:$0xff]
        %v2371 = vld [vmem:[%s8 + $0xd0] sm:$0xff]
        %v2372 = vld [vmem:[%s8 + $0xd8] sm:$0xff]
        %v2373 = vld [vmem:[%s8 + $0xe0] sm:$0xff]
        %v2374 = vld [vmem:[%s8 + $0xe8] sm:$0xff]
        %v2375 = vld [vmem:[%s8 + $0xf0] sm:$0xff]
        %v2376 = vld [vmem:[%s8 + $0xf8] sm:$0xff]
        %v2409 = vunpack.c.l.b16 %v2313
        %v2410 = vunpack.c.h.b16 %v2313
        %v2411 = vunpack.c.l.b16 %v2314
        %v2412 = vunpack.c.h.b16 %v2314
        %v2413 = vunpack.c.l.b16 %v2315
        %v2414 = vunpack.c.h.b16 %v2315
        %v2415 = vunpack.c.l.b16 %v2316
        %v2416 = vunpack.c.h.b16 %v2316
        %v2417 = vunpack.c.l.b16 %v2317
        %v2418 = vunpack.c.h.b16 %v2317
        %v2419 = vunpack.c.l.b16 %v2318
        %v2420 = vunpack.c.h.b16 %v2318
        %v2421 = vunpack.c.l.b16 %v2319
        %v2422 = vunpack.c.h.b16 %v2319
        %v2423 = vunpack.c.l.b16 %v2320
        %v2424 = vunpack.c.h.b16 %v2320
        %v2425 = vunpack.c.l.b16 %v2321
        %v2426 = vunpack.c.h.b16 %v2321
        %v2427 = vunpack.c.l.b16 %v2322
        %v2428 = vunpack.c.h.b16 %v2322
        %v2429 = vunpack.c.l.b16 %v2323
        %v2430 = vunpack.c.h.b16 %v2323
        %v2431 = vunpack.c.l.b16 %v2324
        %v2432 = vunpack.c.h.b16 %v2324
        %v2433 = vunpack.c.l.b16 %v2325
        %v2434 = vunpack.c.h.b16 %v2325
        %v2435 = vunpack.c.l.b16 %v2326
        %v2436 = vunpack.c.h.b16 %v2326
        %v2437 = vunpack.c.l.b16 %v2327
        %v2438 = vunpack.c.h.b16 %v2327
        %v2439 = vunpack.c.l.b16 %v2328
        %v2440 = vunpack.c.h.b16 %v2328
        %v2441 = vunpack.c.l.b16 %v2329
        %v2442 = vunpack.c.h.b16 %v2329
        %v2443 = vunpack.c.l.b16 %v2330
        %v2444 = vunpack.c.h.b16 %v2330
        %v2445 = vunpack.c.l.b16 %v2331
        %v2446 = vunpack.c.h.b16 %v2331
        %v2447 = vunpack.c.l.b16 %v2332
        %v2448 = vunpack.c.h.b16 %v2332
        %v2449 = vunpack.c.l.b16 %v2333
        %v2450 = vunpack.c.h.b16 %v2333
        %v2451 = vunpack.c.l.b16 %v2334
        %v2452 = vunpack.c.h.b16 %v2334
        %v2453 = vunpack.c.l.b16 %v2335
        %v2454 = vunpack.c.h.b16 %v2335
        %v2455 = vunpack.c.l.b16 %v2336
        %v2456 = vunpack.c.h.b16 %v2336
        %v2457 = vunpack.c.l.b16 %v2337
        %v2458 = vunpack.c.h.b16 %v2337
        %v2459 = vunpack.c.l.b16 %v2338
        %v2460 = vunpack.c.h.b16 %v2338
        %v2461 = vunpack.c.l.b16 %v2339
        %v2462 = vunpack.c.h.b16 %v2339
        %v2463 = vunpack.c.l.b16 %v2340
        %v2464 = vunpack.c.h.b16 %v2340
        %v2465 = vunpack.c.l.b16 %v2341
        %v2466 = vunpack.c.h.b16 %v2341
        %v2467 = vunpack.c.l.b16 %v2342
        %v2468 = vunpack.c.h.b16 %v2342
        %v2469 = vunpack.c.l.b16 %v2343
        %v2470 = vunpack.c.h.b16 %v2343
        %v2471 = vunpack.c.l.b16 %v2344
        %v2472 = vunpack.c.h.b16 %v2344
        %v2473 = vpack.c.b16 %v2411, %v2409
        %v2474 = vpack.c.b16 %v2412, %v2410
        %v2475 = vpack.c.b16 %v2415, %v2413
        %v2476 = vpack.c.b16 %v2416, %v2414
        %v2477 = vpack.c.b16 %v2419, %v2417
        %v2478 = vpack.c.b16 %v2420, %v2418
        %v2479 = vpack.c.b16 %v2423, %v2421
        %v2480 = vpack.c.b16 %v2424, %v2422
        %v2481 = vpack.c.b16 %v2427, %v2425
        %v2482 = vpack.c.b16 %v2428, %v2426
        %v2483 = vpack.c.b16 %v2431, %v2429
        %v2484 = vpack.c.b16 %v2432, %v2430
        %v2485 = vpack.c.b16 %v2435, %v2433
        %v2486 = vpack.c.b16 %v2436, %v2434
        %v2487 = vpack.c.b16 %v2439, %v2437
        %v2488 = vpack.c.b16 %v2440, %v2438
        %v2489 = vpack.c.b16 %v2443, %v2441
        %v2490 = vpack.c.b16 %v2444, %v2442
        %v2491 = vpack.c.b16 %v2447, %v2445
        %v2492 = vpack.c.b16 %v2448, %v2446
        %v2493 = vpack.c.b16 %v2451, %v2449
        %v2494 = vpack.c.b16 %v2452, %v2450
        %v2495 = vpack.c.b16 %v2455, %v2453
        %v2496 = vpack.c.b16 %v2456, %v2454
        %v2497 = vpack.c.b16 %v2459, %v2457
        %v2498 = vpack.c.b16 %v2460, %v2458
        %v2499 = vpack.c.b16 %v2463, %v2461
        %v2500 = vpack.c.b16 %v2464, %v2462
        %v2501 = vpack.c.b16 %v2467, %v2465
        %v2502 = vpack.c.b16 %v2468, %v2466
        %v2503 = vpack.c.b16 %v2471, %v2469
        %v2504 = vpack.c.b16 %v2472, %v2470
        %v2569 = vunpack.c.l.b16 %v2345
        %v2570 = vunpack.c.h.b16 %v2345
        %v2571 = vunpack.c.l.b16 %v2346
        %v2572 = vunpack.c.h.b16 %v2346
        %v2573 = vunpack.c.l.b16 %v2347
        %v2574 = vunpack.c.h.b16 %v2347
        %v2575 = vunpack.c.l.b16 %v2348
        %v2576 = vunpack.c.h.b16 %v2348
        %v2577 = vunpack.c.l.b16 %v2349
        %v2578 = vunpack.c.h.b16 %v2349
        %v2579 = vunpack.c.l.b16 %v2350
        %v2580 = vunpack.c.h.b16 %v2350
        %v2581 = vunpack.c.l.b16 %v2351
        %v2582 = vunpack.c.h.b16 %v2351
        %v2583 = vunpack.c.l.b16 %v2352
        %v2584 = vunpack.c.h.b16 %v2352
        %v2585 = vunpack.c.l.b16 %v2353
        %v2586 = vunpack.c.h.b16 %v2353
        %v2587 = vunpack.c.l.b16 %v2354
        %v2588 = vunpack.c.h.b16 %v2354
        %v2589 = vunpack.c.l.b16 %v2355
        %v2590 = vunpack.c.h.b16 %v2355
        %v2591 = vunpack.c.l.b16 %v2356
        %v2592 = vunpack.c.h.b16 %v2356
        %v2593 = vunpack.c.l.b16 %v2357
        %v2594 = vunpack.c.h.b16 %v2357
        %v2595 = vunpack.c.l.b16 %v2358
        %v2596 = vunpack.c.h.b16 %v2358
        %v2597 = vunpack.c.l.b16 %v2359
        %v2598 = vunpack.c.h.b16 %v2359
        %v2599 = vunpack.c.l.b16 %v2360
        %v2600 = vunpack.c.h.b16 %v2360
        %v2601 = vunpack.c.l.b16 %v2361
        %v2602 = vunpack.c.h.b16 %v2361
        %v2603 = vunpack.c.l.b16 %v2362
        %v2604 = vunpack.c.h.b16 %v2362
        %v2605 = vunpack.c.l.b16 %v2363
        %v2606 = vunpack.c.h.b16 %v2363
        %v2607 = vunpack.c.l.b16 %v2364
        %v2608 = vunpack.c.h.b16 %v2364
        %v2609 = vunpack.c.l.b16 %v2365
        %v2610 = vunpack.c.h.b16 %v2365
        %v2611 = vunpack.c.l.b16 %v2366
        %v2612 = vunpack.c.h.b16 %v2366
        %v2613 = vunpack.c.l.b16 %v2367
        %v2614 = vunpack.c.h.b16 %v2367
        %v2615 = vunpack.c.l.b16 %v2368
        %v2616 = vunpack.c.h.b16 %v2368
        %v2617 = vunpack.c.l.b16 %v2369
        %v2618 = vunpack.c.h.b16 %v2369
        %v2619 = vunpack.c.l.b16 %v2370
        %v2620 = vunpack.c.h.b16 %v2370
        %v2621 = vunpack.c.l.b16 %v2371
        %v2622 = vunpack.c.h.b16 %v2371
        %v2623 = vunpack.c.l.b16 %v2372
        %v2624 = vunpack.c.h.b16 %v2372
        %v2625 = vunpack.c.l.b16 %v2373
        %v2626 = vunpack.c.h.b16 %v2373
        %v2627 = vunpack.c.l.b16 %v2374
        %v2628 = vunpack.c.h.b16 %v2374
        %v2629 = vunpack.c.l.b16 %v2375
        %v2630 = vunpack.c.h.b16 %v2375
        %v2631 = vunpack.c.l.b16 %v2376
        %v2632 = vunpack.c.h.b16 %v2376
        %v2633 = vpack.c.b16 %v2571, %v2569
        %v2634 = vpack.c.b16 %v2572, %v2570
        %v2635 = vpack.c.b16 %v2575, %v2573
        %v2636 = vpack.c.b16 %v2576, %v2574
        %v2637 = vpack.c.b16 %v2579, %v2577
        %v2638 = vpack.c.b16 %v2580, %v2578
        %v2639 = vpack.c.b16 %v2583, %v2581
        %v2640 = vpack.c.b16 %v2584, %v2582
        %v2641 = vpack.c.b16 %v2587, %v2585
        %v2642 = vpack.c.b16 %v2588, %v2586
        %v2643 = vpack.c.b16 %v2591, %v2589
        %v2644 = vpack.c.b16 %v2592, %v2590
        %v2645 = vpack.c.b16 %v2595, %v2593
        %v2646 = vpack.c.b16 %v2596, %v2594
        %v2647 = vpack.c.b16 %v2599, %v2597
        %v2648 = vpack.c.b16 %v2600, %v2598
        %v2649 = vpack.c.b16 %v2603, %v2601
        %v2650 = vpack.c.b16 %v2604, %v2602
        %v2651 = vpack.c.b16 %v2607, %v2605
        %v2652 = vpack.c.b16 %v2608, %v2606
        %v2653 = vpack.c.b16 %v2611, %v2609
        %v2654 = vpack.c.b16 %v2612, %v2610
        %v2655 = vpack.c.b16 %v2615, %v2613
        %v2656 = vpack.c.b16 %v2616, %v2614
        %v2657 = vpack.c.b16 %v2619, %v2617
        %v2658 = vpack.c.b16 %v2620, %v2618
        %v2659 = vpack.c.b16 %v2623, %v2621
        %v2660 = vpack.c.b16 %v2624, %v2622
        %v2661 = vpack.c.b16 %v2627, %v2625
        %v2662 = vpack.c.b16 %v2628, %v2626
        %v2663 = vpack.c.b16 %v2631, %v2629
        %v2664 = vpack.c.b16 %v2632, %v2630
        %2697 = vmatprep.subr.bf16.mxu0 %v2634
        %2698 = vmatpush1.bf16.msra.mxu0 %v2633
        %2699 = vmatprep.subr.bf16.mxu0 %v2636
        %2700 = vmatpush1.bf16.msra.mxu0 %v2635
        %2701 = vmatprep.subr.bf16.mxu0 %v2638
        %2702 = vmatpush1.bf16.msra.mxu0 %v2637
        %2703 = vmatprep.subr.bf16.mxu0 %v2640
        %2704 = vmatpush1.bf16.msra.mxu0 %v2639
        %2705 = vmatprep.subr.bf16.mxu0 %v2642
        %2706 = vmatpush1.bf16.msra.mxu0 %v2641
        %2707 = vmatprep.subr.bf16.mxu0 %v2644
        %2708 = vmatpush1.bf16.msra.mxu0 %v2643
        %2709 = vmatprep.subr.bf16.mxu0 %v2646
        %2710 = vmatpush1.bf16.msra.mxu0 %v2645
        %2711 = vmatprep.subr.bf16.mxu0 %v2648
        %2712 = vmatpush1.bf16.msra.mxu0 %v2647
        %2713 = vmatprep.subr.bf16.mxu0 %v2650
        %2714 = vmatpush1.bf16.msra.mxu0 %v2649
        %2715 = vmatprep.subr.bf16.mxu0 %v2652
        %2716 = vmatpush1.bf16.msra.mxu0 %v2651
        %2717 = vmatprep.subr.bf16.mxu0 %v2654
        %2718 = vmatpush1.bf16.msra.mxu0 %v2653
        %2719 = vmatprep.subr.bf16.mxu0 %v2656
        %2720 = vmatpush1.bf16.msra.mxu0 %v2655
        %2721 = vmatprep.subr.bf16.mxu0 %v2658
        %2722 = vmatpush1.bf16.msra.mxu0 %v2657
        %2723 = vmatprep.subr.bf16.mxu0 %v2660
        %2724 = vmatpush1.bf16.msra.mxu0 %v2659
        %2725 = vmatprep.subr.bf16.mxu0 %v2662
        %2726 = vmatpush1.bf16.msra.mxu0 %v2661
        %2727 = vmatprep.subr.bf16.mxu0 %v2664
        %2728 = vmatpush1.bf16.msra.mxu0 %v2663
        %2729 = vmatprep.mubr.bf16.mxu0 %v2474
        %2730 = vmatmul.mubr.bf16.gmra.mrb[0].mxu0 %v2473
        %v2731 = vpop.f32.mrb[0].mxu0
        %v2732 = vadd.f32 0.0, %v2731
        %v2733 = vpop.f32.mrb[0].mxu0
        %v2734 = vadd.f32 0.0, %v2733
        %v2735 = vpop.f32.mrb[0].mxu0
        %v2736 = vadd.f32 0.0, %v2735
        %v2737 = vpop.f32.mrb[0].mxu0
        %v2738 = vadd.f32 0.0, %v2737
        %2739 = vmatprep.mubr.bf16.mxu0 %v2476
        %2740 = vmatmul.mubr.bf16.gmra.mrb[0].mxu0 %v2475
        %v2741 = vpop.f32.mrb[0].mxu0
        %v2742 = vadd.f32 0.0, %v2741
        %v2743 = vpop.f32.mrb[0].mxu0
        %v2744 = vadd.f32 0.0, %v2743
        %v2745 = vpop.f32.mrb[0].mxu0
        %v2746 = vadd.f32 0.0, %v2745
        %v2747 = vpop.f32.mrb[0].mxu0
        %v2748 = vadd.f32 0.0, %v2747
        %2749 = vmatprep.mubr.bf16.mxu0 %v2478
        %2750 = vmatmul.mubr.bf16.gmra.mrb[0].mxu0 %v2477
        %v2751 = vpop.f32.mrb[0].mxu0
        %v2752 = vadd.f32 0.0, %v2751
        %v2753 = vpop.f32.mrb[0].mxu0
        %v2754 = vadd.f32 0.0, %v2753
        %v2755 = vpop.f32.mrb[0].mxu0
        %v2756 = vadd.f32 0.0, %v2755
        %v2757 = vpop.f32.mrb[0].mxu0
        %v2758 = vadd.f32 0.0, %v2757
        %2759 = vmatprep.mubr.bf16.mxu0 %v2480
        %2760 = vmatmul.mubr.bf16.gmra.mrb[0].mxu0 %v2479
        %v2761 = vpop.f32.mrb[0].mxu0
        %v2762 = vadd.f32 0.0, %v2761
        %v2763 = vpop.f32.mrb[0].mxu0
        %v2764 = vadd.f32 0.0, %v2763
        %v2765 = vpop.f32.mrb[0].mxu0
        %v2766 = vadd.f32 0.0, %v2765
        %v2767 = vpop.f32.mrb[0].mxu0
        %v2768 = vadd.f32 0.0, %v2767
        %2769 = vmatprep.mubr.bf16.mxu0 %v2482
        %2770 = vmatmul.mubr.bf16.gmra.mrb[0].mxu0 %v2481
        %v2771 = vpop.f32.mrb[0].mxu0
        %v2772 = vadd.f32 0.0, %v2771
        %v2773 = vpop.f32.mrb[0].mxu0
        %v2774 = vadd.f32 0.0, %v2773
        %v2775 = vpop.f32.mrb[0].mxu0
        %v2776 = vadd.f32 0.0, %v2775
        %v2777 = vpop.f32.mrb[0].mxu0
        %v2778 = vadd.f32 0.0, %v2777
        %2779 = vmatprep.mubr.bf16.mxu0 %v2484
        %2780 = vmatmul.mubr.bf16.gmra.mrb[0].mxu0 %v2483
        %v2781 = vpop.f32.mrb[0].mxu0
        %v2782 = vadd.f32 0.0, %v2781
        %v2783 = vpop.f32.mrb[0].mxu0
        %v2784 = vadd.f32 0.0, %v2783
        %v2785 = vpop.f32.mrb[0].mxu0
        %v2786 = vadd.f32 0.0, %v2785
        %v2787 = vpop.f32.mrb[0].mxu0
        %v2788 = vadd.f32 0.0, %v2787
        %2789 = vmatprep.mubr.bf16.mxu0 %v2486
        %2790 = vmatmul.mubr.bf16.gmra.mrb[0].mxu0 %v2485
        %v2791 = vpop.f32.mrb[0].mxu0
        %v2792 = vadd.f32 0.0, %v2791
        %v2793 = vpop.f32.mrb[0].mxu0
        %v2794 = vadd.f32 0.0, %v2793
        %v2795 = vpop.f32.mrb[0].mxu0
        %v2796 = vadd.f32 0.0, %v2795
        %v2797 = vpop.f32.mrb[0].mxu0
        %v2798 = vadd.f32 0.0, %v2797
        %2799 = vmatprep.mubr.bf16.mxu0 %v2488
        %2800 = vmatmul.mubr.bf16.gmra.mrb[0].mxu0 %v2487
        %v2801 = vpop.f32.mrb[0].mxu0
        %v2802 = vadd.f32 0.0, %v2801
        %v2803 = vpop.f32.mrb[0].mxu0
        %v2804 = vadd.f32 0.0, %v2803
        %v2805 = vpop.f32.mrb[0].mxu0
        %v2806 = vadd.f32 0.0, %v2805
        %v2807 = vpop.f32.mrb[0].mxu0
        %v2808 = vadd.f32 0.0, %v2807
        %2809 = vmatprep.mubr.bf16.mxu0 %v2490
        %2810 = vmatmul.mubr.bf16.gmra.mrb[0].mxu0 %v2489
        %v2811 = vpop.f32.mrb[0].mxu0
        %v2812 = vadd.f32 0.0, %v2811
        %v2813 = vpop.f32.mrb[0].mxu0
        %v2814 = vadd.f32 0.0, %v2813
        %v2815 = vpop.f32.mrb[0].mxu0
        %v2816 = vadd.f32 0.0, %v2815
        %v2817 = vpop.f32.mrb[0].mxu0
        %v2818 = vadd.f32 0.0, %v2817
        %2819 = vmatprep.mubr.bf16.mxu0 %v2492
        %2820 = vmatmul.mubr.bf16.gmra.mrb[0].mxu0 %v2491
        %v2821 = vpop.f32.mrb[0].mxu0
        %v2822 = vadd.f32 0.0, %v2821
        %v2823 = vpop.f32.mrb[0].mxu0
        %v2824 = vadd.f32 0.0, %v2823
        %v2825 = vpop.f32.mrb[0].mxu0
        %v2826 = vadd.f32 0.0, %v2825
        %v2827 = vpop.f32.mrb[0].mxu0
        %v2828 = vadd.f32 0.0, %v2827
        %2829 = vmatprep.mubr.bf16.mxu0 %v2494
        %2830 = vmatmul.mubr.bf16.gmra.mrb[0].mxu0 %v2493
        %v2831 = vpop.f32.mrb[0].mxu0
        %v2832 = vadd.f32 0.0, %v2831
        %v2833 = vpop.f32.mrb[0].mxu0
        %v2834 = vadd.f32 0.0, %v2833
        %v2835 = vpop.f32.mrb[0].mxu0
        %v2836 = vadd.f32 0.0, %v2835
        %v2837 = vpop.f32.mrb[0].mxu0
        %v2838 = vadd.f32 0.0, %v2837
        %2839 = vmatprep.mubr.bf16.mxu0 %v2496
        %2840 = vmatmul.mubr.bf16.gmra.mrb[0].mxu0 %v2495
        %v2841 = vpop.f32.mrb[0].mxu0
        %v2842 = vadd.f32 0.0, %v2841
        %v2843 = vpop.f32.mrb[0].mxu0
        %v2844 = vadd.f32 0.0, %v2843
        %v2845 = vpop.f32.mrb[0].mxu0
        %v2846 = vadd.f32 0.0, %v2845
        %v2847 = vpop.f32.mrb[0].mxu0
        %v2848 = vadd.f32 0.0, %v2847
        %2849 = vmatprep.mubr.bf16.mxu0 %v2498
        %2850 = vmatmul.mubr.bf16.gmra.mrb[0].mxu0 %v2497
        %v2851 = vpop.f32.mrb[0].mxu0
        %v2852 = vadd.f32 0.0, %v2851
        %v2853 = vpop.f32.mrb[0].mxu0
        %v2854 = vadd.f32 0.0, %v2853
        %v2855 = vpop.f32.mrb[0].mxu0
        %v2856 = vadd.f32 0.0, %v2855
        %v2857 = vpop.f32.mrb[0].mxu0
        %v2858 = vadd.f32 0.0, %v2857
        %2859 = vmatprep.mubr.bf16.mxu0 %v2500
        %2860 = vmatmul.mubr.bf16.gmra.mrb[0].mxu0 %v2499
        %v2861 = vpop.f32.mrb[0].mxu0
        %v2862 = vadd.f32 0.0, %v2861
        %v2863 = vpop.f32.mrb[0].mxu0
        %v2864 = vadd.f32 0.0, %v2863
        %v2865 = vpop.f32.mrb[0].mxu0
        %v2866 = vadd.f32 0.0, %v2865
        %v2867 = vpop.f32.mrb[0].mxu0
        %v2868 = vadd.f32 0.0, %v2867
        %2869 = vmatprep.mubr.bf16.mxu0 %v2502
        %2870 = vmatmul.mubr.bf16.gmra.mrb[0].mxu0 %v2501
        %v2871 = vpop.f32.mrb[0].mxu0
        %v2872 = vadd.f32 0.0, %v2871
        %v2873 = vpop.f32.mrb[0].mxu0
        %v2874 = vadd.f32 0.0, %v2873
        %v2875 = vpop.f32.mrb[0].mxu0
        %v2876 = vadd.f32 0.0, %v2875
        %v2877 = vpop.f32.mrb[0].mxu0
        %v2878 = vadd.f32 0.0, %v2877
        %2879 = vmatprep.mubr.bf16.mxu0 %v2504
        %2880 = vmatmul.mubr.bf16.gmra.mrb[0].mxu0 %v2503
        %v2881 = vpop.f32.mrb[0].mxu0
        %v2882 = vadd.f32 0.0, %v2881
        %v2883 = vpop.f32.mrb[0].mxu0
        %v2884 = vadd.f32 0.0, %v2883
        %v2885 = vpop.f32.mrb[0].mxu0
        %v2886 = vadd.f32 0.0, %v2885
        %v2887 = vpop.f32.mrb[0].mxu0
        %v2888 = vadd.f32 0.0, %v2887
        %2889 = vdwg.mxu0
        %v2890 = vadd.f32 %v2249, %v2732
        %v2891 = vadd.f32 %v2250, %v2734
        %v2892 = vadd.f32 %v2251, %v2736
        %v2893 = vadd.f32 %v2252, %v2738
        %v2894 = vadd.f32 %v2253, %v2742
        %v2895 = vadd.f32 %v2254, %v2744
        %v2896 = vadd.f32 %v2255, %v2746
        %v2897 = vadd.f32 %v2256, %v2748
        %v2898 = vadd.f32 %v2257, %v2752
        %v2899 = vadd.f32 %v2258, %v2754
        %v2900 = vadd.f32 %v2259, %v2756
        %v2901 = vadd.f32 %v2260, %v2758
        %v2902 = vadd.f32 %v2261, %v2762
        %v2903 = vadd.f32 %v2262, %v2764
        %v2904 = vadd.f32 %v2263, %v2766
        %v2905 = vadd.f32 %v2264, %v2768
        %v2906 = vadd.f32 %v2265, %v2772
        %v2907 = vadd.f32 %v2266, %v2774
        %v2908 = vadd.f32 %v2267, %v2776
        %v2909 = vadd.f32 %v2268, %v2778
        %v2910 = vadd.f32 %v2269, %v2782
        %v2911 = vadd.f32 %v2270, %v2784
        %v2912 = vadd.f32 %v2271, %v2786
        %v2913 = vadd.f32 %v2272, %v2788
        %v2914 = vadd.f32 %v2273, %v2792
        %v2915 = vadd.f32 %v2274, %v2794
        %v2916 = vadd.f32 %v2275, %v2796
        %v2917 = vadd.f32 %v2276, %v2798
        %v2918 = vadd.f32 %v2277, %v2802
        %v2919 = vadd.f32 %v2278, %v2804
        %v2920 = vadd.f32 %v2279, %v2806
        %v2921 = vadd.f32 %v2280, %v2808
        %v2922 = vadd.f32 %v2281, %v2812
        %v2923 = vadd.f32 %v2282, %v2814
        %v2924 = vadd.f32 %v2283, %v2816
        %v2925 = vadd.f32 %v2284, %v2818
        %v2926 = vadd.f32 %v2285, %v2822
        %v2927 = vadd.f32 %v2286, %v2824
        %v2928 = vadd.f32 %v2287, %v2826
        %v2929 = vadd.f32 %v2288, %v2828
        %v2930 = vadd.f32 %v2289, %v2832
        %v2931 = vadd.f32 %v2290, %v2834
        %v2932 = vadd.f32 %v2291, %v2836
        %v2933 = vadd.f32 %v2292, %v2838
        %v2934 = vadd.f32 %v2293, %v2842
        %v2935 = vadd.f32 %v2294, %v2844
        %v2936 = vadd.f32 %v2295, %v2846
        %v2937 = vadd.f32 %v2296, %v2848
        %v2938 = vadd.f32 %v2297, %v2852
        %v2939 = vadd.f32 %v2298, %v2854
        %v2940 = vadd.f32 %v2299, %v2856
        %v2941 = vadd.f32 %v2300, %v2858
        %v2942 = vadd.f32 %v2301, %v2862
        %v2943 = vadd.f32 %v2302, %v2864
        %v2944 = vadd.f32 %v2303, %v2866
        %v2945 = vadd.f32 %v2304, %v2868
        %v2946 = vadd.f32 %v2305, %v2872
        %v2947 = vadd.f32 %v2306, %v2874
        %v2948 = vadd.f32 %v2307, %v2876
        %v2949 = vadd.f32 %v2308, %v2878
        %v2950 = vadd.f32 %v2309, %v2882
        %v2951 = vadd.f32 %v2310, %v2884
        %v2952 = vadd.f32 %v2311, %v2886
        %v2953 = vadd.f32 %v2312, %v2888
        %v2954 = vld [vmem:[%s515] sm:$0xff]
        %v2955 = vld [vmem:[%s515 + $0x8] sm:$0xff]
        %v2956 = vld [vmem:[%s515 + $0x10] sm:$0xff]
        %v2957 = vld [vmem:[%s515 + $0x18] sm:$0xff]
        %v2958 = vld [vmem:[%s515 + $0x20] sm:$0xff]
        %v2959 = vld [vmem:[%s515 + $0x28] sm:$0xff]
        %v2960 = vld [vmem:[%s515 + $0x30] sm:$0xff]
        %v2961 = vld [vmem:[%s515 + $0x38] sm:$0xff]
        %v2962 = vld [vmem:[%s515 + $0x40] sm:$0xff]
        %v2963 = vld [vmem:[%s515 + $0x48] sm:$0xff]
        %v2964 = vld [vmem:[%s515 + $0x50] sm:$0xff]
        %v2965 = vld [vmem:[%s515 + $0x58] sm:$0xff]
        %v2966 = vld [vmem:[%s515 + $0x60] sm:$0xff]
        %v2967 = vld [vmem:[%s515 + $0x68] sm:$0xff]
        %v2968 = vld [vmem:[%s515 + $0x70] sm:$0xff]
        %v2969 = vld [vmem:[%s515 + $0x78] sm:$0xff]
        %v2970 = vld [vmem:[%s515 + $0x80] sm:$0xff]
        %v2971 = vld [vmem:[%s515 + $0x88] sm:$0xff]
        %v2972 = vld [vmem:[%s515 + $0x90] sm:$0xff]
        %v2973 = vld [vmem:[%s515 + $0x98] sm:$0xff]
        %v2974 = vld [vmem:[%s515 + $0xa0] sm:$0xff]
        %v2975 = vld [vmem:[%s515 + $0xa8] sm:$0xff]
        %v2976 = vld [vmem:[%s515 + $0xb0] sm:$0xff]
        %v2977 = vld [vmem:[%s515 + $0xb8] sm:$0xff]
        %v2978 = vld [vmem:[%s515 + $0xc0] sm:$0xff]
        %v2979 = vld [vmem:[%s515 + $0xc8] sm:$0xff]
        %v2980 = vld [vmem:[%s515 + $0xd0] sm:$0xff]
        %v2981 = vld [vmem:[%s515 + $0xd8] sm:$0xff]
        %v2982 = vld [vmem:[%s515 + $0xe0] sm:$0xff]
        %v2983 = vld [vmem:[%s515 + $0xe8] sm:$0xff]
        %v2984 = vld [vmem:[%s515 + $0xf0] sm:$0xff]
        %v2985 = vld [vmem:[%s515 + $0xf8] sm:$0xff]
        %v2986 = vld [vmem:[%s9] sm:$0xff]
        %v2987 = vld [vmem:[%s9 + $0x8] sm:$0xff]
        %v2988 = vld [vmem:[%s9 + $0x10] sm:$0xff]
        %v2989 = vld [vmem:[%s9 + $0x18] sm:$0xff]
        %v2990 = vld [vmem:[%s9 + $0x20] sm:$0xff]
        %v2991 = vld [vmem:[%s9 + $0x28] sm:$0xff]
        %v2992 = vld [vmem:[%s9 + $0x30] sm:$0xff]
        %v2993 = vld [vmem:[%s9 + $0x38] sm:$0xff]
        %v2994 = vld [vmem:[%s9 + $0x40] sm:$0xff]
        %v2995 = vld [vmem:[%s9 + $0x48] sm:$0xff]
        %v2996 = vld [vmem:[%s9 + $0x50] sm:$0xff]
        %v2997 = vld [vmem:[%s9 + $0x58] sm:$0xff]
        %v2998 = vld [vmem:[%s9 + $0x60] sm:$0xff]
        %v2999 = vld [vmem:[%s9 + $0x68] sm:$0xff]
        %v3000 = vld [vmem:[%s9 + $0x70] sm:$0xff]
        %v3001 = vld [vmem:[%s9 + $0x78] sm:$0xff]
        %v3002 = vld [vmem:[%s9 + $0x80] sm:$0xff]
        %v3003 = vld [vmem:[%s9 + $0x88] sm:$0xff]
        %v3004 = vld [vmem:[%s9 + $0x90] sm:$0xff]
        %v3005 = vld [vmem:[%s9 + $0x98] sm:$0xff]
        %v3006 = vld [vmem:[%s9 + $0xa0] sm:$0xff]
        %v3007 = vld [vmem:[%s9 + $0xa8] sm:$0xff]
        %v3008 = vld [vmem:[%s9 + $0xb0] sm:$0xff]
        %v3009 = vld [vmem:[%s9 + $0xb8] sm:$0xff]
        %v3010 = vld [vmem:[%s9 + $0xc0] sm:$0xff]
        %v3011 = vld [vmem:[%s9 + $0xc8] sm:$0xff]
        %v3012 = vld [vmem:[%s9 + $0xd0] sm:$0xff]
        %v3013 = vld [vmem:[%s9 + $0xd8] sm:$0xff]
        %v3014 = vld [vmem:[%s9 + $0xe0] sm:$0xff]
        %v3015 = vld [vmem:[%s9 + $0xe8] sm:$0xff]
        %v3016 = vld [vmem:[%s9 + $0xf0] sm:$0xff]
        %v3017 = vld [vmem:[%s9 + $0xf8] sm:$0xff]
        %v3050 = vunpack.c.l.b16 %v2954
        %v3051 = vunpack.c.h.b16 %v2954
        %v3052 = vunpack.c.l.b16 %v2955
        %v3053 = vunpack.c.h.b16 %v2955
        %v3054 = vunpack.c.l.b16 %v2956
        %v3055 = vunpack.c.h.b16 %v2956
        %v3056 = vunpack.c.l.b16 %v2957
        %v3057 = vunpack.c.h.b16 %v2957
        %v3058 = vunpack.c.l.b16 %v2958
        %v3059 = vunpack.c.h.b16 %v2958
        %v3060 = vunpack.c.l.b16 %v2959
        %v3061 = vunpack.c.h.b16 %v2959
        %v3062 = vunpack.c.l.b16 %v2960
        %v3063 = vunpack.c.h.b16 %v2960
        %v3064 = vunpack.c.l.b16 %v2961
        %v3065 = vunpack.c.h.b16 %v2961
        %v3066 = vunpack.c.l.b16 %v2962
        %v3067 = vunpack.c.h.b16 %v2962
        %v3068 = vunpack.c.l.b16 %v2963
        %v3069 = vunpack.c.h.b16 %v2963
        %v3070 = vunpack.c.l.b16 %v2964
        %v3071 = vunpack.c.h.b16 %v2964
        %v3072 = vunpack.c.l.b16 %v2965
        %v3073 = vunpack.c.h.b16 %v2965
        %v3074 = vunpack.c.l.b16 %v2966
        %v3075 = vunpack.c.h.b16 %v2966
        %v3076 = vunpack.c.l.b16 %v2967
        %v3077 = vunpack.c.h.b16 %v2967
        %v3078 = vunpack.c.l.b16 %v2968
        %v3079 = vunpack.c.h.b16 %v2968
        %v3080 = vunpack.c.l.b16 %v2969
        %v3081 = vunpack.c.h.b16 %v2969
        %v3082 = vunpack.c.l.b16 %v2970
        %v3083 = vunpack.c.h.b16 %v2970
        %v3084 = vunpack.c.l.b16 %v2971
        %v3085 = vunpack.c.h.b16 %v2971
        %v3086 = vunpack.c.l.b16 %v2972
        %v3087 = vunpack.c.h.b16 %v2972
        %v3088 = vunpack.c.l.b16 %v2973
        %v3089 = vunpack.c.h.b16 %v2973
        %v3090 = vunpack.c.l.b16 %v2974
        %v3091 = vunpack.c.h.b16 %v2974
        %v3092 = vunpack.c.l.b16 %v2975
        %v3093 = vunpack.c.h.b16 %v2975
        %v3094 = vunpack.c.l.b16 %v2976
        %v3095 = vunpack.c.h.b16 %v2976
        %v3096 = vunpack.c.l.b16 %v2977
        %v3097 = vunpack.c.h.b16 %v2977
        %v3098 = vunpack.c.l.b16 %v2978
        %v3099 = vunpack.c.h.b16 %v2978
        %v3100 = vunpack.c.l.b16 %v2979
        %v3101 = vunpack.c.h.b16 %v2979
        %v3102 = vunpack.c.l.b16 %v2980
        %v3103 = vunpack.c.h.b16 %v2980
        %v3104 = vunpack.c.l.b16 %v2981
        %v3105 = vunpack.c.h.b16 %v2981
        %v3106 = vunpack.c.l.b16 %v2982
        %v3107 = vunpack.c.h.b16 %v2982
        %v3108 = vunpack.c.l.b16 %v2983
        %v3109 = vunpack.c.h.b16 %v2983
        %v3110 = vunpack.c.l.b16 %v2984
        %v3111 = vunpack.c.h.b16 %v2984
        %v3112 = vunpack.c.l.b16 %v2985
        %v3113 = vunpack.c.h.b16 %v2985
        %v3114 = vpack.c.b16 %v3052, %v3050
        %v3115 = vpack.c.b16 %v3053, %v3051
        %v3116 = vpack.c.b16 %v3056, %v3054
        %v3117 = vpack.c.b16 %v3057, %v3055
        %v3118 = vpack.c.b16 %v3060, %v3058
        %v3119 = vpack.c.b16 %v3061, %v3059
        %v3120 = vpack.c.b16 %v3064, %v3062
        %v3121 = vpack.c.b16 %v3065, %v3063
        %v3122 = vpack.c.b16 %v3068, %v3066
        %v3123 = vpack.c.b16 %v3069, %v3067
        %v3124 = vpack.c.b16 %v3072, %v3070
        %v3125 = vpack.c.b16 %v3073, %v3071
        %v3126 = vpack.c.b16 %v3076, %v3074
        %v3127 = vpack.c.b16 %v3077, %v3075
        %v3128 = vpack.c.b16 %v3080, %v3078
        %v3129 = vpack.c.b16 %v3081, %v3079
        %v3130 = vpack.c.b16 %v3084, %v3082
        %v3131 = vpack.c.b16 %v3085, %v3083
        %v3132 = vpack.c.b16 %v3088, %v3086
        %v3133 = vpack.c.b16 %v3089, %v3087
        %v3134 = vpack.c.b16 %v3092, %v3090
        %v3135 = vpack.c.b16 %v3093, %v3091
        %v3136 = vpack.c.b16 %v3096, %v3094
        %v3137 = vpack.c.b16 %v3097, %v3095
        %v3138 = vpack.c.b16 %v3100, %v3098
        %v3139 = vpack.c.b16 %v3101, %v3099
        %v3140 = vpack.c.b16 %v3104, %v3102
        %v3141 = vpack.c.b16 %v3105, %v3103
        %v3142 = vpack.c.b16 %v3108, %v3106
        %v3143 = vpack.c.b16 %v3109, %v3107
        %v3144 = vpack.c.b16 %v3112, %v3110
        %v3145 = vpack.c.b16 %v3113, %v3111
        %v3210 = vunpack.c.l.b16 %v2986
        %v3211 = vunpack.c.h.b16 %v2986
        %v3212 = vunpack.c.l.b16 %v2987
        %v3213 = vunpack.c.h.b16 %v2987
        %v3214 = vunpack.c.l.b16 %v2988
        %v3215 = vunpack.c.h.b16 %v2988
        %v3216 = vunpack.c.l.b16 %v2989
        %v3217 = vunpack.c.h.b16 %v2989
        %v3218 = vunpack.c.l.b16 %v2990
        %v3219 = vunpack.c.h.b16 %v2990
        %v3220 = vunpack.c.l.b16 %v2991
        %v3221 = vunpack.c.h.b16 %v2991
        %v3222 = vunpack.c.l.b16 %v2992
        %v3223 = vunpack.c.h.b16 %v2992
        %v3224 = vunpack.c.l.b16 %v2993
        %v3225 = vunpack.c.h.b16 %v2993
        %v3226 = vunpack.c.l.b16 %v2994
        %v3227 = vunpack.c.h.b16 %v2994
        %v3228 = vunpack.c.l.b16 %v2995
        %v3229 = vunpack.c.h.b16 %v2995
        %v3230 = vunpack.c.l.b16 %v2996
        %v3231 = vunpack.c.h.b16 %v2996
        %v3232 = vunpack.c.l.b16 %v2997
        %v3233 = vunpack.c.h.b16 %v2997
        %v3234 = vunpack.c.l.b16 %v2998
        %v3235 = vunpack.c.h.b16 %v2998
        %v3236 = vunpack.c.l.b16 %v2999
        %v3237 = vunpack.c.h.b16 %v2999
        %v3238 = vunpack.c.l.b16 %v3000
        %v3239 = vunpack.c.h.b16 %v3000
        %v3240 = vunpack.c.l.b16 %v3001
        %v3241 = vunpack.c.h.b16 %v3001
        %v3242 = vunpack.c.l.b16 %v3002
        %v3243 = vunpack.c.h.b16 %v3002
        %v3244 = vunpack.c.l.b16 %v3003
        %v3245 = vunpack.c.h.b16 %v3003
        %v3246 = vunpack.c.l.b16 %v3004
        %v3247 = vunpack.c.h.b16 %v3004
        %v3248 = vunpack.c.l.b16 %v3005
        %v3249 = vunpack.c.h.b16 %v3005
        %v3250 = vunpack.c.l.b16 %v3006
        %v3251 = vunpack.c.h.b16 %v3006
        %v3252 = vunpack.c.l.b16 %v3007
        %v3253 = vunpack.c.h.b16 %v3007
        %v3254 = vunpack.c.l.b16 %v3008
        %v3255 = vunpack.c.h.b16 %v3008
        %v3256 = vunpack.c.l.b16 %v3009
        %v3257 = vunpack.c.h.b16 %v3009
        %v3258 = vunpack.c.l.b16 %v3010
        %v3259 = vunpack.c.h.b16 %v3010
        %v3260 = vunpack.c.l.b16 %v3011
        %v3261 = vunpack.c.h.b16 %v3011
        %v3262 = vunpack.c.l.b16 %v3012
        %v3263 = vunpack.c.h.b16 %v3012
        %v3264 = vunpack.c.l.b16 %v3013
        %v3265 = vunpack.c.h.b16 %v3013
        %v3266 = vunpack.c.l.b16 %v3014
        %v3267 = vunpack.c.h.b16 %v3014
        %v3268 = vunpack.c.l.b16 %v3015
        %v3269 = vunpack.c.h.b16 %v3015
        %v3270 = vunpack.c.l.b16 %v3016
        %v3271 = vunpack.c.h.b16 %v3016
        %v3272 = vunpack.c.l.b16 %v3017
        %v3273 = vunpack.c.h.b16 %v3017
        %v3274 = vpack.c.b16 %v3212, %v3210
        %v3275 = vpack.c.b16 %v3213, %v3211
        %v3276 = vpack.c.b16 %v3216, %v3214
        %v3277 = vpack.c.b16 %v3217, %v3215
        %v3278 = vpack.c.b16 %v3220, %v3218
        %v3279 = vpack.c.b16 %v3221, %v3219
        %v3280 = vpack.c.b16 %v3224, %v3222
        %v3281 = vpack.c.b16 %v3225, %v3223
        %v3282 = vpack.c.b16 %v3228, %v3226
        %v3283 = vpack.c.b16 %v3229, %v3227
        %v3284 = vpack.c.b16 %v3232, %v3230
        %v3285 = vpack.c.b16 %v3233, %v3231
        %v3286 = vpack.c.b16 %v3236, %v3234
        %v3287 = vpack.c.b16 %v3237, %v3235
        %v3288 = vpack.c.b16 %v3240, %v3238
        %v3289 = vpack.c.b16 %v3241, %v3239
        %v3290 = vpack.c.b16 %v3244, %v3242
        %v3291 = vpack.c.b16 %v3245, %v3243
        %v3292 = vpack.c.b16 %v3248, %v3246
        %v3293 = vpack.c.b16 %v3249, %v3247
        %v3294 = vpack.c.b16 %v3252, %v3250
        %v3295 = vpack.c.b16 %v3253, %v3251
        %v3296 = vpack.c.b16 %v3256, %v3254
        %v3297 = vpack.c.b16 %v3257, %v3255
        %v3298 = vpack.c.b16 %v3260, %v3258
        %v3299 = vpack.c.b16 %v3261, %v3259
        %v3300 = vpack.c.b16 %v3264, %v3262
        %v3301 = vpack.c.b16 %v3265, %v3263
        %v3302 = vpack.c.b16 %v3268, %v3266
        %v3303 = vpack.c.b16 %v3269, %v3267
        %v3304 = vpack.c.b16 %v3272, %v3270
        %v3305 = vpack.c.b16 %v3273, %v3271
        %3338 = vmatprep.subr.bf16.mxu0 %v3275
        %3339 = vmatpush1.bf16.msra.mxu0 %v3274
        %3340 = vmatprep.subr.bf16.mxu0 %v3277
        %3341 = vmatpush1.bf16.msra.mxu0 %v3276
        %3342 = vmatprep.subr.bf16.mxu0 %v3279
        %3343 = vmatpush1.bf16.msra.mxu0 %v3278
        %3344 = vmatprep.subr.bf16.mxu0 %v3281
        %3345 = vmatpush1.bf16.msra.mxu0 %v3280
        %3346 = vmatprep.subr.bf16.mxu0 %v3283
        %3347 = vmatpush1.bf16.msra.mxu0 %v3282
        %3348 = vmatprep.subr.bf16.mxu0 %v3285
        %3349 = vmatpush1.bf16.msra.mxu0 %v3284
        %3350 = vmatprep.subr.bf16.mxu0 %v3287
        %3351 = vmatpush1.bf16.msra.mxu0 %v3286
        %3352 = vmatprep.subr.bf16.mxu0 %v3289
        %3353 = vmatpush1.bf16.msra.mxu0 %v3288
        %3354 = vmatprep.subr.bf16.mxu0 %v3291
        %3355 = vmatpush1.bf16.msra.mxu0 %v3290
        %3356 = vmatprep.subr.bf16.mxu0 %v3293
        %3357 = vmatpush1.bf16.msra.mxu0 %v3292
        %3358 = vmatprep.subr.bf16.mxu0 %v3295
        %3359 = vmatpush1.bf16.msra.mxu0 %v3294
        %3360 = vmatprep.subr.bf16.mxu0 %v3297
        %3361 = vmatpush1.bf16.msra.mxu0 %v3296
        %3362 = vmatprep.subr.bf16.mxu0 %v3299
        %3363 = vmatpush1.bf16.msra.mxu0 %v3298
        %3364 = vmatprep.subr.bf16.mxu0 %v3301
        %3365 = vmatpush1.bf16.msra.mxu0 %v3300
        %3366 = vmatprep.subr.bf16.mxu0 %v3303
        %3367 = vmatpush1.bf16.msra.mxu0 %v3302
        %3368 = vmatprep.subr.bf16.mxu0 %v3305
        %3369 = vmatpush1.bf16.msra.mxu0 %v3304
        %3370 = vmatprep.mubr.bf16.mxu0 %v3115
        %3371 = vmatmul.mubr.bf16.gmra.mrb[0].mxu0 %v3114
        %v3372 = vpop.f32.mrb[0].mxu0
        %v3373 = vadd.f32 0.0, %v3372
        %v3374 = vpop.f32.mrb[0].mxu0
        %v3375 = vadd.f32 0.0, %v3374
        %v3376 = vpop.f32.mrb[0].mxu0
        %v3377 = vadd.f32 0.0, %v3376
        %v3378 = vpop.f32.mrb[0].mxu0
        %v3379 = vadd.f32 0.0, %v3378
        %3380 = vmatprep.mubr.bf16.mxu0 %v3117
        %3381 = vmatmul.mubr.bf16.gmra.mrb[0].mxu0 %v3116
        %v3382 = vpop.f32.mrb[0].mxu0
        %v3383 = vadd.f32 0.0, %v3382
        %v3384 = vpop.f32.mrb[0].mxu0
        %v3385 = vadd.f32 0.0, %v3384
        %v3386 = vpop.f32.mrb[0].mxu0
        %v3387 = vadd.f32 0.0, %v3386
        %v3388 = vpop.f32.mrb[0].mxu0
        %v3389 = vadd.f32 0.0, %v3388
        %3390 = vmatprep.mubr.bf16.mxu0 %v3119
        %3391 = vmatmul.mubr.bf16.gmra.mrb[0].mxu0 %v3118
        %v3392 = vpop.f32.mrb[0].mxu0
        %v3393 = vadd.f32 0.0, %v3392
        %v3394 = vpop.f32.mrb[0].mxu0
        %v3395 = vadd.f32 0.0, %v3394
        %v3396 = vpop.f32.mrb[0].mxu0
        %v3397 = vadd.f32 0.0, %v3396
        %v3398 = vpop.f32.mrb[0].mxu0
        %v3399 = vadd.f32 0.0, %v3398
        %3400 = vmatprep.mubr.bf16.mxu0 %v3121
        %3401 = vmatmul.mubr.bf16.gmra.mrb[0].mxu0 %v3120
        %v3402 = vpop.f32.mrb[0].mxu0
        %v3403 = vadd.f32 0.0, %v3402
        %v3404 = vpop.f32.mrb[0].mxu0
        %v3405 = vadd.f32 0.0, %v3404
        %v3406 = vpop.f32.mrb[0].mxu0
        %v3407 = vadd.f32 0.0, %v3406
        %v3408 = vpop.f32.mrb[0].mxu0
        %v3409 = vadd.f32 0.0, %v3408
        %3410 = vmatprep.mubr.bf16.mxu0 %v3123
        %3411 = vmatmul.mubr.bf16.gmra.mrb[0].mxu0 %v3122
        %v3412 = vpop.f32.mrb[0].mxu0
        %v3413 = vadd.f32 0.0, %v3412
        %v3414 = vpop.f32.mrb[0].mxu0
        %v3415 = vadd.f32 0.0, %v3414
        %v3416 = vpop.f32.mrb[0].mxu0
        %v3417 = vadd.f32 0.0, %v3416
        %v3418 = vpop.f32.mrb[0].mxu0
        %v3419 = vadd.f32 0.0, %v3418
        %3420 = vmatprep.mubr.bf16.mxu0 %v3125
        %3421 = vmatmul.mubr.bf16.gmra.mrb[0].mxu0 %v3124
        %v3422 = vpop.f32.mrb[0].mxu0
        %v3423 = vadd.f32 0.0, %v3422
        %v3424 = vpop.f32.mrb[0].mxu0
        %v3425 = vadd.f32 0.0, %v3424
        %v3426 = vpop.f32.mrb[0].mxu0
        %v3427 = vadd.f32 0.0, %v3426
        %v3428 = vpop.f32.mrb[0].mxu0
        %v3429 = vadd.f32 0.0, %v3428
        %3430 = vmatprep.mubr.bf16.mxu0 %v3127
        %3431 = vmatmul.mubr.bf16.gmra.mrb[0].mxu0 %v3126
        %v3432 = vpop.f32.mrb[0].mxu0
        %v3433 = vadd.f32 0.0, %v3432
        %v3434 = vpop.f32.mrb[0].mxu0
        %v3435 = vadd.f32 0.0, %v3434
        %v3436 = vpop.f32.mrb[0].mxu0
        %v3437 = vadd.f32 0.0, %v3436
        %v3438 = vpop.f32.mrb[0].mxu0
        %v3439 = vadd.f32 0.0, %v3438
        %3440 = vmatprep.mubr.bf16.mxu0 %v3129
        %3441 = vmatmul.mubr.bf16.gmra.mrb[0].mxu0 %v3128
        %v3442 = vpop.f32.mrb[0].mxu0
        %v3443 = vadd.f32 0.0, %v3442
        %v3444 = vpop.f32.mrb[0].mxu0
        %v3445 = vadd.f32 0.0, %v3444
        %v3446 = vpop.f32.mrb[0].mxu0
        %v3447 = vadd.f32 0.0, %v3446
        %v3448 = vpop.f32.mrb[0].mxu0
        %v3449 = vadd.f32 0.0, %v3448
        %3450 = vmatprep.mubr.bf16.mxu0 %v3131
        %3451 = vmatmul.mubr.bf16.gmra.mrb[0].mxu0 %v3130
        %v3452 = vpop.f32.mrb[0].mxu0
        %v3453 = vadd.f32 0.0, %v3452
        %v3454 = vpop.f32.mrb[0].mxu0
        %v3455 = vadd.f32 0.0, %v3454
        %v3456 = vpop.f32.mrb[0].mxu0
        %v3457 = vadd.f32 0.0, %v3456
        %v3458 = vpop.f32.mrb[0].mxu0
        %v3459 = vadd.f32 0.0, %v3458
        %3460 = vmatprep.mubr.bf16.mxu0 %v3133
        %3461 = vmatmul.mubr.bf16.gmra.mrb[0].mxu0 %v3132
        %v3462 = vpop.f32.mrb[0].mxu0
        %v3463 = vadd.f32 0.0, %v3462
        %v3464 = vpop.f32.mrb[0].mxu0
        %v3465 = vadd.f32 0.0, %v3464
        %v3466 = vpop.f32.mrb[0].mxu0
        %v3467 = vadd.f32 0.0, %v3466
        %v3468 = vpop.f32.mrb[0].mxu0
        %v3469 = vadd.f32 0.0, %v3468
        %3470 = vmatprep.mubr.bf16.mxu0 %v3135
        %3471 = vmatmul.mubr.bf16.gmra.mrb[0].mxu0 %v3134
        %v3472 = vpop.f32.mrb[0].mxu0
        %v3473 = vadd.f32 0.0, %v3472
        %v3474 = vpop.f32.mrb[0].mxu0
        %v3475 = vadd.f32 0.0, %v3474
        %v3476 = vpop.f32.mrb[0].mxu0
        %v3477 = vadd.f32 0.0, %v3476
        %v3478 = vpop.f32.mrb[0].mxu0
        %v3479 = vadd.f32 0.0, %v3478
        %3480 = vmatprep.mubr.bf16.mxu0 %v3137
        %3481 = vmatmul.mubr.bf16.gmra.mrb[0].mxu0 %v3136
        %v3482 = vpop.f32.mrb[0].mxu0
        %v3483 = vadd.f32 0.0, %v3482
        %v3484 = vpop.f32.mrb[0].mxu0
        %v3485 = vadd.f32 0.0, %v3484
        %v3486 = vpop.f32.mrb[0].mxu0
        %v3487 = vadd.f32 0.0, %v3486
        %v3488 = vpop.f32.mrb[0].mxu0
        %v3489 = vadd.f32 0.0, %v3488
        %3490 = vmatprep.mubr.bf16.mxu0 %v3139
        %3491 = vmatmul.mubr.bf16.gmra.mrb[0].mxu0 %v3138
        %v3492 = vpop.f32.mrb[0].mxu0
        %v3493 = vadd.f32 0.0, %v3492
        %v3494 = vpop.f32.mrb[0].mxu0
        %v3495 = vadd.f32 0.0, %v3494
        %v3496 = vpop.f32.mrb[0].mxu0
        %v3497 = vadd.f32 0.0, %v3496
        %v3498 = vpop.f32.mrb[0].mxu0
        %v3499 = vadd.f32 0.0, %v3498
        %3500 = vmatprep.mubr.bf16.mxu0 %v3141
        %3501 = vmatmul.mubr.bf16.gmra.mrb[0].mxu0 %v3140
        %v3502 = vpop.f32.mrb[0].mxu0
        %v3503 = vadd.f32 0.0, %v3502
        %v3504 = vpop.f32.mrb[0].mxu0
        %v3505 = vadd.f32 0.0, %v3504
        %v3506 = vpop.f32.mrb[0].mxu0
        %v3507 = vadd.f32 0.0, %v3506
        %v3508 = vpop.f32.mrb[0].mxu0
        %v3509 = vadd.f32 0.0, %v3508
        %3510 = vmatprep.mubr.bf16.mxu0 %v3143
        %3511 = vmatmul.mubr.bf16.gmra.mrb[0].mxu0 %v3142
        %v3512 = vpop.f32.mrb[0].mxu0
        %v3513 = vadd.f32 0.0, %v3512
        %v3514 = vpop.f32.mrb[0].mxu0
        %v3515 = vadd.f32 0.0, %v3514
        %v3516 = vpop.f32.mrb[0].mxu0
        %v3517 = vadd.f32 0.0, %v3516
        %v3518 = vpop.f32.mrb[0].mxu0
        %v3519 = vadd.f32 0.0, %v3518
        %3520 = vmatprep.mubr.bf16.mxu0 %v3145
        %3521 = vmatmul.mubr.bf16.gmra.mrb[0].mxu0 %v3144
        %v3522 = vpop.f32.mrb[0].mxu0
        %v3523 = vadd.f32 0.0, %v3522
        %v3524 = vpop.f32.mrb[0].mxu0
        %v3525 = vadd.f32 0.0, %v3524
        %v3526 = vpop.f32.mrb[0].mxu0
        %v3527 = vadd.f32 0.0, %v3526
        %v3528 = vpop.f32.mrb[0].mxu0
        %v3529 = vadd.f32 0.0, %v3528
        %3530 = vdwg.mxu0
        %v3531 = vadd.f32 %v2890, %v3373
        %v3532 = vadd.f32 %v2891, %v3375
        %v3533 = vadd.f32 %v2892, %v3377
        %v3534 = vadd.f32 %v2893, %v3379
        %v3535 = vadd.f32 %v2894, %v3383
        %v3536 = vadd.f32 %v2895, %v3385
        %v3537 = vadd.f32 %v2896, %v3387
        %v3538 = vadd.f32 %v2897, %v3389
        %v3539 = vadd.f32 %v2898, %v3393
        %v3540 = vadd.f32 %v2899, %v3395
        %v3541 = vadd.f32 %v2900, %v3397
        %v3542 = vadd.f32 %v2901, %v3399
        %v3543 = vadd.f32 %v2902, %v3403
        %v3544 = vadd.f32 %v2903, %v3405
        %v3545 = vadd.f32 %v2904, %v3407
        %v3546 = vadd.f32 %v2905, %v3409
        %v3547 = vadd.f32 %v2906, %v3413
        %v3548 = vadd.f32 %v2907, %v3415
        %v3549 = vadd.f32 %v2908, %v3417
        %v3550 = vadd.f32 %v2909, %v3419
        %v3551 = vadd.f32 %v2910, %v3423
        %v3552 = vadd.f32 %v2911, %v3425
        %v3553 = vadd.f32 %v2912, %v3427
        %v3554 = vadd.f32 %v2913, %v3429
        %v3555 = vadd.f32 %v2914, %v3433
        %v3556 = vadd.f32 %v2915, %v3435
        %v3557 = vadd.f32 %v2916, %v3437
        %v3558 = vadd.f32 %v2917, %v3439
        %v3559 = vadd.f32 %v2918, %v3443
        %v3560 = vadd.f32 %v2919, %v3445
        %v3561 = vadd.f32 %v2920, %v3447
        %v3562 = vadd.f32 %v2921, %v3449
        %v3563 = vadd.f32 %v2922, %v3453
        %v3564 = vadd.f32 %v2923, %v3455
        %v3565 = vadd.f32 %v2924, %v3457
        %v3566 = vadd.f32 %v2925, %v3459
        %v3567 = vadd.f32 %v2926, %v3463
        %v3568 = vadd.f32 %v2927, %v3465
        %v3569 = vadd.f32 %v2928, %v3467
        %v3570 = vadd.f32 %v2929, %v3469
        %v3571 = vadd.f32 %v2930, %v3473
        %v3572 = vadd.f32 %v2931, %v3475
        %v3573 = vadd.f32 %v2932, %v3477
        %v3574 = vadd.f32 %v2933, %v3479
        %v3575 = vadd.f32 %v2934, %v3483
        %v3576 = vadd.f32 %v2935, %v3485
        %v3577 = vadd.f32 %v2936, %v3487
        %v3578 = vadd.f32 %v2937, %v3489
        %v3579 = vadd.f32 %v2938, %v3493
        %v3580 = vadd.f32 %v2939, %v3495
        %v3581 = vadd.f32 %v2940, %v3497
        %v3582 = vadd.f32 %v2941, %v3499
        %v3583 = vadd.f32 %v2942, %v3503
        %v3584 = vadd.f32 %v2943, %v3505
        %v3585 = vadd.f32 %v2944, %v3507
        %v3586 = vadd.f32 %v2945, %v3509
        %v3587 = vadd.f32 %v2946, %v3513
        %v3588 = vadd.f32 %v2947, %v3515
        %v3589 = vadd.f32 %v2948, %v3517
        %v3590 = vadd.f32 %v2949, %v3519
        %v3591 = vadd.f32 %v2950, %v3523
        %v3592 = vadd.f32 %v2951, %v3525
        %v3593 = vadd.f32 %v2952, %v3527
        %v3594 = vadd.f32 %v2953, %v3529
        %v3595 = vld [vmem:[%s10] sm:$0x3]
        %v3597 = vlaneseq
        %v3598 = vshrl.u32 %v3597, 7
        %v3599 = vsub.s32 0, %v3598
        %v3600 = vrot.slane %v3595, %v3599
        %v3601 = vlaneseq
        %v3602 = vshrl.u32 %v3601, 7
        %v3603 = vsub.s32 1, %v3602
        %v3604 = vrot.slane %v3595, %v3603
        %v3607 = vmul.f32 %v3531, %v3600
        %v3608 = vmul.f32 %v3532, %v3604
        %v3609 = vmul.f32 %v3533, %v3600
        %v3610 = vmul.f32 %v3534, %v3604
        %v3611 = vmul.f32 %v3535, %v3600
        %v3612 = vmul.f32 %v3536, %v3604
        %v3613 = vmul.f32 %v3537, %v3600
        %v3614 = vmul.f32 %v3538, %v3604
        %v3615 = vmul.f32 %v3539, %v3600
        %v3616 = vmul.f32 %v3540, %v3604
        %v3617 = vmul.f32 %v3541, %v3600
        %v3618 = vmul.f32 %v3542, %v3604
        %v3619 = vmul.f32 %v3543, %v3600
        %v3620 = vmul.f32 %v3544, %v3604
        %v3621 = vmul.f32 %v3545, %v3600
        %v3622 = vmul.f32 %v3546, %v3604
        %v3623 = vmul.f32 %v3547, %v3600
        %v3624 = vmul.f32 %v3548, %v3604
        %v3625 = vmul.f32 %v3549, %v3600
        %v3626 = vmul.f32 %v3550, %v3604
        %v3627 = vmul.f32 %v3551, %v3600
        %v3628 = vmul.f32 %v3552, %v3604
        %v3629 = vmul.f32 %v3553, %v3600
        %v3630 = vmul.f32 %v3554, %v3604
        %v3631 = vmul.f32 %v3555, %v3600
        %v3632 = vmul.f32 %v3556, %v3604
        %v3633 = vmul.f32 %v3557, %v3600
        %v3634 = vmul.f32 %v3558, %v3604
        %v3635 = vmul.f32 %v3559, %v3600
        %v3636 = vmul.f32 %v3560, %v3604
        %v3637 = vmul.f32 %v3561, %v3600
        %v3638 = vmul.f32 %v3562, %v3604
        %v3639 = vmul.f32 %v3563, %v3600
        %v3640 = vmul.f32 %v3564, %v3604
        %v3641 = vmul.f32 %v3565, %v3600
        %v3642 = vmul.f32 %v3566, %v3604
        %v3643 = vmul.f32 %v3567, %v3600
        %v3644 = vmul.f32 %v3568, %v3604
        %v3645 = vmul.f32 %v3569, %v3600
        %v3646 = vmul.f32 %v3570, %v3604
        %v3647 = vmul.f32 %v3571, %v3600
        %v3648 = vmul.f32 %v3572, %v3604
        %v3649 = vmul.f32 %v3573, %v3600
        %v3650 = vmul.f32 %v3574, %v3604
        %v3651 = vmul.f32 %v3575, %v3600
        %v3652 = vmul.f32 %v3576, %v3604
        %v3653 = vmul.f32 %v3577, %v3600
        %v3654 = vmul.f32 %v3578, %v3604
        %v3655 = vmul.f32 %v3579, %v3600
        %v3656 = vmul.f32 %v3580, %v3604
        %v3657 = vmul.f32 %v3581, %v3600
        %v3658 = vmul.f32 %v3582, %v3604
        %v3659 = vmul.f32 %v3583, %v3600
        %v3660 = vmul.f32 %v3584, %v3604
        %v3661 = vmul.f32 %v3585, %v3600
        %v3662 = vmul.f32 %v3586, %v3604
        %v3663 = vmul.f32 %v3587, %v3600
        %v3664 = vmul.f32 %v3588, %v3604
        %v3665 = vmul.f32 %v3589, %v3600
        %v3666 = vmul.f32 %v3590, %v3604
        %v3667 = vmul.f32 %v3591, %v3600
        %v3668 = vmul.f32 %v3592, %v3604
        %v3669 = vmul.f32 %v3593, %v3600
        %v3670 = vmul.f32 %v3594, %v3604
        %v3671 = vld [vmem:[%s11] sm:$0x3]
        %v3673 = vlaneseq
        %v3674 = vshrl.u32 %v3673, 7
        %v3675 = vsub.s32 0, %v3674
        %v3676 = vrot.slane %v3671, %v3675
        %v3677 = vlaneseq
        %v3678 = vshrl.u32 %v3677, 7
        %v3679 = vsub.s32 1, %v3678
        %v3680 = vrot.slane %v3671, %v3679
        %v3683 = vadd.f32 %v3607, %v3676
        %v3684 = vadd.f32 %v3608, %v3680
        %v3685 = vadd.f32 %v3609, %v3676
        %v3686 = vadd.f32 %v3610, %v3680
        %v3687 = vadd.f32 %v3611, %v3676
        %v3688 = vadd.f32 %v3612, %v3680
        %v3689 = vadd.f32 %v3613, %v3676
        %v3690 = vadd.f32 %v3614, %v3680
        %v3691 = vadd.f32 %v3615, %v3676
        %v3692 = vadd.f32 %v3616, %v3680
        %v3693 = vadd.f32 %v3617, %v3676
        %v3694 = vadd.f32 %v3618, %v3680
        %v3695 = vadd.f32 %v3619, %v3676
        %v3696 = vadd.f32 %v3620, %v3680
        %v3697 = vadd.f32 %v3621, %v3676
        %v3698 = vadd.f32 %v3622, %v3680
        %v3699 = vadd.f32 %v3623, %v3676
        %v3700 = vadd.f32 %v3624, %v3680
        %v3701 = vadd.f32 %v3625, %v3676
        %v3702 = vadd.f32 %v3626, %v3680
        %v3703 = vadd.f32 %v3627, %v3676
        %v3704 = vadd.f32 %v3628, %v3680
        %v3705 = vadd.f32 %v3629, %v3676
        %v3706 = vadd.f32 %v3630, %v3680
        %v3707 = vadd.f32 %v3631, %v3676
        %v3708 = vadd.f32 %v3632, %v3680
        %v3709 = vadd.f32 %v3633, %v3676
        %v3710 = vadd.f32 %v3634, %v3680
        %v3711 = vadd.f32 %v3635, %v3676
        %v3712 = vadd.f32 %v3636, %v3680
        %v3713 = vadd.f32 %v3637, %v3676
        %v3714 = vadd.f32 %v3638, %v3680
        %v3715 = vadd.f32 %v3639, %v3676
        %v3716 = vadd.f32 %v3640, %v3680
        %v3717 = vadd.f32 %v3641, %v3676
        %v3718 = vadd.f32 %v3642, %v3680
        %v3719 = vadd.f32 %v3643, %v3676
        %v3720 = vadd.f32 %v3644, %v3680
        %v3721 = vadd.f32 %v3645, %v3676
        %v3722 = vadd.f32 %v3646, %v3680
        %v3723 = vadd.f32 %v3647, %v3676
        %v3724 = vadd.f32 %v3648, %v3680
        %v3725 = vadd.f32 %v3649, %v3676
        %v3726 = vadd.f32 %v3650, %v3680
        %v3727 = vadd.f32 %v3651, %v3676
        %v3728 = vadd.f32 %v3652, %v3680
        %v3729 = vadd.f32 %v3653, %v3676
        %v3730 = vadd.f32 %v3654, %v3680
        %v3731 = vadd.f32 %v3655, %v3676
        %v3732 = vadd.f32 %v3656, %v3680
        %v3733 = vadd.f32 %v3657, %v3676
        %v3734 = vadd.f32 %v3658, %v3680
        %v3735 = vadd.f32 %v3659, %v3676
        %v3736 = vadd.f32 %v3660, %v3680
        %v3737 = vadd.f32 %v3661, %v3676
        %v3738 = vadd.f32 %v3662, %v3680
        %v3739 = vadd.f32 %v3663, %v3676
        %v3740 = vadd.f32 %v3664, %v3680
        %v3741 = vadd.f32 %v3665, %v3676
        %v3742 = vadd.f32 %v3666, %v3680
        %v3743 = vadd.f32 %v3667, %v3676
        %v3744 = vadd.f32 %v3668, %v3680
        %v3745 = vadd.f32 %v3669, %v3676
        %v3746 = vadd.f32 %v3670, %v3680
        %v3747 = vmax.f32 %v3683, 0.0
        %v3748 = vmax.f32 %v3684, 0.0
        %v3749 = vmax.f32 %v3685, 0.0
        %v3750 = vmax.f32 %v3686, 0.0
        %v3751 = vmax.f32 %v3687, 0.0
        %v3752 = vmax.f32 %v3688, 0.0
        %v3753 = vmax.f32 %v3689, 0.0
        %v3754 = vmax.f32 %v3690, 0.0
        %v3755 = vmax.f32 %v3691, 0.0
        %v3756 = vmax.f32 %v3692, 0.0
        %v3757 = vmax.f32 %v3693, 0.0
        %v3758 = vmax.f32 %v3694, 0.0
        %v3759 = vmax.f32 %v3695, 0.0
        %v3760 = vmax.f32 %v3696, 0.0
        %v3761 = vmax.f32 %v3697, 0.0
        %v3762 = vmax.f32 %v3698, 0.0
        %v3763 = vmax.f32 %v3699, 0.0
        %v3764 = vmax.f32 %v3700, 0.0
        %v3765 = vmax.f32 %v3701, 0.0
        %v3766 = vmax.f32 %v3702, 0.0
        %v3767 = vmax.f32 %v3703, 0.0
        %v3768 = vmax.f32 %v3704, 0.0
        %v3769 = vmax.f32 %v3705, 0.0
        %v3770 = vmax.f32 %v3706, 0.0
        %v3771 = vmax.f32 %v3707, 0.0
        %v3772 = vmax.f32 %v3708, 0.0
        %v3773 = vmax.f32 %v3709, 0.0
        %v3774 = vmax.f32 %v3710, 0.0
        %v3775 = vmax.f32 %v3711, 0.0
        %v3776 = vmax.f32 %v3712, 0.0
        %v3777 = vmax.f32 %v3713, 0.0
        %v3778 = vmax.f32 %v3714, 0.0
        %v3779 = vmax.f32 %v3715, 0.0
        %v3780 = vmax.f32 %v3716, 0.0
        %v3781 = vmax.f32 %v3717, 0.0
        %v3782 = vmax.f32 %v3718, 0.0
        %v3783 = vmax.f32 %v3719, 0.0
        %v3784 = vmax.f32 %v3720, 0.0
        %v3785 = vmax.f32 %v3721, 0.0
        %v3786 = vmax.f32 %v3722, 0.0
        %v3787 = vmax.f32 %v3723, 0.0
        %v3788 = vmax.f32 %v3724, 0.0
        %v3789 = vmax.f32 %v3725, 0.0
        %v3790 = vmax.f32 %v3726, 0.0
        %v3791 = vmax.f32 %v3727, 0.0
        %v3792 = vmax.f32 %v3728, 0.0
        %v3793 = vmax.f32 %v3729, 0.0
        %v3794 = vmax.f32 %v3730, 0.0
        %v3795 = vmax.f32 %v3731, 0.0
        %v3796 = vmax.f32 %v3732, 0.0
        %v3797 = vmax.f32 %v3733, 0.0
        %v3798 = vmax.f32 %v3734, 0.0
        %v3799 = vmax.f32 %v3735, 0.0
        %v3800 = vmax.f32 %v3736, 0.0
        %v3801 = vmax.f32 %v3737, 0.0
        %v3802 = vmax.f32 %v3738, 0.0
        %v3803 = vmax.f32 %v3739, 0.0
        %v3804 = vmax.f32 %v3740, 0.0
        %v3805 = vmax.f32 %v3741, 0.0
        %v3806 = vmax.f32 %v3742, 0.0
        %v3807 = vmax.f32 %v3743, 0.0
        %v3808 = vmax.f32 %v3744, 0.0
        %v3809 = vmax.f32 %v3745, 0.0
        %v3810 = vmax.f32 %v3746, 0.0
        %3811 = vst [vmem:[%s481] sm:$0xff] %v3747
        %3812 = vst [vmem:[%s481 + $0x8] sm:$0xff] %v3748
        %3813 = vst [vmem:[%s481 + $0x10] sm:$0xff] %v3749
        %3814 = vst [vmem:[%s481 + $0x18] sm:$0xff] %v3750
        %3815 = vst [vmem:[%s481 + $0x20] sm:$0xff] %v3751
        %3816 = vst [vmem:[%s481 + $0x28] sm:$0xff] %v3752
        %3817 = vst [vmem:[%s481 + $0x30] sm:$0xff] %v3753
        %3818 = vst [vmem:[%s481 + $0x38] sm:$0xff] %v3754
        %3819 = vst [vmem:[%s481 + $0x40] sm:$0xff] %v3755
        %3820 = vst [vmem:[%s481 + $0x48] sm:$0xff] %v3756
        %3821 = vst [vmem:[%s481 + $0x50] sm:$0xff] %v3757
        %3822 = vst [vmem:[%s481 + $0x58] sm:$0xff] %v3758
        %3823 = vst [vmem:[%s481 + $0x60] sm:$0xff] %v3759
        %3824 = vst [vmem:[%s481 + $0x68] sm:$0xff] %v3760
        %3825 = vst [vmem:[%s481 + $0x70] sm:$0xff] %v3761
        %3826 = vst [vmem:[%s481 + $0x78] sm:$0xff] %v3762
        %3827 = vst [vmem:[%s481 + $0x80] sm:$0xff] %v3763
        %3828 = vst [vmem:[%s481 + $0x88] sm:$0xff] %v3764
        %3829 = vst [vmem:[%s481 + $0x90] sm:$0xff] %v3765
        %3830 = vst [vmem:[%s481 + $0x98] sm:$0xff] %v3766
        %3831 = vst [vmem:[%s481 + $0xa0] sm:$0xff] %v3767
        %3832 = vst [vmem:[%s481 + $0xa8] sm:$0xff] %v3768
        %3833 = vst [vmem:[%s481 + $0xb0] sm:$0xff] %v3769
        %3834 = vst [vmem:[%s481 + $0xb8] sm:$0xff] %v3770
        %3835 = vst [vmem:[%s481 + $0xc0] sm:$0xff] %v3771
        %3836 = vst [vmem:[%s481 + $0xc8] sm:$0xff] %v3772
        %3837 = vst [vmem:[%s481 + $0xd0] sm:$0xff] %v3773
        %3838 = vst [vmem:[%s481 + $0xd8] sm:$0xff] %v3774
        %3839 = vst [vmem:[%s481 + $0xe0] sm:$0xff] %v3775
        %3840 = vst [vmem:[%s481 + $0xe8] sm:$0xff] %v3776
        %3841 = vst [vmem:[%s481 + $0xf0] sm:$0xff] %v3777
        %3842 = vst [vmem:[%s481 + $0xf8] sm:$0xff] %v3778
        %3843 = vst [vmem:[%s481 + $0x100] sm:$0xff] %v3779
        %3844 = vst [vmem:[%s481 + $0x108] sm:$0xff] %v3780
        %3845 = vst [vmem:[%s481 + $0x110] sm:$0xff] %v3781
        %3846 = vst [vmem:[%s481 + $0x118] sm:$0xff] %v3782
        %3847 = vst [vmem:[%s481 + $0x120] sm:$0xff] %v3783
        %3848 = vst [vmem:[%s481 + $0x128] sm:$0xff] %v3784
        %3849 = vst [vmem:[%s481 + $0x130] sm:$0xff] %v3785
        %3850 = vst [vmem:[%s481 + $0x138] sm:$0xff] %v3786
        %3851 = vst [vmem:[%s481 + $0x140] sm:$0xff] %v3787
        %3852 = vst [vmem:[%s481 + $0x148] sm:$0xff] %v3788
        %3853 = vst [vmem:[%s481 + $0x150] sm:$0xff] %v3789
        %3854 = vst [vmem:[%s481 + $0x158] sm:$0xff] %v3790
        %3855 = vst [vmem:[%s481 + $0x160] sm:$0xff] %v3791
        %3856 = vst [vmem:[%s481 + $0x168] sm:$0xff] %v3792
        %3857 = vst [vmem:[%s481 + $0x170] sm:$0xff] %v3793
        %3858 = vst [vmem:[%s481 + $0x178] sm:$0xff] %v3794
        %3859 = vst [vmem:[%s481 + $0x180] sm:$0xff] %v3795
        %3860 = vst [vmem:[%s481 + $0x188] sm:$0xff] %v3796
        %3861 = vst [vmem:[%s481 + $0x190] sm:$0xff] %v3797
        %3862 = vst [vmem:[%s481 + $0x198] sm:$0xff] %v3798
        %3863 = vst [vmem:[%s481 + $0x1a0] sm:$0xff] %v3799
        %3864 = vst [vmem:[%s481 + $0x1a8] sm:$0xff] %v3800
        %3865 = vst [vmem:[%s481 + $0x1b0] sm:$0xff] %v3801
        %3866 = vst [vmem:[%s481 + $0x1b8] sm:$0xff] %v3802
        %3867 = vst [vmem:[%s481 + $0x1c0] sm:$0xff] %v3803
        %3868 = vst [vmem:[%s481 + $0x1c8] sm:$0xff] %v3804
        %3869 = vst [vmem:[%s481 + $0x1d0] sm:$0xff] %v3805
        %3870 = vst [vmem:[%s481 + $0x1d8] sm:$0xff] %v3806
        %3871 = vst [vmem:[%s481 + $0x1e0] sm:$0xff] %v3807
        %3872 = vst [vmem:[%s481 + $0x1e8] sm:$0xff] %v3808
        %3873 = vst [vmem:[%s481 + $0x1f0] sm:$0xff] %v3809
        %3874 = vst [vmem:[%s481 + $0x1f8] sm:$0xff] %v3810
        %s3875 = sand.u32 %s311, 1
        %s3876 = scalar_lea.sflag [#allocation3], %s3875
        %s3877 = sand.u32 %s311, 1
        %s3878 = smul.addr %s3877, 512
        %s3879 = scalar_lea.vmem [#allocation2], %s3878
        // Predicated region
        $region69: #{aspp_forward.13} parent=67 // pred_check
          %p3880 = pneg %p321
        $region70: #{aspp_forward.13} parent=67 // pred_check_branch
          %3882 = sbr.rel (%p3880) target = $region72
        $region71: #{aspp_forward.13} parent=67 // pred_region
          %s3883 = smul.u32 32, %s26
          %s3885 = ssub.s32 8192, 8192
          %3886 = vsyncadd %s3876, %s3885
          %s3887 = smul.addr %s3883, 2
          %s3888 = smul.addr %s3887, 128
          %s3889 = scalar_lea.hbm %s12, %s3888
          %s3890 = sshll.u32 %s3879, 4
          %s3891 = int_to_ptr.vmem [resolvable:$true] %s3890
          %3896 = dma.vmem_to_hbm [thread:$0]  %s3891, 8192, %s3889, %s3876, 256, 256, 16
        $region72: #{aspp_forward.13} parent=67 // pred_fallthru
          _
      $region68: #{aspp_forward.13} parent=5 // pred_fallthru
        _
      %p3897 = scmp.le.s32.totalorder 2, %s21
      // Predicated region
      $region73: #{aspp_forward.13} parent=5 // pred_check
        %p3898 = pneg %p3897
      $region74: #{aspp_forward.13} parent=5 // pred_check_branch
        %3900 = sbr.rel (%p3898) target = $region76
      $region75: #{aspp_forward.13} parent=5 // pred_region
        %s3901 = ssub.s32 %s21, 2
        // Predicated region
        $region77: #{aspp_forward.13} parent=75 // pred_check
          %p3902 = pneg %p327
        $region78: #{aspp_forward.13} parent=75 // pred_check_branch
          %3904 = sbr.rel (%p3902) target = $region80
        $region79: #{aspp_forward.13} parent=75 // pred_region
          %s3905 = sand.u32 %s312, 1
          %s3906 = scalar_lea.sflag [#allocation3], %s3905
          %s3907 = sand.u32 %s312, 1
          %s3908 = smul.addr %s3907, 512
          %s3909 = scalar_lea.vmem [#allocation2], %s3908
          %3910 = dma.done %s3906, 8192
        $region80: #{aspp_forward.13} parent=75 // pred_fallthru
          _
      $region76: #{aspp_forward.13} parent=5 // pred_fallthru
        _
    $region6: #{aspp_forward.13} parent=1 // loop_footer
      %s25 = sadd.s32 1, %s21
    $region7: #{aspp_forward.13} parent=1 // loop_footer_branch
      %20 = sbr.rel target = $region3
    $region8: #{aspp_forward.13} parent=1 // loop_exit
      _
    %3911 = vsyncpa [#allocation3], 1
    %s3912 = scalar_lea.sflag [#allocation3], 1
    %3913 = vsyncpa %s3912, 1

</llo_original>
